<compile_context>
chip_gen: v7x
topology: tpu7x:2x2x1
jax: 0.10.0
libtpu: 0.0.40
codegen_flags: <defaults>
</compile_context>

<pallas_src>
import functools
import math

import jax
import jax.numpy as jnp
from jax import lax
from jax.experimental import pallas as pl
from jax.experimental.pallas import tpu as pltpu


# ---------------------------------------------------------------------------
# Fused attention-network kernel (all layers, all modules, one invocation).
# ---------------------------------------------------------------------------
def _refiner_attention_kernel(x_ref, sp_mask_ref, tp_mask_ref,
                              w_in_ref, b_in_ref, w_out_ref, b_out_ref,
                              out_ref, *, num_heads, depth):
    """Whole attention network on a VMEM-resident [R, E] slab.

    x_ref       : [R, E]       f32   R = b*t*n, row = (b, t, n) row-major
    sp_mask_ref : [R, R]       f32   additive mask: 0 same spatial pos, -1e30 else
    tp_mask_ref : [R, R]       f32   additive mask: 0 same time step,   -1e30 else
    w_in_ref    : [M, E, 3E]   bf16  fused in-proj per module (Q cols pre-scaled)
    b_in_ref    : [M, 1, 3E]   f32
    w_out_ref   : [M, E, E]    bf16
    b_out_ref   : [M, 1, E]    f32
    out_ref     : [R, E]       f32
    Modules m = 0..M-1 alternate spatial (even) / temporal (odd).
    """
    R, E = x_ref.shape
    n_modules = w_in_ref.shape[0]

    x = x_ref[...]                                                # [R, E] f32
    for m in range(n_modules):
        mask_ref = sp_mask_ref if m % 2 == 0 else tp_mask_ref
        # Fused QKV projection on the full slab: M=128 rows, one MXU push.
        qkv = jnp.dot(x.astype(jnp.bfloat16), w_in_ref[m],
                      preferred_element_type=jnp.float32) + b_in_ref[m]
        out = jnp.zeros((R, E), jnp.float32) + b_out_ref[m]       # start at bias
        for h in range(num_heads):
            lo = h * depth
            qh = qkv[:, lo:lo + depth].astype(jnp.bfloat16)             # [R, d]
            kh = qkv[:, E + lo:E + lo + depth].astype(jnp.bfloat16)     # [R, d]
            vh = qkv[:, 2 * E + lo:2 * E + lo + depth].astype(jnp.bfloat16)
            # q @ k^T over all 128 rows at once (no explicit transpose);
            # the per-view attention grouping is enforced by the additive mask.
            s = lax.dot_general(qh, kh, (((1,), (1,)), ((), ())),
                                preferred_element_type=jnp.float32)     # [R, R]
            s = s + mask_ref[...]
            s = s - jnp.max(s, axis=-1, keepdims=True)
            p = jnp.exp(s)
            p = p * pl.reciprocal(jnp.sum(p, axis=-1, keepdims=True),
                                  approx=True)                          # EUP slot
            ctx = jnp.dot(p.astype(jnp.bfloat16), vh,
                          preferred_element_type=jnp.float32)           # [R, d]
            # Per-head output-projection accumulation: no ctx scratch/concat.
            out = out + jnp.dot(ctx.astype(jnp.bfloat16),
                                w_out_ref[m, lo:lo + depth, :],
                                preferred_element_type=jnp.float32)
        x = out
    out_ref[...] = x


def _additive_group_masks(b, t, n):
    """Additive masks over the flattened (b, t, n) row index."""
    r = jnp.arange(b * t * n, dtype=jnp.int32)
    spatial_id = r % n                      # spatial MHA: same spatial position
    temporal_id = (r // n) % t              # temporal MHA: same time step

    def mk(ids):
        same = ids[:, None] == ids[None, :]
        return jnp.where(same, 0.0, -1e30).astype(jnp.float32)

    return mk(spatial_id), mk(temporal_id)


def refiner_attention_pallas(x, stacked, *, num_heads):
    """x: [b, t, n, e] f32 -> refined [b, t, n, e] f32 (whole attention network)."""
    b, t, n, e = x.shape
    R = b * t * n
    depth = e // num_heads
    sp_mask, tp_mask = _additive_group_masks(b, t, n)
    kernel = functools.partial(_refiner_attention_kernel,
                               num_heads=num_heads, depth=depth)
    vmem = pl.BlockSpec(memory_space=pltpu.MemorySpace.VMEM)
    out = pl.pallas_call(
        kernel,
        out_shape=jax.ShapeDtypeStruct((R, e), jnp.float32),
        in_specs=[vmem] * 7,
        out_specs=vmem,
    )(x.reshape(R, e), sp_mask, tp_mask,
      stacked["w_in"], stacked["b_in"], stacked["w_out"], stacked["b_out"])
    return out.reshape(b, t, n, e)


# ---------------------------------------------------------------------------
# Parameters (torch layout) + one-time kernel-friendly preparation.
# ---------------------------------------------------------------------------
def init_mha_params(key, embed):
    """nn.MultiheadAttention params after _reset_parameters() (torch layout)."""
    k1, k2 = jax.random.split(key)
    b_in = math.sqrt(6.0 / (embed + 3 * embed))       # xavier_uniform_
    b_out = 1.0 / math.sqrt(embed)                    # Linear default
    return {
        "w_in": jax.random.uniform(k1, (3 * embed, embed), jnp.float32,
                                   minval=-b_in, maxval=b_in),
        "b_in": jnp.zeros((3 * embed,), jnp.float32),
        "w_out": jax.random.uniform(k2, (embed, embed), jnp.float32,
                                    minval=-b_out, maxval=b_out),
        "b_out": jnp.zeros((embed,), jnp.float32),
    }


def prepare_mha_params(p, num_heads):
    """One-time prep: transpose to (x @ W) layout, fold 1/sqrt(d) into the Q
    columns of BOTH weight and bias (torch scales q after the bias add), cast
    matmul operands to bf16."""
    embed = p["w_out"].shape[0]
    depth = embed // num_heads
    scale = 1.0 / math.sqrt(depth)
    col_scale = jnp.concatenate([jnp.full((embed,), scale, jnp.float32),
                                 jnp.ones((2 * embed,), jnp.float32)])
    w_in_t = jnp.transpose(p["w_in"]) * col_scale[None, :]          # [E, 3E]
    b_in = p["b_in"] * col_scale
    return {
        "w_in_t": w_in_t.astype(jnp.bfloat16),
        "b_in": b_in.reshape(1, 3 * embed).astype(jnp.float32),
        "w_out_t": jnp.transpose(p["w_out"]).astype(jnp.bfloat16),  # [E, E]
        "b_out": p["b_out"].reshape(1, embed).astype(jnp.float32),
    }


def init_model_params(key, embed, num_heads, num_layers):
    keys = jax.random.split(key, 2 * num_layers + 1)
    layers = []
    for i in range(num_layers):
        layers.append({
            "spatial": prepare_mha_params(init_mha_params(keys[2 * i], embed),
                                          num_heads),
            "temporal": prepare_mha_params(init_mha_params(keys[2 * i + 1], embed),
                                           num_heads),
        })
    mods = [m for layer in layers for m in (layer["spatial"], layer["temporal"])]
    stacked = {
        "w_in": jnp.stack([m["w_in_t"] for m in mods]),     # [2L, E, 3E] bf16
        "b_in": jnp.stack([m["b_in"] for m in mods]),       # [2L, 1, 3E] f32
        "w_out": jnp.stack([m["w_out_t"] for m in mods]),   # [2L, E, E]  bf16
        "b_out": jnp.stack([m["b_out"] for m in mods]),     # [2L, 1, E]  f32
    }
    bound = 1.0 / math.sqrt(embed)
    return {
        "layers": layers,
        "stacked": stacked,
        "score_w": jax.random.uniform(keys[-1], (1, embed), jnp.float32,
                                      minval=-bound, maxval=bound),
        "score_b": jnp.zeros((1,), jnp.float32),   # TokenSelection.init_weights
    }


# ---------------------------------------------------------------------------
# Pure-JAX reference (literal torch view/permute dance, matched precision).
# ---------------------------------------------------------------------------
def _mha_ref(x, prep, num_heads):
    """Self-attention, seq-first x: [S, B, E] (torch batch_first=False)."""
    S, B, E = x.shape
    d = E // num_heads
    qkv = jnp.dot(x.reshape(S * B, E).astype(jnp.bfloat16), prep["w_in_t"],
                  preferred_element_type=jnp.float32).reshape(S, B, 3 * E)
    qkv = qkv + prep["b_in"]
    sp = lambda a: a.reshape(S, B, num_heads, d).astype(jnp.bfloat16)
    qh, kh, vh = sp(qkv[..., :E]), sp(qkv[..., E:2 * E]), sp(qkv[..., 2 * E:])
    s = jnp.einsum("ibhd,jbhd->bhij", qh, kh, preferred_element_type=jnp.float32)
    s = s - s.max(-1, keepdims=True)
    p = jnp.exp(s)
    p = p / p.sum(-1, keepdims=True)
    ctx = jnp.einsum("bhij,jbhd->ibhd", p.astype(jnp.bfloat16), vh,
                     preferred_element_type=jnp.float32)
    ctx = ctx.reshape(S * B, E).astype(jnp.bfloat16)
    out = jnp.dot(ctx, prep["w_out_t"],
                  preferred_element_type=jnp.float32).reshape(S, B, E)
    return out + prep["b_out"]


def attention_network_ref(x, layers, num_heads):
    b, t, n, e = x.shape
    for layer in layers:
        xs = _mha_ref(x.reshape(b * t, n, e), layer["spatial"], num_heads)
        x = xs.reshape(b, t, n, e)
        xt = jnp.transpose(x, (0, 2, 1, 3)).reshape(b * n, t, e)
        xt = _mha_ref(xt, layer["temporal"], num_heads)
        x = jnp.transpose(xt.reshape(b, n, t, e), (0, 2, 1, 3))
    return x


# ---------------------------------------------------------------------------
# Token selection / multi-scale pooling (thin XLA ops) + full forward.
# ---------------------------------------------------------------------------
def token_selection(x, score_w, score_b, top_k):
    # TODO(synk): torch.topk + fancy-index gather has no clean Pallas
    #   equivalent; kept as lax.top_k / take_along_axis in the wrapper.
    b, t, n, e = x.shape
    scores = (x @ score_w.T + score_b)[..., 0].reshape(b, t * n)
    _, idx = lax.top_k(scores, top_k)                 # descending, like torch
    flat = x.reshape(b, t * n, e)
    return jnp.take_along_axis(flat, idx[:, :, None], axis=1)   # [b, top_k, e]


def multi_scale_pool(tokens, scales=(1, 2, 4)):
    # TODO(synk): F.avg_pool1d (kernel=stride=scale) kept as reshape-mean.
    b, k, e = tokens.shape
    outs = []
    for s in scales:
        if k >= s:
            m = (k // s) * s
            outs.append(tokens[:, :m].reshape(b, k // s, s, e).mean(axis=2))
    return jnp.concatenate(outs, axis=1)


def model_forward(x, params, *, num_heads, top_k, use_multi_scale):
    x = refiner_attention_pallas(x, params["stacked"], num_heads=num_heads)
    tokens = token_selection(x, params["score_w"], params["score_b"], top_k)
    if use_multi_scale:
        tokens = multi_scale_pool(tokens)
    return tokens


# ---------------------------------------------------------------------------
if __name__ == "__main__":
    b, t, n, embed = 2, 4, 16, 32
    num_heads, num_layers, top_k = 4, 2, 8
    use_multi_scale = True

    key = jax.random.PRNGKey(0)
    k_x, k_p = jax.random.split(key)
    x = jax.random.normal(k_x, (b, t, n, embed), jnp.float32)
    params = init_model_params(k_p, embed, num_heads, num_layers)

    # 1) Validate the fused attention-network kernel against the pure-JAX
    #    reference (tolerance covers approx EUP reciprocal + accum order).
    attn = jax.jit(functools.partial(refiner_attention_pallas,
                                     num_heads=num_heads))
    out_k = jax.block_until_ready(attn(x, params["stacked"]))
    out_r = attention_network_ref(x, params["layers"], num_heads)
    assert out_k.shape == out_r.shape
    max_err = float(jnp.max(jnp.abs(out_k - out_r)))
    assert jnp.allclose(out_k, out_r, atol=2e-2, rtol=2e-2), (
        f"fused attention kernel mismatch, max err {max_err}")

    # 2) Full SpatioTemporalVisualTokenRefinerModel forward: one Pallas launch
    #    for the whole attention network + thin XLA selection / pooling.
    fwd = jax.jit(functools.partial(model_forward, num_heads=num_heads,
                                    top_k=top_k, use_multi_scale=use_multi_scale))
    out = jax.block_until_ready(fwd(x, params))

    expected_tokens = sum(top_k // s for s in (1, 2, 4) if top_k >= s)  # 8+4+2
    assert out.shape == (b, expected_tokens, embed), out.shape
    assert bool(jnp.all(jnp.isfinite(out)))
    print("KERNEL_OK")
</pallas_src>

<mosaic_0001>
module attributes {stable_mosaic.version = 11 : i64} {
  func.func @_refiner_attention_kernel(%arg0: memref<128x32xf32, #tpu.memory_space<vmem>>, %arg1: memref<128x128xf32, #tpu.memory_space<vmem>>, %arg2: memref<128x128xf32, #tpu.memory_space<vmem>>, %arg3: memref<4x32x96xbf16, #tpu.memory_space<vmem>>, %arg4: memref<4x1x96xf32, #tpu.memory_space<vmem>>, %arg5: memref<4x32x32xbf16, #tpu.memory_space<vmem>>, %arg6: memref<4x1x32xf32, #tpu.memory_space<vmem>>, %arg7: memref<128x32xf32, #tpu.memory_space<vmem>>) attributes {dimension_semantics = [], scalar_prefetch = 0 : i64, scratch_operands = 0 : i64, tpu.core_type = #tpu.core_type<tc>} {
    %c0 = arith.constant 0 : index
    %c0_0 = arith.constant 0 : index
    %0 = vector.load %arg0[%c0, %c0_0] : memref<128x32xf32, #tpu.memory_space<vmem>>, vector<128x32xf32>
    %1 = arith.truncf %0 : vector<128x32xf32> to vector<128x32xbf16>
    %c0_1 = arith.constant 0 : index
    %c0_2 = arith.constant 0 : index
    %c0_3 = arith.constant 0 : index
    %2 = vector.load %arg3[%c0_1, %c0_2, %c0_3] : memref<4x32x96xbf16, #tpu.memory_space<vmem>>, vector<1x32x96xbf16>
    %3 = vector.shape_cast %2 : vector<1x32x96xbf16> to vector<32x96xbf16>
    %cst = arith.constant dense<0.000000e+00> : vector<128x96xf32>
    %4 = tpu.matmul %1, %3, %cst {dimension_numbers = #tpu.dot_dimension_numbers<[1], [0], [0], [1], [0, 0, 1, 1], [], []>} : vector<128x32xbf16>, vector<32x96xbf16>, vector<128x96xf32> -> vector<128x96xf32>
    %c0_4 = arith.constant 0 : index
    %c0_5 = arith.constant 0 : index
    %c0_6 = arith.constant 0 : index
    %5 = vector.load %arg4[%c0_4, %c0_5, %c0_6] : memref<4x1x96xf32, #tpu.memory_space<vmem>>, vector<1x1x96xf32>
    %6 = vector.shape_cast %5 : vector<1x1x96xf32> to vector<1x96xf32>
    %7 = vector.broadcast %6 : vector<1x96xf32> to vector<128x96xf32>
    %8 = arith.addf %4, %7 : vector<128x96xf32>
    %cst_7 = arith.constant 0.000000e+00 : f32
    %9 = vector.broadcast %cst_7 : f32 to vector<128x32xf32>
    %c0_8 = arith.constant 0 : index
    %c0_9 = arith.constant 0 : index
    %c0_10 = arith.constant 0 : index
    %10 = vector.load %arg6[%c0_8, %c0_9, %c0_10] : memref<4x1x32xf32, #tpu.memory_space<vmem>>, vector<1x1x32xf32>
    %11 = vector.shape_cast %10 : vector<1x1x32xf32> to vector<1x32xf32>
    %12 = vector.broadcast %11 : vector<1x32xf32> to vector<128x32xf32>
    %13 = arith.addf %9, %12 : vector<128x32xf32>
    %14 = vector.extract_strided_slice %8 {offsets = [0, 0], sizes = [128, 8], strides = [1, 1]} : vector<128x96xf32> to vector<128x8xf32>
    %15 = arith.truncf %14 : vector<128x8xf32> to vector<128x8xbf16>
    %16 = vector.extract_strided_slice %8 {offsets = [0, 32], sizes = [128, 8], strides = [1, 1]} : vector<128x96xf32> to vector<128x8xf32>
    %17 = arith.truncf %16 : vector<128x8xf32> to vector<128x8xbf16>
    %18 = vector.extract_strided_slice %8 {offsets = [0, 64], sizes = [128, 8], strides = [1, 1]} : vector<128x96xf32> to vector<128x8xf32>
    %19 = arith.truncf %18 : vector<128x8xf32> to vector<128x8xbf16>
    %cst_11 = arith.constant dense<0.000000e+00> : vector<128x128xf32>
    %20 = tpu.matmul %15, %17, %cst_11 {dimension_numbers = #tpu.dot_dimension_numbers<[1], [1], [0], [0], [0, 0, 1, 0], [], []>} : vector<128x8xbf16>, vector<128x8xbf16>, vector<128x128xf32> -> vector<128x128xf32>
    %c0_12 = arith.constant 0 : index
    %c0_13 = arith.constant 0 : index
    %21 = vector.load %arg1[%c0_12, %c0_13] : memref<128x128xf32, #tpu.memory_space<vmem>>, vector<128x128xf32>
    %22 = arith.addf %20, %21 : vector<128x128xf32>
    %cst_14 = arith.constant dense<0xFF800000> : vector<128xf32>
    %23 = vector.multi_reduction <maximumf>, %22, %cst_14 [1] : vector<128x128xf32> to vector<128xf32>
    %24 = vector.shape_cast %23 : vector<128xf32> to vector<128x1xf32>
    %25 = vector.broadcast %24 : vector<128x1xf32> to vector<128x128xf32>
    %26 = arith.subf %22, %25 : vector<128x128xf32>
    %27 = math.exp %26 : vector<128x128xf32>
    %cst_15 = arith.constant dense<0.000000e+00> : vector<128xf32>
    %28 = vector.multi_reduction <add>, %27, %cst_15 [1] : vector<128x128xf32> to vector<128xf32>
    %29 = vector.shape_cast %28 : vector<128xf32> to vector<128x1xf32>
    %30 = tpu.reciprocal %29 {approx = true} : vector<128x1xf32> -> vector<128x1xf32>
    %31 = vector.broadcast %30 : vector<128x1xf32> to vector<128x128xf32>
    %32 = arith.mulf %27, %31 : vector<128x128xf32>
    %33 = arith.truncf %32 : vector<128x128xf32> to vector<128x128xbf16>
    %cst_16 = arith.constant dense<0.000000e+00> : vector<128x8xf32>
    %34 = tpu.matmul %33, %19, %cst_16 {dimension_numbers = #tpu.dot_dimension_numbers<[1], [0], [0], [1], [0, 0, 1, 1], [], []>} : vector<128x128xbf16>, vector<128x8xbf16>, vector<128x8xf32> -> vector<128x8xf32>
    %35 = arith.truncf %34 : vector<128x8xf32> to vector<128x8xbf16>
    %c0_17 = arith.constant 0 : index
    %c0_18 = arith.constant 0 : index
    %c0_19 = arith.constant 0 : index
    %36 = vector.load %arg5[%c0_17, %c0_18, %c0_19] : memref<4x32x32xbf16, #tpu.memory_space<vmem>>, vector<1x8x32xbf16>
    %37 = vector.shape_cast %36 : vector<1x8x32xbf16> to vector<8x32xbf16>
    %cst_20 = arith.constant dense<0.000000e+00> : vector<128x32xf32>
    %38 = tpu.matmul %35, %37, %cst_20 {dimension_numbers = #tpu.dot_dimension_numbers<[1], [0], [0], [1], [0, 0, 1, 1], [], []>} : vector<128x8xbf16>, vector<8x32xbf16>, vector<128x32xf32> -> vector<128x32xf32>
    %39 = arith.addf %13, %38 : vector<128x32xf32>
    %40 = vector.extract_strided_slice %8 {offsets = [0, 8], sizes = [128, 8], strides = [1, 1]} : vector<128x96xf32> to vector<128x8xf32>
    %41 = arith.truncf %40 : vector<128x8xf32> to vector<128x8xbf16>
    %42 = vector.extract_strided_slice %8 {offsets = [0, 40], sizes = [128, 8], strides = [1, 1]} : vector<128x96xf32> to vector<128x8xf32>
    %43 = arith.truncf %42 : vector<128x8xf32> to vector<128x8xbf16>
    %44 = vector.extract_strided_slice %8 {offsets = [0, 72], sizes = [128, 8], strides = [1, 1]} : vector<128x96xf32> to vector<128x8xf32>
    %45 = arith.truncf %44 : vector<128x8xf32> to vector<128x8xbf16>
    %cst_21 = arith.constant dense<0.000000e+00> : vector<128x128xf32>
    %46 = tpu.matmul %41, %43, %cst_21 {dimension_numbers = #tpu.dot_dimension_numbers<[1], [1], [0], [0], [0, 0, 1, 0], [], []>} : vector<128x8xbf16>, vector<128x8xbf16>, vector<128x128xf32> -> vector<128x128xf32>
    %c0_22 = arith.constant 0 : index
    %c0_23 = arith.constant 0 : index
    %47 = vector.load %arg1[%c0_22, %c0_23] : memref<128x128xf32, #tpu.memory_space<vmem>>, vector<128x128xf32>
    %48 = arith.addf %46, %47 : vector<128x128xf32>
    %cst_24 = arith.constant dense<0xFF800000> : vector<128xf32>
    %49 = vector.multi_reduction <maximumf>, %48, %cst_24 [1] : vector<128x128xf32> to vector<128xf32>
    %50 = vector.shape_cast %49 : vector<128xf32> to vector<128x1xf32>
    %51 = vector.broadcast %50 : vector<128x1xf32> to vector<128x128xf32>
    %52 = arith.subf %48, %51 : vector<128x128xf32>
    %53 = math.exp %52 : vector<128x128xf32>
    %cst_25 = arith.constant dense<0.000000e+00> : vector<128xf32>
    %54 = vector.multi_reduction <add>, %53, %cst_25 [1] : vector<128x128xf32> to vector<128xf32>
    %55 = vector.shape_cast %54 : vector<128xf32> to vector<128x1xf32>
    %56 = tpu.reciprocal %55 {approx = true} : vector<128x1xf32> -> vector<128x1xf32>
    %57 = vector.broadcast %56 : vector<128x1xf32> to vector<128x128xf32>
    %58 = arith.mulf %53, %57 : vector<128x128xf32>
    %59 = arith.truncf %58 : vector<128x128xf32> to vector<128x128xbf16>
    %cst_26 = arith.constant dense<0.000000e+00> : vector<128x8xf32>
    %60 = tpu.matmul %59, %45, %cst_26 {dimension_numbers = #tpu.dot_dimension_numbers<[1], [0], [0], [1], [0, 0, 1, 1], [], []>} : vector<128x128xbf16>, vector<128x8xbf16>, vector<128x8xf32> -> vector<128x8xf32>
    %61 = arith.truncf %60 : vector<128x8xf32> to vector<128x8xbf16>
    %c0_27 = arith.constant 0 : index
    %c8 = arith.constant 8 : index
    %c0_28 = arith.constant 0 : index
    %62 = vector.load %arg5[%c0_27, %c8, %c0_28] : memref<4x32x32xbf16, #tpu.memory_space<vmem>>, vector<1x8x32xbf16>
    %63 = vector.shape_cast %62 : vector<1x8x32xbf16> to vector<8x32xbf16>
    %cst_29 = arith.constant dense<0.000000e+00> : vector<128x32xf32>
    %64 = tpu.matmul %61, %63, %cst_29 {dimension_numbers = #tpu.dot_dimension_numbers<[1], [0], [0], [1], [0, 0, 1, 1], [], []>} : vector<128x8xbf16>, vector<8x32xbf16>, vector<128x32xf32> -> vector<128x32xf32>
    %65 = arith.addf %39, %64 : vector<128x32xf32>
    %66 = vector.extract_strided_slice %8 {offsets = [0, 16], sizes = [128, 8], strides = [1, 1]} : vector<128x96xf32> to vector<128x8xf32>
    %67 = arith.truncf %66 : vector<128x8xf32> to vector<128x8xbf16>
    %68 = vector.extract_strided_slice %8 {offsets = [0, 48], sizes = [128, 8], strides = [1, 1]} : vector<128x96xf32> to vector<128x8xf32>
    %69 = arith.truncf %68 : vector<128x8xf32> to vector<128x8xbf16>
    %70 = vector.extract_strided_slice %8 {offsets = [0, 80], sizes = [128, 8], strides = [1, 1]} : vector<128x96xf32> to vector<128x8xf32>
    %71 = arith.truncf %70 : vector<128x8xf32> to vector<128x8xbf16>
    %cst_30 = arith.constant dense<0.000000e+00> : vector<128x128xf32>
    %72 = tpu.matmul %67, %69, %cst_30 {dimension_numbers = #tpu.dot_dimension_numbers<[1], [1], [0], [0], [0, 0, 1, 0], [], []>} : vector<128x8xbf16>, vector<128x8xbf16>, vector<128x128xf32> -> vector<128x128xf32>
    %c0_31 = arith.constant 0 : index
    %c0_32 = arith.constant 0 : index
    %73 = vector.load %arg1[%c0_31, %c0_32] : memref<128x128xf32, #tpu.memory_space<vmem>>, vector<128x128xf32>
    %74 = arith.addf %72, %73 : vector<128x128xf32>
    %cst_33 = arith.constant dense<0xFF800000> : vector<128xf32>
    %75 = vector.multi_reduction <maximumf>, %74, %cst_33 [1] : vector<128x128xf32> to vector<128xf32>
    %76 = vector.shape_cast %75 : vector<128xf32> to vector<128x1xf32>
    %77 = vector.broadcast %76 : vector<128x1xf32> to vector<128x128xf32>
    %78 = arith.subf %74, %77 : vector<128x128xf32>
    %79 = math.exp %78 : vector<128x128xf32>
    %cst_34 = arith.constant dense<0.000000e+00> : vector<128xf32>
    %80 = vector.multi_reduction <add>, %79, %cst_34 [1] : vector<128x128xf32> to vector<128xf32>
    %81 = vector.shape_cast %80 : vector<128xf32> to vector<128x1xf32>
    %82 = tpu.reciprocal %81 {approx = true} : vector<128x1xf32> -> vector<128x1xf32>
    %83 = vector.broadcast %82 : vector<128x1xf32> to vector<128x128xf32>
    %84 = arith.mulf %79, %83 : vector<128x128xf32>
    %85 = arith.truncf %84 : vector<128x128xf32> to vector<128x128xbf16>
    %cst_35 = arith.constant dense<0.000000e+00> : vector<128x8xf32>
    %86 = tpu.matmul %85, %71, %cst_35 {dimension_numbers = #tpu.dot_dimension_numbers<[1], [0], [0], [1], [0, 0, 1, 1], [], []>} : vector<128x128xbf16>, vector<128x8xbf16>, vector<128x8xf32> -> vector<128x8xf32>
    %87 = arith.truncf %86 : vector<128x8xf32> to vector<128x8xbf16>
    %c0_36 = arith.constant 0 : index
    %c16 = arith.constant 16 : index
    %c0_37 = arith.constant 0 : index
    %88 = vector.load %arg5[%c0_36, %c16, %c0_37] : memref<4x32x32xbf16, #tpu.memory_space<vmem>>, vector<1x8x32xbf16>
    %89 = vector.shape_cast %88 : vector<1x8x32xbf16> to vector<8x32xbf16>
    %cst_38 = arith.constant dense<0.000000e+00> : vector<128x32xf32>
    %90 = tpu.matmul %87, %89, %cst_38 {dimension_numbers = #tpu.dot_dimension_numbers<[1], [0], [0], [1], [0, 0, 1, 1], [], []>} : vector<128x8xbf16>, vector<8x32xbf16>, vector<128x32xf32> -> vector<128x32xf32>
    %91 = arith.addf %65, %90 : vector<128x32xf32>
    %92 = vector.extract_strided_slice %8 {offsets = [0, 24], sizes = [128, 8], strides = [1, 1]} : vector<128x96xf32> to vector<128x8xf32>
    %93 = arith.truncf %92 : vector<128x8xf32> to vector<128x8xbf16>
    %94 = vector.extract_strided_slice %8 {offsets = [0, 56], sizes = [128, 8], strides = [1, 1]} : vector<128x96xf32> to vector<128x8xf32>
    %95 = arith.truncf %94 : vector<128x8xf32> to vector<128x8xbf16>
    %96 = vector.extract_strided_slice %8 {offsets = [0, 88], sizes = [128, 8], strides = [1, 1]} : vector<128x96xf32> to vector<128x8xf32>
    %97 = arith.truncf %96 : vector<128x8xf32> to vector<128x8xbf16>
    %cst_39 = arith.constant dense<0.000000e+00> : vector<128x128xf32>
    %98 = tpu.matmul %93, %95, %cst_39 {dimension_numbers = #tpu.dot_dimension_numbers<[1], [1], [0], [0], [0, 0, 1, 0], [], []>} : vector<128x8xbf16>, vector<128x8xbf16>, vector<128x128xf32> -> vector<128x128xf32>
    %c0_40 = arith.constant 0 : index
    %c0_41 = arith.constant 0 : index
    %99 = vector.load %arg1[%c0_40, %c0_41] : memref<128x128xf32, #tpu.memory_space<vmem>>, vector<128x128xf32>
    %100 = arith.addf %98, %99 : vector<128x128xf32>
    %cst_42 = arith.constant dense<0xFF800000> : vector<128xf32>
    %101 = vector.multi_reduction <maximumf>, %100, %cst_42 [1] : vector<128x128xf32> to vector<128xf32>
    %102 = vector.shape_cast %101 : vector<128xf32> to vector<128x1xf32>
    %103 = vector.broadcast %102 : vector<128x1xf32> to vector<128x128xf32>
    %104 = arith.subf %100, %103 : vector<128x128xf32>
    %105 = math.exp %104 : vector<128x128xf32>
    %cst_43 = arith.constant dense<0.000000e+00> : vector<128xf32>
    %106 = vector.multi_reduction <add>, %105, %cst_43 [1] : vector<128x128xf32> to vector<128xf32>
    %107 = vector.shape_cast %106 : vector<128xf32> to vector<128x1xf32>
    %108 = tpu.reciprocal %107 {approx = true} : vector<128x1xf32> -> vector<128x1xf32>
    %109 = vector.broadcast %108 : vector<128x1xf32> to vector<128x128xf32>
    %110 = arith.mulf %105, %109 : vector<128x128xf32>
    %111 = arith.truncf %110 : vector<128x128xf32> to vector<128x128xbf16>
    %cst_44 = arith.constant dense<0.000000e+00> : vector<128x8xf32>
    %112 = tpu.matmul %111, %97, %cst_44 {dimension_numbers = #tpu.dot_dimension_numbers<[1], [0], [0], [1], [0, 0, 1, 1], [], []>} : vector<128x128xbf16>, vector<128x8xbf16>, vector<128x8xf32> -> vector<128x8xf32>
    %113 = arith.truncf %112 : vector<128x8xf32> to vector<128x8xbf16>
    %c0_45 = arith.constant 0 : index
    %c24 = arith.constant 24 : index
    %c0_46 = arith.constant 0 : index
    %114 = vector.load %arg5[%c0_45, %c24, %c0_46] : memref<4x32x32xbf16, #tpu.memory_space<vmem>>, vector<1x8x32xbf16>
    %115 = vector.shape_cast %114 : vector<1x8x32xbf16> to vector<8x32xbf16>
    %cst_47 = arith.constant dense<0.000000e+00> : vector<128x32xf32>
    %116 = tpu.matmul %113, %115, %cst_47 {dimension_numbers = #tpu.dot_dimension_numbers<[1], [0], [0], [1], [0, 0, 1, 1], [], []>} : vector<128x8xbf16>, vector<8x32xbf16>, vector<128x32xf32> -> vector<128x32xf32>
    %117 = arith.addf %91, %116 : vector<128x32xf32>
    %118 = arith.truncf %117 : vector<128x32xf32> to vector<128x32xbf16>
    %c1 = arith.constant 1 : index
    %c0_48 = arith.constant 0 : index
    %c0_49 = arith.constant 0 : index
    %119 = vector.load %arg3[%c1, %c0_48, %c0_49] : memref<4x32x96xbf16, #tpu.memory_space<vmem>>, vector<1x32x96xbf16>
    %120 = vector.shape_cast %119 : vector<1x32x96xbf16> to vector<32x96xbf16>
    %cst_50 = arith.constant dense<0.000000e+00> : vector<128x96xf32>
    %121 = tpu.matmul %118, %120, %cst_50 {dimension_numbers = #tpu.dot_dimension_numbers<[1], [0], [0], [1], [0, 0, 1, 1], [], []>} : vector<128x32xbf16>, vector<32x96xbf16>, vector<128x96xf32> -> vector<128x96xf32>
    %c1_51 = arith.constant 1 : index
    %c0_52 = arith.constant 0 : index
    %c0_53 = arith.constant 0 : index
    %122 = vector.load %arg4[%c1_51, %c0_52, %c0_53] : memref<4x1x96xf32, #tpu.memory_space<vmem>>, vector<1x1x96xf32>
    %123 = vector.shape_cast %122 : vector<1x1x96xf32> to vector<1x96xf32>
    %124 = vector.broadcast %123 : vector<1x96xf32> to vector<128x96xf32>
    %125 = arith.addf %121, %124 : vector<128x96xf32>
    %cst_54 = arith.constant 0.000000e+00 : f32
    %126 = vector.broadcast %cst_54 : f32 to vector<128x32xf32>
    %c1_55 = arith.constant 1 : index
    %c0_56 = arith.constant 0 : index
    %c0_57 = arith.constant 0 : index
    %127 = vector.load %arg6[%c1_55, %c0_56, %c0_57] : memref<4x1x32xf32, #tpu.memory_space<vmem>>, vector<1x1x32xf32>
    %128 = vector.shape_cast %127 : vector<1x1x32xf32> to vector<1x32xf32>
    %129 = vector.broadcast %128 : vector<1x32xf32> to vector<128x32xf32>
    %130 = arith.addf %126, %129 : vector<128x32xf32>
    %131 = vector.extract_strided_slice %125 {offsets = [0, 0], sizes = [128, 8], strides = [1, 1]} : vector<128x96xf32> to vector<128x8xf32>
    %132 = arith.truncf %131 : vector<128x8xf32> to vector<128x8xbf16>
    %133 = vector.extract_strided_slice %125 {offsets = [0, 32], sizes = [128, 8], strides = [1, 1]} : vector<128x96xf32> to vector<128x8xf32>
    %134 = arith.truncf %133 : vector<128x8xf32> to vector<128x8xbf16>
    %135 = vector.extract_strided_slice %125 {offsets = [0, 64], sizes = [128, 8], strides = [1, 1]} : vector<128x96xf32> to vector<128x8xf32>
    %136 = arith.truncf %135 : vector<128x8xf32> to vector<128x8xbf16>
    %cst_58 = arith.constant dense<0.000000e+00> : vector<128x128xf32>
    %137 = tpu.matmul %132, %134, %cst_58 {dimension_numbers = #tpu.dot_dimension_numbers<[1], [1], [0], [0], [0, 0, 1, 0], [], []>} : vector<128x8xbf16>, vector<128x8xbf16>, vector<128x128xf32> -> vector<128x128xf32>
    %c0_59 = arith.constant 0 : index
    %c0_60 = arith.constant 0 : index
    %138 = vector.load %arg2[%c0_59, %c0_60] : memref<128x128xf32, #tpu.memory_space<vmem>>, vector<128x128xf32>
    %139 = arith.addf %137, %138 : vector<128x128xf32>
    %cst_61 = arith.constant dense<0xFF800000> : vector<128xf32>
    %140 = vector.multi_reduction <maximumf>, %139, %cst_61 [1] : vector<128x128xf32> to vector<128xf32>
    %141 = vector.shape_cast %140 : vector<128xf32> to vector<128x1xf32>
    %142 = vector.broadcast %141 : vector<128x1xf32> to vector<128x128xf32>
    %143 = arith.subf %139, %142 : vector<128x128xf32>
    %144 = math.exp %143 : vector<128x128xf32>
    %cst_62 = arith.constant dense<0.000000e+00> : vector<128xf32>
    %145 = vector.multi_reduction <add>, %144, %cst_62 [1] : vector<128x128xf32> to vector<128xf32>
    %146 = vector.shape_cast %145 : vector<128xf32> to vector<128x1xf32>
    %147 = tpu.reciprocal %146 {approx = true} : vector<128x1xf32> -> vector<128x1xf32>
    %148 = vector.broadcast %147 : vector<128x1xf32> to vector<128x128xf32>
    %149 = arith.mulf %144, %148 : vector<128x128xf32>
    %150 = arith.truncf %149 : vector<128x128xf32> to vector<128x128xbf16>
    %cst_63 = arith.constant dense<0.000000e+00> : vector<128x8xf32>
    %151 = tpu.matmul %150, %136, %cst_63 {dimension_numbers = #tpu.dot_dimension_numbers<[1], [0], [0], [1], [0, 0, 1, 1], [], []>} : vector<128x128xbf16>, vector<128x8xbf16>, vector<128x8xf32> -> vector<128x8xf32>
    %152 = arith.truncf %151 : vector<128x8xf32> to vector<128x8xbf16>
    %c1_64 = arith.constant 1 : index
    %c0_65 = arith.constant 0 : index
    %c0_66 = arith.constant 0 : index
    %153 = vector.load %arg5[%c1_64, %c0_65, %c0_66] : memref<4x32x32xbf16, #tpu.memory_space<vmem>>, vector<1x8x32xbf16>
    %154 = vector.shape_cast %153 : vector<1x8x32xbf16> to vector<8x32xbf16>
    %cst_67 = arith.constant dense<0.000000e+00> : vector<128x32xf32>
    %155 = tpu.matmul %152, %154, %cst_67 {dimension_numbers = #tpu.dot_dimension_numbers<[1], [0], [0], [1], [0, 0, 1, 1], [], []>} : vector<128x8xbf16>, vector<8x32xbf16>, vector<128x32xf32> -> vector<128x32xf32>
    %156 = arith.addf %130, %155 : vector<128x32xf32>
    %157 = vector.extract_strided_slice %125 {offsets = [0, 8], sizes = [128, 8], strides = [1, 1]} : vector<128x96xf32> to vector<128x8xf32>
    %158 = arith.truncf %157 : vector<128x8xf32> to vector<128x8xbf16>
    %159 = vector.extract_strided_slice %125 {offsets = [0, 40], sizes = [128, 8], strides = [1, 1]} : vector<128x96xf32> to vector<128x8xf32>
    %160 = arith.truncf %159 : vector<128x8xf32> to vector<128x8xbf16>
    %161 = vector.extract_strided_slice %125 {offsets = [0, 72], sizes = [128, 8], strides = [1, 1]} : vector<128x96xf32> to vector<128x8xf32>
    %162 = arith.truncf %161 : vector<128x8xf32> to vector<128x8xbf16>
    %cst_68 = arith.constant dense<0.000000e+00> : vector<128x128xf32>
    %163 = tpu.matmul %158, %160, %cst_68 {dimension_numbers = #tpu.dot_dimension_numbers<[1], [1], [0], [0], [0, 0, 1, 0], [], []>} : vector<128x8xbf16>, vector<128x8xbf16>, vector<128x128xf32> -> vector<128x128xf32>
    %c0_69 = arith.constant 0 : index
    %c0_70 = arith.constant 0 : index
    %164 = vector.load %arg2[%c0_69, %c0_70] : memref<128x128xf32, #tpu.memory_space<vmem>>, vector<128x128xf32>
    %165 = arith.addf %163, %164 : vector<128x128xf32>
    %cst_71 = arith.constant dense<0xFF800000> : vector<128xf32>
    %166 = vector.multi_reduction <maximumf>, %165, %cst_71 [1] : vector<128x128xf32> to vector<128xf32>
    %167 = vector.shape_cast %166 : vector<128xf32> to vector<128x1xf32>
    %168 = vector.broadcast %167 : vector<128x1xf32> to vector<128x128xf32>
    %169 = arith.subf %165, %168 : vector<128x128xf32>
    %170 = math.exp %169 : vector<128x128xf32>
    %cst_72 = arith.constant dense<0.000000e+00> : vector<128xf32>
    %171 = vector.multi_reduction <add>, %170, %cst_72 [1] : vector<128x128xf32> to vector<128xf32>
    %172 = vector.shape_cast %171 : vector<128xf32> to vector<128x1xf32>
    %173 = tpu.reciprocal %172 {approx = true} : vector<128x1xf32> -> vector<128x1xf32>
    %174 = vector.broadcast %173 : vector<128x1xf32> to vector<128x128xf32>
    %175 = arith.mulf %170, %174 : vector<128x128xf32>
    %176 = arith.truncf %175 : vector<128x128xf32> to vector<128x128xbf16>
    %cst_73 = arith.constant dense<0.000000e+00> : vector<128x8xf32>
    %177 = tpu.matmul %176, %162, %cst_73 {dimension_numbers = #tpu.dot_dimension_numbers<[1], [0], [0], [1], [0, 0, 1, 1], [], []>} : vector<128x128xbf16>, vector<128x8xbf16>, vector<128x8xf32> -> vector<128x8xf32>
    %178 = arith.truncf %177 : vector<128x8xf32> to vector<128x8xbf16>
    %c1_74 = arith.constant 1 : index
    %c8_75 = arith.constant 8 : index
    %c0_76 = arith.constant 0 : index
    %179 = vector.load %arg5[%c1_74, %c8_75, %c0_76] : memref<4x32x32xbf16, #tpu.memory_space<vmem>>, vector<1x8x32xbf16>
    %180 = vector.shape_cast %179 : vector<1x8x32xbf16> to vector<8x32xbf16>
    %cst_77 = arith.constant dense<0.000000e+00> : vector<128x32xf32>
    %181 = tpu.matmul %178, %180, %cst_77 {dimension_numbers = #tpu.dot_dimension_numbers<[1], [0], [0], [1], [0, 0, 1, 1], [], []>} : vector<128x8xbf16>, vector<8x32xbf16>, vector<128x32xf32> -> vector<128x32xf32>
    %182 = arith.addf %156, %181 : vector<128x32xf32>
    %183 = vector.extract_strided_slice %125 {offsets = [0, 16], sizes = [128, 8], strides = [1, 1]} : vector<128x96xf32> to vector<128x8xf32>
    %184 = arith.truncf %183 : vector<128x8xf32> to vector<128x8xbf16>
    %185 = vector.extract_strided_slice %125 {offsets = [0, 48], sizes = [128, 8], strides = [1, 1]} : vector<128x96xf32> to vector<128x8xf32>
    %186 = arith.truncf %185 : vector<128x8xf32> to vector<128x8xbf16>
    %187 = vector.extract_strided_slice %125 {offsets = [0, 80], sizes = [128, 8], strides = [1, 1]} : vector<128x96xf32> to vector<128x8xf32>
    %188 = arith.truncf %187 : vector<128x8xf32> to vector<128x8xbf16>
    %cst_78 = arith.constant dense<0.000000e+00> : vector<128x128xf32>
    %189 = tpu.matmul %184, %186, %cst_78 {dimension_numbers = #tpu.dot_dimension_numbers<[1], [1], [0], [0], [0, 0, 1, 0], [], []>} : vector<128x8xbf16>, vector<128x8xbf16>, vector<128x128xf32> -> vector<128x128xf32>
    %c0_79 = arith.constant 0 : index
    %c0_80 = arith.constant 0 : index
    %190 = vector.load %arg2[%c0_79, %c0_80] : memref<128x128xf32, #tpu.memory_space<vmem>>, vector<128x128xf32>
    %191 = arith.addf %189, %190 : vector<128x128xf32>
    %cst_81 = arith.constant dense<0xFF800000> : vector<128xf32>
    %192 = vector.multi_reduction <maximumf>, %191, %cst_81 [1] : vector<128x128xf32> to vector<128xf32>
    %193 = vector.shape_cast %192 : vector<128xf32> to vector<128x1xf32>
    %194 = vector.broadcast %193 : vector<128x1xf32> to vector<128x128xf32>
    %195 = arith.subf %191, %194 : vector<128x128xf32>
    %196 = math.exp %195 : vector<128x128xf32>
    %cst_82 = arith.constant dense<0.000000e+00> : vector<128xf32>
    %197 = vector.multi_reduction <add>, %196, %cst_82 [1] : vector<128x128xf32> to vector<128xf32>
    %198 = vector.shape_cast %197 : vector<128xf32> to vector<128x1xf32>
    %199 = tpu.reciprocal %198 {approx = true} : vector<128x1xf32> -> vector<128x1xf32>
    %200 = vector.broadcast %199 : vector<128x1xf32> to vector<128x128xf32>
    %201 = arith.mulf %196, %200 : vector<128x128xf32>
    %202 = arith.truncf %201 : vector<128x128xf32> to vector<128x128xbf16>
    %cst_83 = arith.constant dense<0.000000e+00> : vector<128x8xf32>
    %203 = tpu.matmul %202, %188, %cst_83 {dimension_numbers = #tpu.dot_dimension_numbers<[1], [0], [0], [1], [0, 0, 1, 1], [], []>} : vector<128x128xbf16>, vector<128x8xbf16>, vector<128x8xf32> -> vector<128x8xf32>
    %204 = arith.truncf %203 : vector<128x8xf32> to vector<128x8xbf16>
    %c1_84 = arith.constant 1 : index
    %c16_85 = arith.constant 16 : index
    %c0_86 = arith.constant 0 : index
    %205 = vector.load %arg5[%c1_84, %c16_85, %c0_86] : memref<4x32x32xbf16, #tpu.memory_space<vmem>>, vector<1x8x32xbf16>
    %206 = vector.shape_cast %205 : vector<1x8x32xbf16> to vector<8x32xbf16>
    %cst_87 = arith.constant dense<0.000000e+00> : vector<128x32xf32>
    %207 = tpu.matmul %204, %206, %cst_87 {dimension_numbers = #tpu.dot_dimension_numbers<[1], [0], [0], [1], [0, 0, 1, 1], [], []>} : vector<128x8xbf16>, vector<8x32xbf16>, vector<128x32xf32> -> vector<128x32xf32>
    %208 = arith.addf %182, %207 : vector<128x32xf32>
    %209 = vector.extract_strided_slice %125 {offsets = [0, 24], sizes = [128, 8], strides = [1, 1]} : vector<128x96xf32> to vector<128x8xf32>
    %210 = arith.truncf %209 : vector<128x8xf32> to vector<128x8xbf16>
    %211 = vector.extract_strided_slice %125 {offsets = [0, 56], sizes = [128, 8], strides = [1, 1]} : vector<128x96xf32> to vector<128x8xf32>
    %212 = arith.truncf %211 : vector<128x8xf32> to vector<128x8xbf16>
    %213 = vector.extract_strided_slice %125 {offsets = [0, 88], sizes = [128, 8], strides = [1, 1]} : vector<128x96xf32> to vector<128x8xf32>
    %214 = arith.truncf %213 : vector<128x8xf32> to vector<128x8xbf16>
    %cst_88 = arith.constant dense<0.000000e+00> : vector<128x128xf32>
    %215 = tpu.matmul %210, %212, %cst_88 {dimension_numbers = #tpu.dot_dimension_numbers<[1], [1], [0], [0], [0, 0, 1, 0], [], []>} : vector<128x8xbf16>, vector<128x8xbf16>, vector<128x128xf32> -> vector<128x128xf32>
    %c0_89 = arith.constant 0 : index
    %c0_90 = arith.constant 0 : index
    %216 = vector.load %arg2[%c0_89, %c0_90] : memref<128x128xf32, #tpu.memory_space<vmem>>, vector<128x128xf32>
    %217 = arith.addf %215, %216 : vector<128x128xf32>
    %cst_91 = arith.constant dense<0xFF800000> : vector<128xf32>
    %218 = vector.multi_reduction <maximumf>, %217, %cst_91 [1] : vector<128x128xf32> to vector<128xf32>
    %219 = vector.shape_cast %218 : vector<128xf32> to vector<128x1xf32>
    %220 = vector.broadcast %219 : vector<128x1xf32> to vector<128x128xf32>
    %221 = arith.subf %217, %220 : vector<128x128xf32>
    %222 = math.exp %221 : vector<128x128xf32>
    %cst_92 = arith.constant dense<0.000000e+00> : vector<128xf32>
    %223 = vector.multi_reduction <add>, %222, %cst_92 [1] : vector<128x128xf32> to vector<128xf32>
    %224 = vector.shape_cast %223 : vector<128xf32> to vector<128x1xf32>
    %225 = tpu.reciprocal %224 {approx = true} : vector<128x1xf32> -> vector<128x1xf32>
    %226 = vector.broadcast %225 : vector<128x1xf32> to vector<128x128xf32>
    %227 = arith.mulf %222, %226 : vector<128x128xf32>
    %228 = arith.truncf %227 : vector<128x128xf32> to vector<128x128xbf16>
    %cst_93 = arith.constant dense<0.000000e+00> : vector<128x8xf32>
    %229 = tpu.matmul %228, %214, %cst_93 {dimension_numbers = #tpu.dot_dimension_numbers<[1], [0], [0], [1], [0, 0, 1, 1], [], []>} : vector<128x128xbf16>, vector<128x8xbf16>, vector<128x8xf32> -> vector<128x8xf32>
    %230 = arith.truncf %229 : vector<128x8xf32> to vector<128x8xbf16>
    %c1_94 = arith.constant 1 : index
    %c24_95 = arith.constant 24 : index
    %c0_96 = arith.constant 0 : index
    %231 = vector.load %arg5[%c1_94, %c24_95, %c0_96] : memref<4x32x32xbf16, #tpu.memory_space<vmem>>, vector<1x8x32xbf16>
    %232 = vector.shape_cast %231 : vector<1x8x32xbf16> to vector<8x32xbf16>
    %cst_97 = arith.constant dense<0.000000e+00> : vector<128x32xf32>
    %233 = tpu.matmul %230, %232, %cst_97 {dimension_numbers = #tpu.dot_dimension_numbers<[1], [0], [0], [1], [0, 0, 1, 1], [], []>} : vector<128x8xbf16>, vector<8x32xbf16>, vector<128x32xf32> -> vector<128x32xf32>
    %234 = arith.addf %208, %233 : vector<128x32xf32>
    %235 = arith.truncf %234 : vector<128x32xf32> to vector<128x32xbf16>
    %c2 = arith.constant 2 : index
    %c0_98 = arith.constant 0 : index
    %c0_99 = arith.constant 0 : index
    %236 = vector.load %arg3[%c2, %c0_98, %c0_99] : memref<4x32x96xbf16, #tpu.memory_space<vmem>>, vector<1x32x96xbf16>
    %237 = vector.shape_cast %236 : vector<1x32x96xbf16> to vector<32x96xbf16>
    %cst_100 = arith.constant dense<0.000000e+00> : vector<128x96xf32>
    %238 = tpu.matmul %235, %237, %cst_100 {dimension_numbers = #tpu.dot_dimension_numbers<[1], [0], [0], [1], [0, 0, 1, 1], [], []>} : vector<128x32xbf16>, vector<32x96xbf16>, vector<128x96xf32> -> vector<128x96xf32>
    %c2_101 = arith.constant 2 : index
    %c0_102 = arith.constant 0 : index
    %c0_103 = arith.constant 0 : index
    %239 = vector.load %arg4[%c2_101, %c0_102, %c0_103] : memref<4x1x96xf32, #tpu.memory_space<vmem>>, vector<1x1x96xf32>
    %240 = vector.shape_cast %239 : vector<1x1x96xf32> to vector<1x96xf32>
    %241 = vector.broadcast %240 : vector<1x96xf32> to vector<128x96xf32>
    %242 = arith.addf %238, %241 : vector<128x96xf32>
    %cst_104 = arith.constant 0.000000e+00 : f32
    %243 = vector.broadcast %cst_104 : f32 to vector<128x32xf32>
    %c2_105 = arith.constant 2 : index
    %c0_106 = arith.constant 0 : index
    %c0_107 = arith.constant 0 : index
    %244 = vector.load %arg6[%c2_105, %c0_106, %c0_107] : memref<4x1x32xf32, #tpu.memory_space<vmem>>, vector<1x1x32xf32>
    %245 = vector.shape_cast %244 : vector<1x1x32xf32> to vector<1x32xf32>
    %246 = vector.broadcast %245 : vector<1x32xf32> to vector<128x32xf32>
    %247 = arith.addf %243, %246 : vector<128x32xf32>
    %248 = vector.extract_strided_slice %242 {offsets = [0, 0], sizes = [128, 8], strides = [1, 1]} : vector<128x96xf32> to vector<128x8xf32>
    %249 = arith.truncf %248 : vector<128x8xf32> to vector<128x8xbf16>
    %250 = vector.extract_strided_slice %242 {offsets = [0, 32], sizes = [128, 8], strides = [1, 1]} : vector<128x96xf32> to vector<128x8xf32>
    %251 = arith.truncf %250 : vector<128x8xf32> to vector<128x8xbf16>
    %252 = vector.extract_strided_slice %242 {offsets = [0, 64], sizes = [128, 8], strides = [1, 1]} : vector<128x96xf32> to vector<128x8xf32>
    %253 = arith.truncf %252 : vector<128x8xf32> to vector<128x8xbf16>
    %cst_108 = arith.constant dense<0.000000e+00> : vector<128x128xf32>
    %254 = tpu.matmul %249, %251, %cst_108 {dimension_numbers = #tpu.dot_dimension_numbers<[1], [1], [0], [0], [0, 0, 1, 0], [], []>} : vector<128x8xbf16>, vector<128x8xbf16>, vector<128x128xf32> -> vector<128x128xf32>
    %c0_109 = arith.constant 0 : index
    %c0_110 = arith.constant 0 : index
    %255 = vector.load %arg1[%c0_109, %c0_110] : memref<128x128xf32, #tpu.memory_space<vmem>>, vector<128x128xf32>
    %256 = arith.addf %254, %255 : vector<128x128xf32>
    %cst_111 = arith.constant dense<0xFF800000> : vector<128xf32>
    %257 = vector.multi_reduction <maximumf>, %256, %cst_111 [1] : vector<128x128xf32> to vector<128xf32>
    %258 = vector.shape_cast %257 : vector<128xf32> to vector<128x1xf32>
    %259 = vector.broadcast %258 : vector<128x1xf32> to vector<128x128xf32>
    %260 = arith.subf %256, %259 : vector<128x128xf32>
    %261 = math.exp %260 : vector<128x128xf32>
    %cst_112 = arith.constant dense<0.000000e+00> : vector<128xf32>
    %262 = vector.multi_reduction <add>, %261, %cst_112 [1] : vector<128x128xf32> to vector<128xf32>
    %263 = vector.shape_cast %262 : vector<128xf32> to vector<128x1xf32>
    %264 = tpu.reciprocal %263 {approx = true} : vector<128x1xf32> -> vector<128x1xf32>
    %265 = vector.broadcast %264 : vector<128x1xf32> to vector<128x128xf32>
    %266 = arith.mulf %261, %265 : vector<128x128xf32>
    %267 = arith.truncf %266 : vector<128x128xf32> to vector<128x128xbf16>
    %cst_113 = arith.constant dense<0.000000e+00> : vector<128x8xf32>
    %268 = tpu.matmul %267, %253, %cst_113 {dimension_numbers = #tpu.dot_dimension_numbers<[1], [0], [0], [1], [0, 0, 1, 1], [], []>} : vector<128x128xbf16>, vector<128x8xbf16>, vector<128x8xf32> -> vector<128x8xf32>
    %269 = arith.truncf %268 : vector<128x8xf32> to vector<128x8xbf16>
    %c2_114 = arith.constant 2 : index
    %c0_115 = arith.constant 0 : index
    %c0_116 = arith.constant 0 : index
    %270 = vector.load %arg5[%c2_114, %c0_115, %c0_116] : memref<4x32x32xbf16, #tpu.memory_space<vmem>>, vector<1x8x32xbf16>
    %271 = vector.shape_cast %270 : vector<1x8x32xbf16> to vector<8x32xbf16>
    %cst_117 = arith.constant dense<0.000000e+00> : vector<128x32xf32>
    %272 = tpu.matmul %269, %271, %cst_117 {dimension_numbers = #tpu.dot_dimension_numbers<[1], [0], [0], [1], [0, 0, 1, 1], [], []>} : vector<128x8xbf16>, vector<8x32xbf16>, vector<128x32xf32> -> vector<128x32xf32>
    %273 = arith.addf %247, %272 : vector<128x32xf32>
    %274 = vector.extract_strided_slice %242 {offsets = [0, 8], sizes = [128, 8], strides = [1, 1]} : vector<128x96xf32> to vector<128x8xf32>
    %275 = arith.truncf %274 : vector<128x8xf32> to vector<128x8xbf16>
    %276 = vector.extract_strided_slice %242 {offsets = [0, 40], sizes = [128, 8], strides = [1, 1]} : vector<128x96xf32> to vector<128x8xf32>
    %277 = arith.truncf %276 : vector<128x8xf32> to vector<128x8xbf16>
    %278 = vector.extract_strided_slice %242 {offsets = [0, 72], sizes = [128, 8], strides = [1, 1]} : vector<128x96xf32> to vector<128x8xf32>
    %279 = arith.truncf %278 : vector<128x8xf32> to vector<128x8xbf16>
    %cst_118 = arith.constant dense<0.000000e+00> : vector<128x128xf32>
    %280 = tpu.matmul %275, %277, %cst_118 {dimension_numbers = #tpu.dot_dimension_numbers<[1], [1], [0], [0], [0, 0, 1, 0], [], []>} : vector<128x8xbf16>, vector<128x8xbf16>, vector<128x128xf32> -> vector<128x128xf32>
    %c0_119 = arith.constant 0 : index
    %c0_120 = arith.constant 0 : index
    %281 = vector.load %arg1[%c0_119, %c0_120] : memref<128x128xf32, #tpu.memory_space<vmem>>, vector<128x128xf32>
    %282 = arith.addf %280, %281 : vector<128x128xf32>
    %cst_121 = arith.constant dense<0xFF800000> : vector<128xf32>
    %283 = vector.multi_reduction <maximumf>, %282, %cst_121 [1] : vector<128x128xf32> to vector<128xf32>
    %284 = vector.shape_cast %283 : vector<128xf32> to vector<128x1xf32>
    %285 = vector.broadcast %284 : vector<128x1xf32> to vector<128x128xf32>
    %286 = arith.subf %282, %285 : vector<128x128xf32>
    %287 = math.exp %286 : vector<128x128xf32>
    %cst_122 = arith.constant dense<0.000000e+00> : vector<128xf32>
    %288 = vector.multi_reduction <add>, %287, %cst_122 [1] : vector<128x128xf32> to vector<128xf32>
    %289 = vector.shape_cast %288 : vector<128xf32> to vector<128x1xf32>
    %290 = tpu.reciprocal %289 {approx = true} : vector<128x1xf32> -> vector<128x1xf32>
    %291 = vector.broadcast %290 : vector<128x1xf32> to vector<128x128xf32>
    %292 = arith.mulf %287, %291 : vector<128x128xf32>
    %293 = arith.truncf %292 : vector<128x128xf32> to vector<128x128xbf16>
    %cst_123 = arith.constant dense<0.000000e+00> : vector<128x8xf32>
    %294 = tpu.matmul %293, %279, %cst_123 {dimension_numbers = #tpu.dot_dimension_numbers<[1], [0], [0], [1], [0, 0, 1, 1], [], []>} : vector<128x128xbf16>, vector<128x8xbf16>, vector<128x8xf32> -> vector<128x8xf32>
    %295 = arith.truncf %294 : vector<128x8xf32> to vector<128x8xbf16>
    %c2_124 = arith.constant 2 : index
    %c8_125 = arith.constant 8 : index
    %c0_126 = arith.constant 0 : index
    %296 = vector.load %arg5[%c2_124, %c8_125, %c0_126] : memref<4x32x32xbf16, #tpu.memory_space<vmem>>, vector<1x8x32xbf16>
    %297 = vector.shape_cast %296 : vector<1x8x32xbf16> to vector<8x32xbf16>
    %cst_127 = arith.constant dense<0.000000e+00> : vector<128x32xf32>
    %298 = tpu.matmul %295, %297, %cst_127 {dimension_numbers = #tpu.dot_dimension_numbers<[1], [0], [0], [1], [0, 0, 1, 1], [], []>} : vector<128x8xbf16>, vector<8x32xbf16>, vector<128x32xf32> -> vector<128x32xf32>
    %299 = arith.addf %273, %298 : vector<128x32xf32>
    %300 = vector.extract_strided_slice %242 {offsets = [0, 16], sizes = [128, 8], strides = [1, 1]} : vector<128x96xf32> to vector<128x8xf32>
    %301 = arith.truncf %300 : vector<128x8xf32> to vector<128x8xbf16>
    %302 = vector.extract_strided_slice %242 {offsets = [0, 48], sizes = [128, 8], strides = [1, 1]} : vector<128x96xf32> to vector<128x8xf32>
    %303 = arith.truncf %302 : vector<128x8xf32> to vector<128x8xbf16>
    %304 = vector.extract_strided_slice %242 {offsets = [0, 80], sizes = [128, 8], strides = [1, 1]} : vector<128x96xf32> to vector<128x8xf32>
    %305 = arith.truncf %304 : vector<128x8xf32> to vector<128x8xbf16>
    %cst_128 = arith.constant dense<0.000000e+00> : vector<128x128xf32>
    %306 = tpu.matmul %301, %303, %cst_128 {dimension_numbers = #tpu.dot_dimension_numbers<[1], [1], [0], [0], [0, 0, 1, 0], [], []>} : vector<128x8xbf16>, vector<128x8xbf16>, vector<128x128xf32> -> vector<128x128xf32>
    %c0_129 = arith.constant 0 : index
    %c0_130 = arith.constant 0 : index
    %307 = vector.load %arg1[%c0_129, %c0_130] : memref<128x128xf32, #tpu.memory_space<vmem>>, vector<128x128xf32>
    %308 = arith.addf %306, %307 : vector<128x128xf32>
    %cst_131 = arith.constant dense<0xFF800000> : vector<128xf32>
    %309 = vector.multi_reduction <maximumf>, %308, %cst_131 [1] : vector<128x128xf32> to vector<128xf32>
    %310 = vector.shape_cast %309 : vector<128xf32> to vector<128x1xf32>
    %311 = vector.broadcast %310 : vector<128x1xf32> to vector<128x128xf32>
    %312 = arith.subf %308, %311 : vector<128x128xf32>
    %313 = math.exp %312 : vector<128x128xf32>
    %cst_132 = arith.constant dense<0.000000e+00> : vector<128xf32>
    %314 = vector.multi_reduction <add>, %313, %cst_132 [1] : vector<128x128xf32> to vector<128xf32>
    %315 = vector.shape_cast %314 : vector<128xf32> to vector<128x1xf32>
    %316 = tpu.reciprocal %315 {approx = true} : vector<128x1xf32> -> vector<128x1xf32>
    %317 = vector.broadcast %316 : vector<128x1xf32> to vector<128x128xf32>
    %318 = arith.mulf %313, %317 : vector<128x128xf32>
    %319 = arith.truncf %318 : vector<128x128xf32> to vector<128x128xbf16>
    %cst_133 = arith.constant dense<0.000000e+00> : vector<128x8xf32>
    %320 = tpu.matmul %319, %305, %cst_133 {dimension_numbers = #tpu.dot_dimension_numbers<[1], [0], [0], [1], [0, 0, 1, 1], [], []>} : vector<128x128xbf16>, vector<128x8xbf16>, vector<128x8xf32> -> vector<128x8xf32>
    %321 = arith.truncf %320 : vector<128x8xf32> to vector<128x8xbf16>
    %c2_134 = arith.constant 2 : index
    %c16_135 = arith.constant 16 : index
    %c0_136 = arith.constant 0 : index
    %322 = vector.load %arg5[%c2_134, %c16_135, %c0_136] : memref<4x32x32xbf16, #tpu.memory_space<vmem>>, vector<1x8x32xbf16>
    %323 = vector.shape_cast %322 : vector<1x8x32xbf16> to vector<8x32xbf16>
    %cst_137 = arith.constant dense<0.000000e+00> : vector<128x32xf32>
    %324 = tpu.matmul %321, %323, %cst_137 {dimension_numbers = #tpu.dot_dimension_numbers<[1], [0], [0], [1], [0, 0, 1, 1], [], []>} : vector<128x8xbf16>, vector<8x32xbf16>, vector<128x32xf32> -> vector<128x32xf32>
    %325 = arith.addf %299, %324 : vector<128x32xf32>
    %326 = vector.extract_strided_slice %242 {offsets = [0, 24], sizes = [128, 8], strides = [1, 1]} : vector<128x96xf32> to vector<128x8xf32>
    %327 = arith.truncf %326 : vector<128x8xf32> to vector<128x8xbf16>
    %328 = vector.extract_strided_slice %242 {offsets = [0, 56], sizes = [128, 8], strides = [1, 1]} : vector<128x96xf32> to vector<128x8xf32>
    %329 = arith.truncf %328 : vector<128x8xf32> to vector<128x8xbf16>
    %330 = vector.extract_strided_slice %242 {offsets = [0, 88], sizes = [128, 8], strides = [1, 1]} : vector<128x96xf32> to vector<128x8xf32>
    %331 = arith.truncf %330 : vector<128x8xf32> to vector<128x8xbf16>
    %cst_138 = arith.constant dense<0.000000e+00> : vector<128x128xf32>
    %332 = tpu.matmul %327, %329, %cst_138 {dimension_numbers = #tpu.dot_dimension_numbers<[1], [1], [0], [0], [0, 0, 1, 0], [], []>} : vector<128x8xbf16>, vector<128x8xbf16>, vector<128x128xf32> -> vector<128x128xf32>
    %c0_139 = arith.constant 0 : index
    %c0_140 = arith.constant 0 : index
    %333 = vector.load %arg1[%c0_139, %c0_140] : memref<128x128xf32, #tpu.memory_space<vmem>>, vector<128x128xf32>
    %334 = arith.addf %332, %333 : vector<128x128xf32>
    %cst_141 = arith.constant dense<0xFF800000> : vector<128xf32>
    %335 = vector.multi_reduction <maximumf>, %334, %cst_141 [1] : vector<128x128xf32> to vector<128xf32>
    %336 = vector.shape_cast %335 : vector<128xf32> to vector<128x1xf32>
    %337 = vector.broadcast %336 : vector<128x1xf32> to vector<128x128xf32>
    %338 = arith.subf %334, %337 : vector<128x128xf32>
    %339 = math.exp %338 : vector<128x128xf32>
    %cst_142 = arith.constant dense<0.000000e+00> : vector<128xf32>
    %340 = vector.multi_reduction <add>, %339, %cst_142 [1] : vector<128x128xf32> to vector<128xf32>
    %341 = vector.shape_cast %340 : vector<128xf32> to vector<128x1xf32>
    %342 = tpu.reciprocal %341 {approx = true} : vector<128x1xf32> -> vector<128x1xf32>
    %343 = vector.broadcast %342 : vector<128x1xf32> to vector<128x128xf32>
    %344 = arith.mulf %339, %343 : vector<128x128xf32>
    %345 = arith.truncf %344 : vector<128x128xf32> to vector<128x128xbf16>
    %cst_143 = arith.constant dense<0.000000e+00> : vector<128x8xf32>
    %346 = tpu.matmul %345, %331, %cst_143 {dimension_numbers = #tpu.dot_dimension_numbers<[1], [0], [0], [1], [0, 0, 1, 1], [], []>} : vector<128x128xbf16>, vector<128x8xbf16>, vector<128x8xf32> -> vector<128x8xf32>
    %347 = arith.truncf %346 : vector<128x8xf32> to vector<128x8xbf16>
    %c2_144 = arith.constant 2 : index
    %c24_145 = arith.constant 24 : index
    %c0_146 = arith.constant 0 : index
    %348 = vector.load %arg5[%c2_144, %c24_145, %c0_146] : memref<4x32x32xbf16, #tpu.memory_space<vmem>>, vector<1x8x32xbf16>
    %349 = vector.shape_cast %348 : vector<1x8x32xbf16> to vector<8x32xbf16>
    %cst_147 = arith.constant dense<0.000000e+00> : vector<128x32xf32>
    %350 = tpu.matmul %347, %349, %cst_147 {dimension_numbers = #tpu.dot_dimension_numbers<[1], [0], [0], [1], [0, 0, 1, 1], [], []>} : vector<128x8xbf16>, vector<8x32xbf16>, vector<128x32xf32> -> vector<128x32xf32>
    %351 = arith.addf %325, %350 : vector<128x32xf32>
    %352 = arith.truncf %351 : vector<128x32xf32> to vector<128x32xbf16>
    %c3 = arith.constant 3 : index
    %c0_148 = arith.constant 0 : index
    %c0_149 = arith.constant 0 : index
    %353 = vector.load %arg3[%c3, %c0_148, %c0_149] : memref<4x32x96xbf16, #tpu.memory_space<vmem>>, vector<1x32x96xbf16>
    %354 = vector.shape_cast %353 : vector<1x32x96xbf16> to vector<32x96xbf16>
    %cst_150 = arith.constant dense<0.000000e+00> : vector<128x96xf32>
    %355 = tpu.matmul %352, %354, %cst_150 {dimension_numbers = #tpu.dot_dimension_numbers<[1], [0], [0], [1], [0, 0, 1, 1], [], []>} : vector<128x32xbf16>, vector<32x96xbf16>, vector<128x96xf32> -> vector<128x96xf32>
    %c3_151 = arith.constant 3 : index
    %c0_152 = arith.constant 0 : index
    %c0_153 = arith.constant 0 : index
    %356 = vector.load %arg4[%c3_151, %c0_152, %c0_153] : memref<4x1x96xf32, #tpu.memory_space<vmem>>, vector<1x1x96xf32>
    %357 = vector.shape_cast %356 : vector<1x1x96xf32> to vector<1x96xf32>
    %358 = vector.broadcast %357 : vector<1x96xf32> to vector<128x96xf32>
    %359 = arith.addf %355, %358 : vector<128x96xf32>
    %cst_154 = arith.constant 0.000000e+00 : f32
    %360 = vector.broadcast %cst_154 : f32 to vector<128x32xf32>
    %c3_155 = arith.constant 3 : index
    %c0_156 = arith.constant 0 : index
    %c0_157 = arith.constant 0 : index
    %361 = vector.load %arg6[%c3_155, %c0_156, %c0_157] : memref<4x1x32xf32, #tpu.memory_space<vmem>>, vector<1x1x32xf32>
    %362 = vector.shape_cast %361 : vector<1x1x32xf32> to vector<1x32xf32>
    %363 = vector.broadcast %362 : vector<1x32xf32> to vector<128x32xf32>
    %364 = arith.addf %360, %363 : vector<128x32xf32>
    %365 = vector.extract_strided_slice %359 {offsets = [0, 0], sizes = [128, 8], strides = [1, 1]} : vector<128x96xf32> to vector<128x8xf32>
    %366 = arith.truncf %365 : vector<128x8xf32> to vector<128x8xbf16>
    %367 = vector.extract_strided_slice %359 {offsets = [0, 32], sizes = [128, 8], strides = [1, 1]} : vector<128x96xf32> to vector<128x8xf32>
    %368 = arith.truncf %367 : vector<128x8xf32> to vector<128x8xbf16>
    %369 = vector.extract_strided_slice %359 {offsets = [0, 64], sizes = [128, 8], strides = [1, 1]} : vector<128x96xf32> to vector<128x8xf32>
    %370 = arith.truncf %369 : vector<128x8xf32> to vector<128x8xbf16>
    %cst_158 = arith.constant dense<0.000000e+00> : vector<128x128xf32>
    %371 = tpu.matmul %366, %368, %cst_158 {dimension_numbers = #tpu.dot_dimension_numbers<[1], [1], [0], [0], [0, 0, 1, 0], [], []>} : vector<128x8xbf16>, vector<128x8xbf16>, vector<128x128xf32> -> vector<128x128xf32>
    %c0_159 = arith.constant 0 : index
    %c0_160 = arith.constant 0 : index
    %372 = vector.load %arg2[%c0_159, %c0_160] : memref<128x128xf32, #tpu.memory_space<vmem>>, vector<128x128xf32>
    %373 = arith.addf %371, %372 : vector<128x128xf32>
    %cst_161 = arith.constant dense<0xFF800000> : vector<128xf32>
    %374 = vector.multi_reduction <maximumf>, %373, %cst_161 [1] : vector<128x128xf32> to vector<128xf32>
    %375 = vector.shape_cast %374 : vector<128xf32> to vector<128x1xf32>
    %376 = vector.broadcast %375 : vector<128x1xf32> to vector<128x128xf32>
    %377 = arith.subf %373, %376 : vector<128x128xf32>
    %378 = math.exp %377 : vector<128x128xf32>
    %cst_162 = arith.constant dense<0.000000e+00> : vector<128xf32>
    %379 = vector.multi_reduction <add>, %378, %cst_162 [1] : vector<128x128xf32> to vector<128xf32>
    %380 = vector.shape_cast %379 : vector<128xf32> to vector<128x1xf32>
    %381 = tpu.reciprocal %380 {approx = true} : vector<128x1xf32> -> vector<128x1xf32>
    %382 = vector.broadcast %381 : vector<128x1xf32> to vector<128x128xf32>
    %383 = arith.mulf %378, %382 : vector<128x128xf32>
    %384 = arith.truncf %383 : vector<128x128xf32> to vector<128x128xbf16>
    %cst_163 = arith.constant dense<0.000000e+00> : vector<128x8xf32>
    %385 = tpu.matmul %384, %370, %cst_163 {dimension_numbers = #tpu.dot_dimension_numbers<[1], [0], [0], [1], [0, 0, 1, 1], [], []>} : vector<128x128xbf16>, vector<128x8xbf16>, vector<128x8xf32> -> vector<128x8xf32>
    %386 = arith.truncf %385 : vector<128x8xf32> to vector<128x8xbf16>
    %c3_164 = arith.constant 3 : index
    %c0_165 = arith.constant 0 : index
    %c0_166 = arith.constant 0 : index
    %387 = vector.load %arg5[%c3_164, %c0_165, %c0_166] : memref<4x32x32xbf16, #tpu.memory_space<vmem>>, vector<1x8x32xbf16>
    %388 = vector.shape_cast %387 : vector<1x8x32xbf16> to vector<8x32xbf16>
    %cst_167 = arith.constant dense<0.000000e+00> : vector<128x32xf32>
    %389 = tpu.matmul %386, %388, %cst_167 {dimension_numbers = #tpu.dot_dimension_numbers<[1], [0], [0], [1], [0, 0, 1, 1], [], []>} : vector<128x8xbf16>, vector<8x32xbf16>, vector<128x32xf32> -> vector<128x32xf32>
    %390 = arith.addf %364, %389 : vector<128x32xf32>
    %391 = vector.extract_strided_slice %359 {offsets = [0, 8], sizes = [128, 8], strides = [1, 1]} : vector<128x96xf32> to vector<128x8xf32>
    %392 = arith.truncf %391 : vector<128x8xf32> to vector<128x8xbf16>
    %393 = vector.extract_strided_slice %359 {offsets = [0, 40], sizes = [128, 8], strides = [1, 1]} : vector<128x96xf32> to vector<128x8xf32>
    %394 = arith.truncf %393 : vector<128x8xf32> to vector<128x8xbf16>
    %395 = vector.extract_strided_slice %359 {offsets = [0, 72], sizes = [128, 8], strides = [1, 1]} : vector<128x96xf32> to vector<128x8xf32>
    %396 = arith.truncf %395 : vector<128x8xf32> to vector<128x8xbf16>
    %cst_168 = arith.constant dense<0.000000e+00> : vector<128x128xf32>
    %397 = tpu.matmul %392, %394, %cst_168 {dimension_numbers = #tpu.dot_dimension_numbers<[1], [1], [0], [0], [0, 0, 1, 0], [], []>} : vector<128x8xbf16>, vector<128x8xbf16>, vector<128x128xf32> -> vector<128x128xf32>
    %c0_169 = arith.constant 0 : index
    %c0_170 = arith.constant 0 : index
    %398 = vector.load %arg2[%c0_169, %c0_170] : memref<128x128xf32, #tpu.memory_space<vmem>>, vector<128x128xf32>
    %399 = arith.addf %397, %398 : vector<128x128xf32>
    %cst_171 = arith.constant dense<0xFF800000> : vector<128xf32>
    %400 = vector.multi_reduction <maximumf>, %399, %cst_171 [1] : vector<128x128xf32> to vector<128xf32>
    %401 = vector.shape_cast %400 : vector<128xf32> to vector<128x1xf32>
    %402 = vector.broadcast %401 : vector<128x1xf32> to vector<128x128xf32>
    %403 = arith.subf %399, %402 : vector<128x128xf32>
    %404 = math.exp %403 : vector<128x128xf32>
    %cst_172 = arith.constant dense<0.000000e+00> : vector<128xf32>
    %405 = vector.multi_reduction <add>, %404, %cst_172 [1] : vector<128x128xf32> to vector<128xf32>
    %406 = vector.shape_cast %405 : vector<128xf32> to vector<128x1xf32>
    %407 = tpu.reciprocal %406 {approx = true} : vector<128x1xf32> -> vector<128x1xf32>
    %408 = vector.broadcast %407 : vector<128x1xf32> to vector<128x128xf32>
    %409 = arith.mulf %404, %408 : vector<128x128xf32>
    %410 = arith.truncf %409 : vector<128x128xf32> to vector<128x128xbf16>
    %cst_173 = arith.constant dense<0.000000e+00> : vector<128x8xf32>
    %411 = tpu.matmul %410, %396, %cst_173 {dimension_numbers = #tpu.dot_dimension_numbers<[1], [0], [0], [1], [0, 0, 1, 1], [], []>} : vector<128x128xbf16>, vector<128x8xbf16>, vector<128x8xf32> -> vector<128x8xf32>
    %412 = arith.truncf %411 : vector<128x8xf32> to vector<128x8xbf16>
    %c3_174 = arith.constant 3 : index
    %c8_175 = arith.constant 8 : index
    %c0_176 = arith.constant 0 : index
    %413 = vector.load %arg5[%c3_174, %c8_175, %c0_176] : memref<4x32x32xbf16, #tpu.memory_space<vmem>>, vector<1x8x32xbf16>
    %414 = vector.shape_cast %413 : vector<1x8x32xbf16> to vector<8x32xbf16>
    %cst_177 = arith.constant dense<0.000000e+00> : vector<128x32xf32>
    %415 = tpu.matmul %412, %414, %cst_177 {dimension_numbers = #tpu.dot_dimension_numbers<[1], [0], [0], [1], [0, 0, 1, 1], [], []>} : vector<128x8xbf16>, vector<8x32xbf16>, vector<128x32xf32> -> vector<128x32xf32>
    %416 = arith.addf %390, %415 : vector<128x32xf32>
    %417 = vector.extract_strided_slice %359 {offsets = [0, 16], sizes = [128, 8], strides = [1, 1]} : vector<128x96xf32> to vector<128x8xf32>
    %418 = arith.truncf %417 : vector<128x8xf32> to vector<128x8xbf16>
    %419 = vector.extract_strided_slice %359 {offsets = [0, 48], sizes = [128, 8], strides = [1, 1]} : vector<128x96xf32> to vector<128x8xf32>
    %420 = arith.truncf %419 : vector<128x8xf32> to vector<128x8xbf16>
    %421 = vector.extract_strided_slice %359 {offsets = [0, 80], sizes = [128, 8], strides = [1, 1]} : vector<128x96xf32> to vector<128x8xf32>
    %422 = arith.truncf %421 : vector<128x8xf32> to vector<128x8xbf16>
    %cst_178 = arith.constant dense<0.000000e+00> : vector<128x128xf32>
    %423 = tpu.matmul %418, %420, %cst_178 {dimension_numbers = #tpu.dot_dimension_numbers<[1], [1], [0], [0], [0, 0, 1, 0], [], []>} : vector<128x8xbf16>, vector<128x8xbf16>, vector<128x128xf32> -> vector<128x128xf32>
    %c0_179 = arith.constant 0 : index
    %c0_180 = arith.constant 0 : index
    %424 = vector.load %arg2[%c0_179, %c0_180] : memref<128x128xf32, #tpu.memory_space<vmem>>, vector<128x128xf32>
    %425 = arith.addf %423, %424 : vector<128x128xf32>
    %cst_181 = arith.constant dense<0xFF800000> : vector<128xf32>
    %426 = vector.multi_reduction <maximumf>, %425, %cst_181 [1] : vector<128x128xf32> to vector<128xf32>
    %427 = vector.shape_cast %426 : vector<128xf32> to vector<128x1xf32>
    %428 = vector.broadcast %427 : vector<128x1xf32> to vector<128x128xf32>
    %429 = arith.subf %425, %428 : vector<128x128xf32>
    %430 = math.exp %429 : vector<128x128xf32>
    %cst_182 = arith.constant dense<0.000000e+00> : vector<128xf32>
    %431 = vector.multi_reduction <add>, %430, %cst_182 [1] : vector<128x128xf32> to vector<128xf32>
    %432 = vector.shape_cast %431 : vector<128xf32> to vector<128x1xf32>
    %433 = tpu.reciprocal %432 {approx = true} : vector<128x1xf32> -> vector<128x1xf32>
    %434 = vector.broadcast %433 : vector<128x1xf32> to vector<128x128xf32>
    %435 = arith.mulf %430, %434 : vector<128x128xf32>
    %436 = arith.truncf %435 : vector<128x128xf32> to vector<128x128xbf16>
    %cst_183 = arith.constant dense<0.000000e+00> : vector<128x8xf32>
    %437 = tpu.matmul %436, %422, %cst_183 {dimension_numbers = #tpu.dot_dimension_numbers<[1], [0], [0], [1], [0, 0, 1, 1], [], []>} : vector<128x128xbf16>, vector<128x8xbf16>, vector<128x8xf32> -> vector<128x8xf32>
    %438 = arith.truncf %437 : vector<128x8xf32> to vector<128x8xbf16>
    %c3_184 = arith.constant 3 : index
    %c16_185 = arith.constant 16 : index
    %c0_186 = arith.constant 0 : index
    %439 = vector.load %arg5[%c3_184, %c16_185, %c0_186] : memref<4x32x32xbf16, #tpu.memory_space<vmem>>, vector<1x8x32xbf16>
    %440 = vector.shape_cast %439 : vector<1x8x32xbf16> to vector<8x32xbf16>
    %cst_187 = arith.constant dense<0.000000e+00> : vector<128x32xf32>
    %441 = tpu.matmul %438, %440, %cst_187 {dimension_numbers = #tpu.dot_dimension_numbers<[1], [0], [0], [1], [0, 0, 1, 1], [], []>} : vector<128x8xbf16>, vector<8x32xbf16>, vector<128x32xf32> -> vector<128x32xf32>
    %442 = arith.addf %416, %441 : vector<128x32xf32>
    %443 = vector.extract_strided_slice %359 {offsets = [0, 24], sizes = [128, 8], strides = [1, 1]} : vector<128x96xf32> to vector<128x8xf32>
    %444 = arith.truncf %443 : vector<128x8xf32> to vector<128x8xbf16>
    %445 = vector.extract_strided_slice %359 {offsets = [0, 56], sizes = [128, 8], strides = [1, 1]} : vector<128x96xf32> to vector<128x8xf32>
    %446 = arith.truncf %445 : vector<128x8xf32> to vector<128x8xbf16>
    %447 = vector.extract_strided_slice %359 {offsets = [0, 88], sizes = [128, 8], strides = [1, 1]} : vector<128x96xf32> to vector<128x8xf32>
    %448 = arith.truncf %447 : vector<128x8xf32> to vector<128x8xbf16>
    %cst_188 = arith.constant dense<0.000000e+00> : vector<128x128xf32>
    %449 = tpu.matmul %444, %446, %cst_188 {dimension_numbers = #tpu.dot_dimension_numbers<[1], [1], [0], [0], [0, 0, 1, 0], [], []>} : vector<128x8xbf16>, vector<128x8xbf16>, vector<128x128xf32> -> vector<128x128xf32>
    %c0_189 = arith.constant 0 : index
    %c0_190 = arith.constant 0 : index
    %450 = vector.load %arg2[%c0_189, %c0_190] : memref<128x128xf32, #tpu.memory_space<vmem>>, vector<128x128xf32>
    %451 = arith.addf %449, %450 : vector<128x128xf32>
    %cst_191 = arith.constant dense<0xFF800000> : vector<128xf32>
    %452 = vector.multi_reduction <maximumf>, %451, %cst_191 [1] : vector<128x128xf32> to vector<128xf32>
    %453 = vector.shape_cast %452 : vector<128xf32> to vector<128x1xf32>
    %454 = vector.broadcast %453 : vector<128x1xf32> to vector<128x128xf32>
    %455 = arith.subf %451, %454 : vector<128x128xf32>
    %456 = math.exp %455 : vector<128x128xf32>
    %cst_192 = arith.constant dense<0.000000e+00> : vector<128xf32>
    %457 = vector.multi_reduction <add>, %456, %cst_192 [1] : vector<128x128xf32> to vector<128xf32>
    %458 = vector.shape_cast %457 : vector<128xf32> to vector<128x1xf32>
    %459 = tpu.reciprocal %458 {approx = true} : vector<128x1xf32> -> vector<128x1xf32>
    %460 = vector.broadcast %459 : vector<128x1xf32> to vector<128x128xf32>
    %461 = arith.mulf %456, %460 : vector<128x128xf32>
    %462 = arith.truncf %461 : vector<128x128xf32> to vector<128x128xbf16>
    %cst_193 = arith.constant dense<0.000000e+00> : vector<128x8xf32>
    %463 = tpu.matmul %462, %448, %cst_193 {dimension_numbers = #tpu.dot_dimension_numbers<[1], [0], [0], [1], [0, 0, 1, 1], [], []>} : vector<128x128xbf16>, vector<128x8xbf16>, vector<128x8xf32> -> vector<128x8xf32>
    %464 = arith.truncf %463 : vector<128x8xf32> to vector<128x8xbf16>
    %c3_194 = arith.constant 3 : index
    %c24_195 = arith.constant 24 : index
    %c0_196 = arith.constant 0 : index
    %465 = vector.load %arg5[%c3_194, %c24_195, %c0_196] : memref<4x32x32xbf16, #tpu.memory_space<vmem>>, vector<1x8x32xbf16>
    %466 = vector.shape_cast %465 : vector<1x8x32xbf16> to vector<8x32xbf16>
    %cst_197 = arith.constant dense<0.000000e+00> : vector<128x32xf32>
    %467 = tpu.matmul %464, %466, %cst_197 {dimension_numbers = #tpu.dot_dimension_numbers<[1], [0], [0], [1], [0, 0, 1, 1], [], []>} : vector<128x8xbf16>, vector<8x32xbf16>, vector<128x32xf32> -> vector<128x32xf32>
    %468 = arith.addf %442, %467 : vector<128x32xf32>
    %c0_198 = arith.constant 0 : index
    %c0_199 = arith.constant 0 : index
    %469 = vector.load %arg7[%c0_198, %c0_199] : memref<128x32xf32, #tpu.memory_space<vmem>>, vector<128x32xf32>
    tpu.vector_store %arg7[%c0_198, %c0_199], %468 {strides = array<i32>} : memref<128x32xf32, #tpu.memory_space<vmem>>, vector<128x32xf32>,
    return
  }
}

</mosaic_0001>

<llo_original>
// kernel: refiner_attention_pallas.1
$region0: #{refiner_attention_pallas.1}
  #allocation0 [shape = 'u32[]', space=smem, size = 0x4, offset = 0x4, fixed_abs, tag = 'smem constant byte address 0x4 - core index']
  #allocation1 [shape = 'u32[144,128]{1,0:T(1,128)}', space=vmem, size = 0x12000, scoped, tag = 'internal scratch']
  %s0 = inlined_call_operand.vmem [shape: f32[128,32], index: 0, kind: input, shape index: {}]
  %s1 = inlined_call_operand.vmem [shape: f32[128,128], index: 1, kind: input, shape index: {}]
  %s2 = inlined_call_operand.vmem [shape: f32[128,128], index: 2, kind: input, shape index: {}]
  %s3 = inlined_call_operand.vmem [shape: bf16[4,32,96], index: 3, kind: input, shape index: {}]
  %s4 = inlined_call_operand.vmem [shape: f32[4,1,96], index: 4, kind: input, shape index: {}]
  %s5 = inlined_call_operand.vmem [shape: bf16[4,32,32], index: 5, kind: input, shape index: {}]
  %s6 = inlined_call_operand.vmem [shape: f32[4,1,32], index: 6, kind: input, shape index: {}]
  %s7 = inlined_call_operand.hbm [shape: f32[128,32], index: 7, kind: output, shape index: {}]
  %s8 = sld [smem:[#allocation0]]
  $region38: #{refiner_attention_pallas.1} parent=0
    _
  %s10 = ssub.s32 1, %s8
  %s11 = scalar_select 0, %s10, %s8
  $region1: #{refiner_attention_pallas.1} parent=0
    #allocation2 [shape = 'u8[65536]{0}', space=vmem, size = 0x10000, scoped, tag = 'output window, operand 0, single buffered']
    #allocation3 [shape = 's32[1]{0}', space=sflag, size = 0x4, scoped, tag = 'scoped memory for refiner_attention_pallas.1']
    %12 = vsyncpa [#allocation3], 0
    // Predicated region
    $region2: #{refiner_attention_pallas.1} parent=1 // pred_check
      _
    $region3: #{refiner_attention_pallas.1} parent=1 // pred_check_branch
      %14 = sbr.rel (0) target = $region5
    $region4: #{refiner_attention_pallas.1} parent=1 // pred_region
      _
    $region5: #{refiner_attention_pallas.1} parent=1 // pred_fallthru
      _
    // Predicated region
    $region6: #{refiner_attention_pallas.1} parent=1 // pred_check
      _
    $region7: #{refiner_attention_pallas.1} parent=1 // pred_check_branch
      %16 = sbr.rel (0) target = $region9
    $region8: #{refiner_attention_pallas.1} parent=1 // pred_region
      _
    $region9: #{refiner_attention_pallas.1} parent=1 // pred_fallthru
      _
    // Predicated region
    $region10: #{refiner_attention_pallas.1} parent=1 // pred_check
      _
    $region11: #{refiner_attention_pallas.1} parent=1 // pred_check_branch
      %18 = sbr.rel (0) target = $region13
    $region12: #{refiner_attention_pallas.1} parent=1 // pred_region
      _
    $region13: #{refiner_attention_pallas.1} parent=1 // pred_fallthru
      _
    // Predicated region
    $region14: #{refiner_attention_pallas.1} parent=1 // pred_check
      _
    $region15: #{refiner_attention_pallas.1} parent=1 // pred_check_branch
      %20 = sbr.rel (0) target = $region17
    $region16: #{refiner_attention_pallas.1} parent=1 // pred_region
      _
    $region17: #{refiner_attention_pallas.1} parent=1 // pred_fallthru
      _
    // Predicated region
    $region18: #{refiner_attention_pallas.1} parent=1 // pred_check
      _
    $region19: #{refiner_attention_pallas.1} parent=1 // pred_check_branch
      %22 = sbr.rel (0) target = $region21
    $region20: #{refiner_attention_pallas.1} parent=1 // pred_region
      _
    $region21: #{refiner_attention_pallas.1} parent=1 // pred_fallthru
      _
    // Predicated region
    $region22: #{refiner_attention_pallas.1} parent=1 // pred_check
      _
    $region23: #{refiner_attention_pallas.1} parent=1 // pred_check_branch
      %24 = sbr.rel (0) target = $region25
    $region24: #{refiner_attention_pallas.1} parent=1 // pred_region
      _
    $region25: #{refiner_attention_pallas.1} parent=1 // pred_fallthru
      _
    // Predicated region
    $region26: #{refiner_attention_pallas.1} parent=1 // pred_check
      _
    $region27: #{refiner_attention_pallas.1} parent=1 // pred_check_branch
      %26 = sbr.rel (0) target = $region29
    $region28: #{refiner_attention_pallas.1} parent=1 // pred_region
      _
    $region29: #{refiner_attention_pallas.1} parent=1 // pred_fallthru
      _
    %v28 = vld [vmem:[%s0] sm:$0xff]
    %v29 = vld [vmem:[%s0 + $0x8] sm:$0xff]
    %v30 = vld [vmem:[%s0 + $0x10] sm:$0xff]
    %v31 = vld [vmem:[%s0 + $0x18] sm:$0xff]
    %v32 = vld [vmem:[%s0 + $0x20] sm:$0xff]
    %v33 = vld [vmem:[%s0 + $0x28] sm:$0xff]
    %v34 = vld [vmem:[%s0 + $0x30] sm:$0xff]
    %v35 = vld [vmem:[%s0 + $0x38] sm:$0xff]
    %v36 = vld [vmem:[%s0 + $0x40] sm:$0xff]
    %v37 = vld [vmem:[%s0 + $0x48] sm:$0xff]
    %v38 = vld [vmem:[%s0 + $0x50] sm:$0xff]
    %v39 = vld [vmem:[%s0 + $0x58] sm:$0xff]
    %v40 = vld [vmem:[%s0 + $0x60] sm:$0xff]
    %v41 = vld [vmem:[%s0 + $0x68] sm:$0xff]
    %v42 = vld [vmem:[%s0 + $0x70] sm:$0xff]
    %v43 = vld [vmem:[%s0 + $0x78] sm:$0xff]
    %v44 = vpack.c.bf16 %v29, %v28
    %v45 = vpack.c.bf16 %v31, %v30
    %v46 = vpack.c.bf16 %v33, %v32
    %v47 = vpack.c.bf16 %v35, %v34
    %v48 = vpack.c.bf16 %v37, %v36
    %v49 = vpack.c.bf16 %v39, %v38
    %v50 = vpack.c.bf16 %v41, %v40
    %v51 = vpack.c.bf16 %v43, %v42
    %v52 = vld [vmem:[%s3] sm:$0xf]
    %v53 = vld [vmem:[%s3 + $0x4] sm:$0xf]
    %v54 = vld [vmem:[%s3 + $0x8] sm:$0xf]
    %v55 = vld [vmem:[%s3 + $0xc] sm:$0xf]
    %v56 = vld [vmem:[%s4] sm:$0x1]
    %v58 = vlaneseq
    %v59 = vshrl.u32 %v58, 7
    %v60 = vsub.s32 0, %v59
    %v61 = vrot.slane %v56, %v60
    %v67 = vunpack.c.l.b16 %v52
    %v68 = vunpack.c.l.b16 %v53
    %v69 = vunpack.c.l.b16 %v54
    %v70 = vunpack.c.l.b16 %v55
    %v71 = vpack.c.b16 %v68, %v67
    %v72 = vpack.c.b16 %v70, %v69
    %vm75 = vcmask 261120
    %v77 = vsel %vm75, %v44, 0
    %v80 = vsel %vm75, %v45, 0
    %v83 = vsel %vm75, %v46, 0
    %v86 = vsel %vm75, %v47, 0
    %v89 = vsel %vm75, %v48, 0
    %v92 = vsel %vm75, %v49, 0
    %v95 = vsel %vm75, %v50, 0
    %v98 = vsel %vm75, %v51, 0
    %100 = vmatprep.subr.bf16.mxu0 0
    %101 = vmatpush1.bf16.msra.mxu0 %v71
    %102 = vmatprep.subr.bf16.mxu0 0
    %103 = vmatpush1.bf16.msra.mxu0 %v72
    %104 = vmatprep.subr.bf16.mxu0 0
    %105 = vmatpush1.bf16.msra.mxu0 0
    %106 = vmatprep.subr.bf16.mxu0 0
    %107 = vmatpush1.bf16.msra.mxu0 0
    %108 = vmatprep.subr.bf16.mxu0 0
    %109 = vmatpush1.bf16.msra.mxu0 0
    %110 = vmatprep.subr.bf16.mxu0 0
    %111 = vmatpush1.bf16.msra.mxu0 0
    %112 = vmatprep.subr.bf16.mxu0 0
    %113 = vmatpush1.bf16.msra.mxu0 0
    %114 = vmatprep.subr.bf16.mxu0 0
    %115 = vmatpush1.bf16.msra.mxu0 0
    %116 = vmatprep.subr.bf16.mxu0 0
    %117 = vmatpush1.bf16.msra.mxu0 0
    %118 = vmatprep.subr.bf16.mxu0 0
    %119 = vmatpush1.bf16.msra.mxu0 0
    %120 = vmatprep.subr.bf16.mxu0 0
    %121 = vmatpush1.bf16.msra.mxu0 0
    %122 = vmatprep.subr.bf16.mxu0 0
    %123 = vmatpush1.bf16.msra.mxu0 0
    %124 = vmatprep.subr.bf16.mxu0 0
    %125 = vmatpush1.bf16.msra.mxu0 0
    %126 = vmatprep.subr.bf16.mxu0 0
    %127 = vmatpush1.bf16.msra.mxu0 0
    %128 = vmatprep.subr.bf16.mxu0 0
    %129 = vmatpush1.bf16.msra.mxu0 0
    %130 = vmatprep.subr.bf16.mxu0 0
    %131 = vmatpush1.bf16.msra.mxu0 0
    %132 = vmatprep.mubr.bf16.mxu0 0
    %133 = vmatmul.mubr.bf16.gmra.mrb[0].mxu0 %v77
    %v134 = vpop.f32.mrb[0].mxu0
    %v135 = vadd.f32 %v61, %v134
    %v136 = vpop.f32.mrb[0].mxu0
    %v137 = vpop.f32.mrb[0].mxu0
    %v138 = vadd.f32 %v61, %v137
    %v139 = vpop.f32.mrb[0].mxu0
    %140 = vmatprep.mubr.bf16.mxu0 0
    %141 = vmatmul.mubr.bf16.gmra.mrb[0].mxu0 %v80
    %v142 = vpop.f32.mrb[0].mxu0
    %v143 = vadd.f32 %v61, %v142
    %v144 = vpop.f32.mrb[0].mxu0
    %v145 = vpop.f32.mrb[0].mxu0
    %v146 = vadd.f32 %v61, %v145
    %v147 = vpop.f32.mrb[0].mxu0
    %148 = vmatprep.mubr.bf16.mxu0 0
    %149 = vmatmul.mubr.bf16.gmra.mrb[0].mxu0 %v83
    %v150 = vpop.f32.mrb[0].mxu0
    %v151 = vadd.f32 %v61, %v150
    %v152 = vpop.f32.mrb[0].mxu0
    %v153 = vpop.f32.mrb[0].mxu0
    %v154 = vadd.f32 %v61, %v153
    %v155 = vpop.f32.mrb[0].mxu0
    %156 = vmatprep.mubr.bf16.mxu0 0
    %157 = vmatmul.mubr.bf16.gmra.mrb[0].mxu0 %v86
    %v158 = vpop.f32.mrb[0].mxu0
    %v159 = vadd.f32 %v61, %v158
    %v160 = vpop.f32.mrb[0].mxu0
    %v161 = vpop.f32.mrb[0].mxu0
    %v162 = vadd.f32 %v61, %v161
    %v163 = vpop.f32.mrb[0].mxu0
    %164 = vmatprep.mubr.bf16.mxu0 0
    %165 = vmatmul.mubr.bf16.gmra.mrb[0].mxu0 %v89
    %v166 = vpop.f32.mrb[0].mxu0
    %v167 = vadd.f32 %v61, %v166
    %v168 = vpop.f32.mrb[0].mxu0
    %v169 = vpop.f32.mrb[0].mxu0
    %v170 = vadd.f32 %v61, %v169
    %v171 = vpop.f32.mrb[0].mxu0
    %172 = vmatprep.mubr.bf16.mxu0 0
    %173 = vmatmul.mubr.bf16.gmra.mrb[0].mxu0 %v92
    %v174 = vpop.f32.mrb[0].mxu0
    %v175 = vadd.f32 %v61, %v174
    %v176 = vpop.f32.mrb[0].mxu0
    %v177 = vpop.f32.mrb[0].mxu0
    %v178 = vadd.f32 %v61, %v177
    %v179 = vpop.f32.mrb[0].mxu0
    %180 = vmatprep.mubr.bf16.mxu0 0
    %181 = vmatmul.mubr.bf16.gmra.mrb[0].mxu0 %v95
    %v182 = vpop.f32.mrb[0].mxu0
    %v183 = vadd.f32 %v61, %v182
    %v184 = vpop.f32.mrb[0].mxu0
    %v185 = vpop.f32.mrb[0].mxu0
    %v186 = vadd.f32 %v61, %v185
    %v187 = vpop.f32.mrb[0].mxu0
    %188 = vmatprep.mubr.bf16.mxu0 0
    %189 = vmatmul.mubr.bf16.gmra.mrb[0].mxu0 %v98
    %v190 = vpop.f32.mrb[0].mxu0
    %v191 = vadd.f32 %v61, %v190
    %v192 = vpop.f32.mrb[0].mxu0
    %v193 = vpop.f32.mrb[0].mxu0
    %v194 = vadd.f32 %v61, %v193
    %v195 = vpop.f32.mrb[0].mxu0
    %196 = vdwg.mxu0
    %v197 = vld [vmem:[%s6] sm:$0x1]
    %v199 = vlaneseq
    %v200 = vshrl.u32 %v199, 7
    %v201 = vsub.s32 0, %v200
    %v202 = vrot.slane %v197, %v201
    %v204 = vadd.f32 %v202, 0.0
    %v205 = vpack.c.bf16 %v138, %v135
    %v206 = vpack.c.bf16 %v146, %v143
    %v207 = vpack.c.bf16 %v154, %v151
    %v208 = vpack.c.bf16 %v162, %v159
    %v209 = vpack.c.bf16 %v170, %v167
    %v210 = vpack.c.bf16 %v178, %v175
    %v211 = vpack.c.bf16 %v186, %v183
    %v212 = vpack.c.bf16 %v194, %v191
    %v213 = vld [vmem:[%s1] sm:$0xff]
    %v214 = vld [vmem:[%s1 + $0x8] sm:$0xff]
    %v215 = vld [vmem:[%s1 + $0x10] sm:$0xff]
    %v216 = vld [vmem:[%s1 + $0x18] sm:$0xff]
    %v217 = vld [vmem:[%s1 + $0x20] sm:$0xff]
    %v218 = vld [vmem:[%s1 + $0x28] sm:$0xff]
    %v219 = vld [vmem:[%s1 + $0x30] sm:$0xff]
    %v220 = vld [vmem:[%s1 + $0x38] sm:$0xff]
    %v221 = vld [vmem:[%s1 + $0x40] sm:$0xff]
    %v222 = vld [vmem:[%s1 + $0x48] sm:$0xff]
    %v223 = vld [vmem:[%s1 + $0x50] sm:$0xff]
    %v224 = vld [vmem:[%s1 + $0x58] sm:$0xff]
    %v225 = vld [vmem:[%s1 + $0x60] sm:$0xff]
    %v226 = vld [vmem:[%s1 + $0x68] sm:$0xff]
    %v227 = vld [vmem:[%s1 + $0x70] sm:$0xff]
    %v228 = vld [vmem:[%s1 + $0x78] sm:$0xff]
    %237 = vrot.lane.b32.xlu0 %v205, 96
    %v238 = vpop.permute.xlu0 %237
    %239 = vrot.lane.b32.xlu0 %v206, 96
    %v240 = vpop.permute.xlu0 %239
    %241 = vrot.lane.b32.xlu0 %v207, 96
    %v242 = vpop.permute.xlu0 %241
    %243 = vrot.lane.b32.xlu0 %v208, 96
    %v244 = vpop.permute.xlu0 %243
    %245 = vrot.lane.b32.xlu0 %v209, 96
    %v246 = vpop.permute.xlu0 %245
    %247 = vrot.lane.b32.xlu0 %v210, 96
    %v248 = vpop.permute.xlu0 %247
    %249 = vrot.lane.b32.xlu0 %v211, 96
    %v250 = vpop.permute.xlu0 %249
    %251 = vrot.lane.b32.xlu0 %v212, 96
    %v252 = vpop.permute.xlu0 %251
    %vm253 = vcmask 64512
    %v255 = vsel %vm253, %v205, 0
    %v258 = vsel %vm253, %v206, 0
    %v261 = vsel %vm253, %v207, 0
    %v264 = vsel %vm253, %v208, 0
    %v267 = vsel %vm253, %v209, 0
    %v270 = vsel %vm253, %v210, 0
    %v273 = vsel %vm253, %v211, 0
    %v276 = vsel %vm253, %v212, 0
    %v279 = vsel %vm253, %v238, 0
    %v282 = vsel %vm253, %v240, 0
    %v285 = vsel %vm253, %v242, 0
    %v288 = vsel %vm253, %v244, 0
    %v291 = vsel %vm253, %v246, 0
    %v294 = vsel %vm253, %v248, 0
    %v297 = vsel %vm253, %v250, 0
    %v300 = vsel %vm253, %v252, 0
    %302 = vmatprep.subr.bf16.mxu0 0
    %303 = vmatpush1.bf16.xpose.msra.mxu0 %v279
    %304 = vmatprep.subr.bf16.mxu0 0
    %305 = vmatpush1.bf16.xpose.msra.mxu0 %v282
    %306 = vmatprep.subr.bf16.mxu0 0
    %307 = vmatpush1.bf16.xpose.msra.mxu0 %v285
    %308 = vmatprep.subr.bf16.mxu0 0
    %309 = vmatpush1.bf16.xpose.msra.mxu0 %v288
    %310 = vmatprep.subr.bf16.mxu0 0
    %311 = vmatpush1.bf16.xpose.msra.mxu0 %v291
    %312 = vmatprep.subr.bf16.mxu0 0
    %313 = vmatpush1.bf16.xpose.msra.mxu0 %v294
    %314 = vmatprep.subr.bf16.mxu0 0
    %315 = vmatpush1.bf16.xpose.msra.mxu0 %v297
    %316 = vmatprep.subr.bf16.mxu0 0
    %317 = vmatpush1.bf16.xpose.msra.mxu0 %v300
    %318 = vmatprep.subr.bf16.mxu0 0
    %319 = vmatpush1.bf16.xpose.msra.mxu0 0
    %320 = vmatprep.subr.bf16.mxu0 0
    %321 = vmatpush1.bf16.xpose.msra.mxu0 0
    %322 = vmatprep.subr.bf16.mxu0 0
    %323 = vmatpush1.bf16.xpose.msra.mxu0 0
    %324 = vmatprep.subr.bf16.mxu0 0
    %325 = vmatpush1.bf16.xpose.msra.mxu0 0
    %326 = vmatprep.subr.bf16.mxu0 0
    %327 = vmatpush1.bf16.xpose.msra.mxu0 0
    %328 = vmatprep.subr.bf16.mxu0 0
    %329 = vmatpush1.bf16.xpose.msra.mxu0 0
    %330 = vmatprep.subr.bf16.mxu0 0
    %331 = vmatpush1.bf16.xpose.msra.mxu0 0
    %332 = vmatprep.subr.bf16.mxu0 0
    %333 = vmatpush1.bf16.xpose.msra.mxu0 0
    %334 = vmatprep.mubr.bf16.mxu0 0
    %335 = vmatmul.mubr.bf16.gmra.mrb[0].mxu0 %v255
    %v336 = vpop.f32.mrb[0].mxu0
    %v337 = vadd.f32 %v213, %v336
    %v338 = vpop.f32.mrb[0].mxu0
    %v339 = vpop.f32.mrb[0].mxu0
    %v340 = vadd.f32 %v214, %v339
    %v341 = vpop.f32.mrb[0].mxu0
    %342 = vmatprep.mubr.bf16.mxu0 0
    %343 = vmatmul.mubr.bf16.gmra.mrb[0].mxu0 %v258
    %v344 = vpop.f32.mrb[0].mxu0
    %v345 = vadd.f32 %v215, %v344
    %v346 = vpop.f32.mrb[0].mxu0
    %v347 = vpop.f32.mrb[0].mxu0
    %v348 = vadd.f32 %v216, %v347
    %v349 = vpop.f32.mrb[0].mxu0
    %350 = vmatprep.mubr.bf16.mxu0 0
    %351 = vmatmul.mubr.bf16.gmra.mrb[0].mxu0 %v261
    %v352 = vpop.f32.mrb[0].mxu0
    %v353 = vadd.f32 %v217, %v352
    %v354 = vpop.f32.mrb[0].mxu0
    %v355 = vpop.f32.mrb[0].mxu0
    %v356 = vadd.f32 %v218, %v355
    %v357 = vpop.f32.mrb[0].mxu0
    %358 = vmatprep.mubr.bf16.mxu0 0
    %359 = vmatmul.mubr.bf16.gmra.mrb[0].mxu0 %v264
    %v360 = vpop.f32.mrb[0].mxu0
    %v361 = vadd.f32 %v219, %v360
    %v362 = vpop.f32.mrb[0].mxu0
    %v363 = vpop.f32.mrb[0].mxu0
    %v364 = vadd.f32 %v220, %v363
    %v365 = vpop.f32.mrb[0].mxu0
    %366 = vmatprep.mubr.bf16.mxu0 0
    %367 = vmatmul.mubr.bf16.gmra.mrb[0].mxu0 %v267
    %v368 = vpop.f32.mrb[0].mxu0
    %v369 = vadd.f32 %v221, %v368
    %v370 = vpop.f32.mrb[0].mxu0
    %v371 = vpop.f32.mrb[0].mxu0
    %v372 = vadd.f32 %v222, %v371
    %v373 = vpop.f32.mrb[0].mxu0
    %374 = vmatprep.mubr.bf16.mxu0 0
    %375 = vmatmul.mubr.bf16.gmra.mrb[0].mxu0 %v270
    %v376 = vpop.f32.mrb[0].mxu0
    %v377 = vadd.f32 %v223, %v376
    %v378 = vpop.f32.mrb[0].mxu0
    %v379 = vpop.f32.mrb[0].mxu0
    %v380 = vadd.f32 %v224, %v379
    %v381 = vpop.f32.mrb[0].mxu0
    %382 = vmatprep.mubr.bf16.mxu0 0
    %383 = vmatmul.mubr.bf16.gmra.mrb[0].mxu0 %v273
    %v384 = vpop.f32.mrb[0].mxu0
    %v385 = vadd.f32 %v225, %v384
    %v386 = vpop.f32.mrb[0].mxu0
    %v387 = vpop.f32.mrb[0].mxu0
    %v388 = vadd.f32 %v226, %v387
    %v389 = vpop.f32.mrb[0].mxu0
    %390 = vmatprep.mubr.bf16.mxu0 0
    %391 = vmatmul.mubr.bf16.gmra.mrb[0].mxu0 %v276
    %v392 = vpop.f32.mrb[0].mxu0
    %v393 = vadd.f32 %v227, %v392
    %v394 = vpop.f32.mrb[0].mxu0
    %v395 = vpop.f32.mrb[0].mxu0
    %v396 = vadd.f32 %v228, %v395
    %v397 = vpop.f32.mrb[0].mxu0
    %398 = vdwg.mxu0
    %399 = vmax.xlane.f32.xlu0 %v337
    %v400 = vpop.xlane.xlu0 %399
    %401 = vmax.xlane.f32.xlu0 %v340
    %v402 = vpop.xlane.xlu0 %401
    %403 = vmax.xlane.f32.xlu0 %v345
    %v404 = vpop.xlane.xlu0 %403
    %405 = vmax.xlane.f32.xlu0 %v348
    %v406 = vpop.xlane.xlu0 %405
    %407 = vmax.xlane.f32.xlu0 %v353
    %v408 = vpop.xlane.xlu0 %407
    %409 = vmax.xlane.f32.xlu0 %v356
    %v410 = vpop.xlane.xlu0 %409
    %411 = vmax.xlane.f32.xlu0 %v361
    %v412 = vpop.xlane.xlu0 %411
    %413 = vmax.xlane.f32.xlu0 %v364
    %v414 = vpop.xlane.xlu0 %413
    %415 = vmax.xlane.f32.xlu0 %v369
    %v416 = vpop.xlane.xlu0 %415
    %417 = vmax.xlane.f32.xlu0 %v372
    %v418 = vpop.xlane.xlu0 %417
    %419 = vmax.xlane.f32.xlu0 %v377
    %v420 = vpop.xlane.xlu0 %419
    %421 = vmax.xlane.f32.xlu0 %v380
    %v422 = vpop.xlane.xlu0 %421
    %423 = vmax.xlane.f32.xlu0 %v385
    %v424 = vpop.xlane.xlu0 %423
    %425 = vmax.xlane.f32.xlu0 %v388
    %v426 = vpop.xlane.xlu0 %425
    %427 = vmax.xlane.f32.xlu0 %v393
    %v428 = vpop.xlane.xlu0 %427
    %429 = vmax.xlane.f32.xlu0 %v396
    %v430 = vpop.xlane.xlu0 %429
    %v431 = vsub.f32 %v337, %v400
    %v432 = vsub.f32 %v340, %v402
    %v433 = vsub.f32 %v345, %v404
    %v434 = vsub.f32 %v348, %v406
    %v435 = vsub.f32 %v353, %v408
    %v436 = vsub.f32 %v356, %v410
    %v437 = vsub.f32 %v361, %v412
    %v438 = vsub.f32 %v364, %v414
    %v439 = vsub.f32 %v369, %v416
    %v440 = vsub.f32 %v372, %v418
    %v441 = vsub.f32 %v377, %v420
    %v442 = vsub.f32 %v380, %v422
    %v443 = vsub.f32 %v385, %v424
    %v444 = vsub.f32 %v388, %v426
    %v445 = vsub.f32 %v393, %v428
    %v446 = vsub.f32 %v396, %v430
    %v447 = vmul.f32 %v431, 1.442695
    %v448 = vpow.pop %v447
    %v449 = vmul.f32 %v432, 1.442695
    %v450 = vpow.pop %v449
    %v451 = vmul.f32 %v433, 1.442695
    %v452 = vpow.pop %v451
    %v453 = vmul.f32 %v434, 1.442695
    %v454 = vpow.pop %v453
    %v455 = vmul.f32 %v435, 1.442695
    %v456 = vpow.pop %v455
    %v457 = vmul.f32 %v436, 1.442695
    %v458 = vpow.pop %v457
    %v459 = vmul.f32 %v437, 1.442695
    %v460 = vpow.pop %v459
    %v461 = vmul.f32 %v438, 1.442695
    %v462 = vpow.pop %v461
    %v463 = vmul.f32 %v439, 1.442695
    %v464 = vpow.pop %v463
    %v465 = vmul.f32 %v440, 1.442695
    %v466 = vpow.pop %v465
    %v467 = vmul.f32 %v441, 1.442695
    %v468 = vpow.pop %v467
    %v469 = vmul.f32 %v442, 1.442695
    %v470 = vpow.pop %v469
    %v471 = vmul.f32 %v443, 1.442695
    %v472 = vpow.pop %v471
    %v473 = vmul.f32 %v444, 1.442695
    %v474 = vpow.pop %v473
    %v475 = vmul.f32 %v445, 1.442695
    %v476 = vpow.pop %v475
    %v477 = vmul.f32 %v446, 1.442695
    %v478 = vpow.pop %v477
    %479 = vadd.xlane.f32.xlu0 %v448
    %v480 = vpop.xlane.xlu0 %479
    %481 = vadd.xlane.f32.xlu0 %v450
    %v482 = vpop.xlane.xlu0 %481
    %483 = vadd.xlane.f32.xlu0 %v452
    %v484 = vpop.xlane.xlu0 %483
    %485 = vadd.xlane.f32.xlu0 %v454
    %v486 = vpop.xlane.xlu0 %485
    %487 = vadd.xlane.f32.xlu0 %v456
    %v488 = vpop.xlane.xlu0 %487
    %489 = vadd.xlane.f32.xlu0 %v458
    %v490 = vpop.xlane.xlu0 %489
    %491 = vadd.xlane.f32.xlu0 %v460
    %v492 = vpop.xlane.xlu0 %491
    %493 = vadd.xlane.f32.xlu0 %v462
    %v494 = vpop.xlane.xlu0 %493
    %495 = vadd.xlane.f32.xlu0 %v464
    %v496 = vpop.xlane.xlu0 %495
    %497 = vadd.xlane.f32.xlu0 %v466
    %v498 = vpop.xlane.xlu0 %497
    %499 = vadd.xlane.f32.xlu0 %v468
    %v500 = vpop.xlane.xlu0 %499
    %501 = vadd.xlane.f32.xlu0 %v470
    %v502 = vpop.xlane.xlu0 %501
    %503 = vadd.xlane.f32.xlu0 %v472
    %v504 = vpop.xlane.xlu0 %503
    %505 = vadd.xlane.f32.xlu0 %v474
    %v506 = vpop.xlane.xlu0 %505
    %507 = vadd.xlane.f32.xlu0 %v476
    %v508 = vpop.xlane.xlu0 %507
    %509 = vadd.xlane.f32.xlu0 %v478
    %v510 = vpop.xlane.xlu0 %509
    %v511 = vrcp.pop %v480
    %v512 = vrcp.pop %v482
    %v513 = vrcp.pop %v484
    %v514 = vrcp.pop %v486
    %v515 = vrcp.pop %v488
    %v516 = vrcp.pop %v490
    %v517 = vrcp.pop %v492
    %v518 = vrcp.pop %v494
    %v519 = vrcp.pop %v496
    %v520 = vrcp.pop %v498
    %v521 = vrcp.pop %v500
    %v522 = vrcp.pop %v502
    %v523 = vrcp.pop %v504
    %v524 = vrcp.pop %v506
    %v525 = vrcp.pop %v508
    %v526 = vrcp.pop %v510
    %v527 = vmul.f32 %v448, %v511
    %v528 = vmul.f32 %v450, %v512
    %v529 = vmul.f32 %v452, %v513
    %v530 = vmul.f32 %v454, %v514
    %v531 = vmul.f32 %v456, %v515
    %v532 = vmul.f32 %v458, %v516
    %v533 = vmul.f32 %v460, %v517
    %v534 = vmul.f32 %v462, %v518
    %v535 = vmul.f32 %v464, %v519
    %v536 = vmul.f32 %v466, %v520
    %v537 = vmul.f32 %v468, %v521
    %v538 = vmul.f32 %v470, %v522
    %v539 = vmul.f32 %v472, %v523
    %v540 = vmul.f32 %v474, %v524
    %v541 = vmul.f32 %v476, %v525
    %v542 = vmul.f32 %v478, %v526
    %v543 = vpack.c.bf16 %v528, %v527
    %v544 = vpack.c.bf16 %v530, %v529
    %v545 = vpack.c.bf16 %v532, %v531
    %v546 = vpack.c.bf16 %v534, %v533
    %v547 = vpack.c.bf16 %v536, %v535
    %v548 = vpack.c.bf16 %v538, %v537
    %v549 = vpack.c.bf16 %v540, %v539
    %v550 = vpack.c.bf16 %v542, %v541
    %551 = vrot.lane.b32.xlu0 %v205, 64
    %v552 = vpop.permute.xlu0 %551
    %553 = vrot.lane.b32.xlu0 %v206, 64
    %v554 = vpop.permute.xlu0 %553
    %555 = vrot.lane.b32.xlu0 %v207, 64
    %v556 = vpop.permute.xlu0 %555
    %557 = vrot.lane.b32.xlu0 %v208, 64
    %v558 = vpop.permute.xlu0 %557
    %559 = vrot.lane.b32.xlu0 %v209, 64
    %v560 = vpop.permute.xlu0 %559
    %561 = vrot.lane.b32.xlu0 %v210, 64
    %v562 = vpop.permute.xlu0 %561
    %563 = vrot.lane.b32.xlu0 %v211, 64
    %v564 = vpop.permute.xlu0 %563
    %565 = vrot.lane.b32.xlu0 %v212, 64
    %v566 = vpop.permute.xlu0 %565
    %575 = vmatprep.subr.bf16.mxu0 0
    %576 = vmatpush1.bf16.msra.mxu0 %v552
    %577 = vmatprep.subr.bf16.mxu0 0
    %578 = vmatpush1.bf16.msra.mxu0 %v554
    %579 = vmatprep.subr.bf16.mxu0 0
    %580 = vmatpush1.bf16.msra.mxu0 %v556
    %581 = vmatprep.subr.bf16.mxu0 0
    %582 = vmatpush1.bf16.msra.mxu0 %v558
    %583 = vmatprep.subr.bf16.mxu0 0
    %584 = vmatpush1.bf16.msra.mxu0 %v560
    %585 = vmatprep.subr.bf16.mxu0 0
    %586 = vmatpush1.bf16.msra.mxu0 %v562
    %587 = vmatprep.subr.bf16.mxu0 0
    %588 = vmatpush1.bf16.msra.mxu0 %v564
    %589 = vmatprep.subr.bf16.mxu0 0
    %590 = vmatpush1.bf16.msra.mxu0 %v566
    %591 = vmatprep.subr.bf16.mxu0 0
    %592 = vmatpush1.bf16.msra.mxu0 0
    %593 = vmatprep.subr.bf16.mxu0 0
    %594 = vmatpush1.bf16.msra.mxu0 0
    %595 = vmatprep.subr.bf16.mxu0 0
    %596 = vmatpush1.bf16.msra.mxu0 0
    %597 = vmatprep.subr.bf16.mxu0 0
    %598 = vmatpush1.bf16.msra.mxu0 0
    %599 = vmatprep.subr.bf16.mxu0 0
    %600 = vmatpush1.bf16.msra.mxu0 0
    %601 = vmatprep.subr.bf16.mxu0 0
    %602 = vmatpush1.bf16.msra.mxu0 0
    %603 = vmatprep.subr.bf16.mxu0 0
    %604 = vmatpush1.bf16.msra.mxu0 0
    %605 = vmatprep.subr.bf16.mxu0 0
    %606 = vmatpush1.bf16.msra.mxu0 0
    %607 = vmatprep.mubr.bf16.mxu0 0
    %608 = vmatmul.mubr.bf16.gmra.mrb[0].mxu0 %v543
    %v609 = vpop.f32.mrb[0].mxu0
    %v610 = vadd.f32 0.0, %v609
    %v611 = vpop.f32.mrb[0].mxu0
    %v612 = vpop.f32.mrb[0].mxu0
    %v613 = vadd.f32 0.0, %v612
    %v614 = vpop.f32.mrb[0].mxu0
    %615 = vmatprep.mubr.bf16.mxu0 0
    %616 = vmatmul.mubr.bf16.gmra.mrb[0].mxu0 %v544
    %v617 = vpop.f32.mrb[0].mxu0
    %v618 = vadd.f32 0.0, %v617
    %v619 = vpop.f32.mrb[0].mxu0
    %v620 = vpop.f32.mrb[0].mxu0
    %v621 = vadd.f32 0.0, %v620
    %v622 = vpop.f32.mrb[0].mxu0
    %623 = vmatprep.mubr.bf16.mxu0 0
    %624 = vmatmul.mubr.bf16.gmra.mrb[0].mxu0 %v545
    %v625 = vpop.f32.mrb[0].mxu0
    %v626 = vadd.f32 0.0, %v625
    %v627 = vpop.f32.mrb[0].mxu0
    %v628 = vpop.f32.mrb[0].mxu0
    %v629 = vadd.f32 0.0, %v628
    %v630 = vpop.f32.mrb[0].mxu0
    %631 = vmatprep.mubr.bf16.mxu0 0
    %632 = vmatmul.mubr.bf16.gmra.mrb[0].mxu0 %v546
    %v633 = vpop.f32.mrb[0].mxu0
    %v634 = vadd.f32 0.0, %v633
    %v635 = vpop.f32.mrb[0].mxu0
    %v636 = vpop.f32.mrb[0].mxu0
    %v637 = vadd.f32 0.0, %v636
    %v638 = vpop.f32.mrb[0].mxu0
    %639 = vmatprep.mubr.bf16.mxu0 0
    %640 = vmatmul.mubr.bf16.gmra.mrb[0].mxu0 %v547
    %v641 = vpop.f32.mrb[0].mxu0
    %v642 = vadd.f32 0.0, %v641
    %v643 = vpop.f32.mrb[0].mxu0
    %v644 = vpop.f32.mrb[0].mxu0
    %v645 = vadd.f32 0.0, %v644
    %v646 = vpop.f32.mrb[0].mxu0
    %647 = vmatprep.mubr.bf16.mxu0 0
    %648 = vmatmul.mubr.bf16.gmra.mrb[0].mxu0 %v548
    %v649 = vpop.f32.mrb[0].mxu0
    %v650 = vadd.f32 0.0, %v649
    %v651 = vpop.f32.mrb[0].mxu0
    %v652 = vpop.f32.mrb[0].mxu0
    %v653 = vadd.f32 0.0, %v652
    %v654 = vpop.f32.mrb[0].mxu0
    %655 = vmatprep.mubr.bf16.mxu0 0
    %656 = vmatmul.mubr.bf16.gmra.mrb[0].mxu0 %v549
    %v657 = vpop.f32.mrb[0].mxu0
    %v658 = vadd.f32 0.0, %v657
    %v659 = vpop.f32.mrb[0].mxu0
    %v660 = vpop.f32.mrb[0].mxu0
    %v661 = vadd.f32 0.0, %v660
    %v662 = vpop.f32.mrb[0].mxu0
    %663 = vmatprep.mubr.bf16.mxu0 0
    %664 = vmatmul.mubr.bf16.gmra.mrb[0].mxu0 %v550
    %v665 = vpop.f32.mrb[0].mxu0
    %v666 = vadd.f32 0.0, %v665
    %v667 = vpop.f32.mrb[0].mxu0
    %v668 = vpop.f32.mrb[0].mxu0
    %v669 = vadd.f32 0.0, %v668
    %v670 = vpop.f32.mrb[0].mxu0
    %671 = vdwg.mxu0
    %v672 = vpack.c.bf16 %v613, %v610
    %v673 = vpack.c.bf16 %v621, %v618
    %v674 = vpack.c.bf16 %v629, %v626
    %v675 = vpack.c.bf16 %v637, %v634
    %v676 = vpack.c.bf16 %v645, %v642
    %v677 = vpack.c.bf16 %v653, %v650
    %v678 = vpack.c.bf16 %v661, %v658
    %v679 = vpack.c.bf16 %v669, %v666
    %v680 = vld [vmem:[%s5] sm:$0xf]
    %v682 = vsel %vm253, %v672, 0
    %v685 = vsel %vm253, %v673, 0
    %v688 = vsel %vm253, %v674, 0
    %v691 = vsel %vm253, %v675, 0
    %v694 = vsel %vm253, %v676, 0
    %v697 = vsel %vm253, %v677, 0
    %v700 = vsel %vm253, %v678, 0
    %v703 = vsel %vm253, %v679, 0
    %vm705 = vcmask 1043456
    %v707 = vsel %vm705, %v680, 0
    %709 = vmatprep.subr.bf16.mxu0 0
    %710 = vmatpush1.bf16.msra.mxu0 %v707
    %711 = vmatprep.subr.bf16.mxu0 0
    %712 = vmatpush1.bf16.msra.mxu0 0
    %713 = vmatprep.subr.bf16.mxu0 0
    %714 = vmatpush1.bf16.msra.mxu0 0
    %715 = vmatprep.subr.bf16.mxu0 0
    %716 = vmatpush1.bf16.msra.mxu0 0
    %717 = vmatprep.subr.bf16.mxu0 0
    %718 = vmatpush1.bf16.msra.mxu0 0
    %719 = vmatprep.subr.bf16.mxu0 0
    %720 = vmatpush1.bf16.msra.mxu0 0
    %721 = vmatprep.subr.bf16.mxu0 0
    %722 = vmatpush1.bf16.msra.mxu0 0
    %723 = vmatprep.subr.bf16.mxu0 0
    %724 = vmatpush1.bf16.msra.mxu0 0
    %725 = vmatprep.subr.bf16.mxu0 0
    %726 = vmatpush1.bf16.msra.mxu0 0
    %727 = vmatprep.subr.bf16.mxu0 0
    %728 = vmatpush1.bf16.msra.mxu0 0
    %729 = vmatprep.subr.bf16.mxu0 0
    %730 = vmatpush1.bf16.msra.mxu0 0
    %731 = vmatprep.subr.bf16.mxu0 0
    %732 = vmatpush1.bf16.msra.mxu0 0
    %733 = vmatprep.subr.bf16.mxu0 0
    %734 = vmatpush1.bf16.msra.mxu0 0
    %735 = vmatprep.subr.bf16.mxu0 0
    %736 = vmatpush1.bf16.msra.mxu0 0
    %737 = vmatprep.subr.bf16.mxu0 0
    %738 = vmatpush1.bf16.msra.mxu0 0
    %739 = vmatprep.subr.bf16.mxu0 0
    %740 = vmatpush1.bf16.msra.mxu0 0
    %741 = vmatprep.mubr.bf16.mxu0 0
    %742 = vmatmul.mubr.bf16.gmra.mrb[0].mxu0 %v682
    %v743 = vpop.f32.mrb[0].mxu0
    %v744 = vadd.f32 0.0, %v743
    %v745 = vpop.f32.mrb[0].mxu0
    %v746 = vpop.f32.mrb[0].mxu0
    %v747 = vadd.f32 0.0, %v746
    %v748 = vpop.f32.mrb[0].mxu0
    %749 = vmatprep.mubr.bf16.mxu0 0
    %750 = vmatmul.mubr.bf16.gmra.mrb[0].mxu0 %v685
    %v751 = vpop.f32.mrb[0].mxu0
    %v752 = vadd.f32 0.0, %v751
    %v753 = vpop.f32.mrb[0].mxu0
    %v754 = vpop.f32.mrb[0].mxu0
    %v755 = vadd.f32 0.0, %v754
    %v756 = vpop.f32.mrb[0].mxu0
    %757 = vmatprep.mubr.bf16.mxu0 0
    %758 = vmatmul.mubr.bf16.gmra.mrb[0].mxu0 %v688
    %v759 = vpop.f32.mrb[0].mxu0
    %v760 = vadd.f32 0.0, %v759
    %v761 = vpop.f32.mrb[0].mxu0
    %v762 = vpop.f32.mrb[0].mxu0
    %v763 = vadd.f32 0.0, %v762
    %v764 = vpop.f32.mrb[0].mxu0
    %765 = vmatprep.mubr.bf16.mxu0 0
    %766 = vmatmul.mubr.bf16.gmra.mrb[0].mxu0 %v691
    %v767 = vpop.f32.mrb[0].mxu0
    %v768 = vadd.f32 0.0, %v767
    %v769 = vpop.f32.mrb[0].mxu0
    %v770 = vpop.f32.mrb[0].mxu0
    %v771 = vadd.f32 0.0, %v770
    %v772 = vpop.f32.mrb[0].mxu0
    %773 = vmatprep.mubr.bf16.mxu0 0
    %774 = vmatmul.mubr.bf16.gmra.mrb[0].mxu0 %v694
    %v775 = vpop.f32.mrb[0].mxu0
    %v776 = vadd.f32 0.0, %v775
    %v777 = vpop.f32.mrb[0].mxu0
    %v778 = vpop.f32.mrb[0].mxu0
    %v779 = vadd.f32 0.0, %v778
    %v780 = vpop.f32.mrb[0].mxu0
    %781 = vmatprep.mubr.bf16.mxu0 0
    %782 = vmatmul.mubr.bf16.gmra.mrb[0].mxu0 %v697
    %v783 = vpop.f32.mrb[0].mxu0
    %v784 = vadd.f32 0.0, %v783
    %v785 = vpop.f32.mrb[0].mxu0
    %v786 = vpop.f32.mrb[0].mxu0
    %v787 = vadd.f32 0.0, %v786
    %v788 = vpop.f32.mrb[0].mxu0
    %789 = vmatprep.mubr.bf16.mxu0 0
    %790 = vmatmul.mubr.bf16.gmra.mrb[0].mxu0 %v700
    %v791 = vpop.f32.mrb[0].mxu0
    %v792 = vadd.f32 0.0, %v791
    %v793 = vpop.f32.mrb[0].mxu0
    %v794 = vpop.f32.mrb[0].mxu0
    %v795 = vadd.f32 0.0, %v794
    %v796 = vpop.f32.mrb[0].mxu0
    %797 = vmatprep.mubr.bf16.mxu0 0
    %798 = vmatmul.mubr.bf16.gmra.mrb[0].mxu0 %v703
    %v799 = vpop.f32.mrb[0].mxu0
    %v800 = vadd.f32 0.0, %v799
    %v801 = vpop.f32.mrb[0].mxu0
    %v802 = vpop.f32.mrb[0].mxu0
    %v803 = vadd.f32 0.0, %v802
    %v804 = vpop.f32.mrb[0].mxu0
    %805 = vdwg.mxu0
    %v806 = vadd.f32 %v204, %v744
    %v807 = vadd.f32 %v204, %v747
    %v808 = vadd.f32 %v204, %v752
    %v809 = vadd.f32 %v204, %v755
    %v810 = vadd.f32 %v204, %v760
    %v811 = vadd.f32 %v204, %v763
    %v812 = vadd.f32 %v204, %v768
    %v813 = vadd.f32 %v204, %v771
    %v814 = vadd.f32 %v204, %v776
    %v815 = vadd.f32 %v204, %v779
    %v816 = vadd.f32 %v204, %v784
    %v817 = vadd.f32 %v204, %v787
    %v818 = vadd.f32 %v204, %v792
    %v819 = vadd.f32 %v204, %v795
    %v820 = vadd.f32 %v204, %v800
    %v821 = vadd.f32 %v204, %v803
    %822 = vrot.lane.b32.xlu0 %v205, 120
    %v823 = vpop.permute.xlu0 %822
    %824 = vrot.lane.b32.xlu0 %v206, 120
    %v825 = vpop.permute.xlu0 %824
    %826 = vrot.lane.b32.xlu0 %v207, 120
    %v827 = vpop.permute.xlu0 %826
    %828 = vrot.lane.b32.xlu0 %v208, 120
    %v829 = vpop.permute.xlu0 %828
    %830 = vrot.lane.b32.xlu0 %v209, 120
    %v831 = vpop.permute.xlu0 %830
    %832 = vrot.lane.b32.xlu0 %v210, 120
    %v833 = vpop.permute.xlu0 %832
    %834 = vrot.lane.b32.xlu0 %v211, 120
    %v835 = vpop.permute.xlu0 %834
    %836 = vrot.lane.b32.xlu0 %v212, 120
    %v837 = vpop.permute.xlu0 %836
    %838 = vrot.lane.b32.xlu0 %v205, 88
    %v839 = vpop.permute.xlu0 %838
    %840 = vrot.lane.b32.xlu0 %v206, 88
    %v841 = vpop.permute.xlu0 %840
    %842 = vrot.lane.b32.xlu0 %v207, 88
    %v843 = vpop.permute.xlu0 %842
    %844 = vrot.lane.b32.xlu0 %v208, 88
    %v845 = vpop.permute.xlu0 %844
    %846 = vrot.lane.b32.xlu0 %v209, 88
    %v847 = vpop.permute.xlu0 %846
    %848 = vrot.lane.b32.xlu0 %v210, 88
    %v849 = vpop.permute.xlu0 %848
    %850 = vrot.lane.b32.xlu0 %v211, 88
    %v851 = vpop.permute.xlu0 %850
    %852 = vrot.lane.b32.xlu0 %v212, 88
    %v853 = vpop.permute.xlu0 %852
    %v855 = vsel %vm253, %v823, 0
    %v858 = vsel %vm253, %v825, 0
    %v861 = vsel %vm253, %v827, 0
    %v864 = vsel %vm253, %v829, 0
    %v867 = vsel %vm253, %v831, 0
    %v870 = vsel %vm253, %v833, 0
    %v873 = vsel %vm253, %v835, 0
    %v876 = vsel %vm253, %v837, 0
    %v879 = vsel %vm253, %v839, 0
    %v882 = vsel %vm253, %v841, 0
    %v885 = vsel %vm253, %v843, 0
    %v888 = vsel %vm253, %v845, 0
    %v891 = vsel %vm253, %v847, 0
    %v894 = vsel %vm253, %v849, 0
    %v897 = vsel %vm253, %v851, 0
    %v900 = vsel %vm253, %v853, 0
    %902 = vmatprep.subr.bf16.mxu0 0
    %903 = vmatpush1.bf16.xpose.msra.mxu0 %v879
    %904 = vmatprep.subr.bf16.mxu0 0
    %905 = vmatpush1.bf16.xpose.msra.mxu0 %v882
    %906 = vmatprep.subr.bf16.mxu0 0
    %907 = vmatpush1.bf16.xpose.msra.mxu0 %v885
    %908 = vmatprep.subr.bf16.mxu0 0
    %909 = vmatpush1.bf16.xpose.msra.mxu0 %v888
    %910 = vmatprep.subr.bf16.mxu0 0
    %911 = vmatpush1.bf16.xpose.msra.mxu0 %v891
    %912 = vmatprep.subr.bf16.mxu0 0
    %913 = vmatpush1.bf16.xpose.msra.mxu0 %v894
    %914 = vmatprep.subr.bf16.mxu0 0
    %915 = vmatpush1.bf16.xpose.msra.mxu0 %v897
    %916 = vmatprep.subr.bf16.mxu0 0
    %917 = vmatpush1.bf16.xpose.msra.mxu0 %v900
    %918 = vmatprep.subr.bf16.mxu0 0
    %919 = vmatpush1.bf16.xpose.msra.mxu0 0
    %920 = vmatprep.subr.bf16.mxu0 0
    %921 = vmatpush1.bf16.xpose.msra.mxu0 0
    %922 = vmatprep.subr.bf16.mxu0 0
    %923 = vmatpush1.bf16.xpose.msra.mxu0 0
    %924 = vmatprep.subr.bf16.mxu0 0
    %925 = vmatpush1.bf16.xpose.msra.mxu0 0
    %926 = vmatprep.subr.bf16.mxu0 0
    %927 = vmatpush1.bf16.xpose.msra.mxu0 0
    %928 = vmatprep.subr.bf16.mxu0 0
    %929 = vmatpush1.bf16.xpose.msra.mxu0 0
    %930 = vmatprep.subr.bf16.mxu0 0
    %931 = vmatpush1.bf16.xpose.msra.mxu0 0
    %932 = vmatprep.subr.bf16.mxu0 0
    %933 = vmatpush1.bf16.xpose.msra.mxu0 0
    %934 = vmatprep.mubr.bf16.mxu0 0
    %935 = vmatmul.mubr.bf16.gmra.mrb[0].mxu0 %v855
    %v936 = vpop.f32.mrb[0].mxu0
    %v937 = vadd.f32 %v213, %v936
    %v938 = vpop.f32.mrb[0].mxu0
    %v939 = vpop.f32.mrb[0].mxu0
    %v940 = vadd.f32 %v214, %v939
    %v941 = vpop.f32.mrb[0].mxu0
    %942 = vmatprep.mubr.bf16.mxu0 0
    %943 = vmatmul.mubr.bf16.gmra.mrb[0].mxu0 %v858
    %v944 = vpop.f32.mrb[0].mxu0
    %v945 = vadd.f32 %v215, %v944
    %v946 = vpop.f32.mrb[0].mxu0
    %v947 = vpop.f32.mrb[0].mxu0
    %v948 = vadd.f32 %v216, %v947
    %v949 = vpop.f32.mrb[0].mxu0
    %950 = vmatprep.mubr.bf16.mxu0 0
    %951 = vmatmul.mubr.bf16.gmra.mrb[0].mxu0 %v861
    %v952 = vpop.f32.mrb[0].mxu0
    %v953 = vadd.f32 %v217, %v952
    %v954 = vpop.f32.mrb[0].mxu0
    %v955 = vpop.f32.mrb[0].mxu0
    %v956 = vadd.f32 %v218, %v955
    %v957 = vpop.f32.mrb[0].mxu0
    %958 = vmatprep.mubr.bf16.mxu0 0
    %959 = vmatmul.mubr.bf16.gmra.mrb[0].mxu0 %v864
    %v960 = vpop.f32.mrb[0].mxu0
    %v961 = vadd.f32 %v219, %v960
    %v962 = vpop.f32.mrb[0].mxu0
    %v963 = vpop.f32.mrb[0].mxu0
    %v964 = vadd.f32 %v220, %v963
    %v965 = vpop.f32.mrb[0].mxu0
    %966 = vmatprep.mubr.bf16.mxu0 0
    %967 = vmatmul.mubr.bf16.gmra.mrb[0].mxu0 %v867
    %v968 = vpop.f32.mrb[0].mxu0
    %v969 = vadd.f32 %v221, %v968
    %v970 = vpop.f32.mrb[0].mxu0
    %v971 = vpop.f32.mrb[0].mxu0
    %v972 = vadd.f32 %v222, %v971
    %v973 = vpop.f32.mrb[0].mxu0
    %974 = vmatprep.mubr.bf16.mxu0 0
    %975 = vmatmul.mubr.bf16.gmra.mrb[0].mxu0 %v870
    %v976 = vpop.f32.mrb[0].mxu0
    %v977 = vadd.f32 %v223, %v976
    %v978 = vpop.f32.mrb[0].mxu0
    %v979 = vpop.f32.mrb[0].mxu0
    %v980 = vadd.f32 %v224, %v979
    %v981 = vpop.f32.mrb[0].mxu0
    %982 = vmatprep.mubr.bf16.mxu0 0
    %983 = vmatmul.mubr.bf16.gmra.mrb[0].mxu0 %v873
    %v984 = vpop.f32.mrb[0].mxu0
    %v985 = vadd.f32 %v225, %v984
    %v986 = vpop.f32.mrb[0].mxu0
    %v987 = vpop.f32.mrb[0].mxu0
    %v988 = vadd.f32 %v226, %v987
    %v989 = vpop.f32.mrb[0].mxu0
    %990 = vmatprep.mubr.bf16.mxu0 0
    %991 = vmatmul.mubr.bf16.gmra.mrb[0].mxu0 %v876
    %v992 = vpop.f32.mrb[0].mxu0
    %v993 = vadd.f32 %v227, %v992
    %v994 = vpop.f32.mrb[0].mxu0
    %v995 = vpop.f32.mrb[0].mxu0
    %v996 = vadd.f32 %v228, %v995
    %v997 = vpop.f32.mrb[0].mxu0
    %998 = vdwg.mxu0
    %999 = vmax.xlane.f32.xlu0 %v937
    %v1000 = vpop.xlane.xlu0 %999
    %1001 = vmax.xlane.f32.xlu0 %v940
    %v1002 = vpop.xlane.xlu0 %1001
    %1003 = vmax.xlane.f32.xlu0 %v945
    %v1004 = vpop.xlane.xlu0 %1003
    %1005 = vmax.xlane.f32.xlu0 %v948
    %v1006 = vpop.xlane.xlu0 %1005
    %1007 = vmax.xlane.f32.xlu0 %v953
    %v1008 = vpop.xlane.xlu0 %1007
    %1009 = vmax.xlane.f32.xlu0 %v956
    %v1010 = vpop.xlane.xlu0 %1009
    %1011 = vmax.xlane.f32.xlu0 %v961
    %v1012 = vpop.xlane.xlu0 %1011
    %1013 = vmax.xlane.f32.xlu0 %v964
    %v1014 = vpop.xlane.xlu0 %1013
    %1015 = vmax.xlane.f32.xlu0 %v969
    %v1016 = vpop.xlane.xlu0 %1015
    %1017 = vmax.xlane.f32.xlu0 %v972
    %v1018 = vpop.xlane.xlu0 %1017
    %1019 = vmax.xlane.f32.xlu0 %v977
    %v1020 = vpop.xlane.xlu0 %1019
    %1021 = vmax.xlane.f32.xlu0 %v980
    %v1022 = vpop.xlane.xlu0 %1021
    %1023 = vmax.xlane.f32.xlu0 %v985
    %v1024 = vpop.xlane.xlu0 %1023
    %1025 = vmax.xlane.f32.xlu0 %v988
    %v1026 = vpop.xlane.xlu0 %1025
    %1027 = vmax.xlane.f32.xlu0 %v993
    %v1028 = vpop.xlane.xlu0 %1027
    %1029 = vmax.xlane.f32.xlu0 %v996
    %v1030 = vpop.xlane.xlu0 %1029
    %v1031 = vsub.f32 %v937, %v1000
    %v1032 = vsub.f32 %v940, %v1002
    %v1033 = vsub.f32 %v945, %v1004
    %v1034 = vsub.f32 %v948, %v1006
    %v1035 = vsub.f32 %v953, %v1008
    %v1036 = vsub.f32 %v956, %v1010
    %v1037 = vsub.f32 %v961, %v1012
    %v1038 = vsub.f32 %v964, %v1014
    %v1039 = vsub.f32 %v969, %v1016
    %v1040 = vsub.f32 %v972, %v1018
    %v1041 = vsub.f32 %v977, %v1020
    %v1042 = vsub.f32 %v980, %v1022
    %v1043 = vsub.f32 %v985, %v1024
    %v1044 = vsub.f32 %v988, %v1026
    %v1045 = vsub.f32 %v993, %v1028
    %v1046 = vsub.f32 %v996, %v1030
    %v1047 = vmul.f32 %v1031, 1.442695
    %v1048 = vpow.pop %v1047
    %v1049 = vmul.f32 %v1032, 1.442695
    %v1050 = vpow.pop %v1049
    %v1051 = vmul.f32 %v1033, 1.442695
    %v1052 = vpow.pop %v1051
    %v1053 = vmul.f32 %v1034, 1.442695
    %v1054 = vpow.pop %v1053
    %v1055 = vmul.f32 %v1035, 1.442695
    %v1056 = vpow.pop %v1055
    %v1057 = vmul.f32 %v1036, 1.442695
    %v1058 = vpow.pop %v1057
    %v1059 = vmul.f32 %v1037, 1.442695
    %v1060 = vpow.pop %v1059
    %v1061 = vmul.f32 %v1038, 1.442695
    %v1062 = vpow.pop %v1061
    %v1063 = vmul.f32 %v1039, 1.442695
    %v1064 = vpow.pop %v1063
    %v1065 = vmul.f32 %v1040, 1.442695
    %v1066 = vpow.pop %v1065
    %v1067 = vmul.f32 %v1041, 1.442695
    %v1068 = vpow.pop %v1067
    %v1069 = vmul.f32 %v1042, 1.442695
    %v1070 = vpow.pop %v1069
    %v1071 = vmul.f32 %v1043, 1.442695
    %v1072 = vpow.pop %v1071
    %v1073 = vmul.f32 %v1044, 1.442695
    %v1074 = vpow.pop %v1073
    %v1075 = vmul.f32 %v1045, 1.442695
    %v1076 = vpow.pop %v1075
    %v1077 = vmul.f32 %v1046, 1.442695
    %v1078 = vpow.pop %v1077
    %1079 = vadd.xlane.f32.xlu0 %v1048
    %v1080 = vpop.xlane.xlu0 %1079
    %1081 = vadd.xlane.f32.xlu0 %v1050
    %v1082 = vpop.xlane.xlu0 %1081
    %1083 = vadd.xlane.f32.xlu0 %v1052
    %v1084 = vpop.xlane.xlu0 %1083
    %1085 = vadd.xlane.f32.xlu0 %v1054
    %v1086 = vpop.xlane.xlu0 %1085
    %1087 = vadd.xlane.f32.xlu0 %v1056
    %v1088 = vpop.xlane.xlu0 %1087
    %1089 = vadd.xlane.f32.xlu0 %v1058
    %v1090 = vpop.xlane.xlu0 %1089
    %1091 = vadd.xlane.f32.xlu0 %v1060
    %v1092 = vpop.xlane.xlu0 %1091
    %1093 = vadd.xlane.f32.xlu0 %v1062
    %v1094 = vpop.xlane.xlu0 %1093
    %1095 = vadd.xlane.f32.xlu0 %v1064
    %v1096 = vpop.xlane.xlu0 %1095
    %1097 = vadd.xlane.f32.xlu0 %v1066
    %v1098 = vpop.xlane.xlu0 %1097
    %1099 = vadd.xlane.f32.xlu0 %v1068
    %v1100 = vpop.xlane.xlu0 %1099
    %1101 = vadd.xlane.f32.xlu0 %v1070
    %v1102 = vpop.xlane.xlu0 %1101
    %1103 = vadd.xlane.f32.xlu0 %v1072
    %v1104 = vpop.xlane.xlu0 %1103
    %1105 = vadd.xlane.f32.xlu0 %v1074
    %v1106 = vpop.xlane.xlu0 %1105
    %1107 = vadd.xlane.f32.xlu0 %v1076
    %v1108 = vpop.xlane.xlu0 %1107
    %1109 = vadd.xlane.f32.xlu0 %v1078
    %v1110 = vpop.xlane.xlu0 %1109
    %v1111 = vrcp.pop %v1080
    %v1112 = vrcp.pop %v1082
    %v1113 = vrcp.pop %v1084
    %v1114 = vrcp.pop %v1086
    %v1115 = vrcp.pop %v1088
    %v1116 = vrcp.pop %v1090
    %v1117 = vrcp.pop %v1092
    %v1118 = vrcp.pop %v1094
    %v1119 = vrcp.pop %v1096
    %v1120 = vrcp.pop %v1098
    %v1121 = vrcp.pop %v1100
    %v1122 = vrcp.pop %v1102
    %v1123 = vrcp.pop %v1104
    %v1124 = vrcp.pop %v1106
    %v1125 = vrcp.pop %v1108
    %v1126 = vrcp.pop %v1110
    %v1127 = vmul.f32 %v1048, %v1111
    %v1128 = vmul.f32 %v1050, %v1112
    %v1129 = vmul.f32 %v1052, %v1113
    %v1130 = vmul.f32 %v1054, %v1114
    %v1131 = vmul.f32 %v1056, %v1115
    %v1132 = vmul.f32 %v1058, %v1116
    %v1133 = vmul.f32 %v1060, %v1117
    %v1134 = vmul.f32 %v1062, %v1118
    %v1135 = vmul.f32 %v1064, %v1119
    %v1136 = vmul.f32 %v1066, %v1120
    %v1137 = vmul.f32 %v1068, %v1121
    %v1138 = vmul.f32 %v1070, %v1122
    %v1139 = vmul.f32 %v1072, %v1123
    %v1140 = vmul.f32 %v1074, %v1124
    %v1141 = vmul.f32 %v1076, %v1125
    %v1142 = vmul.f32 %v1078, %v1126
    %v1143 = vpack.c.bf16 %v1128, %v1127
    %v1144 = vpack.c.bf16 %v1130, %v1129
    %v1145 = vpack.c.bf16 %v1132, %v1131
    %v1146 = vpack.c.bf16 %v1134, %v1133
    %v1147 = vpack.c.bf16 %v1136, %v1135
    %v1148 = vpack.c.bf16 %v1138, %v1137
    %v1149 = vpack.c.bf16 %v1140, %v1139
    %v1150 = vpack.c.bf16 %v1142, %v1141
    %1151 = vrot.lane.b32.xlu0 %v205, 56
    %v1152 = vpop.permute.xlu0 %1151
    %1153 = vrot.lane.b32.xlu0 %v206, 56
    %v1154 = vpop.permute.xlu0 %1153
    %1155 = vrot.lane.b32.xlu0 %v207, 56
    %v1156 = vpop.permute.xlu0 %1155
    %1157 = vrot.lane.b32.xlu0 %v208, 56
    %v1158 = vpop.permute.xlu0 %1157
    %1159 = vrot.lane.b32.xlu0 %v209, 56
    %v1160 = vpop.permute.xlu0 %1159
    %1161 = vrot.lane.b32.xlu0 %v210, 56
    %v1162 = vpop.permute.xlu0 %1161
    %1163 = vrot.lane.b32.xlu0 %v211, 56
    %v1164 = vpop.permute.xlu0 %1163
    %1165 = vrot.lane.b32.xlu0 %v212, 56
    %v1166 = vpop.permute.xlu0 %1165
    %1175 = vmatprep.subr.bf16.mxu0 0
    %1176 = vmatpush1.bf16.msra.mxu0 %v1152
    %1177 = vmatprep.subr.bf16.mxu0 0
    %1178 = vmatpush1.bf16.msra.mxu0 %v1154
    %1179 = vmatprep.subr.bf16.mxu0 0
    %1180 = vmatpush1.bf16.msra.mxu0 %v1156
    %1181 = vmatprep.subr.bf16.mxu0 0
    %1182 = vmatpush1.bf16.msra.mxu0 %v1158
    %1183 = vmatprep.subr.bf16.mxu0 0
    %1184 = vmatpush1.bf16.msra.mxu0 %v1160
    %1185 = vmatprep.subr.bf16.mxu0 0
    %1186 = vmatpush1.bf16.msra.mxu0 %v1162
    %1187 = vmatprep.subr.bf16.mxu0 0
    %1188 = vmatpush1.bf16.msra.mxu0 %v1164
    %1189 = vmatprep.subr.bf16.mxu0 0
    %1190 = vmatpush1.bf16.msra.mxu0 %v1166
    %1191 = vmatprep.subr.bf16.mxu0 0
    %1192 = vmatpush1.bf16.msra.mxu0 0
    %1193 = vmatprep.subr.bf16.mxu0 0
    %1194 = vmatpush1.bf16.msra.mxu0 0
    %1195 = vmatprep.subr.bf16.mxu0 0
    %1196 = vmatpush1.bf16.msra.mxu0 0
    %1197 = vmatprep.subr.bf16.mxu0 0
    %1198 = vmatpush1.bf16.msra.mxu0 0
    %1199 = vmatprep.subr.bf16.mxu0 0
    %1200 = vmatpush1.bf16.msra.mxu0 0
    %1201 = vmatprep.subr.bf16.mxu0 0
    %1202 = vmatpush1.bf16.msra.mxu0 0
    %1203 = vmatprep.subr.bf16.mxu0 0
    %1204 = vmatpush1.bf16.msra.mxu0 0
    %1205 = vmatprep.subr.bf16.mxu0 0
    %1206 = vmatpush1.bf16.msra.mxu0 0
    %1207 = vmatprep.mubr.bf16.mxu0 0
    %1208 = vmatmul.mubr.bf16.gmra.mrb[0].mxu0 %v1143
    %v1209 = vpop.f32.mrb[0].mxu0
    %v1210 = vadd.f32 0.0, %v1209
    %v1211 = vpop.f32.mrb[0].mxu0
    %v1212 = vpop.f32.mrb[0].mxu0
    %v1213 = vadd.f32 0.0, %v1212
    %v1214 = vpop.f32.mrb[0].mxu0
    %1215 = vmatprep.mubr.bf16.mxu0 0
    %1216 = vmatmul.mubr.bf16.gmra.mrb[0].mxu0 %v1144
    %v1217 = vpop.f32.mrb[0].mxu0
    %v1218 = vadd.f32 0.0, %v1217
    %v1219 = vpop.f32.mrb[0].mxu0
    %v1220 = vpop.f32.mrb[0].mxu0
    %v1221 = vadd.f32 0.0, %v1220
    %v1222 = vpop.f32.mrb[0].mxu0
    %1223 = vmatprep.mubr.bf16.mxu0 0
    %1224 = vmatmul.mubr.bf16.gmra.mrb[0].mxu0 %v1145
    %v1225 = vpop.f32.mrb[0].mxu0
    %v1226 = vadd.f32 0.0, %v1225
    %v1227 = vpop.f32.mrb[0].mxu0
    %v1228 = vpop.f32.mrb[0].mxu0
    %v1229 = vadd.f32 0.0, %v1228
    %v1230 = vpop.f32.mrb[0].mxu0
    %1231 = vmatprep.mubr.bf16.mxu0 0
    %1232 = vmatmul.mubr.bf16.gmra.mrb[0].mxu0 %v1146
    %v1233 = vpop.f32.mrb[0].mxu0
    %v1234 = vadd.f32 0.0, %v1233
    %v1235 = vpop.f32.mrb[0].mxu0
    %v1236 = vpop.f32.mrb[0].mxu0
    %v1237 = vadd.f32 0.0, %v1236
    %v1238 = vpop.f32.mrb[0].mxu0
    %1239 = vmatprep.mubr.bf16.mxu0 0
    %1240 = vmatmul.mubr.bf16.gmra.mrb[0].mxu0 %v1147
    %v1241 = vpop.f32.mrb[0].mxu0
    %v1242 = vadd.f32 0.0, %v1241
    %v1243 = vpop.f32.mrb[0].mxu0
    %v1244 = vpop.f32.mrb[0].mxu0
    %v1245 = vadd.f32 0.0, %v1244
    %v1246 = vpop.f32.mrb[0].mxu0
    %1247 = vmatprep.mubr.bf16.mxu0 0
    %1248 = vmatmul.mubr.bf16.gmra.mrb[0].mxu0 %v1148
    %v1249 = vpop.f32.mrb[0].mxu0
    %v1250 = vadd.f32 0.0, %v1249
    %v1251 = vpop.f32.mrb[0].mxu0
    %v1252 = vpop.f32.mrb[0].mxu0
    %v1253 = vadd.f32 0.0, %v1252
    %v1254 = vpop.f32.mrb[0].mxu0
    %1255 = vmatprep.mubr.bf16.mxu0 0
    %1256 = vmatmul.mubr.bf16.gmra.mrb[0].mxu0 %v1149
    %v1257 = vpop.f32.mrb[0].mxu0
    %v1258 = vadd.f32 0.0, %v1257
    %v1259 = vpop.f32.mrb[0].mxu0
    %v1260 = vpop.f32.mrb[0].mxu0
    %v1261 = vadd.f32 0.0, %v1260
    %v1262 = vpop.f32.mrb[0].mxu0
    %1263 = vmatprep.mubr.bf16.mxu0 0
    %1264 = vmatmul.mubr.bf16.gmra.mrb[0].mxu0 %v1150
    %v1265 = vpop.f32.mrb[0].mxu0
    %v1266 = vadd.f32 0.0, %v1265
    %v1267 = vpop.f32.mrb[0].mxu0
    %v1268 = vpop.f32.mrb[0].mxu0
    %v1269 = vadd.f32 0.0, %v1268
    %v1270 = vpop.f32.mrb[0].mxu0
    %1271 = vdwg.mxu0
    %v1272 = vpack.c.bf16 %v1213, %v1210
    %v1273 = vpack.c.bf16 %v1221, %v1218
    %v1274 = vpack.c.bf16 %v1229, %v1226
    %v1275 = vpack.c.bf16 %v1237, %v1234
    %v1276 = vpack.c.bf16 %v1245, %v1242
    %v1277 = vpack.c.bf16 %v1253, %v1250
    %v1278 = vpack.c.bf16 %v1261, %v1258
    %v1279 = vpack.c.bf16 %v1269, %v1266
    %v1280 = vld [vmem:[%s5 + $0x4] sm:$0xf]
    %v1282 = vsel %vm253, %v1272, 0
    %v1285 = vsel %vm253, %v1273, 0
    %v1288 = vsel %vm253, %v1274, 0
    %v1291 = vsel %vm253, %v1275, 0
    %v1294 = vsel %vm253, %v1276, 0
    %v1297 = vsel %vm253, %v1277, 0
    %v1300 = vsel %vm253, %v1278, 0
    %v1303 = vsel %vm253, %v1279, 0
    %v1306 = vsel %vm705, %v1280, 0
    %1308 = vmatprep.subr.bf16.mxu0 0
    %1309 = vmatpush1.bf16.msra.mxu0 %v1306
    %1310 = vmatprep.subr.bf16.mxu0 0
    %1311 = vmatpush1.bf16.msra.mxu0 0
    %1312 = vmatprep.subr.bf16.mxu0 0
    %1313 = vmatpush1.bf16.msra.mxu0 0
    %1314 = vmatprep.subr.bf16.mxu0 0
    %1315 = vmatpush1.bf16.msra.mxu0 0
    %1316 = vmatprep.subr.bf16.mxu0 0
    %1317 = vmatpush1.bf16.msra.mxu0 0
    %1318 = vmatprep.subr.bf16.mxu0 0
    %1319 = vmatpush1.bf16.msra.mxu0 0
    %1320 = vmatprep.subr.bf16.mxu0 0
    %1321 = vmatpush1.bf16.msra.mxu0 0
    %1322 = vmatprep.subr.bf16.mxu0 0
    %1323 = vmatpush1.bf16.msra.mxu0 0
    %1324 = vmatprep.subr.bf16.mxu0 0
    %1325 = vmatpush1.bf16.msra.mxu0 0
    %1326 = vmatprep.subr.bf16.mxu0 0
    %1327 = vmatpush1.bf16.msra.mxu0 0
    %1328 = vmatprep.subr.bf16.mxu0 0
    %1329 = vmatpush1.bf16.msra.mxu0 0
    %1330 = vmatprep.subr.bf16.mxu0 0
    %1331 = vmatpush1.bf16.msra.mxu0 0
    %1332 = vmatprep.subr.bf16.mxu0 0
    %1333 = vmatpush1.bf16.msra.mxu0 0
    %1334 = vmatprep.subr.bf16.mxu0 0
    %1335 = vmatpush1.bf16.msra.mxu0 0
    %1336 = vmatprep.subr.bf16.mxu0 0
    %1337 = vmatpush1.bf16.msra.mxu0 0
    %1338 = vmatprep.subr.bf16.mxu0 0
    %1339 = vmatpush1.bf16.msra.mxu0 0
    %1340 = vmatprep.mubr.bf16.mxu0 0
    %1341 = vmatmul.mubr.bf16.gmra.mrb[0].mxu0 %v1282
    %v1342 = vpop.f32.mrb[0].mxu0
    %v1343 = vadd.f32 0.0, %v1342
    %v1344 = vpop.f32.mrb[0].mxu0
    %v1345 = vpop.f32.mrb[0].mxu0
    %v1346 = vadd.f32 0.0, %v1345
    %v1347 = vpop.f32.mrb[0].mxu0
    %1348 = vmatprep.mubr.bf16.mxu0 0
    %1349 = vmatmul.mubr.bf16.gmra.mrb[0].mxu0 %v1285
    %v1350 = vpop.f32.mrb[0].mxu0
    %v1351 = vadd.f32 0.0, %v1350
    %v1352 = vpop.f32.mrb[0].mxu0
    %v1353 = vpop.f32.mrb[0].mxu0
    %v1354 = vadd.f32 0.0, %v1353
    %v1355 = vpop.f32.mrb[0].mxu0
    %1356 = vmatprep.mubr.bf16.mxu0 0
    %1357 = vmatmul.mubr.bf16.gmra.mrb[0].mxu0 %v1288
    %v1358 = vpop.f32.mrb[0].mxu0
    %v1359 = vadd.f32 0.0, %v1358
    %v1360 = vpop.f32.mrb[0].mxu0
    %v1361 = vpop.f32.mrb[0].mxu0
    %v1362 = vadd.f32 0.0, %v1361
    %v1363 = vpop.f32.mrb[0].mxu0
    %1364 = vmatprep.mubr.bf16.mxu0 0
    %1365 = vmatmul.mubr.bf16.gmra.mrb[0].mxu0 %v1291
    %v1366 = vpop.f32.mrb[0].mxu0
    %v1367 = vadd.f32 0.0, %v1366
    %v1368 = vpop.f32.mrb[0].mxu0
    %v1369 = vpop.f32.mrb[0].mxu0
    %v1370 = vadd.f32 0.0, %v1369
    %v1371 = vpop.f32.mrb[0].mxu0
    %1372 = vmatprep.mubr.bf16.mxu0 0
    %1373 = vmatmul.mubr.bf16.gmra.mrb[0].mxu0 %v1294
    %v1374 = vpop.f32.mrb[0].mxu0
    %v1375 = vadd.f32 0.0, %v1374
    %v1376 = vpop.f32.mrb[0].mxu0
    %v1377 = vpop.f32.mrb[0].mxu0
    %v1378 = vadd.f32 0.0, %v1377
    %v1379 = vpop.f32.mrb[0].mxu0
    %1380 = vmatprep.mubr.bf16.mxu0 0
    %1381 = vmatmul.mubr.bf16.gmra.mrb[0].mxu0 %v1297
    %v1382 = vpop.f32.mrb[0].mxu0
    %v1383 = vadd.f32 0.0, %v1382
    %v1384 = vpop.f32.mrb[0].mxu0
    %v1385 = vpop.f32.mrb[0].mxu0
    %v1386 = vadd.f32 0.0, %v1385
    %v1387 = vpop.f32.mrb[0].mxu0
    %1388 = vmatprep.mubr.bf16.mxu0 0
    %1389 = vmatmul.mubr.bf16.gmra.mrb[0].mxu0 %v1300
    %v1390 = vpop.f32.mrb[0].mxu0
    %v1391 = vadd.f32 0.0, %v1390
    %v1392 = vpop.f32.mrb[0].mxu0
    %v1393 = vpop.f32.mrb[0].mxu0
    %v1394 = vadd.f32 0.0, %v1393
    %v1395 = vpop.f32.mrb[0].mxu0
    %1396 = vmatprep.mubr.bf16.mxu0 0
    %1397 = vmatmul.mubr.bf16.gmra.mrb[0].mxu0 %v1303
    %v1398 = vpop.f32.mrb[0].mxu0
    %v1399 = vadd.f32 0.0, %v1398
    %v1400 = vpop.f32.mrb[0].mxu0
    %v1401 = vpop.f32.mrb[0].mxu0
    %v1402 = vadd.f32 0.0, %v1401
    %v1403 = vpop.f32.mrb[0].mxu0
    %1404 = vdwg.mxu0
    %v1405 = vadd.f32 %v806, %v1343
    %v1406 = vadd.f32 %v807, %v1346
    %v1407 = vadd.f32 %v808, %v1351
    %v1408 = vadd.f32 %v809, %v1354
    %v1409 = vadd.f32 %v810, %v1359
    %v1410 = vadd.f32 %v811, %v1362
    %v1411 = vadd.f32 %v812, %v1367
    %v1412 = vadd.f32 %v813, %v1370
    %v1413 = vadd.f32 %v814, %v1375
    %v1414 = vadd.f32 %v815, %v1378
    %v1415 = vadd.f32 %v816, %v1383
    %v1416 = vadd.f32 %v817, %v1386
    %v1417 = vadd.f32 %v818, %v1391
    %v1418 = vadd.f32 %v819, %v1394
    %v1419 = vadd.f32 %v820, %v1399
    %v1420 = vadd.f32 %v821, %v1402
    %1421 = vrot.lane.b32.xlu0 %v205, 112
    %v1422 = vpop.permute.xlu0 %1421
    %1423 = vrot.lane.b32.xlu0 %v206, 112
    %v1424 = vpop.permute.xlu0 %1423
    %1425 = vrot.lane.b32.xlu0 %v207, 112
    %v1426 = vpop.permute.xlu0 %1425
    %1427 = vrot.lane.b32.xlu0 %v208, 112
    %v1428 = vpop.permute.xlu0 %1427
    %1429 = vrot.lane.b32.xlu0 %v209, 112
    %v1430 = vpop.permute.xlu0 %1429
    %1431 = vrot.lane.b32.xlu0 %v210, 112
    %v1432 = vpop.permute.xlu0 %1431
    %1433 = vrot.lane.b32.xlu0 %v211, 112
    %v1434 = vpop.permute.xlu0 %1433
    %1435 = vrot.lane.b32.xlu0 %v212, 112
    %v1436 = vpop.permute.xlu0 %1435
    %1437 = vrot.lane.b32.xlu0 %v205, 80
    %v1438 = vpop.permute.xlu0 %1437
    %1439 = vrot.lane.b32.xlu0 %v206, 80
    %v1440 = vpop.permute.xlu0 %1439
    %1441 = vrot.lane.b32.xlu0 %v207, 80
    %v1442 = vpop.permute.xlu0 %1441
    %1443 = vrot.lane.b32.xlu0 %v208, 80
    %v1444 = vpop.permute.xlu0 %1443
    %1445 = vrot.lane.b32.xlu0 %v209, 80
    %v1446 = vpop.permute.xlu0 %1445
    %1447 = vrot.lane.b32.xlu0 %v210, 80
    %v1448 = vpop.permute.xlu0 %1447
    %1449 = vrot.lane.b32.xlu0 %v211, 80
    %v1450 = vpop.permute.xlu0 %1449
    %1451 = vrot.lane.b32.xlu0 %v212, 80
    %v1452 = vpop.permute.xlu0 %1451
    %v1454 = vsel %vm253, %v1422, 0
    %v1457 = vsel %vm253, %v1424, 0
    %v1460 = vsel %vm253, %v1426, 0
    %v1463 = vsel %vm253, %v1428, 0
    %v1466 = vsel %vm253, %v1430, 0
    %v1469 = vsel %vm253, %v1432, 0
    %v1472 = vsel %vm253, %v1434, 0
    %v1475 = vsel %vm253, %v1436, 0
    %v1478 = vsel %vm253, %v1438, 0
    %v1481 = vsel %vm253, %v1440, 0
    %v1484 = vsel %vm253, %v1442, 0
    %v1487 = vsel %vm253, %v1444, 0
    %v1490 = vsel %vm253, %v1446, 0
    %v1493 = vsel %vm253, %v1448, 0
    %v1496 = vsel %vm253, %v1450, 0
    %v1499 = vsel %vm253, %v1452, 0
    %1501 = vmatprep.subr.bf16.mxu0 0
    %1502 = vmatpush1.bf16.xpose.msra.mxu0 %v1478
    %1503 = vmatprep.subr.bf16.mxu0 0
    %1504 = vmatpush1.bf16.xpose.msra.mxu0 %v1481
    %1505 = vmatprep.subr.bf16.mxu0 0
    %1506 = vmatpush1.bf16.xpose.msra.mxu0 %v1484
    %1507 = vmatprep.subr.bf16.mxu0 0
    %1508 = vmatpush1.bf16.xpose.msra.mxu0 %v1487
    %1509 = vmatprep.subr.bf16.mxu0 0
    %1510 = vmatpush1.bf16.xpose.msra.mxu0 %v1490
    %1511 = vmatprep.subr.bf16.mxu0 0
    %1512 = vmatpush1.bf16.xpose.msra.mxu0 %v1493
    %1513 = vmatprep.subr.bf16.mxu0 0
    %1514 = vmatpush1.bf16.xpose.msra.mxu0 %v1496
    %1515 = vmatprep.subr.bf16.mxu0 0
    %1516 = vmatpush1.bf16.xpose.msra.mxu0 %v1499
    %1517 = vmatprep.subr.bf16.mxu0 0
    %1518 = vmatpush1.bf16.xpose.msra.mxu0 0
    %1519 = vmatprep.subr.bf16.mxu0 0
    %1520 = vmatpush1.bf16.xpose.msra.mxu0 0
    %1521 = vmatprep.subr.bf16.mxu0 0
    %1522 = vmatpush1.bf16.xpose.msra.mxu0 0
    %1523 = vmatprep.subr.bf16.mxu0 0
    %1524 = vmatpush1.bf16.xpose.msra.mxu0 0
    %1525 = vmatprep.subr.bf16.mxu0 0
    %1526 = vmatpush1.bf16.xpose.msra.mxu0 0
    %1527 = vmatprep.subr.bf16.mxu0 0
    %1528 = vmatpush1.bf16.xpose.msra.mxu0 0
    %1529 = vmatprep.subr.bf16.mxu0 0
    %1530 = vmatpush1.bf16.xpose.msra.mxu0 0
    %1531 = vmatprep.subr.bf16.mxu0 0
    %1532 = vmatpush1.bf16.xpose.msra.mxu0 0
    %1533 = vmatprep.mubr.bf16.mxu0 0
    %1534 = vmatmul.mubr.bf16.gmra.mrb[0].mxu0 %v1454
    %v1535 = vpop.f32.mrb[0].mxu0
    %v1536 = vadd.f32 %v213, %v1535
    %v1537 = vpop.f32.mrb[0].mxu0
    %v1538 = vpop.f32.mrb[0].mxu0
    %v1539 = vadd.f32 %v214, %v1538
    %v1540 = vpop.f32.mrb[0].mxu0
    %1541 = vmatprep.mubr.bf16.mxu0 0
    %1542 = vmatmul.mubr.bf16.gmra.mrb[0].mxu0 %v1457
    %v1543 = vpop.f32.mrb[0].mxu0
    %v1544 = vadd.f32 %v215, %v1543
    %v1545 = vpop.f32.mrb[0].mxu0
    %v1546 = vpop.f32.mrb[0].mxu0
    %v1547 = vadd.f32 %v216, %v1546
    %v1548 = vpop.f32.mrb[0].mxu0
    %1549 = vmatprep.mubr.bf16.mxu0 0
    %1550 = vmatmul.mubr.bf16.gmra.mrb[0].mxu0 %v1460
    %v1551 = vpop.f32.mrb[0].mxu0
    %v1552 = vadd.f32 %v217, %v1551
    %v1553 = vpop.f32.mrb[0].mxu0
    %v1554 = vpop.f32.mrb[0].mxu0
    %v1555 = vadd.f32 %v218, %v1554
    %v1556 = vpop.f32.mrb[0].mxu0
    %1557 = vmatprep.mubr.bf16.mxu0 0
    %1558 = vmatmul.mubr.bf16.gmra.mrb[0].mxu0 %v1463
    %v1559 = vpop.f32.mrb[0].mxu0
    %v1560 = vadd.f32 %v219, %v1559
    %v1561 = vpop.f32.mrb[0].mxu0
    %v1562 = vpop.f32.mrb[0].mxu0
    %v1563 = vadd.f32 %v220, %v1562
    %v1564 = vpop.f32.mrb[0].mxu0
    %1565 = vmatprep.mubr.bf16.mxu0 0
    %1566 = vmatmul.mubr.bf16.gmra.mrb[0].mxu0 %v1466
    %v1567 = vpop.f32.mrb[0].mxu0
    %v1568 = vadd.f32 %v221, %v1567
    %v1569 = vpop.f32.mrb[0].mxu0
    %v1570 = vpop.f32.mrb[0].mxu0
    %v1571 = vadd.f32 %v222, %v1570
    %v1572 = vpop.f32.mrb[0].mxu0
    %1573 = vmatprep.mubr.bf16.mxu0 0
    %1574 = vmatmul.mubr.bf16.gmra.mrb[0].mxu0 %v1469
    %v1575 = vpop.f32.mrb[0].mxu0
    %v1576 = vadd.f32 %v223, %v1575
    %v1577 = vpop.f32.mrb[0].mxu0
    %v1578 = vpop.f32.mrb[0].mxu0
    %v1579 = vadd.f32 %v224, %v1578
    %v1580 = vpop.f32.mrb[0].mxu0
    %1581 = vmatprep.mubr.bf16.mxu0 0
    %1582 = vmatmul.mubr.bf16.gmra.mrb[0].mxu0 %v1472
    %v1583 = vpop.f32.mrb[0].mxu0
    %v1584 = vadd.f32 %v225, %v1583
    %v1585 = vpop.f32.mrb[0].mxu0
    %v1586 = vpop.f32.mrb[0].mxu0
    %v1587 = vadd.f32 %v226, %v1586
    %v1588 = vpop.f32.mrb[0].mxu0
    %1589 = vmatprep.mubr.bf16.mxu0 0
    %1590 = vmatmul.mubr.bf16.gmra.mrb[0].mxu0 %v1475
    %v1591 = vpop.f32.mrb[0].mxu0
    %v1592 = vadd.f32 %v227, %v1591
    %v1593 = vpop.f32.mrb[0].mxu0
    %v1594 = vpop.f32.mrb[0].mxu0
    %v1595 = vadd.f32 %v228, %v1594
    %v1596 = vpop.f32.mrb[0].mxu0
    %1597 = vdwg.mxu0
    %1598 = vmax.xlane.f32.xlu0 %v1536
    %v1599 = vpop.xlane.xlu0 %1598
    %1600 = vmax.xlane.f32.xlu0 %v1539
    %v1601 = vpop.xlane.xlu0 %1600
    %1602 = vmax.xlane.f32.xlu0 %v1544
    %v1603 = vpop.xlane.xlu0 %1602
    %1604 = vmax.xlane.f32.xlu0 %v1547
    %v1605 = vpop.xlane.xlu0 %1604
    %1606 = vmax.xlane.f32.xlu0 %v1552
    %v1607 = vpop.xlane.xlu0 %1606
    %1608 = vmax.xlane.f32.xlu0 %v1555
    %v1609 = vpop.xlane.xlu0 %1608
    %1610 = vmax.xlane.f32.xlu0 %v1560
    %v1611 = vpop.xlane.xlu0 %1610
    %1612 = vmax.xlane.f32.xlu0 %v1563
    %v1613 = vpop.xlane.xlu0 %1612
    %1614 = vmax.xlane.f32.xlu0 %v1568
    %v1615 = vpop.xlane.xlu0 %1614
    %1616 = vmax.xlane.f32.xlu0 %v1571
    %v1617 = vpop.xlane.xlu0 %1616
    %1618 = vmax.xlane.f32.xlu0 %v1576
    %v1619 = vpop.xlane.xlu0 %1618
    %1620 = vmax.xlane.f32.xlu0 %v1579
    %v1621 = vpop.xlane.xlu0 %1620
    %1622 = vmax.xlane.f32.xlu0 %v1584
    %v1623 = vpop.xlane.xlu0 %1622
    %1624 = vmax.xlane.f32.xlu0 %v1587
    %v1625 = vpop.xlane.xlu0 %1624
    %1626 = vmax.xlane.f32.xlu0 %v1592
    %v1627 = vpop.xlane.xlu0 %1626
    %1628 = vmax.xlane.f32.xlu0 %v1595
    %v1629 = vpop.xlane.xlu0 %1628
    %v1630 = vsub.f32 %v1536, %v1599
    %v1631 = vsub.f32 %v1539, %v1601
    %v1632 = vsub.f32 %v1544, %v1603
    %v1633 = vsub.f32 %v1547, %v1605
    %v1634 = vsub.f32 %v1552, %v1607
    %v1635 = vsub.f32 %v1555, %v1609
    %v1636 = vsub.f32 %v1560, %v1611
    %v1637 = vsub.f32 %v1563, %v1613
    %v1638 = vsub.f32 %v1568, %v1615
    %v1639 = vsub.f32 %v1571, %v1617
    %v1640 = vsub.f32 %v1576, %v1619
    %v1641 = vsub.f32 %v1579, %v1621
    %v1642 = vsub.f32 %v1584, %v1623
    %v1643 = vsub.f32 %v1587, %v1625
    %v1644 = vsub.f32 %v1592, %v1627
    %v1645 = vsub.f32 %v1595, %v1629
    %v1646 = vmul.f32 %v1630, 1.442695
    %v1647 = vpow.pop %v1646
    %v1648 = vmul.f32 %v1631, 1.442695
    %v1649 = vpow.pop %v1648
    %v1650 = vmul.f32 %v1632, 1.442695
    %v1651 = vpow.pop %v1650
    %v1652 = vmul.f32 %v1633, 1.442695
    %v1653 = vpow.pop %v1652
    %v1654 = vmul.f32 %v1634, 1.442695
    %v1655 = vpow.pop %v1654
    %v1656 = vmul.f32 %v1635, 1.442695
    %v1657 = vpow.pop %v1656
    %v1658 = vmul.f32 %v1636, 1.442695
    %v1659 = vpow.pop %v1658
    %v1660 = vmul.f32 %v1637, 1.442695
    %v1661 = vpow.pop %v1660
    %v1662 = vmul.f32 %v1638, 1.442695
    %v1663 = vpow.pop %v1662
    %v1664 = vmul.f32 %v1639, 1.442695
    %v1665 = vpow.pop %v1664
    %v1666 = vmul.f32 %v1640, 1.442695
    %v1667 = vpow.pop %v1666
    %v1668 = vmul.f32 %v1641, 1.442695
    %v1669 = vpow.pop %v1668
    %v1670 = vmul.f32 %v1642, 1.442695
    %v1671 = vpow.pop %v1670
    %v1672 = vmul.f32 %v1643, 1.442695
    %v1673 = vpow.pop %v1672
    %v1674 = vmul.f32 %v1644, 1.442695
    %v1675 = vpow.pop %v1674
    %v1676 = vmul.f32 %v1645, 1.442695
    %v1677 = vpow.pop %v1676
    %1678 = vadd.xlane.f32.xlu0 %v1647
    %v1679 = vpop.xlane.xlu0 %1678
    %1680 = vadd.xlane.f32.xlu0 %v1649
    %v1681 = vpop.xlane.xlu0 %1680
    %1682 = vadd.xlane.f32.xlu0 %v1651
    %v1683 = vpop.xlane.xlu0 %1682
    %1684 = vadd.xlane.f32.xlu0 %v1653
    %v1685 = vpop.xlane.xlu0 %1684
    %1686 = vadd.xlane.f32.xlu0 %v1655
    %v1687 = vpop.xlane.xlu0 %1686
    %1688 = vadd.xlane.f32.xlu0 %v1657
    %v1689 = vpop.xlane.xlu0 %1688
    %1690 = vadd.xlane.f32.xlu0 %v1659
    %v1691 = vpop.xlane.xlu0 %1690
    %1692 = vadd.xlane.f32.xlu0 %v1661
    %v1693 = vpop.xlane.xlu0 %1692
    %1694 = vadd.xlane.f32.xlu0 %v1663
    %v1695 = vpop.xlane.xlu0 %1694
    %1696 = vadd.xlane.f32.xlu0 %v1665
    %v1697 = vpop.xlane.xlu0 %1696
    %1698 = vadd.xlane.f32.xlu0 %v1667
    %v1699 = vpop.xlane.xlu0 %1698
    %1700 = vadd.xlane.f32.xlu0 %v1669
    %v1701 = vpop.xlane.xlu0 %1700
    %1702 = vadd.xlane.f32.xlu0 %v1671
    %v1703 = vpop.xlane.xlu0 %1702
    %1704 = vadd.xlane.f32.xlu0 %v1673
    %v1705 = vpop.xlane.xlu0 %1704
    %1706 = vadd.xlane.f32.xlu0 %v1675
    %v1707 = vpop.xlane.xlu0 %1706
    %1708 = vadd.xlane.f32.xlu0 %v1677
    %v1709 = vpop.xlane.xlu0 %1708
    %v1710 = vrcp.pop %v1679
    %v1711 = vrcp.pop %v1681
    %v1712 = vrcp.pop %v1683
    %v1713 = vrcp.pop %v1685
    %v1714 = vrcp.pop %v1687
    %v1715 = vrcp.pop %v1689
    %v1716 = vrcp.pop %v1691
    %v1717 = vrcp.pop %v1693
    %v1718 = vrcp.pop %v1695
    %v1719 = vrcp.pop %v1697
    %v1720 = vrcp.pop %v1699
    %v1721 = vrcp.pop %v1701
    %v1722 = vrcp.pop %v1703
    %v1723 = vrcp.pop %v1705
    %v1724 = vrcp.pop %v1707
    %v1725 = vrcp.pop %v1709
    %v1726 = vmul.f32 %v1647, %v1710
    %v1727 = vmul.f32 %v1649, %v1711
    %v1728 = vmul.f32 %v1651, %v1712
    %v1729 = vmul.f32 %v1653, %v1713
    %v1730 = vmul.f32 %v1655, %v1714
    %v1731 = vmul.f32 %v1657, %v1715
    %v1732 = vmul.f32 %v1659, %v1716
    %v1733 = vmul.f32 %v1661, %v1717
    %v1734 = vmul.f32 %v1663, %v1718
    %v1735 = vmul.f32 %v1665, %v1719
    %v1736 = vmul.f32 %v1667, %v1720
    %v1737 = vmul.f32 %v1669, %v1721
    %v1738 = vmul.f32 %v1671, %v1722
    %v1739 = vmul.f32 %v1673, %v1723
    %v1740 = vmul.f32 %v1675, %v1724
    %v1741 = vmul.f32 %v1677, %v1725
    %v1742 = vpack.c.bf16 %v1727, %v1726
    %v1743 = vpack.c.bf16 %v1729, %v1728
    %v1744 = vpack.c.bf16 %v1731, %v1730
    %v1745 = vpack.c.bf16 %v1733, %v1732
    %v1746 = vpack.c.bf16 %v1735, %v1734
    %v1747 = vpack.c.bf16 %v1737, %v1736
    %v1748 = vpack.c.bf16 %v1739, %v1738
    %v1749 = vpack.c.bf16 %v1741, %v1740
    %1750 = vrot.lane.b32.xlu0 %v205, 48
    %v1751 = vpop.permute.xlu0 %1750
    %1752 = vrot.lane.b32.xlu0 %v206, 48
    %v1753 = vpop.permute.xlu0 %1752
    %1754 = vrot.lane.b32.xlu0 %v207, 48
    %v1755 = vpop.permute.xlu0 %1754
    %1756 = vrot.lane.b32.xlu0 %v208, 48
    %v1757 = vpop.permute.xlu0 %1756
    %1758 = vrot.lane.b32.xlu0 %v209, 48
    %v1759 = vpop.permute.xlu0 %1758
    %1760 = vrot.lane.b32.xlu0 %v210, 48
    %v1761 = vpop.permute.xlu0 %1760
    %1762 = vrot.lane.b32.xlu0 %v211, 48
    %v1763 = vpop.permute.xlu0 %1762
    %1764 = vrot.lane.b32.xlu0 %v212, 48
    %v1765 = vpop.permute.xlu0 %1764
    %1774 = vmatprep.subr.bf16.mxu0 0
    %1775 = vmatpush1.bf16.msra.mxu0 %v1751
    %1776 = vmatprep.subr.bf16.mxu0 0
    %1777 = vmatpush1.bf16.msra.mxu0 %v1753
    %1778 = vmatprep.subr.bf16.mxu0 0
    %1779 = vmatpush1.bf16.msra.mxu0 %v1755
    %1780 = vmatprep.subr.bf16.mxu0 0
    %1781 = vmatpush1.bf16.msra.mxu0 %v1757
    %1782 = vmatprep.subr.bf16.mxu0 0
    %1783 = vmatpush1.bf16.msra.mxu0 %v1759
    %1784 = vmatprep.subr.bf16.mxu0 0
    %1785 = vmatpush1.bf16.msra.mxu0 %v1761
    %1786 = vmatprep.subr.bf16.mxu0 0
    %1787 = vmatpush1.bf16.msra.mxu0 %v1763
    %1788 = vmatprep.subr.bf16.mxu0 0
    %1789 = vmatpush1.bf16.msra.mxu0 %v1765
    %1790 = vmatprep.subr.bf16.mxu0 0
    %1791 = vmatpush1.bf16.msra.mxu0 0
    %1792 = vmatprep.subr.bf16.mxu0 0
    %1793 = vmatpush1.bf16.msra.mxu0 0
    %1794 = vmatprep.subr.bf16.mxu0 0
    %1795 = vmatpush1.bf16.msra.mxu0 0
    %1796 = vmatprep.subr.bf16.mxu0 0
    %1797 = vmatpush1.bf16.msra.mxu0 0
    %1798 = vmatprep.subr.bf16.mxu0 0
    %1799 = vmatpush1.bf16.msra.mxu0 0
    %1800 = vmatprep.subr.bf16.mxu0 0
    %1801 = vmatpush1.bf16.msra.mxu0 0
    %1802 = vmatprep.subr.bf16.mxu0 0
    %1803 = vmatpush1.bf16.msra.mxu0 0
    %1804 = vmatprep.subr.bf16.mxu0 0
    %1805 = vmatpush1.bf16.msra.mxu0 0
    %1806 = vmatprep.mubr.bf16.mxu0 0
    %1807 = vmatmul.mubr.bf16.gmra.mrb[0].mxu0 %v1742
    %v1808 = vpop.f32.mrb[0].mxu0
    %v1809 = vadd.f32 0.0, %v1808
    %v1810 = vpop.f32.mrb[0].mxu0
    %v1811 = vpop.f32.mrb[0].mxu0
    %v1812 = vadd.f32 0.0, %v1811
    %v1813 = vpop.f32.mrb[0].mxu0
    %1814 = vmatprep.mubr.bf16.mxu0 0
    %1815 = vmatmul.mubr.bf16.gmra.mrb[0].mxu0 %v1743
    %v1816 = vpop.f32.mrb[0].mxu0
    %v1817 = vadd.f32 0.0, %v1816
    %v1818 = vpop.f32.mrb[0].mxu0
    %v1819 = vpop.f32.mrb[0].mxu0
    %v1820 = vadd.f32 0.0, %v1819
    %v1821 = vpop.f32.mrb[0].mxu0
    %1822 = vmatprep.mubr.bf16.mxu0 0
    %1823 = vmatmul.mubr.bf16.gmra.mrb[0].mxu0 %v1744
    %v1824 = vpop.f32.mrb[0].mxu0
    %v1825 = vadd.f32 0.0, %v1824
    %v1826 = vpop.f32.mrb[0].mxu0
    %v1827 = vpop.f32.mrb[0].mxu0
    %v1828 = vadd.f32 0.0, %v1827
    %v1829 = vpop.f32.mrb[0].mxu0
    %1830 = vmatprep.mubr.bf16.mxu0 0
    %1831 = vmatmul.mubr.bf16.gmra.mrb[0].mxu0 %v1745
    %v1832 = vpop.f32.mrb[0].mxu0
    %v1833 = vadd.f32 0.0, %v1832
    %v1834 = vpop.f32.mrb[0].mxu0
    %v1835 = vpop.f32.mrb[0].mxu0
    %v1836 = vadd.f32 0.0, %v1835
    %v1837 = vpop.f32.mrb[0].mxu0
    %1838 = vmatprep.mubr.bf16.mxu0 0
    %1839 = vmatmul.mubr.bf16.gmra.mrb[0].mxu0 %v1746
    %v1840 = vpop.f32.mrb[0].mxu0
    %v1841 = vadd.f32 0.0, %v1840
    %v1842 = vpop.f32.mrb[0].mxu0
    %v1843 = vpop.f32.mrb[0].mxu0
    %v1844 = vadd.f32 0.0, %v1843
    %v1845 = vpop.f32.mrb[0].mxu0
    %1846 = vmatprep.mubr.bf16.mxu0 0
    %1847 = vmatmul.mubr.bf16.gmra.mrb[0].mxu0 %v1747
    %v1848 = vpop.f32.mrb[0].mxu0
    %v1849 = vadd.f32 0.0, %v1848
    %v1850 = vpop.f32.mrb[0].mxu0
    %v1851 = vpop.f32.mrb[0].mxu0
    %v1852 = vadd.f32 0.0, %v1851
    %v1853 = vpop.f32.mrb[0].mxu0
    %1854 = vmatprep.mubr.bf16.mxu0 0
    %1855 = vmatmul.mubr.bf16.gmra.mrb[0].mxu0 %v1748
    %v1856 = vpop.f32.mrb[0].mxu0
    %v1857 = vadd.f32 0.0, %v1856
    %v1858 = vpop.f32.mrb[0].mxu0
    %v1859 = vpop.f32.mrb[0].mxu0
    %v1860 = vadd.f32 0.0, %v1859
    %v1861 = vpop.f32.mrb[0].mxu0
    %1862 = vmatprep.mubr.bf16.mxu0 0
    %1863 = vmatmul.mubr.bf16.gmra.mrb[0].mxu0 %v1749
    %v1864 = vpop.f32.mrb[0].mxu0
    %v1865 = vadd.f32 0.0, %v1864
    %v1866 = vpop.f32.mrb[0].mxu0
    %v1867 = vpop.f32.mrb[0].mxu0
    %v1868 = vadd.f32 0.0, %v1867
    %v1869 = vpop.f32.mrb[0].mxu0
    %1870 = vdwg.mxu0
    %v1871 = vpack.c.bf16 %v1812, %v1809
    %v1872 = vpack.c.bf16 %v1820, %v1817
    %v1873 = vpack.c.bf16 %v1828, %v1825
    %v1874 = vpack.c.bf16 %v1836, %v1833
    %v1875 = vpack.c.bf16 %v1844, %v1841
    %v1876 = vpack.c.bf16 %v1852, %v1849
    %v1877 = vpack.c.bf16 %v1860, %v1857
    %v1878 = vpack.c.bf16 %v1868, %v1865
    %v1879 = vld [vmem:[%s5 + $0x8] sm:$0xf]
    %v1881 = vsel %vm253, %v1871, 0
    %v1884 = vsel %vm253, %v1872, 0
    %v1887 = vsel %vm253, %v1873, 0
    %v1890 = vsel %vm253, %v1874, 0
    %v1893 = vsel %vm253, %v1875, 0
    %v1896 = vsel %vm253, %v1876, 0
    %v1899 = vsel %vm253, %v1877, 0
    %v1902 = vsel %vm253, %v1878, 0
    %v1905 = vsel %vm705, %v1879, 0
    %1907 = vmatprep.subr.bf16.mxu0 0
    %1908 = vmatpush1.bf16.msra.mxu0 %v1905
    %1909 = vmatprep.subr.bf16.mxu0 0
    %1910 = vmatpush1.bf16.msra.mxu0 0
    %1911 = vmatprep.subr.bf16.mxu0 0
    %1912 = vmatpush1.bf16.msra.mxu0 0
    %1913 = vmatprep.subr.bf16.mxu0 0
    %1914 = vmatpush1.bf16.msra.mxu0 0
    %1915 = vmatprep.subr.bf16.mxu0 0
    %1916 = vmatpush1.bf16.msra.mxu0 0
    %1917 = vmatprep.subr.bf16.mxu0 0
    %1918 = vmatpush1.bf16.msra.mxu0 0
    %1919 = vmatprep.subr.bf16.mxu0 0
    %1920 = vmatpush1.bf16.msra.mxu0 0
    %1921 = vmatprep.subr.bf16.mxu0 0
    %1922 = vmatpush1.bf16.msra.mxu0 0
    %1923 = vmatprep.subr.bf16.mxu0 0
    %1924 = vmatpush1.bf16.msra.mxu0 0
    %1925 = vmatprep.subr.bf16.mxu0 0
    %1926 = vmatpush1.bf16.msra.mxu0 0
    %1927 = vmatprep.subr.bf16.mxu0 0
    %1928 = vmatpush1.bf16.msra.mxu0 0
    %1929 = vmatprep.subr.bf16.mxu0 0
    %1930 = vmatpush1.bf16.msra.mxu0 0
    %1931 = vmatprep.subr.bf16.mxu0 0
    %1932 = vmatpush1.bf16.msra.mxu0 0
    %1933 = vmatprep.subr.bf16.mxu0 0
    %1934 = vmatpush1.bf16.msra.mxu0 0
    %1935 = vmatprep.subr.bf16.mxu0 0
    %1936 = vmatpush1.bf16.msra.mxu0 0
    %1937 = vmatprep.subr.bf16.mxu0 0
    %1938 = vmatpush1.bf16.msra.mxu0 0
    %1939 = vmatprep.mubr.bf16.mxu0 0
    %1940 = vmatmul.mubr.bf16.gmra.mrb[0].mxu0 %v1881
    %v1941 = vpop.f32.mrb[0].mxu0
    %v1942 = vadd.f32 0.0, %v1941
    %v1943 = vpop.f32.mrb[0].mxu0
    %v1944 = vpop.f32.mrb[0].mxu0
    %v1945 = vadd.f32 0.0, %v1944
    %v1946 = vpop.f32.mrb[0].mxu0
    %1947 = vmatprep.mubr.bf16.mxu0 0
    %1948 = vmatmul.mubr.bf16.gmra.mrb[0].mxu0 %v1884
    %v1949 = vpop.f32.mrb[0].mxu0
    %v1950 = vadd.f32 0.0, %v1949
    %v1951 = vpop.f32.mrb[0].mxu0
    %v1952 = vpop.f32.mrb[0].mxu0
    %v1953 = vadd.f32 0.0, %v1952
    %v1954 = vpop.f32.mrb[0].mxu0
    %1955 = vmatprep.mubr.bf16.mxu0 0
    %1956 = vmatmul.mubr.bf16.gmra.mrb[0].mxu0 %v1887
    %v1957 = vpop.f32.mrb[0].mxu0
    %v1958 = vadd.f32 0.0, %v1957
    %v1959 = vpop.f32.mrb[0].mxu0
    %v1960 = vpop.f32.mrb[0].mxu0
    %v1961 = vadd.f32 0.0, %v1960
    %v1962 = vpop.f32.mrb[0].mxu0
    %1963 = vmatprep.mubr.bf16.mxu0 0
    %1964 = vmatmul.mubr.bf16.gmra.mrb[0].mxu0 %v1890
    %v1965 = vpop.f32.mrb[0].mxu0
    %v1966 = vadd.f32 0.0, %v1965
    %v1967 = vpop.f32.mrb[0].mxu0
    %v1968 = vpop.f32.mrb[0].mxu0
    %v1969 = vadd.f32 0.0, %v1968
    %v1970 = vpop.f32.mrb[0].mxu0
    %1971 = vmatprep.mubr.bf16.mxu0 0
    %1972 = vmatmul.mubr.bf16.gmra.mrb[0].mxu0 %v1893
    %v1973 = vpop.f32.mrb[0].mxu0
    %v1974 = vadd.f32 0.0, %v1973
    %v1975 = vpop.f32.mrb[0].mxu0
    %v1976 = vpop.f32.mrb[0].mxu0
    %v1977 = vadd.f32 0.0, %v1976
    %v1978 = vpop.f32.mrb[0].mxu0
    %1979 = vmatprep.mubr.bf16.mxu0 0
    %1980 = vmatmul.mubr.bf16.gmra.mrb[0].mxu0 %v1896
    %v1981 = vpop.f32.mrb[0].mxu0
    %v1982 = vadd.f32 0.0, %v1981
    %v1983 = vpop.f32.mrb[0].mxu0
    %v1984 = vpop.f32.mrb[0].mxu0
    %v1985 = vadd.f32 0.0, %v1984
    %v1986 = vpop.f32.mrb[0].mxu0
    %1987 = vmatprep.mubr.bf16.mxu0 0
    %1988 = vmatmul.mubr.bf16.gmra.mrb[0].mxu0 %v1899
    %v1989 = vpop.f32.mrb[0].mxu0
    %v1990 = vadd.f32 0.0, %v1989
    %v1991 = vpop.f32.mrb[0].mxu0
    %v1992 = vpop.f32.mrb[0].mxu0
    %v1993 = vadd.f32 0.0, %v1992
    %v1994 = vpop.f32.mrb[0].mxu0
    %1995 = vmatprep.mubr.bf16.mxu0 0
    %1996 = vmatmul.mubr.bf16.gmra.mrb[0].mxu0 %v1902
    %v1997 = vpop.f32.mrb[0].mxu0
    %v1998 = vadd.f32 0.0, %v1997
    %v1999 = vpop.f32.mrb[0].mxu0
    %v2000 = vpop.f32.mrb[0].mxu0
    %v2001 = vadd.f32 0.0, %v2000
    %v2002 = vpop.f32.mrb[0].mxu0
    %2003 = vdwg.mxu0
    %v2004 = vadd.f32 %v1405, %v1942
    %v2005 = vadd.f32 %v1406, %v1945
    %v2006 = vadd.f32 %v1407, %v1950
    %v2007 = vadd.f32 %v1408, %v1953
    %v2008 = vadd.f32 %v1409, %v1958
    %v2009 = vadd.f32 %v1410, %v1961
    %v2010 = vadd.f32 %v1411, %v1966
    %v2011 = vadd.f32 %v1412, %v1969
    %v2012 = vadd.f32 %v1413, %v1974
    %v2013 = vadd.f32 %v1414, %v1977
    %v2014 = vadd.f32 %v1415, %v1982
    %v2015 = vadd.f32 %v1416, %v1985
    %v2016 = vadd.f32 %v1417, %v1990
    %v2017 = vadd.f32 %v1418, %v1993
    %v2018 = vadd.f32 %v1419, %v1998
    %v2019 = vadd.f32 %v1420, %v2001
    %2020 = vrot.lane.b32.xlu0 %v205, 104
    %v2021 = vpop.permute.xlu0 %2020
    %2022 = vrot.lane.b32.xlu0 %v206, 104
    %v2023 = vpop.permute.xlu0 %2022
    %2024 = vrot.lane.b32.xlu0 %v207, 104
    %v2025 = vpop.permute.xlu0 %2024
    %2026 = vrot.lane.b32.xlu0 %v208, 104
    %v2027 = vpop.permute.xlu0 %2026
    %2028 = vrot.lane.b32.xlu0 %v209, 104
    %v2029 = vpop.permute.xlu0 %2028
    %2030 = vrot.lane.b32.xlu0 %v210, 104
    %v2031 = vpop.permute.xlu0 %2030
    %2032 = vrot.lane.b32.xlu0 %v211, 104
    %v2033 = vpop.permute.xlu0 %2032
    %2034 = vrot.lane.b32.xlu0 %v212, 104
    %v2035 = vpop.permute.xlu0 %2034
    %2036 = vrot.lane.b32.xlu0 %v205, 72
    %v2037 = vpop.permute.xlu0 %2036
    %2038 = vrot.lane.b32.xlu0 %v206, 72
    %v2039 = vpop.permute.xlu0 %2038
    %2040 = vrot.lane.b32.xlu0 %v207, 72
    %v2041 = vpop.permute.xlu0 %2040
    %2042 = vrot.lane.b32.xlu0 %v208, 72
    %v2043 = vpop.permute.xlu0 %2042
    %2044 = vrot.lane.b32.xlu0 %v209, 72
    %v2045 = vpop.permute.xlu0 %2044
    %2046 = vrot.lane.b32.xlu0 %v210, 72
    %v2047 = vpop.permute.xlu0 %2046
    %2048 = vrot.lane.b32.xlu0 %v211, 72
    %v2049 = vpop.permute.xlu0 %2048
    %2050 = vrot.lane.b32.xlu0 %v212, 72
    %v2051 = vpop.permute.xlu0 %2050
    %v2053 = vsel %vm253, %v2021, 0
    %v2056 = vsel %vm253, %v2023, 0
    %v2059 = vsel %vm253, %v2025, 0
    %v2062 = vsel %vm253, %v2027, 0
    %v2065 = vsel %vm253, %v2029, 0
    %v2068 = vsel %vm253, %v2031, 0
    %v2071 = vsel %vm253, %v2033, 0
    %v2074 = vsel %vm253, %v2035, 0
    %v2077 = vsel %vm253, %v2037, 0
    %v2080 = vsel %vm253, %v2039, 0
    %v2083 = vsel %vm253, %v2041, 0
    %v2086 = vsel %vm253, %v2043, 0
    %v2089 = vsel %vm253, %v2045, 0
    %v2092 = vsel %vm253, %v2047, 0
    %v2095 = vsel %vm253, %v2049, 0
    %v2098 = vsel %vm253, %v2051, 0
    %2100 = vmatprep.subr.bf16.mxu0 0
    %2101 = vmatpush1.bf16.xpose.msra.mxu0 %v2077
    %2102 = vmatprep.subr.bf16.mxu0 0
    %2103 = vmatpush1.bf16.xpose.msra.mxu0 %v2080
    %2104 = vmatprep.subr.bf16.mxu0 0
    %2105 = vmatpush1.bf16.xpose.msra.mxu0 %v2083
    %2106 = vmatprep.subr.bf16.mxu0 0
    %2107 = vmatpush1.bf16.xpose.msra.mxu0 %v2086
    %2108 = vmatprep.subr.bf16.mxu0 0
    %2109 = vmatpush1.bf16.xpose.msra.mxu0 %v2089
    %2110 = vmatprep.subr.bf16.mxu0 0
    %2111 = vmatpush1.bf16.xpose.msra.mxu0 %v2092
    %2112 = vmatprep.subr.bf16.mxu0 0
    %2113 = vmatpush1.bf16.xpose.msra.mxu0 %v2095
    %2114 = vmatprep.subr.bf16.mxu0 0
    %2115 = vmatpush1.bf16.xpose.msra.mxu0 %v2098
    %2116 = vmatprep.subr.bf16.mxu0 0
    %2117 = vmatpush1.bf16.xpose.msra.mxu0 0
    %2118 = vmatprep.subr.bf16.mxu0 0
    %2119 = vmatpush1.bf16.xpose.msra.mxu0 0
    %2120 = vmatprep.subr.bf16.mxu0 0
    %2121 = vmatpush1.bf16.xpose.msra.mxu0 0
    %2122 = vmatprep.subr.bf16.mxu0 0
    %2123 = vmatpush1.bf16.xpose.msra.mxu0 0
    %2124 = vmatprep.subr.bf16.mxu0 0
    %2125 = vmatpush1.bf16.xpose.msra.mxu0 0
    %2126 = vmatprep.subr.bf16.mxu0 0
    %2127 = vmatpush1.bf16.xpose.msra.mxu0 0
    %2128 = vmatprep.subr.bf16.mxu0 0
    %2129 = vmatpush1.bf16.xpose.msra.mxu0 0
    %2130 = vmatprep.subr.bf16.mxu0 0
    %2131 = vmatpush1.bf16.xpose.msra.mxu0 0
    %2132 = vmatprep.mubr.bf16.mxu0 0
    %2133 = vmatmul.mubr.bf16.gmra.mrb[0].mxu0 %v2053
    %v2134 = vpop.f32.mrb[0].mxu0
    %v2135 = vadd.f32 %v213, %v2134
    %v2136 = vpop.f32.mrb[0].mxu0
    %v2137 = vpop.f32.mrb[0].mxu0
    %v2138 = vadd.f32 %v214, %v2137
    %v2139 = vpop.f32.mrb[0].mxu0
    %2140 = vmatprep.mubr.bf16.mxu0 0
    %2141 = vmatmul.mubr.bf16.gmra.mrb[0].mxu0 %v2056
    %v2142 = vpop.f32.mrb[0].mxu0
    %v2143 = vadd.f32 %v215, %v2142
    %v2144 = vpop.f32.mrb[0].mxu0
    %v2145 = vpop.f32.mrb[0].mxu0
    %v2146 = vadd.f32 %v216, %v2145
    %v2147 = vpop.f32.mrb[0].mxu0
    %2148 = vmatprep.mubr.bf16.mxu0 0
    %2149 = vmatmul.mubr.bf16.gmra.mrb[0].mxu0 %v2059
    %v2150 = vpop.f32.mrb[0].mxu0
    %v2151 = vadd.f32 %v217, %v2150
    %v2152 = vpop.f32.mrb[0].mxu0
    %v2153 = vpop.f32.mrb[0].mxu0
    %v2154 = vadd.f32 %v218, %v2153
    %v2155 = vpop.f32.mrb[0].mxu0
    %2156 = vmatprep.mubr.bf16.mxu0 0
    %2157 = vmatmul.mubr.bf16.gmra.mrb[0].mxu0 %v2062
    %v2158 = vpop.f32.mrb[0].mxu0
    %v2159 = vadd.f32 %v219, %v2158
    %v2160 = vpop.f32.mrb[0].mxu0
    %v2161 = vpop.f32.mrb[0].mxu0
    %v2162 = vadd.f32 %v220, %v2161
    %v2163 = vpop.f32.mrb[0].mxu0
    %2164 = vmatprep.mubr.bf16.mxu0 0
    %2165 = vmatmul.mubr.bf16.gmra.mrb[0].mxu0 %v2065
    %v2166 = vpop.f32.mrb[0].mxu0
    %v2167 = vadd.f32 %v221, %v2166
    %v2168 = vpop.f32.mrb[0].mxu0
    %v2169 = vpop.f32.mrb[0].mxu0
    %v2170 = vadd.f32 %v222, %v2169
    %v2171 = vpop.f32.mrb[0].mxu0
    %2172 = vmatprep.mubr.bf16.mxu0 0
    %2173 = vmatmul.mubr.bf16.gmra.mrb[0].mxu0 %v2068
    %v2174 = vpop.f32.mrb[0].mxu0
    %v2175 = vadd.f32 %v223, %v2174
    %v2176 = vpop.f32.mrb[0].mxu0
    %v2177 = vpop.f32.mrb[0].mxu0
    %v2178 = vadd.f32 %v224, %v2177
    %v2179 = vpop.f32.mrb[0].mxu0
    %2180 = vmatprep.mubr.bf16.mxu0 0
    %2181 = vmatmul.mubr.bf16.gmra.mrb[0].mxu0 %v2071
    %v2182 = vpop.f32.mrb[0].mxu0
    %v2183 = vadd.f32 %v225, %v2182
    %v2184 = vpop.f32.mrb[0].mxu0
    %v2185 = vpop.f32.mrb[0].mxu0
    %v2186 = vadd.f32 %v226, %v2185
    %v2187 = vpop.f32.mrb[0].mxu0
    %2188 = vmatprep.mubr.bf16.mxu0 0
    %2189 = vmatmul.mubr.bf16.gmra.mrb[0].mxu0 %v2074
    %v2190 = vpop.f32.mrb[0].mxu0
    %v2191 = vadd.f32 %v227, %v2190
    %v2192 = vpop.f32.mrb[0].mxu0
    %v2193 = vpop.f32.mrb[0].mxu0
    %v2194 = vadd.f32 %v228, %v2193
    %v2195 = vpop.f32.mrb[0].mxu0
    %2196 = vdwg.mxu0
    %2197 = vmax.xlane.f32.xlu0 %v2135
    %v2198 = vpop.xlane.xlu0 %2197
    %2199 = vmax.xlane.f32.xlu0 %v2138
    %v2200 = vpop.xlane.xlu0 %2199
    %2201 = vmax.xlane.f32.xlu0 %v2143
    %v2202 = vpop.xlane.xlu0 %2201
    %2203 = vmax.xlane.f32.xlu0 %v2146
    %v2204 = vpop.xlane.xlu0 %2203
    %2205 = vmax.xlane.f32.xlu0 %v2151
    %v2206 = vpop.xlane.xlu0 %2205
    %2207 = vmax.xlane.f32.xlu0 %v2154
    %v2208 = vpop.xlane.xlu0 %2207
    %2209 = vmax.xlane.f32.xlu0 %v2159
    %v2210 = vpop.xlane.xlu0 %2209
    %2211 = vmax.xlane.f32.xlu0 %v2162
    %v2212 = vpop.xlane.xlu0 %2211
    %2213 = vmax.xlane.f32.xlu0 %v2167
    %v2214 = vpop.xlane.xlu0 %2213
    %2215 = vmax.xlane.f32.xlu0 %v2170
    %v2216 = vpop.xlane.xlu0 %2215
    %2217 = vmax.xlane.f32.xlu0 %v2175
    %v2218 = vpop.xlane.xlu0 %2217
    %2219 = vmax.xlane.f32.xlu0 %v2178
    %v2220 = vpop.xlane.xlu0 %2219
    %2221 = vmax.xlane.f32.xlu0 %v2183
    %v2222 = vpop.xlane.xlu0 %2221
    %2223 = vmax.xlane.f32.xlu0 %v2186
    %v2224 = vpop.xlane.xlu0 %2223
    %2225 = vmax.xlane.f32.xlu0 %v2191
    %v2226 = vpop.xlane.xlu0 %2225
    %2227 = vmax.xlane.f32.xlu0 %v2194
    %v2228 = vpop.xlane.xlu0 %2227
    %v2229 = vsub.f32 %v2135, %v2198
    %v2230 = vsub.f32 %v2138, %v2200
    %v2231 = vsub.f32 %v2143, %v2202
    %v2232 = vsub.f32 %v2146, %v2204
    %v2233 = vsub.f32 %v2151, %v2206
    %v2234 = vsub.f32 %v2154, %v2208
    %v2235 = vsub.f32 %v2159, %v2210
    %v2236 = vsub.f32 %v2162, %v2212
    %v2237 = vsub.f32 %v2167, %v2214
    %v2238 = vsub.f32 %v2170, %v2216
    %v2239 = vsub.f32 %v2175, %v2218
    %v2240 = vsub.f32 %v2178, %v2220
    %v2241 = vsub.f32 %v2183, %v2222
    %v2242 = vsub.f32 %v2186, %v2224
    %v2243 = vsub.f32 %v2191, %v2226
    %v2244 = vsub.f32 %v2194, %v2228
    %v2245 = vmul.f32 %v2229, 1.442695
    %v2246 = vpow.pop %v2245
    %v2247 = vmul.f32 %v2230, 1.442695
    %v2248 = vpow.pop %v2247
    %v2249 = vmul.f32 %v2231, 1.442695
    %v2250 = vpow.pop %v2249
    %v2251 = vmul.f32 %v2232, 1.442695
    %v2252 = vpow.pop %v2251
    %v2253 = vmul.f32 %v2233, 1.442695
    %v2254 = vpow.pop %v2253
    %v2255 = vmul.f32 %v2234, 1.442695
    %v2256 = vpow.pop %v2255
    %v2257 = vmul.f32 %v2235, 1.442695
    %v2258 = vpow.pop %v2257
    %v2259 = vmul.f32 %v2236, 1.442695
    %v2260 = vpow.pop %v2259
    %v2261 = vmul.f32 %v2237, 1.442695
    %v2262 = vpow.pop %v2261
    %v2263 = vmul.f32 %v2238, 1.442695
    %v2264 = vpow.pop %v2263
    %v2265 = vmul.f32 %v2239, 1.442695
    %v2266 = vpow.pop %v2265
    %v2267 = vmul.f32 %v2240, 1.442695
    %v2268 = vpow.pop %v2267
    %v2269 = vmul.f32 %v2241, 1.442695
    %v2270 = vpow.pop %v2269
    %v2271 = vmul.f32 %v2242, 1.442695
    %v2272 = vpow.pop %v2271
    %v2273 = vmul.f32 %v2243, 1.442695
    %v2274 = vpow.pop %v2273
    %v2275 = vmul.f32 %v2244, 1.442695
    %v2276 = vpow.pop %v2275
    %2277 = vadd.xlane.f32.xlu0 %v2246
    %v2278 = vpop.xlane.xlu0 %2277
    %2279 = vadd.xlane.f32.xlu0 %v2248
    %v2280 = vpop.xlane.xlu0 %2279
    %2281 = vadd.xlane.f32.xlu0 %v2250
    %v2282 = vpop.xlane.xlu0 %2281
    %2283 = vadd.xlane.f32.xlu0 %v2252
    %v2284 = vpop.xlane.xlu0 %2283
    %2285 = vadd.xlane.f32.xlu0 %v2254
    %v2286 = vpop.xlane.xlu0 %2285
    %2287 = vadd.xlane.f32.xlu0 %v2256
    %v2288 = vpop.xlane.xlu0 %2287
    %2289 = vadd.xlane.f32.xlu0 %v2258
    %v2290 = vpop.xlane.xlu0 %2289
    %2291 = vadd.xlane.f32.xlu0 %v2260
    %v2292 = vpop.xlane.xlu0 %2291
    %2293 = vadd.xlane.f32.xlu0 %v2262
    %v2294 = vpop.xlane.xlu0 %2293
    %2295 = vadd.xlane.f32.xlu0 %v2264
    %v2296 = vpop.xlane.xlu0 %2295
    %2297 = vadd.xlane.f32.xlu0 %v2266
    %v2298 = vpop.xlane.xlu0 %2297
    %2299 = vadd.xlane.f32.xlu0 %v2268
    %v2300 = vpop.xlane.xlu0 %2299
    %2301 = vadd.xlane.f32.xlu0 %v2270
    %v2302 = vpop.xlane.xlu0 %2301
    %2303 = vadd.xlane.f32.xlu0 %v2272
    %v2304 = vpop.xlane.xlu0 %2303
    %2305 = vadd.xlane.f32.xlu0 %v2274
    %v2306 = vpop.xlane.xlu0 %2305
    %2307 = vadd.xlane.f32.xlu0 %v2276
    %v2308 = vpop.xlane.xlu0 %2307
    %v2309 = vrcp.pop %v2278
    %v2310 = vrcp.pop %v2280
    %v2311 = vrcp.pop %v2282
    %v2312 = vrcp.pop %v2284
    %v2313 = vrcp.pop %v2286
    %v2314 = vrcp.pop %v2288
    %v2315 = vrcp.pop %v2290
    %v2316 = vrcp.pop %v2292
    %v2317 = vrcp.pop %v2294
    %v2318 = vrcp.pop %v2296
    %v2319 = vrcp.pop %v2298
    %v2320 = vrcp.pop %v2300
    %v2321 = vrcp.pop %v2302
    %v2322 = vrcp.pop %v2304
    %v2323 = vrcp.pop %v2306
    %v2324 = vrcp.pop %v2308
    %v2325 = vmul.f32 %v2246, %v2309
    %v2326 = vmul.f32 %v2248, %v2310
    %v2327 = vmul.f32 %v2250, %v2311
    %v2328 = vmul.f32 %v2252, %v2312
    %v2329 = vmul.f32 %v2254, %v2313
    %v2330 = vmul.f32 %v2256, %v2314
    %v2331 = vmul.f32 %v2258, %v2315
    %v2332 = vmul.f32 %v2260, %v2316
    %v2333 = vmul.f32 %v2262, %v2317
    %v2334 = vmul.f32 %v2264, %v2318
    %v2335 = vmul.f32 %v2266, %v2319
    %v2336 = vmul.f32 %v2268, %v2320
    %v2337 = vmul.f32 %v2270, %v2321
    %v2338 = vmul.f32 %v2272, %v2322
    %v2339 = vmul.f32 %v2274, %v2323
    %v2340 = vmul.f32 %v2276, %v2324
    %v2341 = vpack.c.bf16 %v2326, %v2325
    %v2342 = vpack.c.bf16 %v2328, %v2327
    %v2343 = vpack.c.bf16 %v2330, %v2329
    %v2344 = vpack.c.bf16 %v2332, %v2331
    %v2345 = vpack.c.bf16 %v2334, %v2333
    %v2346 = vpack.c.bf16 %v2336, %v2335
    %v2347 = vpack.c.bf16 %v2338, %v2337
    %v2348 = vpack.c.bf16 %v2340, %v2339
    %2349 = vrot.lane.b32.xlu0 %v205, 40
    %v2350 = vpop.permute.xlu0 %2349
    %2351 = vrot.lane.b32.xlu0 %v206, 40
    %v2352 = vpop.permute.xlu0 %2351
    %2353 = vrot.lane.b32.xlu0 %v207, 40
    %v2354 = vpop.permute.xlu0 %2353
    %2355 = vrot.lane.b32.xlu0 %v208, 40
    %v2356 = vpop.permute.xlu0 %2355
    %2357 = vrot.lane.b32.xlu0 %v209, 40
    %v2358 = vpop.permute.xlu0 %2357
    %2359 = vrot.lane.b32.xlu0 %v210, 40
    %v2360 = vpop.permute.xlu0 %2359
    %2361 = vrot.lane.b32.xlu0 %v211, 40
    %v2362 = vpop.permute.xlu0 %2361
    %2363 = vrot.lane.b32.xlu0 %v212, 40
    %v2364 = vpop.permute.xlu0 %2363
    %2373 = vmatprep.subr.bf16.mxu0 0
    %2374 = vmatpush1.bf16.msra.mxu0 %v2350
    %2375 = vmatprep.subr.bf16.mxu0 0
    %2376 = vmatpush1.bf16.msra.mxu0 %v2352
    %2377 = vmatprep.subr.bf16.mxu0 0
    %2378 = vmatpush1.bf16.msra.mxu0 %v2354
    %2379 = vmatprep.subr.bf16.mxu0 0
    %2380 = vmatpush1.bf16.msra.mxu0 %v2356
    %2381 = vmatprep.subr.bf16.mxu0 0
    %2382 = vmatpush1.bf16.msra.mxu0 %v2358
    %2383 = vmatprep.subr.bf16.mxu0 0
    %2384 = vmatpush1.bf16.msra.mxu0 %v2360
    %2385 = vmatprep.subr.bf16.mxu0 0
    %2386 = vmatpush1.bf16.msra.mxu0 %v2362
    %2387 = vmatprep.subr.bf16.mxu0 0
    %2388 = vmatpush1.bf16.msra.mxu0 %v2364
    %2389 = vmatprep.subr.bf16.mxu0 0
    %2390 = vmatpush1.bf16.msra.mxu0 0
    %2391 = vmatprep.subr.bf16.mxu0 0
    %2392 = vmatpush1.bf16.msra.mxu0 0
    %2393 = vmatprep.subr.bf16.mxu0 0
    %2394 = vmatpush1.bf16.msra.mxu0 0
    %2395 = vmatprep.subr.bf16.mxu0 0
    %2396 = vmatpush1.bf16.msra.mxu0 0
    %2397 = vmatprep.subr.bf16.mxu0 0
    %2398 = vmatpush1.bf16.msra.mxu0 0
    %2399 = vmatprep.subr.bf16.mxu0 0
    %2400 = vmatpush1.bf16.msra.mxu0 0
    %2401 = vmatprep.subr.bf16.mxu0 0
    %2402 = vmatpush1.bf16.msra.mxu0 0
    %2403 = vmatprep.subr.bf16.mxu0 0
    %2404 = vmatpush1.bf16.msra.mxu0 0
    %2405 = vmatprep.mubr.bf16.mxu0 0
    %2406 = vmatmul.mubr.bf16.gmra.mrb[0].mxu0 %v2341
    %v2407 = vpop.f32.mrb[0].mxu0
    %v2408 = vadd.f32 0.0, %v2407
    %v2409 = vpop.f32.mrb[0].mxu0
    %v2410 = vpop.f32.mrb[0].mxu0
    %v2411 = vadd.f32 0.0, %v2410
    %v2412 = vpop.f32.mrb[0].mxu0
    %2413 = vmatprep.mubr.bf16.mxu0 0
    %2414 = vmatmul.mubr.bf16.gmra.mrb[0].mxu0 %v2342
    %v2415 = vpop.f32.mrb[0].mxu0
    %v2416 = vadd.f32 0.0, %v2415
    %v2417 = vpop.f32.mrb[0].mxu0
    %v2418 = vpop.f32.mrb[0].mxu0
    %v2419 = vadd.f32 0.0, %v2418
    %v2420 = vpop.f32.mrb[0].mxu0
    %2421 = vmatprep.mubr.bf16.mxu0 0
    %2422 = vmatmul.mubr.bf16.gmra.mrb[0].mxu0 %v2343
    %v2423 = vpop.f32.mrb[0].mxu0
    %v2424 = vadd.f32 0.0, %v2423
    %v2425 = vpop.f32.mrb[0].mxu0
    %v2426 = vpop.f32.mrb[0].mxu0
    %v2427 = vadd.f32 0.0, %v2426
    %v2428 = vpop.f32.mrb[0].mxu0
    %2429 = vmatprep.mubr.bf16.mxu0 0
    %2430 = vmatmul.mubr.bf16.gmra.mrb[0].mxu0 %v2344
    %v2431 = vpop.f32.mrb[0].mxu0
    %v2432 = vadd.f32 0.0, %v2431
    %v2433 = vpop.f32.mrb[0].mxu0
    %v2434 = vpop.f32.mrb[0].mxu0
    %v2435 = vadd.f32 0.0, %v2434
    %v2436 = vpop.f32.mrb[0].mxu0
    %2437 = vmatprep.mubr.bf16.mxu0 0
    %2438 = vmatmul.mubr.bf16.gmra.mrb[0].mxu0 %v2345
    %v2439 = vpop.f32.mrb[0].mxu0
    %v2440 = vadd.f32 0.0, %v2439
    %v2441 = vpop.f32.mrb[0].mxu0
    %v2442 = vpop.f32.mrb[0].mxu0
    %v2443 = vadd.f32 0.0, %v2442
    %v2444 = vpop.f32.mrb[0].mxu0
    %2445 = vmatprep.mubr.bf16.mxu0 0
    %2446 = vmatmul.mubr.bf16.gmra.mrb[0].mxu0 %v2346
    %v2447 = vpop.f32.mrb[0].mxu0
    %v2448 = vadd.f32 0.0, %v2447
    %v2449 = vpop.f32.mrb[0].mxu0
    %v2450 = vpop.f32.mrb[0].mxu0
    %v2451 = vadd.f32 0.0, %v2450
    %v2452 = vpop.f32.mrb[0].mxu0
    %2453 = vmatprep.mubr.bf16.mxu0 0
    %2454 = vmatmul.mubr.bf16.gmra.mrb[0].mxu0 %v2347
    %v2455 = vpop.f32.mrb[0].mxu0
    %v2456 = vadd.f32 0.0, %v2455
    %v2457 = vpop.f32.mrb[0].mxu0
    %v2458 = vpop.f32.mrb[0].mxu0
    %v2459 = vadd.f32 0.0, %v2458
    %v2460 = vpop.f32.mrb[0].mxu0
    %2461 = vmatprep.mubr.bf16.mxu0 0
    %2462 = vmatmul.mubr.bf16.gmra.mrb[0].mxu0 %v2348
    %v2463 = vpop.f32.mrb[0].mxu0
    %v2464 = vadd.f32 0.0, %v2463
    %v2465 = vpop.f32.mrb[0].mxu0
    %v2466 = vpop.f32.mrb[0].mxu0
    %v2467 = vadd.f32 0.0, %v2466
    %v2468 = vpop.f32.mrb[0].mxu0
    %2469 = vdwg.mxu0
    %v2470 = vpack.c.bf16 %v2411, %v2408
    %v2471 = vpack.c.bf16 %v2419, %v2416
    %v2472 = vpack.c.bf16 %v2427, %v2424
    %v2473 = vpack.c.bf16 %v2435, %v2432
    %v2474 = vpack.c.bf16 %v2443, %v2440
    %v2475 = vpack.c.bf16 %v2451, %v2448
    %v2476 = vpack.c.bf16 %v2459, %v2456
    %v2477 = vpack.c.bf16 %v2467, %v2464
    %v2478 = vld [vmem:[%s5 + $0xc] sm:$0xf]
    %v2480 = vsel %vm253, %v2470, 0
    %v2483 = vsel %vm253, %v2471, 0
    %v2486 = vsel %vm253, %v2472, 0
    %v2489 = vsel %vm253, %v2473, 0
    %v2492 = vsel %vm253, %v2474, 0
    %v2495 = vsel %vm253, %v2475, 0
    %v2498 = vsel %vm253, %v2476, 0
    %v2501 = vsel %vm253, %v2477, 0
    %v2504 = vsel %vm705, %v2478, 0
    %2506 = vmatprep.subr.bf16.mxu0 0
    %2507 = vmatpush1.bf16.msra.mxu0 %v2504
    %2508 = vmatprep.subr.bf16.mxu0 0
    %2509 = vmatpush1.bf16.msra.mxu0 0
    %2510 = vmatprep.subr.bf16.mxu0 0
    %2511 = vmatpush1.bf16.msra.mxu0 0
    %2512 = vmatprep.subr.bf16.mxu0 0
    %2513 = vmatpush1.bf16.msra.mxu0 0
    %2514 = vmatprep.subr.bf16.mxu0 0
    %2515 = vmatpush1.bf16.msra.mxu0 0
    %2516 = vmatprep.subr.bf16.mxu0 0
    %2517 = vmatpush1.bf16.msra.mxu0 0
    %2518 = vmatprep.subr.bf16.mxu0 0
    %2519 = vmatpush1.bf16.msra.mxu0 0
    %2520 = vmatprep.subr.bf16.mxu0 0
    %2521 = vmatpush1.bf16.msra.mxu0 0
    %2522 = vmatprep.subr.bf16.mxu0 0
    %2523 = vmatpush1.bf16.msra.mxu0 0
    %2524 = vmatprep.subr.bf16.mxu0 0
    %2525 = vmatpush1.bf16.msra.mxu0 0
    %2526 = vmatprep.subr.bf16.mxu0 0
    %2527 = vmatpush1.bf16.msra.mxu0 0
    %2528 = vmatprep.subr.bf16.mxu0 0
    %2529 = vmatpush1.bf16.msra.mxu0 0
    %2530 = vmatprep.subr.bf16.mxu0 0
    %2531 = vmatpush1.bf16.msra.mxu0 0
    %2532 = vmatprep.subr.bf16.mxu0 0
    %2533 = vmatpush1.bf16.msra.mxu0 0
    %2534 = vmatprep.subr.bf16.mxu0 0
    %2535 = vmatpush1.bf16.msra.mxu0 0
    %2536 = vmatprep.subr.bf16.mxu0 0
    %2537 = vmatpush1.bf16.msra.mxu0 0
    %2538 = vmatprep.mubr.bf16.mxu0 0
    %2539 = vmatmul.mubr.bf16.gmra.mrb[0].mxu0 %v2480
    %v2540 = vpop.f32.mrb[0].mxu0
    %v2541 = vadd.f32 0.0, %v2540
    %v2542 = vpop.f32.mrb[0].mxu0
    %v2543 = vpop.f32.mrb[0].mxu0
    %v2544 = vadd.f32 0.0, %v2543
    %v2545 = vpop.f32.mrb[0].mxu0
    %2546 = vmatprep.mubr.bf16.mxu0 0
    %2547 = vmatmul.mubr.bf16.gmra.mrb[0].mxu0 %v2483
    %v2548 = vpop.f32.mrb[0].mxu0
    %v2549 = vadd.f32 0.0, %v2548
    %v2550 = vpop.f32.mrb[0].mxu0
    %v2551 = vpop.f32.mrb[0].mxu0
    %v2552 = vadd.f32 0.0, %v2551
    %v2553 = vpop.f32.mrb[0].mxu0
    %2554 = vmatprep.mubr.bf16.mxu0 0
    %2555 = vmatmul.mubr.bf16.gmra.mrb[0].mxu0 %v2486
    %v2556 = vpop.f32.mrb[0].mxu0
    %v2557 = vadd.f32 0.0, %v2556
    %v2558 = vpop.f32.mrb[0].mxu0
    %v2559 = vpop.f32.mrb[0].mxu0
    %v2560 = vadd.f32 0.0, %v2559
    %v2561 = vpop.f32.mrb[0].mxu0
    %2562 = vmatprep.mubr.bf16.mxu0 0
    %2563 = vmatmul.mubr.bf16.gmra.mrb[0].mxu0 %v2489
    %v2564 = vpop.f32.mrb[0].mxu0
    %v2565 = vadd.f32 0.0, %v2564
    %v2566 = vpop.f32.mrb[0].mxu0
    %v2567 = vpop.f32.mrb[0].mxu0
    %v2568 = vadd.f32 0.0, %v2567
    %v2569 = vpop.f32.mrb[0].mxu0
    %2570 = vmatprep.mubr.bf16.mxu0 0
    %2571 = vmatmul.mubr.bf16.gmra.mrb[0].mxu0 %v2492
    %v2572 = vpop.f32.mrb[0].mxu0
    %v2573 = vadd.f32 0.0, %v2572
    %v2574 = vpop.f32.mrb[0].mxu0
    %v2575 = vpop.f32.mrb[0].mxu0
    %v2576 = vadd.f32 0.0, %v2575
    %v2577 = vpop.f32.mrb[0].mxu0
    %2578 = vmatprep.mubr.bf16.mxu0 0
    %2579 = vmatmul.mubr.bf16.gmra.mrb[0].mxu0 %v2495
    %v2580 = vpop.f32.mrb[0].mxu0
    %v2581 = vadd.f32 0.0, %v2580
    %v2582 = vpop.f32.mrb[0].mxu0
    %v2583 = vpop.f32.mrb[0].mxu0
    %v2584 = vadd.f32 0.0, %v2583
    %v2585 = vpop.f32.mrb[0].mxu0
    %2586 = vmatprep.mubr.bf16.mxu0 0
    %2587 = vmatmul.mubr.bf16.gmra.mrb[0].mxu0 %v2498
    %v2588 = vpop.f32.mrb[0].mxu0
    %v2589 = vadd.f32 0.0, %v2588
    %v2590 = vpop.f32.mrb[0].mxu0
    %v2591 = vpop.f32.mrb[0].mxu0
    %v2592 = vadd.f32 0.0, %v2591
    %v2593 = vpop.f32.mrb[0].mxu0
    %2594 = vmatprep.mubr.bf16.mxu0 0
    %2595 = vmatmul.mubr.bf16.gmra.mrb[0].mxu0 %v2501
    %v2596 = vpop.f32.mrb[0].mxu0
    %v2597 = vadd.f32 0.0, %v2596
    %v2598 = vpop.f32.mrb[0].mxu0
    %v2599 = vpop.f32.mrb[0].mxu0
    %v2600 = vadd.f32 0.0, %v2599
    %v2601 = vpop.f32.mrb[0].mxu0
    %2602 = vdwg.mxu0
    %v2603 = vadd.f32 %v2004, %v2541
    %v2604 = vadd.f32 %v2005, %v2544
    %v2605 = vadd.f32 %v2006, %v2549
    %v2606 = vadd.f32 %v2007, %v2552
    %v2607 = vadd.f32 %v2008, %v2557
    %v2608 = vadd.f32 %v2009, %v2560
    %v2609 = vadd.f32 %v2010, %v2565
    %v2610 = vadd.f32 %v2011, %v2568
    %v2611 = vadd.f32 %v2012, %v2573
    %v2612 = vadd.f32 %v2013, %v2576
    %v2613 = vadd.f32 %v2014, %v2581
    %v2614 = vadd.f32 %v2015, %v2584
    %v2615 = vadd.f32 %v2016, %v2589
    %v2616 = vadd.f32 %v2017, %v2592
    %v2617 = vadd.f32 %v2018, %v2597
    %v2618 = vadd.f32 %v2019, %v2600
    %v2619 = vpack.c.bf16 %v2604, %v2603
    %v2620 = vpack.c.bf16 %v2606, %v2605
    %v2621 = vpack.c.bf16 %v2608, %v2607
    %v2622 = vpack.c.bf16 %v2610, %v2609
    %v2623 = vpack.c.bf16 %v2612, %v2611
    %v2624 = vpack.c.bf16 %v2614, %v2613
    %v2625 = vpack.c.bf16 %v2616, %v2615
    %v2626 = vpack.c.bf16 %v2618, %v2617
    %s2627 = scalar_lea.vmem %s3, 16
    %v2628 = vld [vmem:[%s2627] sm:$0xf]
    %v2629 = vld [vmem:[%s2627 + $0x4] sm:$0xf]
    %v2630 = vld [vmem:[%s2627 + $0x8] sm:$0xf]
    %v2631 = vld [vmem:[%s2627 + $0xc] sm:$0xf]
    %s2632 = scalar_lea.vmem %s4, 1
    %v2633 = vld [vmem:[%s2632] sm:$0x1]
    %v2635 = vlaneseq
    %v2636 = vshrl.u32 %v2635, 7
    %v2637 = vsub.s32 0, %v2636
    %v2638 = vrot.slane %v2633, %v2637
    %v2644 = vunpack.c.l.b16 %v2628
    %v2645 = vunpack.c.l.b16 %v2629
    %v2646 = vunpack.c.l.b16 %v2630
    %v2647 = vunpack.c.l.b16 %v2631
    %v2648 = vpack.c.b16 %v2645, %v2644
    %v2649 = vpack.c.b16 %v2647, %v2646
    %v2653 = vsel %vm75, %v2619, 0
    %v2656 = vsel %vm75, %v2620, 0
    %v2659 = vsel %vm75, %v2621, 0
    %v2662 = vsel %vm75, %v2622, 0
    %v2665 = vsel %vm75, %v2623, 0
    %v2668 = vsel %vm75, %v2624, 0
    %v2671 = vsel %vm75, %v2625, 0
    %v2674 = vsel %vm75, %v2626, 0
    %2676 = vmatprep.subr.bf16.mxu0 0
    %2677 = vmatpush1.bf16.msra.mxu0 %v2648
    %2678 = vmatprep.subr.bf16.mxu0 0
    %2679 = vmatpush1.bf16.msra.mxu0 %v2649
    %2680 = vmatprep.subr.bf16.mxu0 0
    %2681 = vmatpush1.bf16.msra.mxu0 0
    %2682 = vmatprep.subr.bf16.mxu0 0
    %2683 = vmatpush1.bf16.msra.mxu0 0
    %2684 = vmatprep.subr.bf16.mxu0 0
    %2685 = vmatpush1.bf16.msra.mxu0 0
    %2686 = vmatprep.subr.bf16.mxu0 0
    %2687 = vmatpush1.bf16.msra.mxu0 0
    %2688 = vmatprep.subr.bf16.mxu0 0
    %2689 = vmatpush1.bf16.msra.mxu0 0
    %2690 = vmatprep.subr.bf16.mxu0 0
    %2691 = vmatpush1.bf16.msra.mxu0 0
    %2692 = vmatprep.subr.bf16.mxu0 0
    %2693 = vmatpush1.bf16.msra.mxu0 0
    %2694 = vmatprep.subr.bf16.mxu0 0
    %2695 = vmatpush1.bf16.msra.mxu0 0
    %2696 = vmatprep.subr.bf16.mxu0 0
    %2697 = vmatpush1.bf16.msra.mxu0 0
    %2698 = vmatprep.subr.bf16.mxu0 0
    %2699 = vmatpush1.bf16.msra.mxu0 0
    %2700 = vmatprep.subr.bf16.mxu0 0
    %2701 = vmatpush1.bf16.msra.mxu0 0
    %2702 = vmatprep.subr.bf16.mxu0 0
    %2703 = vmatpush1.bf16.msra.mxu0 0
    %2704 = vmatprep.subr.bf16.mxu0 0
    %2705 = vmatpush1.bf16.msra.mxu0 0
    %2706 = vmatprep.subr.bf16.mxu0 0
    %2707 = vmatpush1.bf16.msra.mxu0 0
    %2708 = vmatprep.mubr.bf16.mxu0 0
    %2709 = vmatmul.mubr.bf16.gmra.mrb[0].mxu0 %v2653
    %v2710 = vpop.f32.mrb[0].mxu0
    %v2711 = vadd.f32 %v2638, %v2710
    %v2712 = vpop.f32.mrb[0].mxu0
    %v2713 = vpop.f32.mrb[0].mxu0
    %v2714 = vadd.f32 %v2638, %v2713
    %v2715 = vpop.f32.mrb[0].mxu0
    %2716 = vmatprep.mubr.bf16.mxu0 0
    %2717 = vmatmul.mubr.bf16.gmra.mrb[0].mxu0 %v2656
    %v2718 = vpop.f32.mrb[0].mxu0
    %v2719 = vadd.f32 %v2638, %v2718
    %v2720 = vpop.f32.mrb[0].mxu0
    %v2721 = vpop.f32.mrb[0].mxu0
    %v2722 = vadd.f32 %v2638, %v2721
    %v2723 = vpop.f32.mrb[0].mxu0
    %2724 = vmatprep.mubr.bf16.mxu0 0
    %2725 = vmatmul.mubr.bf16.gmra.mrb[0].mxu0 %v2659
    %v2726 = vpop.f32.mrb[0].mxu0
    %v2727 = vadd.f32 %v2638, %v2726
    %v2728 = vpop.f32.mrb[0].mxu0
    %v2729 = vpop.f32.mrb[0].mxu0
    %v2730 = vadd.f32 %v2638, %v2729
    %v2731 = vpop.f32.mrb[0].mxu0
    %2732 = vmatprep.mubr.bf16.mxu0 0
    %2733 = vmatmul.mubr.bf16.gmra.mrb[0].mxu0 %v2662
    %v2734 = vpop.f32.mrb[0].mxu0
    %v2735 = vadd.f32 %v2638, %v2734
    %v2736 = vpop.f32.mrb[0].mxu0
    %v2737 = vpop.f32.mrb[0].mxu0
    %v2738 = vadd.f32 %v2638, %v2737
    %v2739 = vpop.f32.mrb[0].mxu0
    %2740 = vmatprep.mubr.bf16.mxu0 0
    %2741 = vmatmul.mubr.bf16.gmra.mrb[0].mxu0 %v2665
    %v2742 = vpop.f32.mrb[0].mxu0
    %v2743 = vadd.f32 %v2638, %v2742
    %v2744 = vpop.f32.mrb[0].mxu0
    %v2745 = vpop.f32.mrb[0].mxu0
    %v2746 = vadd.f32 %v2638, %v2745
    %v2747 = vpop.f32.mrb[0].mxu0
    %2748 = vmatprep.mubr.bf16.mxu0 0
    %2749 = vmatmul.mubr.bf16.gmra.mrb[0].mxu0 %v2668
    %v2750 = vpop.f32.mrb[0].mxu0
    %v2751 = vadd.f32 %v2638, %v2750
    %v2752 = vpop.f32.mrb[0].mxu0
    %v2753 = vpop.f32.mrb[0].mxu0
    %v2754 = vadd.f32 %v2638, %v2753
    %v2755 = vpop.f32.mrb[0].mxu0
    %2756 = vmatprep.mubr.bf16.mxu0 0
    %2757 = vmatmul.mubr.bf16.gmra.mrb[0].mxu0 %v2671
    %v2758 = vpop.f32.mrb[0].mxu0
    %v2759 = vadd.f32 %v2638, %v2758
    %v2760 = vpop.f32.mrb[0].mxu0
    %v2761 = vpop.f32.mrb[0].mxu0
    %v2762 = vadd.f32 %v2638, %v2761
    %v2763 = vpop.f32.mrb[0].mxu0
    %2764 = vmatprep.mubr.bf16.mxu0 0
    %2765 = vmatmul.mubr.bf16.gmra.mrb[0].mxu0 %v2674
    %v2766 = vpop.f32.mrb[0].mxu0
    %v2767 = vadd.f32 %v2638, %v2766
    %v2768 = vpop.f32.mrb[0].mxu0
    %v2769 = vpop.f32.mrb[0].mxu0
    %v2770 = vadd.f32 %v2638, %v2769
    %v2771 = vpop.f32.mrb[0].mxu0
    %2772 = vdwg.mxu0
    %s2773 = scalar_lea.vmem %s6, 1
    %v2774 = vld [vmem:[%s2773] sm:$0x1]
    %v2776 = vlaneseq
    %v2777 = vshrl.u32 %v2776, 7
    %v2778 = vsub.s32 0, %v2777
    %v2779 = vrot.slane %v2774, %v2778
    %v2781 = vadd.f32 %v2779, 0.0
    %v2782 = vpack.c.bf16 %v2714, %v2711
    %v2783 = vpack.c.bf16 %v2722, %v2719
    %v2784 = vpack.c.bf16 %v2730, %v2727
    %v2785 = vpack.c.bf16 %v2738, %v2735
    %v2786 = vpack.c.bf16 %v2746, %v2743
    %v2787 = vpack.c.bf16 %v2754, %v2751
    %v2788 = vpack.c.bf16 %v2762, %v2759
    %v2789 = vpack.c.bf16 %v2770, %v2767
    %v2790 = vld [vmem:[%s2] sm:$0xff]
    %v2791 = vld [vmem:[%s2 + $0x8] sm:$0xff]
    %v2792 = vld [vmem:[%s2 + $0x10] sm:$0xff]
    %v2793 = vld [vmem:[%s2 + $0x18] sm:$0xff]
    %v2794 = vld [vmem:[%s2 + $0x20] sm:$0xff]
    %v2795 = vld [vmem:[%s2 + $0x28] sm:$0xff]
    %v2796 = vld [vmem:[%s2 + $0x30] sm:$0xff]
    %v2797 = vld [vmem:[%s2 + $0x38] sm:$0xff]
    %v2798 = vld [vmem:[%s2 + $0x40] sm:$0xff]
    %v2799 = vld [vmem:[%s2 + $0x48] sm:$0xff]
    %v2800 = vld [vmem:[%s2 + $0x50] sm:$0xff]
    %v2801 = vld [vmem:[%s2 + $0x58] sm:$0xff]
    %v2802 = vld [vmem:[%s2 + $0x60] sm:$0xff]
    %v2803 = vld [vmem:[%s2 + $0x68] sm:$0xff]
    %v2804 = vld [vmem:[%s2 + $0x70] sm:$0xff]
    %v2805 = vld [vmem:[%s2 + $0x78] sm:$0xff]
    %2814 = vrot.lane.b32.xlu0 %v2782, 96
    %v2815 = vpop.permute.xlu0 %2814
    %2816 = vrot.lane.b32.xlu0 %v2783, 96
    %v2817 = vpop.permute.xlu0 %2816
    %2818 = vrot.lane.b32.xlu0 %v2784, 96
    %v2819 = vpop.permute.xlu0 %2818
    %2820 = vrot.lane.b32.xlu0 %v2785, 96
    %v2821 = vpop.permute.xlu0 %2820
    %2822 = vrot.lane.b32.xlu0 %v2786, 96
    %v2823 = vpop.permute.xlu0 %2822
    %2824 = vrot.lane.b32.xlu0 %v2787, 96
    %v2825 = vpop.permute.xlu0 %2824
    %2826 = vrot.lane.b32.xlu0 %v2788, 96
    %v2827 = vpop.permute.xlu0 %2826
    %2828 = vrot.lane.b32.xlu0 %v2789, 96
    %v2829 = vpop.permute.xlu0 %2828
    %v2831 = vsel %vm253, %v2782, 0
    %v2834 = vsel %vm253, %v2783, 0
    %v2837 = vsel %vm253, %v2784, 0
    %v2840 = vsel %vm253, %v2785, 0
    %v2843 = vsel %vm253, %v2786, 0
    %v2846 = vsel %vm253, %v2787, 0
    %v2849 = vsel %vm253, %v2788, 0
    %v2852 = vsel %vm253, %v2789, 0
    %v2855 = vsel %vm253, %v2815, 0
    %v2858 = vsel %vm253, %v2817, 0
    %v2861 = vsel %vm253, %v2819, 0
    %v2864 = vsel %vm253, %v2821, 0
    %v2867 = vsel %vm253, %v2823, 0
    %v2870 = vsel %vm253, %v2825, 0
    %v2873 = vsel %vm253, %v2827, 0
    %v2876 = vsel %vm253, %v2829, 0
    %2878 = vmatprep.subr.bf16.mxu0 0
    %2879 = vmatpush1.bf16.xpose.msra.mxu0 %v2855
    %2880 = vmatprep.subr.bf16.mxu0 0
    %2881 = vmatpush1.bf16.xpose.msra.mxu0 %v2858
    %2882 = vmatprep.subr.bf16.mxu0 0
    %2883 = vmatpush1.bf16.xpose.msra.mxu0 %v2861
    %2884 = vmatprep.subr.bf16.mxu0 0
    %2885 = vmatpush1.bf16.xpose.msra.mxu0 %v2864
    %2886 = vmatprep.subr.bf16.mxu0 0
    %2887 = vmatpush1.bf16.xpose.msra.mxu0 %v2867
    %2888 = vmatprep.subr.bf16.mxu0 0
    %2889 = vmatpush1.bf16.xpose.msra.mxu0 %v2870
    %2890 = vmatprep.subr.bf16.mxu0 0
    %2891 = vmatpush1.bf16.xpose.msra.mxu0 %v2873
    %2892 = vmatprep.subr.bf16.mxu0 0
    %2893 = vmatpush1.bf16.xpose.msra.mxu0 %v2876
    %2894 = vmatprep.subr.bf16.mxu0 0
    %2895 = vmatpush1.bf16.xpose.msra.mxu0 0
    %2896 = vmatprep.subr.bf16.mxu0 0
    %2897 = vmatpush1.bf16.xpose.msra.mxu0 0
    %2898 = vmatprep.subr.bf16.mxu0 0
    %2899 = vmatpush1.bf16.xpose.msra.mxu0 0
    %2900 = vmatprep.subr.bf16.mxu0 0
    %2901 = vmatpush1.bf16.xpose.msra.mxu0 0
    %2902 = vmatprep.subr.bf16.mxu0 0
    %2903 = vmatpush1.bf16.xpose.msra.mxu0 0
    %2904 = vmatprep.subr.bf16.mxu0 0
    %2905 = vmatpush1.bf16.xpose.msra.mxu0 0
    %2906 = vmatprep.subr.bf16.mxu0 0
    %2907 = vmatpush1.bf16.xpose.msra.mxu0 0
    %2908 = vmatprep.subr.bf16.mxu0 0
    %2909 = vmatpush1.bf16.xpose.msra.mxu0 0
    %2910 = vmatprep.mubr.bf16.mxu0 0
    %2911 = vmatmul.mubr.bf16.gmra.mrb[0].mxu0 %v2831
    %v2912 = vpop.f32.mrb[0].mxu0
    %v2913 = vadd.f32 %v2790, %v2912
    %v2914 = vpop.f32.mrb[0].mxu0
    %v2915 = vpop.f32.mrb[0].mxu0
    %v2916 = vadd.f32 %v2791, %v2915
    %v2917 = vpop.f32.mrb[0].mxu0
    %2918 = vmatprep.mubr.bf16.mxu0 0
    %2919 = vmatmul.mubr.bf16.gmra.mrb[0].mxu0 %v2834
    %v2920 = vpop.f32.mrb[0].mxu0
    %v2921 = vadd.f32 %v2792, %v2920
    %v2922 = vpop.f32.mrb[0].mxu0
    %v2923 = vpop.f32.mrb[0].mxu0
    %v2924 = vadd.f32 %v2793, %v2923
    %v2925 = vpop.f32.mrb[0].mxu0
    %2926 = vmatprep.mubr.bf16.mxu0 0
    %2927 = vmatmul.mubr.bf16.gmra.mrb[0].mxu0 %v2837
    %v2928 = vpop.f32.mrb[0].mxu0
    %v2929 = vadd.f32 %v2794, %v2928
    %v2930 = vpop.f32.mrb[0].mxu0
    %v2931 = vpop.f32.mrb[0].mxu0
    %v2932 = vadd.f32 %v2795, %v2931
    %v2933 = vpop.f32.mrb[0].mxu0
    %2934 = vmatprep.mubr.bf16.mxu0 0
    %2935 = vmatmul.mubr.bf16.gmra.mrb[0].mxu0 %v2840
    %v2936 = vpop.f32.mrb[0].mxu0
    %v2937 = vadd.f32 %v2796, %v2936
    %v2938 = vpop.f32.mrb[0].mxu0
    %v2939 = vpop.f32.mrb[0].mxu0
    %v2940 = vadd.f32 %v2797, %v2939
    %v2941 = vpop.f32.mrb[0].mxu0
    %2942 = vmatprep.mubr.bf16.mxu0 0
    %2943 = vmatmul.mubr.bf16.gmra.mrb[0].mxu0 %v2843
    %v2944 = vpop.f32.mrb[0].mxu0
    %v2945 = vadd.f32 %v2798, %v2944
    %v2946 = vpop.f32.mrb[0].mxu0
    %v2947 = vpop.f32.mrb[0].mxu0
    %v2948 = vadd.f32 %v2799, %v2947
    %v2949 = vpop.f32.mrb[0].mxu0
    %2950 = vmatprep.mubr.bf16.mxu0 0
    %2951 = vmatmul.mubr.bf16.gmra.mrb[0].mxu0 %v2846
    %v2952 = vpop.f32.mrb[0].mxu0
    %v2953 = vadd.f32 %v2800, %v2952
    %v2954 = vpop.f32.mrb[0].mxu0
    %v2955 = vpop.f32.mrb[0].mxu0
    %v2956 = vadd.f32 %v2801, %v2955
    %v2957 = vpop.f32.mrb[0].mxu0
    %2958 = vmatprep.mubr.bf16.mxu0 0
    %2959 = vmatmul.mubr.bf16.gmra.mrb[0].mxu0 %v2849
    %v2960 = vpop.f32.mrb[0].mxu0
    %v2961 = vadd.f32 %v2802, %v2960
    %v2962 = vpop.f32.mrb[0].mxu0
    %v2963 = vpop.f32.mrb[0].mxu0
    %v2964 = vadd.f32 %v2803, %v2963
    %v2965 = vpop.f32.mrb[0].mxu0
    %2966 = vmatprep.mubr.bf16.mxu0 0
    %2967 = vmatmul.mubr.bf16.gmra.mrb[0].mxu0 %v2852
    %v2968 = vpop.f32.mrb[0].mxu0
    %v2969 = vadd.f32 %v2804, %v2968
    %v2970 = vpop.f32.mrb[0].mxu0
    %v2971 = vpop.f32.mrb[0].mxu0
    %v2972 = vadd.f32 %v2805, %v2971
    %v2973 = vpop.f32.mrb[0].mxu0
    %2974 = vdwg.mxu0
    %2975 = vmax.xlane.f32.xlu0 %v2913
    %v2976 = vpop.xlane.xlu0 %2975
    %2977 = vmax.xlane.f32.xlu0 %v2916
    %v2978 = vpop.xlane.xlu0 %2977
    %2979 = vmax.xlane.f32.xlu0 %v2921
    %v2980 = vpop.xlane.xlu0 %2979
    %2981 = vmax.xlane.f32.xlu0 %v2924
    %v2982 = vpop.xlane.xlu0 %2981
    %2983 = vmax.xlane.f32.xlu0 %v2929
    %v2984 = vpop.xlane.xlu0 %2983
    %2985 = vmax.xlane.f32.xlu0 %v2932
    %v2986 = vpop.xlane.xlu0 %2985
    %2987 = vmax.xlane.f32.xlu0 %v2937
    %v2988 = vpop.xlane.xlu0 %2987
    %2989 = vmax.xlane.f32.xlu0 %v2940
    %v2990 = vpop.xlane.xlu0 %2989
    %2991 = vmax.xlane.f32.xlu0 %v2945
    %v2992 = vpop.xlane.xlu0 %2991
    %2993 = vmax.xlane.f32.xlu0 %v2948
    %v2994 = vpop.xlane.xlu0 %2993
    %2995 = vmax.xlane.f32.xlu0 %v2953
    %v2996 = vpop.xlane.xlu0 %2995
    %2997 = vmax.xlane.f32.xlu0 %v2956
    %v2998 = vpop.xlane.xlu0 %2997
    %2999 = vmax.xlane.f32.xlu0 %v2961
    %v3000 = vpop.xlane.xlu0 %2999
    %3001 = vmax.xlane.f32.xlu0 %v2964
    %v3002 = vpop.xlane.xlu0 %3001
    %3003 = vmax.xlane.f32.xlu0 %v2969
    %v3004 = vpop.xlane.xlu0 %3003
    %3005 = vmax.xlane.f32.xlu0 %v2972
    %v3006 = vpop.xlane.xlu0 %3005
    %v3007 = vsub.f32 %v2913, %v2976
    %v3008 = vsub.f32 %v2916, %v2978
    %v3009 = vsub.f32 %v2921, %v2980
    %v3010 = vsub.f32 %v2924, %v2982
    %v3011 = vsub.f32 %v2929, %v2984
    %v3012 = vsub.f32 %v2932, %v2986
    %v3013 = vsub.f32 %v2937, %v2988
    %v3014 = vsub.f32 %v2940, %v2990
    %v3015 = vsub.f32 %v2945, %v2992
    %v3016 = vsub.f32 %v2948, %v2994
    %v3017 = vsub.f32 %v2953, %v2996
    %v3018 = vsub.f32 %v2956, %v2998
    %v3019 = vsub.f32 %v2961, %v3000
    %v3020 = vsub.f32 %v2964, %v3002
    %v3021 = vsub.f32 %v2969, %v3004
    %v3022 = vsub.f32 %v2972, %v3006
    %v3023 = vmul.f32 %v3007, 1.442695
    %v3024 = vpow.pop %v3023
    %v3025 = vmul.f32 %v3008, 1.442695
    %v3026 = vpow.pop %v3025
    %v3027 = vmul.f32 %v3009, 1.442695
    %v3028 = vpow.pop %v3027
    %v3029 = vmul.f32 %v3010, 1.442695
    %v3030 = vpow.pop %v3029
    %v3031 = vmul.f32 %v3011, 1.442695
    %v3032 = vpow.pop %v3031
    %v3033 = vmul.f32 %v3012, 1.442695
    %v3034 = vpow.pop %v3033
    %v3035 = vmul.f32 %v3013, 1.442695
    %v3036 = vpow.pop %v3035
    %v3037 = vmul.f32 %v3014, 1.442695
    %v3038 = vpow.pop %v3037
    %v3039 = vmul.f32 %v3015, 1.442695
    %v3040 = vpow.pop %v3039
    %v3041 = vmul.f32 %v3016, 1.442695
    %v3042 = vpow.pop %v3041
    %v3043 = vmul.f32 %v3017, 1.442695
    %v3044 = vpow.pop %v3043
    %v3045 = vmul.f32 %v3018, 1.442695
    %v3046 = vpow.pop %v3045
    %v3047 = vmul.f32 %v3019, 1.442695
    %v3048 = vpow.pop %v3047
    %v3049 = vmul.f32 %v3020, 1.442695
    %v3050 = vpow.pop %v3049
    %v3051 = vmul.f32 %v3021, 1.442695
    %v3052 = vpow.pop %v3051
    %v3053 = vmul.f32 %v3022, 1.442695
    %v3054 = vpow.pop %v3053
    %3055 = vadd.xlane.f32.xlu0 %v3024
    %v3056 = vpop.xlane.xlu0 %3055
    %3057 = vadd.xlane.f32.xlu0 %v3026
    %v3058 = vpop.xlane.xlu0 %3057
    %3059 = vadd.xlane.f32.xlu0 %v3028
    %v3060 = vpop.xlane.xlu0 %3059
    %3061 = vadd.xlane.f32.xlu0 %v3030
    %v3062 = vpop.xlane.xlu0 %3061
    %3063 = vadd.xlane.f32.xlu0 %v3032
    %v3064 = vpop.xlane.xlu0 %3063
    %3065 = vadd.xlane.f32.xlu0 %v3034
    %v3066 = vpop.xlane.xlu0 %3065
    %3067 = vadd.xlane.f32.xlu0 %v3036
    %v3068 = vpop.xlane.xlu0 %3067
    %3069 = vadd.xlane.f32.xlu0 %v3038
    %v3070 = vpop.xlane.xlu0 %3069
    %3071 = vadd.xlane.f32.xlu0 %v3040
    %v3072 = vpop.xlane.xlu0 %3071
    %3073 = vadd.xlane.f32.xlu0 %v3042
    %v3074 = vpop.xlane.xlu0 %3073
    %3075 = vadd.xlane.f32.xlu0 %v3044
    %v3076 = vpop.xlane.xlu0 %3075
    %3077 = vadd.xlane.f32.xlu0 %v3046
    %v3078 = vpop.xlane.xlu0 %3077
    %3079 = vadd.xlane.f32.xlu0 %v3048
    %v3080 = vpop.xlane.xlu0 %3079
    %3081 = vadd.xlane.f32.xlu0 %v3050
    %v3082 = vpop.xlane.xlu0 %3081
    %3083 = vadd.xlane.f32.xlu0 %v3052
    %v3084 = vpop.xlane.xlu0 %3083
    %3085 = vadd.xlane.f32.xlu0 %v3054
    %v3086 = vpop.xlane.xlu0 %3085
    %v3087 = vrcp.pop %v3056
    %v3088 = vrcp.pop %v3058
    %v3089 = vrcp.pop %v3060
    %v3090 = vrcp.pop %v3062
    %v3091 = vrcp.pop %v3064
    %v3092 = vrcp.pop %v3066
    %v3093 = vrcp.pop %v3068
    %v3094 = vrcp.pop %v3070
    %v3095 = vrcp.pop %v3072
    %v3096 = vrcp.pop %v3074
    %v3097 = vrcp.pop %v3076
    %v3098 = vrcp.pop %v3078
    %v3099 = vrcp.pop %v3080
    %v3100 = vrcp.pop %v3082
    %v3101 = vrcp.pop %v3084
    %v3102 = vrcp.pop %v3086
    %v3103 = vmul.f32 %v3024, %v3087
    %v3104 = vmul.f32 %v3026, %v3088
    %v3105 = vmul.f32 %v3028, %v3089
    %v3106 = vmul.f32 %v3030, %v3090
    %v3107 = vmul.f32 %v3032, %v3091
    %v3108 = vmul.f32 %v3034, %v3092
    %v3109 = vmul.f32 %v3036, %v3093
    %v3110 = vmul.f32 %v3038, %v3094
    %v3111 = vmul.f32 %v3040, %v3095
    %v3112 = vmul.f32 %v3042, %v3096
    %v3113 = vmul.f32 %v3044, %v3097
    %v3114 = vmul.f32 %v3046, %v3098
    %v3115 = vmul.f32 %v3048, %v3099
    %v3116 = vmul.f32 %v3050, %v3100
    %v3117 = vmul.f32 %v3052, %v3101
    %v3118 = vmul.f32 %v3054, %v3102
    %v3119 = vpack.c.bf16 %v3104, %v3103
    %v3120 = vpack.c.bf16 %v3106, %v3105
    %v3121 = vpack.c.bf16 %v3108, %v3107
    %v3122 = vpack.c.bf16 %v3110, %v3109
    %v3123 = vpack.c.bf16 %v3112, %v3111
    %v3124 = vpack.c.bf16 %v3114, %v3113
    %v3125 = vpack.c.bf16 %v3116, %v3115
    %v3126 = vpack.c.bf16 %v3118, %v3117
    %3127 = vrot.lane.b32.xlu0 %v2782, 64
    %v3128 = vpop.permute.xlu0 %3127
    %3129 = vrot.lane.b32.xlu0 %v2783, 64
    %v3130 = vpop.permute.xlu0 %3129
    %3131 = vrot.lane.b32.xlu0 %v2784, 64
    %v3132 = vpop.permute.xlu0 %3131
    %3133 = vrot.lane.b32.xlu0 %v2785, 64
    %v3134 = vpop.permute.xlu0 %3133
    %3135 = vrot.lane.b32.xlu0 %v2786, 64
    %v3136 = vpop.permute.xlu0 %3135
    %3137 = vrot.lane.b32.xlu0 %v2787, 64
    %v3138 = vpop.permute.xlu0 %3137
    %3139 = vrot.lane.b32.xlu0 %v2788, 64
    %v3140 = vpop.permute.xlu0 %3139
    %3141 = vrot.lane.b32.xlu0 %v2789, 64
    %v3142 = vpop.permute.xlu0 %3141
    %3151 = vmatprep.subr.bf16.mxu0 0
    %3152 = vmatpush1.bf16.msra.mxu0 %v3128
    %3153 = vmatprep.subr.bf16.mxu0 0
    %3154 = vmatpush1.bf16.msra.mxu0 %v3130
    %3155 = vmatprep.subr.bf16.mxu0 0
    %3156 = vmatpush1.bf16.msra.mxu0 %v3132
    %3157 = vmatprep.subr.bf16.mxu0 0
    %3158 = vmatpush1.bf16.msra.mxu0 %v3134
    %3159 = vmatprep.subr.bf16.mxu0 0
    %3160 = vmatpush1.bf16.msra.mxu0 %v3136
    %3161 = vmatprep.subr.bf16.mxu0 0
    %3162 = vmatpush1.bf16.msra.mxu0 %v3138
    %3163 = vmatprep.subr.bf16.mxu0 0
    %3164 = vmatpush1.bf16.msra.mxu0 %v3140
    %3165 = vmatprep.subr.bf16.mxu0 0
    %3166 = vmatpush1.bf16.msra.mxu0 %v3142
    %3167 = vmatprep.subr.bf16.mxu0 0
    %3168 = vmatpush1.bf16.msra.mxu0 0
    %3169 = vmatprep.subr.bf16.mxu0 0
    %3170 = vmatpush1.bf16.msra.mxu0 0
    %3171 = vmatprep.subr.bf16.mxu0 0
    %3172 = vmatpush1.bf16.msra.mxu0 0
    %3173 = vmatprep.subr.bf16.mxu0 0
    %3174 = vmatpush1.bf16.msra.mxu0 0
    %3175 = vmatprep.subr.bf16.mxu0 0
    %3176 = vmatpush1.bf16.msra.mxu0 0
    %3177 = vmatprep.subr.bf16.mxu0 0
    %3178 = vmatpush1.bf16.msra.mxu0 0
    %3179 = vmatprep.subr.bf16.mxu0 0
    %3180 = vmatpush1.bf16.msra.mxu0 0
    %3181 = vmatprep.subr.bf16.mxu0 0
    %3182 = vmatpush1.bf16.msra.mxu0 0
    %3183 = vmatprep.mubr.bf16.mxu0 0
    %3184 = vmatmul.mubr.bf16.gmra.mrb[0].mxu0 %v3119
    %v3185 = vpop.f32.mrb[0].mxu0
    %v3186 = vadd.f32 0.0, %v3185
    %v3187 = vpop.f32.mrb[0].mxu0
    %v3188 = vpop.f32.mrb[0].mxu0
    %v3189 = vadd.f32 0.0, %v3188
    %v3190 = vpop.f32.mrb[0].mxu0
    %3191 = vmatprep.mubr.bf16.mxu0 0
    %3192 = vmatmul.mubr.bf16.gmra.mrb[0].mxu0 %v3120
    %v3193 = vpop.f32.mrb[0].mxu0
    %v3194 = vadd.f32 0.0, %v3193
    %v3195 = vpop.f32.mrb[0].mxu0
    %v3196 = vpop.f32.mrb[0].mxu0
    %v3197 = vadd.f32 0.0, %v3196
    %v3198 = vpop.f32.mrb[0].mxu0
    %3199 = vmatprep.mubr.bf16.mxu0 0
    %3200 = vmatmul.mubr.bf16.gmra.mrb[0].mxu0 %v3121
    %v3201 = vpop.f32.mrb[0].mxu0
    %v3202 = vadd.f32 0.0, %v3201
    %v3203 = vpop.f32.mrb[0].mxu0
    %v3204 = vpop.f32.mrb[0].mxu0
    %v3205 = vadd.f32 0.0, %v3204
    %v3206 = vpop.f32.mrb[0].mxu0
    %3207 = vmatprep.mubr.bf16.mxu0 0
    %3208 = vmatmul.mubr.bf16.gmra.mrb[0].mxu0 %v3122
    %v3209 = vpop.f32.mrb[0].mxu0
    %v3210 = vadd.f32 0.0, %v3209
    %v3211 = vpop.f32.mrb[0].mxu0
    %v3212 = vpop.f32.mrb[0].mxu0
    %v3213 = vadd.f32 0.0, %v3212
    %v3214 = vpop.f32.mrb[0].mxu0
    %3215 = vmatprep.mubr.bf16.mxu0 0
    %3216 = vmatmul.mubr.bf16.gmra.mrb[0].mxu0 %v3123
    %v3217 = vpop.f32.mrb[0].mxu0
    %v3218 = vadd.f32 0.0, %v3217
    %v3219 = vpop.f32.mrb[0].mxu0
    %v3220 = vpop.f32.mrb[0].mxu0
    %v3221 = vadd.f32 0.0, %v3220
    %v3222 = vpop.f32.mrb[0].mxu0
    %3223 = vmatprep.mubr.bf16.mxu0 0
    %3224 = vmatmul.mubr.bf16.gmra.mrb[0].mxu0 %v3124
    %v3225 = vpop.f32.mrb[0].mxu0
    %v3226 = vadd.f32 0.0, %v3225
    %v3227 = vpop.f32.mrb[0].mxu0
    %v3228 = vpop.f32.mrb[0].mxu0
    %v3229 = vadd.f32 0.0, %v3228
    %v3230 = vpop.f32.mrb[0].mxu0
    %3231 = vmatprep.mubr.bf16.mxu0 0
    %3232 = vmatmul.mubr.bf16.gmra.mrb[0].mxu0 %v3125
    %v3233 = vpop.f32.mrb[0].mxu0
    %v3234 = vadd.f32 0.0, %v3233
    %v3235 = vpop.f32.mrb[0].mxu0
    %v3236 = vpop.f32.mrb[0].mxu0
    %v3237 = vadd.f32 0.0, %v3236
    %v3238 = vpop.f32.mrb[0].mxu0
    %3239 = vmatprep.mubr.bf16.mxu0 0
    %3240 = vmatmul.mubr.bf16.gmra.mrb[0].mxu0 %v3126
    %v3241 = vpop.f32.mrb[0].mxu0
    %v3242 = vadd.f32 0.0, %v3241
    %v3243 = vpop.f32.mrb[0].mxu0
    %v3244 = vpop.f32.mrb[0].mxu0
    %v3245 = vadd.f32 0.0, %v3244
    %v3246 = vpop.f32.mrb[0].mxu0
    %3247 = vdwg.mxu0
    %v3248 = vpack.c.bf16 %v3189, %v3186
    %v3249 = vpack.c.bf16 %v3197, %v3194
    %v3250 = vpack.c.bf16 %v3205, %v3202
    %v3251 = vpack.c.bf16 %v3213, %v3210
    %v3252 = vpack.c.bf16 %v3221, %v3218
    %v3253 = vpack.c.bf16 %v3229, %v3226
    %v3254 = vpack.c.bf16 %v3237, %v3234
    %v3255 = vpack.c.bf16 %v3245, %v3242
    %s3256 = scalar_lea.vmem %s5, 16
    %v3257 = vld [vmem:[%s3256] sm:$0xf]
    %v3259 = vsel %vm253, %v3248, 0
    %v3262 = vsel %vm253, %v3249, 0
    %v3265 = vsel %vm253, %v3250, 0
    %v3268 = vsel %vm253, %v3251, 0
    %v3271 = vsel %vm253, %v3252, 0
    %v3274 = vsel %vm253, %v3253, 0
    %v3277 = vsel %vm253, %v3254, 0
    %v3280 = vsel %vm253, %v3255, 0
    %v3283 = vsel %vm705, %v3257, 0
    %3285 = vmatprep.subr.bf16.mxu0 0
    %3286 = vmatpush1.bf16.msra.mxu0 %v3283
    %3287 = vmatprep.subr.bf16.mxu0 0
    %3288 = vmatpush1.bf16.msra.mxu0 0
    %3289 = vmatprep.subr.bf16.mxu0 0
    %3290 = vmatpush1.bf16.msra.mxu0 0
    %3291 = vmatprep.subr.bf16.mxu0 0
    %3292 = vmatpush1.bf16.msra.mxu0 0
    %3293 = vmatprep.subr.bf16.mxu0 0
    %3294 = vmatpush1.bf16.msra.mxu0 0
    %3295 = vmatprep.subr.bf16.mxu0 0
    %3296 = vmatpush1.bf16.msra.mxu0 0
    %3297 = vmatprep.subr.bf16.mxu0 0
    %3298 = vmatpush1.bf16.msra.mxu0 0
    %3299 = vmatprep.subr.bf16.mxu0 0
    %3300 = vmatpush1.bf16.msra.mxu0 0
    %3301 = vmatprep.subr.bf16.mxu0 0
    %3302 = vmatpush1.bf16.msra.mxu0 0
    %3303 = vmatprep.subr.bf16.mxu0 0
    %3304 = vmatpush1.bf16.msra.mxu0 0
    %3305 = vmatprep.subr.bf16.mxu0 0
    %3306 = vmatpush1.bf16.msra.mxu0 0
    %3307 = vmatprep.subr.bf16.mxu0 0
    %3308 = vmatpush1.bf16.msra.mxu0 0
    %3309 = vmatprep.subr.bf16.mxu0 0
    %3310 = vmatpush1.bf16.msra.mxu0 0
    %3311 = vmatprep.subr.bf16.mxu0 0
    %3312 = vmatpush1.bf16.msra.mxu0 0
    %3313 = vmatprep.subr.bf16.mxu0 0
    %3314 = vmatpush1.bf16.msra.mxu0 0
    %3315 = vmatprep.subr.bf16.mxu0 0
    %3316 = vmatpush1.bf16.msra.mxu0 0
    %3317 = vmatprep.mubr.bf16.mxu0 0
    %3318 = vmatmul.mubr.bf16.gmra.mrb[0].mxu0 %v3259
    %v3319 = vpop.f32.mrb[0].mxu0
    %v3320 = vadd.f32 0.0, %v3319
    %v3321 = vpop.f32.mrb[0].mxu0
    %v3322 = vpop.f32.mrb[0].mxu0
    %v3323 = vadd.f32 0.0, %v3322
    %v3324 = vpop.f32.mrb[0].mxu0
    %3325 = vmatprep.mubr.bf16.mxu0 0
    %3326 = vmatmul.mubr.bf16.gmra.mrb[0].mxu0 %v3262
    %v3327 = vpop.f32.mrb[0].mxu0
    %v3328 = vadd.f32 0.0, %v3327
    %v3329 = vpop.f32.mrb[0].mxu0
    %v3330 = vpop.f32.mrb[0].mxu0
    %v3331 = vadd.f32 0.0, %v3330
    %v3332 = vpop.f32.mrb[0].mxu0
    %3333 = vmatprep.mubr.bf16.mxu0 0
    %3334 = vmatmul.mubr.bf16.gmra.mrb[0].mxu0 %v3265
    %v3335 = vpop.f32.mrb[0].mxu0
    %v3336 = vadd.f32 0.0, %v3335
    %v3337 = vpop.f32.mrb[0].mxu0
    %v3338 = vpop.f32.mrb[0].mxu0
    %v3339 = vadd.f32 0.0, %v3338
    %v3340 = vpop.f32.mrb[0].mxu0
    %3341 = vmatprep.mubr.bf16.mxu0 0
    %3342 = vmatmul.mubr.bf16.gmra.mrb[0].mxu0 %v3268
    %v3343 = vpop.f32.mrb[0].mxu0
    %v3344 = vadd.f32 0.0, %v3343
    %v3345 = vpop.f32.mrb[0].mxu0
    %v3346 = vpop.f32.mrb[0].mxu0
    %v3347 = vadd.f32 0.0, %v3346
    %v3348 = vpop.f32.mrb[0].mxu0
    %3349 = vmatprep.mubr.bf16.mxu0 0
    %3350 = vmatmul.mubr.bf16.gmra.mrb[0].mxu0 %v3271
    %v3351 = vpop.f32.mrb[0].mxu0
    %v3352 = vadd.f32 0.0, %v3351
    %v3353 = vpop.f32.mrb[0].mxu0
    %v3354 = vpop.f32.mrb[0].mxu0
    %v3355 = vadd.f32 0.0, %v3354
    %v3356 = vpop.f32.mrb[0].mxu0
    %3357 = vmatprep.mubr.bf16.mxu0 0
    %3358 = vmatmul.mubr.bf16.gmra.mrb[0].mxu0 %v3274
    %v3359 = vpop.f32.mrb[0].mxu0
    %v3360 = vadd.f32 0.0, %v3359
    %v3361 = vpop.f32.mrb[0].mxu0
    %v3362 = vpop.f32.mrb[0].mxu0
    %v3363 = vadd.f32 0.0, %v3362
    %v3364 = vpop.f32.mrb[0].mxu0
    %3365 = vmatprep.mubr.bf16.mxu0 0
    %3366 = vmatmul.mubr.bf16.gmra.mrb[0].mxu0 %v3277
    %v3367 = vpop.f32.mrb[0].mxu0
    %v3368 = vadd.f32 0.0, %v3367
    %v3369 = vpop.f32.mrb[0].mxu0
    %v3370 = vpop.f32.mrb[0].mxu0
    %v3371 = vadd.f32 0.0, %v3370
    %v3372 = vpop.f32.mrb[0].mxu0
    %3373 = vmatprep.mubr.bf16.mxu0 0
    %3374 = vmatmul.mubr.bf16.gmra.mrb[0].mxu0 %v3280
    %v3375 = vpop.f32.mrb[0].mxu0
    %v3376 = vadd.f32 0.0, %v3375
    %v3377 = vpop.f32.mrb[0].mxu0
    %v3378 = vpop.f32.mrb[0].mxu0
    %v3379 = vadd.f32 0.0, %v3378
    %v3380 = vpop.f32.mrb[0].mxu0
    %3381 = vdwg.mxu0
    %v3382 = vadd.f32 %v2781, %v3320
    %v3383 = vadd.f32 %v2781, %v3323
    %v3384 = vadd.f32 %v2781, %v3328
    %v3385 = vadd.f32 %v2781, %v3331
    %v3386 = vadd.f32 %v2781, %v3336
    %v3387 = vadd.f32 %v2781, %v3339
    %v3388 = vadd.f32 %v2781, %v3344
    %v3389 = vadd.f32 %v2781, %v3347
    %v3390 = vadd.f32 %v2781, %v3352
    %v3391 = vadd.f32 %v2781, %v3355
    %v3392 = vadd.f32 %v2781, %v3360
    %v3393 = vadd.f32 %v2781, %v3363
    %v3394 = vadd.f32 %v2781, %v3368
    %v3395 = vadd.f32 %v2781, %v3371
    %v3396 = vadd.f32 %v2781, %v3376
    %v3397 = vadd.f32 %v2781, %v3379
    %3398 = vrot.lane.b32.xlu0 %v2782, 120
    %v3399 = vpop.permute.xlu0 %3398
    %3400 = vrot.lane.b32.xlu0 %v2783, 120
    %v3401 = vpop.permute.xlu0 %3400
    %3402 = vrot.lane.b32.xlu0 %v2784, 120
    %v3403 = vpop.permute.xlu0 %3402
    %3404 = vrot.lane.b32.xlu0 %v2785, 120
    %v3405 = vpop.permute.xlu0 %3404
    %3406 = vrot.lane.b32.xlu0 %v2786, 120
    %v3407 = vpop.permute.xlu0 %3406
    %3408 = vrot.lane.b32.xlu0 %v2787, 120
    %v3409 = vpop.permute.xlu0 %3408
    %3410 = vrot.lane.b32.xlu0 %v2788, 120
    %v3411 = vpop.permute.xlu0 %3410
    %3412 = vrot.lane.b32.xlu0 %v2789, 120
    %v3413 = vpop.permute.xlu0 %3412
    %3414 = vrot.lane.b32.xlu0 %v2782, 88
    %v3415 = vpop.permute.xlu0 %3414
    %3416 = vrot.lane.b32.xlu0 %v2783, 88
    %v3417 = vpop.permute.xlu0 %3416
    %3418 = vrot.lane.b32.xlu0 %v2784, 88
    %v3419 = vpop.permute.xlu0 %3418
    %3420 = vrot.lane.b32.xlu0 %v2785, 88
    %v3421 = vpop.permute.xlu0 %3420
    %3422 = vrot.lane.b32.xlu0 %v2786, 88
    %v3423 = vpop.permute.xlu0 %3422
    %3424 = vrot.lane.b32.xlu0 %v2787, 88
    %v3425 = vpop.permute.xlu0 %3424
    %3426 = vrot.lane.b32.xlu0 %v2788, 88
    %v3427 = vpop.permute.xlu0 %3426
    %3428 = vrot.lane.b32.xlu0 %v2789, 88
    %v3429 = vpop.permute.xlu0 %3428
    %v3431 = vsel %vm253, %v3399, 0
    %v3434 = vsel %vm253, %v3401, 0
    %v3437 = vsel %vm253, %v3403, 0
    %v3440 = vsel %vm253, %v3405, 0
    %v3443 = vsel %vm253, %v3407, 0
    %v3446 = vsel %vm253, %v3409, 0
    %v3449 = vsel %vm253, %v3411, 0
    %v3452 = vsel %vm253, %v3413, 0
    %v3455 = vsel %vm253, %v3415, 0
    %v3458 = vsel %vm253, %v3417, 0
    %v3461 = vsel %vm253, %v3419, 0
    %v3464 = vsel %vm253, %v3421, 0
    %v3467 = vsel %vm253, %v3423, 0
    %v3470 = vsel %vm253, %v3425, 0
    %v3473 = vsel %vm253, %v3427, 0
    %v3476 = vsel %vm253, %v3429, 0
    %3478 = vmatprep.subr.bf16.mxu0 0
    %3479 = vmatpush1.bf16.xpose.msra.mxu0 %v3455
    %3480 = vmatprep.subr.bf16.mxu0 0
    %3481 = vmatpush1.bf16.xpose.msra.mxu0 %v3458
    %3482 = vmatprep.subr.bf16.mxu0 0
    %3483 = vmatpush1.bf16.xpose.msra.mxu0 %v3461
    %3484 = vmatprep.subr.bf16.mxu0 0
    %3485 = vmatpush1.bf16.xpose.msra.mxu0 %v3464
    %3486 = vmatprep.subr.bf16.mxu0 0
    %3487 = vmatpush1.bf16.xpose.msra.mxu0 %v3467
    %3488 = vmatprep.subr.bf16.mxu0 0
    %3489 = vmatpush1.bf16.xpose.msra.mxu0 %v3470
    %3490 = vmatprep.subr.bf16.mxu0 0
    %3491 = vmatpush1.bf16.xpose.msra.mxu0 %v3473
    %3492 = vmatprep.subr.bf16.mxu0 0
    %3493 = vmatpush1.bf16.xpose.msra.mxu0 %v3476
    %3494 = vmatprep.subr.bf16.mxu0 0
    %3495 = vmatpush1.bf16.xpose.msra.mxu0 0
    %3496 = vmatprep.subr.bf16.mxu0 0
    %3497 = vmatpush1.bf16.xpose.msra.mxu0 0
    %3498 = vmatprep.subr.bf16.mxu0 0
    %3499 = vmatpush1.bf16.xpose.msra.mxu0 0
    %3500 = vmatprep.subr.bf16.mxu0 0
    %3501 = vmatpush1.bf16.xpose.msra.mxu0 0
    %3502 = vmatprep.subr.bf16.mxu0 0
    %3503 = vmatpush1.bf16.xpose.msra.mxu0 0
    %3504 = vmatprep.subr.bf16.mxu0 0
    %3505 = vmatpush1.bf16.xpose.msra.mxu0 0
    %3506 = vmatprep.subr.bf16.mxu0 0
    %3507 = vmatpush1.bf16.xpose.msra.mxu0 0
    %3508 = vmatprep.subr.bf16.mxu0 0
    %3509 = vmatpush1.bf16.xpose.msra.mxu0 0
    %3510 = vmatprep.mubr.bf16.mxu0 0
    %3511 = vmatmul.mubr.bf16.gmra.mrb[0].mxu0 %v3431
    %v3512 = vpop.f32.mrb[0].mxu0
    %v3513 = vadd.f32 %v2790, %v3512
    %v3514 = vpop.f32.mrb[0].mxu0
    %v3515 = vpop.f32.mrb[0].mxu0
    %v3516 = vadd.f32 %v2791, %v3515
    %v3517 = vpop.f32.mrb[0].mxu0
    %3518 = vmatprep.mubr.bf16.mxu0 0
    %3519 = vmatmul.mubr.bf16.gmra.mrb[0].mxu0 %v3434
    %v3520 = vpop.f32.mrb[0].mxu0
    %v3521 = vadd.f32 %v2792, %v3520
    %v3522 = vpop.f32.mrb[0].mxu0
    %v3523 = vpop.f32.mrb[0].mxu0
    %v3524 = vadd.f32 %v2793, %v3523
    %v3525 = vpop.f32.mrb[0].mxu0
    %3526 = vmatprep.mubr.bf16.mxu0 0
    %3527 = vmatmul.mubr.bf16.gmra.mrb[0].mxu0 %v3437
    %v3528 = vpop.f32.mrb[0].mxu0
    %v3529 = vadd.f32 %v2794, %v3528
    %v3530 = vpop.f32.mrb[0].mxu0
    %v3531 = vpop.f32.mrb[0].mxu0
    %v3532 = vadd.f32 %v2795, %v3531
    %v3533 = vpop.f32.mrb[0].mxu0
    %3534 = vmatprep.mubr.bf16.mxu0 0
    %3535 = vmatmul.mubr.bf16.gmra.mrb[0].mxu0 %v3440
    %v3536 = vpop.f32.mrb[0].mxu0
    %v3537 = vadd.f32 %v2796, %v3536
    %v3538 = vpop.f32.mrb[0].mxu0
    %v3539 = vpop.f32.mrb[0].mxu0
    %v3540 = vadd.f32 %v2797, %v3539
    %v3541 = vpop.f32.mrb[0].mxu0
    %3542 = vmatprep.mubr.bf16.mxu0 0
    %3543 = vmatmul.mubr.bf16.gmra.mrb[0].mxu0 %v3443
    %v3544 = vpop.f32.mrb[0].mxu0
    %v3545 = vadd.f32 %v2798, %v3544
    %v3546 = vpop.f32.mrb[0].mxu0
    %v3547 = vpop.f32.mrb[0].mxu0
    %v3548 = vadd.f32 %v2799, %v3547
    %v3549 = vpop.f32.mrb[0].mxu0
    %3550 = vmatprep.mubr.bf16.mxu0 0
    %3551 = vmatmul.mubr.bf16.gmra.mrb[0].mxu0 %v3446
    %v3552 = vpop.f32.mrb[0].mxu0
    %v3553 = vadd.f32 %v2800, %v3552
    %v3554 = vpop.f32.mrb[0].mxu0
    %v3555 = vpop.f32.mrb[0].mxu0
    %v3556 = vadd.f32 %v2801, %v3555
    %v3557 = vpop.f32.mrb[0].mxu0
    %3558 = vmatprep.mubr.bf16.mxu0 0
    %3559 = vmatmul.mubr.bf16.gmra.mrb[0].mxu0 %v3449
    %v3560 = vpop.f32.mrb[0].mxu0
    %v3561 = vadd.f32 %v2802, %v3560
    %v3562 = vpop.f32.mrb[0].mxu0
    %v3563 = vpop.f32.mrb[0].mxu0
    %v3564 = vadd.f32 %v2803, %v3563
    %v3565 = vpop.f32.mrb[0].mxu0
    %3566 = vmatprep.mubr.bf16.mxu0 0
    %3567 = vmatmul.mubr.bf16.gmra.mrb[0].mxu0 %v3452
    %v3568 = vpop.f32.mrb[0].mxu0
    %v3569 = vadd.f32 %v2804, %v3568
    %v3570 = vpop.f32.mrb[0].mxu0
    %v3571 = vpop.f32.mrb[0].mxu0
    %v3572 = vadd.f32 %v2805, %v3571
    %v3573 = vpop.f32.mrb[0].mxu0
    %3574 = vdwg.mxu0
    %3575 = vmax.xlane.f32.xlu0 %v3513
    %v3576 = vpop.xlane.xlu0 %3575
    %3577 = vmax.xlane.f32.xlu0 %v3516
    %v3578 = vpop.xlane.xlu0 %3577
    %3579 = vmax.xlane.f32.xlu0 %v3521
    %v3580 = vpop.xlane.xlu0 %3579
    %3581 = vmax.xlane.f32.xlu0 %v3524
    %v3582 = vpop.xlane.xlu0 %3581
    %3583 = vmax.xlane.f32.xlu0 %v3529
    %v3584 = vpop.xlane.xlu0 %3583
    %3585 = vmax.xlane.f32.xlu0 %v3532
    %v3586 = vpop.xlane.xlu0 %3585
    %3587 = vmax.xlane.f32.xlu0 %v3537
    %v3588 = vpop.xlane.xlu0 %3587
    %3589 = vmax.xlane.f32.xlu0 %v3540
    %v3590 = vpop.xlane.xlu0 %3589
    %3591 = vmax.xlane.f32.xlu0 %v3545
    %v3592 = vpop.xlane.xlu0 %3591
    %3593 = vmax.xlane.f32.xlu0 %v3548
    %v3594 = vpop.xlane.xlu0 %3593
    %3595 = vmax.xlane.f32.xlu0 %v3553
    %v3596 = vpop.xlane.xlu0 %3595
    %3597 = vmax.xlane.f32.xlu0 %v3556
    %v3598 = vpop.xlane.xlu0 %3597
    %3599 = vmax.xlane.f32.xlu0 %v3561
    %v3600 = vpop.xlane.xlu0 %3599
    %3601 = vmax.xlane.f32.xlu0 %v3564
    %v3602 = vpop.xlane.xlu0 %3601
    %3603 = vmax.xlane.f32.xlu0 %v3569
    %v3604 = vpop.xlane.xlu0 %3603
    %3605 = vmax.xlane.f32.xlu0 %v3572
    %v3606 = vpop.xlane.xlu0 %3605
    %v3607 = vsub.f32 %v3513, %v3576
    %v3608 = vsub.f32 %v3516, %v3578
    %v3609 = vsub.f32 %v3521, %v3580
    %v3610 = vsub.f32 %v3524, %v3582
    %v3611 = vsub.f32 %v3529, %v3584
    %v3612 = vsub.f32 %v3532, %v3586
    %v3613 = vsub.f32 %v3537, %v3588
    %v3614 = vsub.f32 %v3540, %v3590
    %v3615 = vsub.f32 %v3545, %v3592
    %v3616 = vsub.f32 %v3548, %v3594
    %v3617 = vsub.f32 %v3553, %v3596
    %v3618 = vsub.f32 %v3556, %v3598
    %v3619 = vsub.f32 %v3561, %v3600
    %v3620 = vsub.f32 %v3564, %v3602
    %v3621 = vsub.f32 %v3569, %v3604
    %v3622 = vsub.f32 %v3572, %v3606
    %v3623 = vmul.f32 %v3607, 1.442695
    %v3624 = vpow.pop %v3623
    %v3625 = vmul.f32 %v3608, 1.442695
    %v3626 = vpow.pop %v3625
    %v3627 = vmul.f32 %v3609, 1.442695
    %v3628 = vpow.pop %v3627
    %v3629 = vmul.f32 %v3610, 1.442695
    %v3630 = vpow.pop %v3629
    %v3631 = vmul.f32 %v3611, 1.442695
    %v3632 = vpow.pop %v3631
    %v3633 = vmul.f32 %v3612, 1.442695
    %v3634 = vpow.pop %v3633
    %v3635 = vmul.f32 %v3613, 1.442695
    %v3636 = vpow.pop %v3635
    %v3637 = vmul.f32 %v3614, 1.442695
    %v3638 = vpow.pop %v3637
    %v3639 = vmul.f32 %v3615, 1.442695
    %v3640 = vpow.pop %v3639
    %v3641 = vmul.f32 %v3616, 1.442695
    %v3642 = vpow.pop %v3641
    %v3643 = vmul.f32 %v3617, 1.442695
    %v3644 = vpow.pop %v3643
    %v3645 = vmul.f32 %v3618, 1.442695
    %v3646 = vpow.pop %v3645
    %v3647 = vmul.f32 %v3619, 1.442695
    %v3648 = vpow.pop %v3647
    %v3649 = vmul.f32 %v3620, 1.442695
    %v3650 = vpow.pop %v3649
    %v3651 = vmul.f32 %v3621, 1.442695
    %v3652 = vpow.pop %v3651
    %v3653 = vmul.f32 %v3622, 1.442695
    %v3654 = vpow.pop %v3653
    %3655 = vadd.xlane.f32.xlu0 %v3624
    %v3656 = vpop.xlane.xlu0 %3655
    %3657 = vadd.xlane.f32.xlu0 %v3626
    %v3658 = vpop.xlane.xlu0 %3657
    %3659 = vadd.xlane.f32.xlu0 %v3628
    %v3660 = vpop.xlane.xlu0 %3659
    %3661 = vadd.xlane.f32.xlu0 %v3630
    %v3662 = vpop.xlane.xlu0 %3661
    %3663 = vadd.xlane.f32.xlu0 %v3632
    %v3664 = vpop.xlane.xlu0 %3663
    %3665 = vadd.xlane.f32.xlu0 %v3634
    %v3666 = vpop.xlane.xlu0 %3665
    %3667 = vadd.xlane.f32.xlu0 %v3636
    %v3668 = vpop.xlane.xlu0 %3667
    %3669 = vadd.xlane.f32.xlu0 %v3638
    %v3670 = vpop.xlane.xlu0 %3669
    %3671 = vadd.xlane.f32.xlu0 %v3640
    %v3672 = vpop.xlane.xlu0 %3671
    %3673 = vadd.xlane.f32.xlu0 %v3642
    %v3674 = vpop.xlane.xlu0 %3673
    %3675 = vadd.xlane.f32.xlu0 %v3644
    %v3676 = vpop.xlane.xlu0 %3675
    %3677 = vadd.xlane.f32.xlu0 %v3646
    %v3678 = vpop.xlane.xlu0 %3677
    %3679 = vadd.xlane.f32.xlu0 %v3648
    %v3680 = vpop.xlane.xlu0 %3679
    %3681 = vadd.xlane.f32.xlu0 %v3650
    %v3682 = vpop.xlane.xlu0 %3681
    %3683 = vadd.xlane.f32.xlu0 %v3652
    %v3684 = vpop.xlane.xlu0 %3683
    %3685 = vadd.xlane.f32.xlu0 %v3654
    %v3686 = vpop.xlane.xlu0 %3685
    %v3687 = vrcp.pop %v3656
    %v3688 = vrcp.pop %v3658
    %v3689 = vrcp.pop %v3660
    %v3690 = vrcp.pop %v3662
    %v3691 = vrcp.pop %v3664
    %v3692 = vrcp.pop %v3666
    %v3693 = vrcp.pop %v3668
    %v3694 = vrcp.pop %v3670
    %v3695 = vrcp.pop %v3672
    %v3696 = vrcp.pop %v3674
    %v3697 = vrcp.pop %v3676
    %v3698 = vrcp.pop %v3678
    %v3699 = vrcp.pop %v3680
    %v3700 = vrcp.pop %v3682
    %v3701 = vrcp.pop %v3684
    %v3702 = vrcp.pop %v3686
    %v3703 = vmul.f32 %v3624, %v3687
    %v3704 = vmul.f32 %v3626, %v3688
    %v3705 = vmul.f32 %v3628, %v3689
    %v3706 = vmul.f32 %v3630, %v3690
    %v3707 = vmul.f32 %v3632, %v3691
    %v3708 = vmul.f32 %v3634, %v3692
    %v3709 = vmul.f32 %v3636, %v3693
    %v3710 = vmul.f32 %v3638, %v3694
    %v3711 = vmul.f32 %v3640, %v3695
    %v3712 = vmul.f32 %v3642, %v3696
    %v3713 = vmul.f32 %v3644, %v3697
    %v3714 = vmul.f32 %v3646, %v3698
    %v3715 = vmul.f32 %v3648, %v3699
    %v3716 = vmul.f32 %v3650, %v3700
    %v3717 = vmul.f32 %v3652, %v3701
    %v3718 = vmul.f32 %v3654, %v3702
    %v3719 = vpack.c.bf16 %v3704, %v3703
    %v3720 = vpack.c.bf16 %v3706, %v3705
    %v3721 = vpack.c.bf16 %v3708, %v3707
    %v3722 = vpack.c.bf16 %v3710, %v3709
    %v3723 = vpack.c.bf16 %v3712, %v3711
    %v3724 = vpack.c.bf16 %v3714, %v3713
    %v3725 = vpack.c.bf16 %v3716, %v3715
    %v3726 = vpack.c.bf16 %v3718, %v3717
    %3727 = vrot.lane.b32.xlu0 %v2782, 56
    %v3728 = vpop.permute.xlu0 %3727
    %3729 = vrot.lane.b32.xlu0 %v2783, 56
    %v3730 = vpop.permute.xlu0 %3729
    %3731 = vrot.lane.b32.xlu0 %v2784, 56
    %v3732 = vpop.permute.xlu0 %3731
    %3733 = vrot.lane.b32.xlu0 %v2785, 56
    %v3734 = vpop.permute.xlu0 %3733
    %3735 = vrot.lane.b32.xlu0 %v2786, 56
    %v3736 = vpop.permute.xlu0 %3735
    %3737 = vrot.lane.b32.xlu0 %v2787, 56
    %v3738 = vpop.permute.xlu0 %3737
    %3739 = vrot.lane.b32.xlu0 %v2788, 56
    %v3740 = vpop.permute.xlu0 %3739
    %3741 = vrot.lane.b32.xlu0 %v2789, 56
    %v3742 = vpop.permute.xlu0 %3741
    %3751 = vmatprep.subr.bf16.mxu0 0
    %3752 = vmatpush1.bf16.msra.mxu0 %v3728
    %3753 = vmatprep.subr.bf16.mxu0 0
    %3754 = vmatpush1.bf16.msra.mxu0 %v3730
    %3755 = vmatprep.subr.bf16.mxu0 0
    %3756 = vmatpush1.bf16.msra.mxu0 %v3732
    %3757 = vmatprep.subr.bf16.mxu0 0
    %3758 = vmatpush1.bf16.msra.mxu0 %v3734
    %3759 = vmatprep.subr.bf16.mxu0 0
    %3760 = vmatpush1.bf16.msra.mxu0 %v3736
    %3761 = vmatprep.subr.bf16.mxu0 0
    %3762 = vmatpush1.bf16.msra.mxu0 %v3738
    %3763 = vmatprep.subr.bf16.mxu0 0
    %3764 = vmatpush1.bf16.msra.mxu0 %v3740
    %3765 = vmatprep.subr.bf16.mxu0 0
    %3766 = vmatpush1.bf16.msra.mxu0 %v3742
    %3767 = vmatprep.subr.bf16.mxu0 0
    %3768 = vmatpush1.bf16.msra.mxu0 0
    %3769 = vmatprep.subr.bf16.mxu0 0
    %3770 = vmatpush1.bf16.msra.mxu0 0
    %3771 = vmatprep.subr.bf16.mxu0 0
    %3772 = vmatpush1.bf16.msra.mxu0 0
    %3773 = vmatprep.subr.bf16.mxu0 0
    %3774 = vmatpush1.bf16.msra.mxu0 0
    %3775 = vmatprep.subr.bf16.mxu0 0
    %3776 = vmatpush1.bf16.msra.mxu0 0
    %3777 = vmatprep.subr.bf16.mxu0 0
    %3778 = vmatpush1.bf16.msra.mxu0 0
    %3779 = vmatprep.subr.bf16.mxu0 0
    %3780 = vmatpush1.bf16.msra.mxu0 0
    %3781 = vmatprep.subr.bf16.mxu0 0
    %3782 = vmatpush1.bf16.msra.mxu0 0
    %3783 = vmatprep.mubr.bf16.mxu0 0
    %3784 = vmatmul.mubr.bf16.gmra.mrb[0].mxu0 %v3719
    %v3785 = vpop.f32.mrb[0].mxu0
    %v3786 = vadd.f32 0.0, %v3785
    %v3787 = vpop.f32.mrb[0].mxu0
    %v3788 = vpop.f32.mrb[0].mxu0
    %v3789 = vadd.f32 0.0, %v3788
    %v3790 = vpop.f32.mrb[0].mxu0
    %3791 = vmatprep.mubr.bf16.mxu0 0
    %3792 = vmatmul.mubr.bf16.gmra.mrb[0].mxu0 %v3720
    %v3793 = vpop.f32.mrb[0].mxu0
    %v3794 = vadd.f32 0.0, %v3793
    %v3795 = vpop.f32.mrb[0].mxu0
    %v3796 = vpop.f32.mrb[0].mxu0
    %v3797 = vadd.f32 0.0, %v3796
    %v3798 = vpop.f32.mrb[0].mxu0
    %3799 = vmatprep.mubr.bf16.mxu0 0
    %3800 = vmatmul.mubr.bf16.gmra.mrb[0].mxu0 %v3721
    %v3801 = vpop.f32.mrb[0].mxu0
    %v3802 = vadd.f32 0.0, %v3801
    %v3803 = vpop.f32.mrb[0].mxu0
    %v3804 = vpop.f32.mrb[0].mxu0
    %v3805 = vadd.f32 0.0, %v3804
    %v3806 = vpop.f32.mrb[0].mxu0
    %3807 = vmatprep.mubr.bf16.mxu0 0
    %3808 = vmatmul.mubr.bf16.gmra.mrb[0].mxu0 %v3722
    %v3809 = vpop.f32.mrb[0].mxu0
    %v3810 = vadd.f32 0.0, %v3809
    %v3811 = vpop.f32.mrb[0].mxu0
    %v3812 = vpop.f32.mrb[0].mxu0
    %v3813 = vadd.f32 0.0, %v3812
    %v3814 = vpop.f32.mrb[0].mxu0
    %3815 = vmatprep.mubr.bf16.mxu0 0
    %3816 = vmatmul.mubr.bf16.gmra.mrb[0].mxu0 %v3723
    %v3817 = vpop.f32.mrb[0].mxu0
    %v3818 = vadd.f32 0.0, %v3817
    %v3819 = vpop.f32.mrb[0].mxu0
    %v3820 = vpop.f32.mrb[0].mxu0
    %v3821 = vadd.f32 0.0, %v3820
    %v3822 = vpop.f32.mrb[0].mxu0
    %3823 = vmatprep.mubr.bf16.mxu0 0
    %3824 = vmatmul.mubr.bf16.gmra.mrb[0].mxu0 %v3724
    %v3825 = vpop.f32.mrb[0].mxu0
    %v3826 = vadd.f32 0.0, %v3825
    %v3827 = vpop.f32.mrb[0].mxu0
    %v3828 = vpop.f32.mrb[0].mxu0
    %v3829 = vadd.f32 0.0, %v3828
    %v3830 = vpop.f32.mrb[0].mxu0
    %3831 = vmatprep.mubr.bf16.mxu0 0
    %3832 = vmatmul.mubr.bf16.gmra.mrb[0].mxu0 %v3725
    %v3833 = vpop.f32.mrb[0].mxu0
    %v3834 = vadd.f32 0.0, %v3833
    %v3835 = vpop.f32.mrb[0].mxu0
    %v3836 = vpop.f32.mrb[0].mxu0
    %v3837 = vadd.f32 0.0, %v3836
    %v3838 = vpop.f32.mrb[0].mxu0
    %3839 = vmatprep.mubr.bf16.mxu0 0
    %3840 = vmatmul.mubr.bf16.gmra.mrb[0].mxu0 %v3726
    %v3841 = vpop.f32.mrb[0].mxu0
    %v3842 = vadd.f32 0.0, %v3841
    %v3843 = vpop.f32.mrb[0].mxu0
    %v3844 = vpop.f32.mrb[0].mxu0
    %v3845 = vadd.f32 0.0, %v3844
    %v3846 = vpop.f32.mrb[0].mxu0
    %3847 = vdwg.mxu0
    %v3848 = vpack.c.bf16 %v3789, %v3786
    %v3849 = vpack.c.bf16 %v3797, %v3794
    %v3850 = vpack.c.bf16 %v3805, %v3802
    %v3851 = vpack.c.bf16 %v3813, %v3810
    %v3852 = vpack.c.bf16 %v3821, %v3818
    %v3853 = vpack.c.bf16 %v3829, %v3826
    %v3854 = vpack.c.bf16 %v3837, %v3834
    %v3855 = vpack.c.bf16 %v3845, %v3842
    %v3856 = vld [vmem:[%s3256 + $0x4] sm:$0xf]
    %v3858 = vsel %vm253, %v3848, 0
    %v3861 = vsel %vm253, %v3849, 0
    %v3864 = vsel %vm253, %v3850, 0
    %v3867 = vsel %vm253, %v3851, 0
    %v3870 = vsel %vm253, %v3852, 0
    %v3873 = vsel %vm253, %v3853, 0
    %v3876 = vsel %vm253, %v3854, 0
    %v3879 = vsel %vm253, %v3855, 0
    %v3882 = vsel %vm705, %v3856, 0
    %3884 = vmatprep.subr.bf16.mxu0 0
    %3885 = vmatpush1.bf16.msra.mxu0 %v3882
    %3886 = vmatprep.subr.bf16.mxu0 0
    %3887 = vmatpush1.bf16.msra.mxu0 0
    %3888 = vmatprep.subr.bf16.mxu0 0
    %3889 = vmatpush1.bf16.msra.mxu0 0
    %3890 = vmatprep.subr.bf16.mxu0 0
    %3891 = vmatpush1.bf16.msra.mxu0 0
    %3892 = vmatprep.subr.bf16.mxu0 0
    %3893 = vmatpush1.bf16.msra.mxu0 0
    %3894 = vmatprep.subr.bf16.mxu0 0
    %3895 = vmatpush1.bf16.msra.mxu0 0
    %3896 = vmatprep.subr.bf16.mxu0 0
    %3897 = vmatpush1.bf16.msra.mxu0 0
    %3898 = vmatprep.subr.bf16.mxu0 0
    %3899 = vmatpush1.bf16.msra.mxu0 0
    %3900 = vmatprep.subr.bf16.mxu0 0
    %3901 = vmatpush1.bf16.msra.mxu0 0
    %3902 = vmatprep.subr.bf16.mxu0 0
    %3903 = vmatpush1.bf16.msra.mxu0 0
    %3904 = vmatprep.subr.bf16.mxu0 0
    %3905 = vmatpush1.bf16.msra.mxu0 0
    %3906 = vmatprep.subr.bf16.mxu0 0
    %3907 = vmatpush1.bf16.msra.mxu0 0
    %3908 = vmatprep.subr.bf16.mxu0 0
    %3909 = vmatpush1.bf16.msra.mxu0 0
    %3910 = vmatprep.subr.bf16.mxu0 0
    %3911 = vmatpush1.bf16.msra.mxu0 0
    %3912 = vmatprep.subr.bf16.mxu0 0
    %3913 = vmatpush1.bf16.msra.mxu0 0
    %3914 = vmatprep.subr.bf16.mxu0 0
    %3915 = vmatpush1.bf16.msra.mxu0 0
    %3916 = vmatprep.mubr.bf16.mxu0 0
    %3917 = vmatmul.mubr.bf16.gmra.mrb[0].mxu0 %v3858
    %v3918 = vpop.f32.mrb[0].mxu0
    %v3919 = vadd.f32 0.0, %v3918
    %v3920 = vpop.f32.mrb[0].mxu0
    %v3921 = vpop.f32.mrb[0].mxu0
    %v3922 = vadd.f32 0.0, %v3921
    %v3923 = vpop.f32.mrb[0].mxu0
    %3924 = vmatprep.mubr.bf16.mxu0 0
    %3925 = vmatmul.mubr.bf16.gmra.mrb[0].mxu0 %v3861
    %v3926 = vpop.f32.mrb[0].mxu0
    %v3927 = vadd.f32 0.0, %v3926
    %v3928 = vpop.f32.mrb[0].mxu0
    %v3929 = vpop.f32.mrb[0].mxu0
    %v3930 = vadd.f32 0.0, %v3929
    %v3931 = vpop.f32.mrb[0].mxu0
    %3932 = vmatprep.mubr.bf16.mxu0 0
    %3933 = vmatmul.mubr.bf16.gmra.mrb[0].mxu0 %v3864
    %v3934 = vpop.f32.mrb[0].mxu0
    %v3935 = vadd.f32 0.0, %v3934
    %v3936 = vpop.f32.mrb[0].mxu0
    %v3937 = vpop.f32.mrb[0].mxu0
    %v3938 = vadd.f32 0.0, %v3937
    %v3939 = vpop.f32.mrb[0].mxu0
    %3940 = vmatprep.mubr.bf16.mxu0 0
    %3941 = vmatmul.mubr.bf16.gmra.mrb[0].mxu0 %v3867
    %v3942 = vpop.f32.mrb[0].mxu0
    %v3943 = vadd.f32 0.0, %v3942
    %v3944 = vpop.f32.mrb[0].mxu0
    %v3945 = vpop.f32.mrb[0].mxu0
    %v3946 = vadd.f32 0.0, %v3945
    %v3947 = vpop.f32.mrb[0].mxu0
    %3948 = vmatprep.mubr.bf16.mxu0 0
    %3949 = vmatmul.mubr.bf16.gmra.mrb[0].mxu0 %v3870
    %v3950 = vpop.f32.mrb[0].mxu0
    %v3951 = vadd.f32 0.0, %v3950
    %v3952 = vpop.f32.mrb[0].mxu0
    %v3953 = vpop.f32.mrb[0].mxu0
    %v3954 = vadd.f32 0.0, %v3953
    %v3955 = vpop.f32.mrb[0].mxu0
    %3956 = vmatprep.mubr.bf16.mxu0 0
    %3957 = vmatmul.mubr.bf16.gmra.mrb[0].mxu0 %v3873
    %v3958 = vpop.f32.mrb[0].mxu0
    %v3959 = vadd.f32 0.0, %v3958
    %v3960 = vpop.f32.mrb[0].mxu0
    %v3961 = vpop.f32.mrb[0].mxu0
    %v3962 = vadd.f32 0.0, %v3961
    %v3963 = vpop.f32.mrb[0].mxu0
    %3964 = vmatprep.mubr.bf16.mxu0 0
    %3965 = vmatmul.mubr.bf16.gmra.mrb[0].mxu0 %v3876
    %v3966 = vpop.f32.mrb[0].mxu0
    %v3967 = vadd.f32 0.0, %v3966
    %v3968 = vpop.f32.mrb[0].mxu0
    %v3969 = vpop.f32.mrb[0].mxu0
    %v3970 = vadd.f32 0.0, %v3969
    %v3971 = vpop.f32.mrb[0].mxu0
    %3972 = vmatprep.mubr.bf16.mxu0 0
    %3973 = vmatmul.mubr.bf16.gmra.mrb[0].mxu0 %v3879
    %v3974 = vpop.f32.mrb[0].mxu0
    %v3975 = vadd.f32 0.0, %v3974
    %v3976 = vpop.f32.mrb[0].mxu0
    %v3977 = vpop.f32.mrb[0].mxu0
    %v3978 = vadd.f32 0.0, %v3977
    %v3979 = vpop.f32.mrb[0].mxu0
    %3980 = vdwg.mxu0
    %v3981 = vadd.f32 %v3382, %v3919
    %v3982 = vadd.f32 %v3383, %v3922
    %v3983 = vadd.f32 %v3384, %v3927
    %v3984 = vadd.f32 %v3385, %v3930
    %v3985 = vadd.f32 %v3386, %v3935
    %v3986 = vadd.f32 %v3387, %v3938
    %v3987 = vadd.f32 %v3388, %v3943
    %v3988 = vadd.f32 %v3389, %v3946
    %v3989 = vadd.f32 %v3390, %v3951
    %v3990 = vadd.f32 %v3391, %v3954
    %v3991 = vadd.f32 %v3392, %v3959
    %v3992 = vadd.f32 %v3393, %v3962
    %v3993 = vadd.f32 %v3394, %v3967
    %v3994 = vadd.f32 %v3395, %v3970
    %v3995 = vadd.f32 %v3396, %v3975
    %v3996 = vadd.f32 %v3397, %v3978
    %3997 = vrot.lane.b32.xlu0 %v2782, 112
    %v3998 = vpop.permute.xlu0 %3997
    %3999 = vrot.lane.b32.xlu0 %v2783, 112
    %v4000 = vpop.permute.xlu0 %3999
    %4001 = vrot.lane.b32.xlu0 %v2784, 112
    %v4002 = vpop.permute.xlu0 %4001
    %4003 = vrot.lane.b32.xlu0 %v2785, 112
    %v4004 = vpop.permute.xlu0 %4003
    %4005 = vrot.lane.b32.xlu0 %v2786, 112
    %v4006 = vpop.permute.xlu0 %4005
    %4007 = vrot.lane.b32.xlu0 %v2787, 112
    %v4008 = vpop.permute.xlu0 %4007
    %4009 = vrot.lane.b32.xlu0 %v2788, 112
    %v4010 = vpop.permute.xlu0 %4009
    %4011 = vrot.lane.b32.xlu0 %v2789, 112
    %v4012 = vpop.permute.xlu0 %4011
    %4013 = vrot.lane.b32.xlu0 %v2782, 80
    %v4014 = vpop.permute.xlu0 %4013
    %4015 = vrot.lane.b32.xlu0 %v2783, 80
    %v4016 = vpop.permute.xlu0 %4015
    %4017 = vrot.lane.b32.xlu0 %v2784, 80
    %v4018 = vpop.permute.xlu0 %4017
    %4019 = vrot.lane.b32.xlu0 %v2785, 80
    %v4020 = vpop.permute.xlu0 %4019
    %4021 = vrot.lane.b32.xlu0 %v2786, 80
    %v4022 = vpop.permute.xlu0 %4021
    %4023 = vrot.lane.b32.xlu0 %v2787, 80
    %v4024 = vpop.permute.xlu0 %4023
    %4025 = vrot.lane.b32.xlu0 %v2788, 80
    %v4026 = vpop.permute.xlu0 %4025
    %4027 = vrot.lane.b32.xlu0 %v2789, 80
    %v4028 = vpop.permute.xlu0 %4027
    %v4030 = vsel %vm253, %v3998, 0
    %v4033 = vsel %vm253, %v4000, 0
    %v4036 = vsel %vm253, %v4002, 0
    %v4039 = vsel %vm253, %v4004, 0
    %v4042 = vsel %vm253, %v4006, 0
    %v4045 = vsel %vm253, %v4008, 0
    %v4048 = vsel %vm253, %v4010, 0
    %v4051 = vsel %vm253, %v4012, 0
    %v4054 = vsel %vm253, %v4014, 0
    %v4057 = vsel %vm253, %v4016, 0
    %v4060 = vsel %vm253, %v4018, 0
    %v4063 = vsel %vm253, %v4020, 0
    %v4066 = vsel %vm253, %v4022, 0
    %v4069 = vsel %vm253, %v4024, 0
    %v4072 = vsel %vm253, %v4026, 0
    %v4075 = vsel %vm253, %v4028, 0
    %4077 = vmatprep.subr.bf16.mxu0 0
    %4078 = vmatpush1.bf16.xpose.msra.mxu0 %v4054
    %4079 = vmatprep.subr.bf16.mxu0 0
    %4080 = vmatpush1.bf16.xpose.msra.mxu0 %v4057
    %4081 = vmatprep.subr.bf16.mxu0 0
    %4082 = vmatpush1.bf16.xpose.msra.mxu0 %v4060
    %4083 = vmatprep.subr.bf16.mxu0 0
    %4084 = vmatpush1.bf16.xpose.msra.mxu0 %v4063
    %4085 = vmatprep.subr.bf16.mxu0 0
    %4086 = vmatpush1.bf16.xpose.msra.mxu0 %v4066
    %4087 = vmatprep.subr.bf16.mxu0 0
    %4088 = vmatpush1.bf16.xpose.msra.mxu0 %v4069
    %4089 = vmatprep.subr.bf16.mxu0 0
    %4090 = vmatpush1.bf16.xpose.msra.mxu0 %v4072
    %4091 = vmatprep.subr.bf16.mxu0 0
    %4092 = vmatpush1.bf16.xpose.msra.mxu0 %v4075
    %4093 = vmatprep.subr.bf16.mxu0 0
    %4094 = vmatpush1.bf16.xpose.msra.mxu0 0
    %4095 = vmatprep.subr.bf16.mxu0 0
    %4096 = vmatpush1.bf16.xpose.msra.mxu0 0
    %4097 = vmatprep.subr.bf16.mxu0 0
    %4098 = vmatpush1.bf16.xpose.msra.mxu0 0
    %4099 = vmatprep.subr.bf16.mxu0 0
    %4100 = vmatpush1.bf16.xpose.msra.mxu0 0
    %4101 = vmatprep.subr.bf16.mxu0 0
    %4102 = vmatpush1.bf16.xpose.msra.mxu0 0
    %4103 = vmatprep.subr.bf16.mxu0 0
    %4104 = vmatpush1.bf16.xpose.msra.mxu0 0
    %4105 = vmatprep.subr.bf16.mxu0 0
    %4106 = vmatpush1.bf16.xpose.msra.mxu0 0
    %4107 = vmatprep.subr.bf16.mxu0 0
    %4108 = vmatpush1.bf16.xpose.msra.mxu0 0
    %4109 = vmatprep.mubr.bf16.mxu0 0
    %4110 = vmatmul.mubr.bf16.gmra.mrb[0].mxu0 %v4030
    %v4111 = vpop.f32.mrb[0].mxu0
    %v4112 = vadd.f32 %v2790, %v4111
    %v4113 = vpop.f32.mrb[0].mxu0
    %v4114 = vpop.f32.mrb[0].mxu0
    %v4115 = vadd.f32 %v2791, %v4114
    %v4116 = vpop.f32.mrb[0].mxu0
    %4117 = vmatprep.mubr.bf16.mxu0 0
    %4118 = vmatmul.mubr.bf16.gmra.mrb[0].mxu0 %v4033
    %v4119 = vpop.f32.mrb[0].mxu0
    %v4120 = vadd.f32 %v2792, %v4119
    %v4121 = vpop.f32.mrb[0].mxu0
    %v4122 = vpop.f32.mrb[0].mxu0
    %v4123 = vadd.f32 %v2793, %v4122
    %v4124 = vpop.f32.mrb[0].mxu0
    %4125 = vmatprep.mubr.bf16.mxu0 0
    %4126 = vmatmul.mubr.bf16.gmra.mrb[0].mxu0 %v4036
    %v4127 = vpop.f32.mrb[0].mxu0
    %v4128 = vadd.f32 %v2794, %v4127
    %v4129 = vpop.f32.mrb[0].mxu0
    %v4130 = vpop.f32.mrb[0].mxu0
    %v4131 = vadd.f32 %v2795, %v4130
    %v4132 = vpop.f32.mrb[0].mxu0
    %4133 = vmatprep.mubr.bf16.mxu0 0
    %4134 = vmatmul.mubr.bf16.gmra.mrb[0].mxu0 %v4039
    %v4135 = vpop.f32.mrb[0].mxu0
    %v4136 = vadd.f32 %v2796, %v4135
    %v4137 = vpop.f32.mrb[0].mxu0
    %v4138 = vpop.f32.mrb[0].mxu0
    %v4139 = vadd.f32 %v2797, %v4138
    %v4140 = vpop.f32.mrb[0].mxu0
    %4141 = vmatprep.mubr.bf16.mxu0 0
    %4142 = vmatmul.mubr.bf16.gmra.mrb[0].mxu0 %v4042
    %v4143 = vpop.f32.mrb[0].mxu0
    %v4144 = vadd.f32 %v2798, %v4143
    %v4145 = vpop.f32.mrb[0].mxu0
    %v4146 = vpop.f32.mrb[0].mxu0
    %v4147 = vadd.f32 %v2799, %v4146
    %v4148 = vpop.f32.mrb[0].mxu0
    %4149 = vmatprep.mubr.bf16.mxu0 0
    %4150 = vmatmul.mubr.bf16.gmra.mrb[0].mxu0 %v4045
    %v4151 = vpop.f32.mrb[0].mxu0
    %v4152 = vadd.f32 %v2800, %v4151
    %v4153 = vpop.f32.mrb[0].mxu0
    %v4154 = vpop.f32.mrb[0].mxu0
    %v4155 = vadd.f32 %v2801, %v4154
    %v4156 = vpop.f32.mrb[0].mxu0
    %4157 = vmatprep.mubr.bf16.mxu0 0
    %4158 = vmatmul.mubr.bf16.gmra.mrb[0].mxu0 %v4048
    %v4159 = vpop.f32.mrb[0].mxu0
    %v4160 = vadd.f32 %v2802, %v4159
    %v4161 = vpop.f32.mrb[0].mxu0
    %v4162 = vpop.f32.mrb[0].mxu0
    %v4163 = vadd.f32 %v2803, %v4162
    %v4164 = vpop.f32.mrb[0].mxu0
    %4165 = vmatprep.mubr.bf16.mxu0 0
    %4166 = vmatmul.mubr.bf16.gmra.mrb[0].mxu0 %v4051
    %v4167 = vpop.f32.mrb[0].mxu0
    %v4168 = vadd.f32 %v2804, %v4167
    %v4169 = vpop.f32.mrb[0].mxu0
    %v4170 = vpop.f32.mrb[0].mxu0
    %v4171 = vadd.f32 %v2805, %v4170
    %v4172 = vpop.f32.mrb[0].mxu0
    %4173 = vdwg.mxu0
    %4174 = vmax.xlane.f32.xlu0 %v4112
    %v4175 = vpop.xlane.xlu0 %4174
    %4176 = vmax.xlane.f32.xlu0 %v4115
    %v4177 = vpop.xlane.xlu0 %4176
    %4178 = vmax.xlane.f32.xlu0 %v4120
    %v4179 = vpop.xlane.xlu0 %4178
    %4180 = vmax.xlane.f32.xlu0 %v4123
    %v4181 = vpop.xlane.xlu0 %4180
    %4182 = vmax.xlane.f32.xlu0 %v4128
    %v4183 = vpop.xlane.xlu0 %4182
    %4184 = vmax.xlane.f32.xlu0 %v4131
    %v4185 = vpop.xlane.xlu0 %4184
    %4186 = vmax.xlane.f32.xlu0 %v4136
    %v4187 = vpop.xlane.xlu0 %4186
    %4188 = vmax.xlane.f32.xlu0 %v4139
    %v4189 = vpop.xlane.xlu0 %4188
    %4190 = vmax.xlane.f32.xlu0 %v4144
    %v4191 = vpop.xlane.xlu0 %4190
    %4192 = vmax.xlane.f32.xlu0 %v4147
    %v4193 = vpop.xlane.xlu0 %4192
    %4194 = vmax.xlane.f32.xlu0 %v4152
    %v4195 = vpop.xlane.xlu0 %4194
    %4196 = vmax.xlane.f32.xlu0 %v4155
    %v4197 = vpop.xlane.xlu0 %4196
    %4198 = vmax.xlane.f32.xlu0 %v4160
    %v4199 = vpop.xlane.xlu0 %4198
    %4200 = vmax.xlane.f32.xlu0 %v4163
    %v4201 = vpop.xlane.xlu0 %4200
    %4202 = vmax.xlane.f32.xlu0 %v4168
    %v4203 = vpop.xlane.xlu0 %4202
    %4204 = vmax.xlane.f32.xlu0 %v4171
    %v4205 = vpop.xlane.xlu0 %4204
    %v4206 = vsub.f32 %v4112, %v4175
    %v4207 = vsub.f32 %v4115, %v4177
    %v4208 = vsub.f32 %v4120, %v4179
    %v4209 = vsub.f32 %v4123, %v4181
    %v4210 = vsub.f32 %v4128, %v4183
    %v4211 = vsub.f32 %v4131, %v4185
    %v4212 = vsub.f32 %v4136, %v4187
    %v4213 = vsub.f32 %v4139, %v4189
    %v4214 = vsub.f32 %v4144, %v4191
    %v4215 = vsub.f32 %v4147, %v4193
    %v4216 = vsub.f32 %v4152, %v4195
    %v4217 = vsub.f32 %v4155, %v4197
    %v4218 = vsub.f32 %v4160, %v4199
    %v4219 = vsub.f32 %v4163, %v4201
    %v4220 = vsub.f32 %v4168, %v4203
    %v4221 = vsub.f32 %v4171, %v4205
    %v4222 = vmul.f32 %v4206, 1.442695
    %v4223 = vpow.pop %v4222
    %v4224 = vmul.f32 %v4207, 1.442695
    %v4225 = vpow.pop %v4224
    %v4226 = vmul.f32 %v4208, 1.442695
    %v4227 = vpow.pop %v4226
    %v4228 = vmul.f32 %v4209, 1.442695
    %v4229 = vpow.pop %v4228
    %v4230 = vmul.f32 %v4210, 1.442695
    %v4231 = vpow.pop %v4230
    %v4232 = vmul.f32 %v4211, 1.442695
    %v4233 = vpow.pop %v4232
    %v4234 = vmul.f32 %v4212, 1.442695
    %v4235 = vpow.pop %v4234
    %v4236 = vmul.f32 %v4213, 1.442695
    %v4237 = vpow.pop %v4236
    %v4238 = vmul.f32 %v4214, 1.442695
    %v4239 = vpow.pop %v4238
    %v4240 = vmul.f32 %v4215, 1.442695
    %v4241 = vpow.pop %v4240
    %v4242 = vmul.f32 %v4216, 1.442695
    %v4243 = vpow.pop %v4242
    %v4244 = vmul.f32 %v4217, 1.442695
    %v4245 = vpow.pop %v4244
    %v4246 = vmul.f32 %v4218, 1.442695
    %v4247 = vpow.pop %v4246
    %v4248 = vmul.f32 %v4219, 1.442695
    %v4249 = vpow.pop %v4248
    %v4250 = vmul.f32 %v4220, 1.442695
    %v4251 = vpow.pop %v4250
    %v4252 = vmul.f32 %v4221, 1.442695
    %v4253 = vpow.pop %v4252
    %4254 = vadd.xlane.f32.xlu0 %v4223
    %v4255 = vpop.xlane.xlu0 %4254
    %4256 = vadd.xlane.f32.xlu0 %v4225
    %v4257 = vpop.xlane.xlu0 %4256
    %4258 = vadd.xlane.f32.xlu0 %v4227
    %v4259 = vpop.xlane.xlu0 %4258
    %4260 = vadd.xlane.f32.xlu0 %v4229
    %v4261 = vpop.xlane.xlu0 %4260
    %4262 = vadd.xlane.f32.xlu0 %v4231
    %v4263 = vpop.xlane.xlu0 %4262
    %4264 = vadd.xlane.f32.xlu0 %v4233
    %v4265 = vpop.xlane.xlu0 %4264
    %4266 = vadd.xlane.f32.xlu0 %v4235
    %v4267 = vpop.xlane.xlu0 %4266
    %4268 = vadd.xlane.f32.xlu0 %v4237
    %v4269 = vpop.xlane.xlu0 %4268
    %4270 = vadd.xlane.f32.xlu0 %v4239
    %v4271 = vpop.xlane.xlu0 %4270
    %4272 = vadd.xlane.f32.xlu0 %v4241
    %v4273 = vpop.xlane.xlu0 %4272
    %4274 = vadd.xlane.f32.xlu0 %v4243
    %v4275 = vpop.xlane.xlu0 %4274
    %4276 = vadd.xlane.f32.xlu0 %v4245
    %v4277 = vpop.xlane.xlu0 %4276
    %4278 = vadd.xlane.f32.xlu0 %v4247
    %v4279 = vpop.xlane.xlu0 %4278
    %4280 = vadd.xlane.f32.xlu0 %v4249
    %v4281 = vpop.xlane.xlu0 %4280
    %4282 = vadd.xlane.f32.xlu0 %v4251
    %v4283 = vpop.xlane.xlu0 %4282
    %4284 = vadd.xlane.f32.xlu0 %v4253
    %v4285 = vpop.xlane.xlu0 %4284
    %v4286 = vrcp.pop %v4255
    %v4287 = vrcp.pop %v4257
    %v4288 = vrcp.pop %v4259
    %v4289 = vrcp.pop %v4261
    %v4290 = vrcp.pop %v4263
    %v4291 = vrcp.pop %v4265
    %v4292 = vrcp.pop %v4267
    %v4293 = vrcp.pop %v4269
    %v4294 = vrcp.pop %v4271
    %v4295 = vrcp.pop %v4273
    %v4296 = vrcp.pop %v4275
    %v4297 = vrcp.pop %v4277
    %v4298 = vrcp.pop %v4279
    %v4299 = vrcp.pop %v4281
    %v4300 = vrcp.pop %v4283
    %v4301 = vrcp.pop %v4285
    %v4302 = vmul.f32 %v4223, %v4286
    %v4303 = vmul.f32 %v4225, %v4287
    %v4304 = vmul.f32 %v4227, %v4288
    %v4305 = vmul.f32 %v4229, %v4289
    %v4306 = vmul.f32 %v4231, %v4290
    %v4307 = vmul.f32 %v4233, %v4291
    %v4308 = vmul.f32 %v4235, %v4292
    %v4309 = vmul.f32 %v4237, %v4293
    %v4310 = vmul.f32 %v4239, %v4294
    %v4311 = vmul.f32 %v4241, %v4295
    %v4312 = vmul.f32 %v4243, %v4296
    %v4313 = vmul.f32 %v4245, %v4297
    %v4314 = vmul.f32 %v4247, %v4298
    %v4315 = vmul.f32 %v4249, %v4299
    %v4316 = vmul.f32 %v4251, %v4300
    %v4317 = vmul.f32 %v4253, %v4301
    %v4318 = vpack.c.bf16 %v4303, %v4302
    %v4319 = vpack.c.bf16 %v4305, %v4304
    %v4320 = vpack.c.bf16 %v4307, %v4306
    %v4321 = vpack.c.bf16 %v4309, %v4308
    %v4322 = vpack.c.bf16 %v4311, %v4310
    %v4323 = vpack.c.bf16 %v4313, %v4312
    %v4324 = vpack.c.bf16 %v4315, %v4314
    %v4325 = vpack.c.bf16 %v4317, %v4316
    %4326 = vrot.lane.b32.xlu0 %v2782, 48
    %v4327 = vpop.permute.xlu0 %4326
    %4328 = vrot.lane.b32.xlu0 %v2783, 48
    %v4329 = vpop.permute.xlu0 %4328
    %4330 = vrot.lane.b32.xlu0 %v2784, 48
    %v4331 = vpop.permute.xlu0 %4330
    %4332 = vrot.lane.b32.xlu0 %v2785, 48
    %v4333 = vpop.permute.xlu0 %4332
    %4334 = vrot.lane.b32.xlu0 %v2786, 48
    %v4335 = vpop.permute.xlu0 %4334
    %4336 = vrot.lane.b32.xlu0 %v2787, 48
    %v4337 = vpop.permute.xlu0 %4336
    %4338 = vrot.lane.b32.xlu0 %v2788, 48
    %v4339 = vpop.permute.xlu0 %4338
    %4340 = vrot.lane.b32.xlu0 %v2789, 48
    %v4341 = vpop.permute.xlu0 %4340
    %4350 = vmatprep.subr.bf16.mxu0 0
    %4351 = vmatpush1.bf16.msra.mxu0 %v4327
    %4352 = vmatprep.subr.bf16.mxu0 0
    %4353 = vmatpush1.bf16.msra.mxu0 %v4329
    %4354 = vmatprep.subr.bf16.mxu0 0
    %4355 = vmatpush1.bf16.msra.mxu0 %v4331
    %4356 = vmatprep.subr.bf16.mxu0 0
    %4357 = vmatpush1.bf16.msra.mxu0 %v4333
    %4358 = vmatprep.subr.bf16.mxu0 0
    %4359 = vmatpush1.bf16.msra.mxu0 %v4335
    %4360 = vmatprep.subr.bf16.mxu0 0
    %4361 = vmatpush1.bf16.msra.mxu0 %v4337
    %4362 = vmatprep.subr.bf16.mxu0 0
    %4363 = vmatpush1.bf16.msra.mxu0 %v4339
    %4364 = vmatprep.subr.bf16.mxu0 0
    %4365 = vmatpush1.bf16.msra.mxu0 %v4341
    %4366 = vmatprep.subr.bf16.mxu0 0
    %4367 = vmatpush1.bf16.msra.mxu0 0
    %4368 = vmatprep.subr.bf16.mxu0 0
    %4369 = vmatpush1.bf16.msra.mxu0 0
    %4370 = vmatprep.subr.bf16.mxu0 0
    %4371 = vmatpush1.bf16.msra.mxu0 0
    %4372 = vmatprep.subr.bf16.mxu0 0
    %4373 = vmatpush1.bf16.msra.mxu0 0
    %4374 = vmatprep.subr.bf16.mxu0 0
    %4375 = vmatpush1.bf16.msra.mxu0 0
    %4376 = vmatprep.subr.bf16.mxu0 0
    %4377 = vmatpush1.bf16.msra.mxu0 0
    %4378 = vmatprep.subr.bf16.mxu0 0
    %4379 = vmatpush1.bf16.msra.mxu0 0
    %4380 = vmatprep.subr.bf16.mxu0 0
    %4381 = vmatpush1.bf16.msra.mxu0 0
    %4382 = vmatprep.mubr.bf16.mxu0 0
    %4383 = vmatmul.mubr.bf16.gmra.mrb[0].mxu0 %v4318
    %v4384 = vpop.f32.mrb[0].mxu0
    %v4385 = vadd.f32 0.0, %v4384
    %v4386 = vpop.f32.mrb[0].mxu0
    %v4387 = vpop.f32.mrb[0].mxu0
    %v4388 = vadd.f32 0.0, %v4387
    %v4389 = vpop.f32.mrb[0].mxu0
    %4390 = vmatprep.mubr.bf16.mxu0 0
    %4391 = vmatmul.mubr.bf16.gmra.mrb[0].mxu0 %v4319
    %v4392 = vpop.f32.mrb[0].mxu0
    %v4393 = vadd.f32 0.0, %v4392
    %v4394 = vpop.f32.mrb[0].mxu0
    %v4395 = vpop.f32.mrb[0].mxu0
    %v4396 = vadd.f32 0.0, %v4395
    %v4397 = vpop.f32.mrb[0].mxu0
    %4398 = vmatprep.mubr.bf16.mxu0 0
    %4399 = vmatmul.mubr.bf16.gmra.mrb[0].mxu0 %v4320
    %v4400 = vpop.f32.mrb[0].mxu0
    %v4401 = vadd.f32 0.0, %v4400
    %v4402 = vpop.f32.mrb[0].mxu0
    %v4403 = vpop.f32.mrb[0].mxu0
    %v4404 = vadd.f32 0.0, %v4403
    %v4405 = vpop.f32.mrb[0].mxu0
    %4406 = vmatprep.mubr.bf16.mxu0 0
    %4407 = vmatmul.mubr.bf16.gmra.mrb[0].mxu0 %v4321
    %v4408 = vpop.f32.mrb[0].mxu0
    %v4409 = vadd.f32 0.0, %v4408
    %v4410 = vpop.f32.mrb[0].mxu0
    %v4411 = vpop.f32.mrb[0].mxu0
    %v4412 = vadd.f32 0.0, %v4411
    %v4413 = vpop.f32.mrb[0].mxu0
    %4414 = vmatprep.mubr.bf16.mxu0 0
    %4415 = vmatmul.mubr.bf16.gmra.mrb[0].mxu0 %v4322
    %v4416 = vpop.f32.mrb[0].mxu0
    %v4417 = vadd.f32 0.0, %v4416
    %v4418 = vpop.f32.mrb[0].mxu0
    %v4419 = vpop.f32.mrb[0].mxu0
    %v4420 = vadd.f32 0.0, %v4419
    %v4421 = vpop.f32.mrb[0].mxu0
    %4422 = vmatprep.mubr.bf16.mxu0 0
    %4423 = vmatmul.mubr.bf16.gmra.mrb[0].mxu0 %v4323
    %v4424 = vpop.f32.mrb[0].mxu0
    %v4425 = vadd.f32 0.0, %v4424
    %v4426 = vpop.f32.mrb[0].mxu0
    %v4427 = vpop.f32.mrb[0].mxu0
    %v4428 = vadd.f32 0.0, %v4427
    %v4429 = vpop.f32.mrb[0].mxu0
    %4430 = vmatprep.mubr.bf16.mxu0 0
    %4431 = vmatmul.mubr.bf16.gmra.mrb[0].mxu0 %v4324
    %v4432 = vpop.f32.mrb[0].mxu0
    %v4433 = vadd.f32 0.0, %v4432
    %v4434 = vpop.f32.mrb[0].mxu0
    %v4435 = vpop.f32.mrb[0].mxu0
    %v4436 = vadd.f32 0.0, %v4435
    %v4437 = vpop.f32.mrb[0].mxu0
    %4438 = vmatprep.mubr.bf16.mxu0 0
    %4439 = vmatmul.mubr.bf16.gmra.mrb[0].mxu0 %v4325
    %v4440 = vpop.f32.mrb[0].mxu0
    %v4441 = vadd.f32 0.0, %v4440
    %v4442 = vpop.f32.mrb[0].mxu0
    %v4443 = vpop.f32.mrb[0].mxu0
    %v4444 = vadd.f32 0.0, %v4443
    %v4445 = vpop.f32.mrb[0].mxu0
    %4446 = vdwg.mxu0
    %v4447 = vpack.c.bf16 %v4388, %v4385
    %v4448 = vpack.c.bf16 %v4396, %v4393
    %v4449 = vpack.c.bf16 %v4404, %v4401
    %v4450 = vpack.c.bf16 %v4412, %v4409
    %v4451 = vpack.c.bf16 %v4420, %v4417
    %v4452 = vpack.c.bf16 %v4428, %v4425
    %v4453 = vpack.c.bf16 %v4436, %v4433
    %v4454 = vpack.c.bf16 %v4444, %v4441
    %v4455 = vld [vmem:[%s3256 + $0x8] sm:$0xf]
    %v4457 = vsel %vm253, %v4447, 0
    %v4460 = vsel %vm253, %v4448, 0
    %v4463 = vsel %vm253, %v4449, 0
    %v4466 = vsel %vm253, %v4450, 0
    %v4469 = vsel %vm253, %v4451, 0
    %v4472 = vsel %vm253, %v4452, 0
    %v4475 = vsel %vm253, %v4453, 0
    %v4478 = vsel %vm253, %v4454, 0
    %v4481 = vsel %vm705, %v4455, 0
    %4483 = vmatprep.subr.bf16.mxu0 0
    %4484 = vmatpush1.bf16.msra.mxu0 %v4481
    %4485 = vmatprep.subr.bf16.mxu0 0
    %4486 = vmatpush1.bf16.msra.mxu0 0
    %4487 = vmatprep.subr.bf16.mxu0 0
    %4488 = vmatpush1.bf16.msra.mxu0 0
    %4489 = vmatprep.subr.bf16.mxu0 0
    %4490 = vmatpush1.bf16.msra.mxu0 0
    %4491 = vmatprep.subr.bf16.mxu0 0
    %4492 = vmatpush1.bf16.msra.mxu0 0
    %4493 = vmatprep.subr.bf16.mxu0 0
    %4494 = vmatpush1.bf16.msra.mxu0 0
    %4495 = vmatprep.subr.bf16.mxu0 0
    %4496 = vmatpush1.bf16.msra.mxu0 0
    %4497 = vmatprep.subr.bf16.mxu0 0
    %4498 = vmatpush1.bf16.msra.mxu0 0
    %4499 = vmatprep.subr.bf16.mxu0 0
    %4500 = vmatpush1.bf16.msra.mxu0 0
    %4501 = vmatprep.subr.bf16.mxu0 0
    %4502 = vmatpush1.bf16.msra.mxu0 0
    %4503 = vmatprep.subr.bf16.mxu0 0
    %4504 = vmatpush1.bf16.msra.mxu0 0
    %4505 = vmatprep.subr.bf16.mxu0 0
    %4506 = vmatpush1.bf16.msra.mxu0 0
    %4507 = vmatprep.subr.bf16.mxu0 0
    %4508 = vmatpush1.bf16.msra.mxu0 0
    %4509 = vmatprep.subr.bf16.mxu0 0
    %4510 = vmatpush1.bf16.msra.mxu0 0
    %4511 = vmatprep.subr.bf16.mxu0 0
    %4512 = vmatpush1.bf16.msra.mxu0 0
    %4513 = vmatprep.subr.bf16.mxu0 0
    %4514 = vmatpush1.bf16.msra.mxu0 0
    %4515 = vmatprep.mubr.bf16.mxu0 0
    %4516 = vmatmul.mubr.bf16.gmra.mrb[0].mxu0 %v4457
    %v4517 = vpop.f32.mrb[0].mxu0
    %v4518 = vadd.f32 0.0, %v4517
    %v4519 = vpop.f32.mrb[0].mxu0
    %v4520 = vpop.f32.mrb[0].mxu0
    %v4521 = vadd.f32 0.0, %v4520
    %v4522 = vpop.f32.mrb[0].mxu0
    %4523 = vmatprep.mubr.bf16.mxu0 0
    %4524 = vmatmul.mubr.bf16.gmra.mrb[0].mxu0 %v4460
    %v4525 = vpop.f32.mrb[0].mxu0
    %v4526 = vadd.f32 0.0, %v4525
    %v4527 = vpop.f32.mrb[0].mxu0
    %v4528 = vpop.f32.mrb[0].mxu0
    %v4529 = vadd.f32 0.0, %v4528
    %v4530 = vpop.f32.mrb[0].mxu0
    %4531 = vmatprep.mubr.bf16.mxu0 0
    %4532 = vmatmul.mubr.bf16.gmra.mrb[0].mxu0 %v4463
    %v4533 = vpop.f32.mrb[0].mxu0
    %v4534 = vadd.f32 0.0, %v4533
    %v4535 = vpop.f32.mrb[0].mxu0
    %v4536 = vpop.f32.mrb[0].mxu0
    %v4537 = vadd.f32 0.0, %v4536
    %v4538 = vpop.f32.mrb[0].mxu0
    %4539 = vmatprep.mubr.bf16.mxu0 0
    %4540 = vmatmul.mubr.bf16.gmra.mrb[0].mxu0 %v4466
    %v4541 = vpop.f32.mrb[0].mxu0
    %v4542 = vadd.f32 0.0, %v4541
    %v4543 = vpop.f32.mrb[0].mxu0
    %v4544 = vpop.f32.mrb[0].mxu0
    %v4545 = vadd.f32 0.0, %v4544
    %v4546 = vpop.f32.mrb[0].mxu0
    %4547 = vmatprep.mubr.bf16.mxu0 0
    %4548 = vmatmul.mubr.bf16.gmra.mrb[0].mxu0 %v4469
    %v4549 = vpop.f32.mrb[0].mxu0
    %v4550 = vadd.f32 0.0, %v4549
    %v4551 = vpop.f32.mrb[0].mxu0
    %v4552 = vpop.f32.mrb[0].mxu0
    %v4553 = vadd.f32 0.0, %v4552
    %v4554 = vpop.f32.mrb[0].mxu0
    %4555 = vmatprep.mubr.bf16.mxu0 0
    %4556 = vmatmul.mubr.bf16.gmra.mrb[0].mxu0 %v4472
    %v4557 = vpop.f32.mrb[0].mxu0
    %v4558 = vadd.f32 0.0, %v4557
    %v4559 = vpop.f32.mrb[0].mxu0
    %v4560 = vpop.f32.mrb[0].mxu0
    %v4561 = vadd.f32 0.0, %v4560
    %v4562 = vpop.f32.mrb[0].mxu0
    %4563 = vmatprep.mubr.bf16.mxu0 0
    %4564 = vmatmul.mubr.bf16.gmra.mrb[0].mxu0 %v4475
    %v4565 = vpop.f32.mrb[0].mxu0
    %v4566 = vadd.f32 0.0, %v4565
    %v4567 = vpop.f32.mrb[0].mxu0
    %v4568 = vpop.f32.mrb[0].mxu0
    %v4569 = vadd.f32 0.0, %v4568
    %v4570 = vpop.f32.mrb[0].mxu0
    %4571 = vmatprep.mubr.bf16.mxu0 0
    %4572 = vmatmul.mubr.bf16.gmra.mrb[0].mxu0 %v4478
    %v4573 = vpop.f32.mrb[0].mxu0
    %v4574 = vadd.f32 0.0, %v4573
    %v4575 = vpop.f32.mrb[0].mxu0
    %v4576 = vpop.f32.mrb[0].mxu0
    %v4577 = vadd.f32 0.0, %v4576
    %v4578 = vpop.f32.mrb[0].mxu0
    %4579 = vdwg.mxu0
    %v4580 = vadd.f32 %v3981, %v4518
    %v4581 = vadd.f32 %v3982, %v4521
    %v4582 = vadd.f32 %v3983, %v4526
    %v4583 = vadd.f32 %v3984, %v4529
    %v4584 = vadd.f32 %v3985, %v4534
    %v4585 = vadd.f32 %v3986, %v4537
    %v4586 = vadd.f32 %v3987, %v4542
    %v4587 = vadd.f32 %v3988, %v4545
    %v4588 = vadd.f32 %v3989, %v4550
    %v4589 = vadd.f32 %v3990, %v4553
    %v4590 = vadd.f32 %v3991, %v4558
    %v4591 = vadd.f32 %v3992, %v4561
    %v4592 = vadd.f32 %v3993, %v4566
    %v4593 = vadd.f32 %v3994, %v4569
    %v4594 = vadd.f32 %v3995, %v4574
    %v4595 = vadd.f32 %v3996, %v4577
    %4596 = vrot.lane.b32.xlu0 %v2782, 104
    %v4597 = vpop.permute.xlu0 %4596
    %4598 = vrot.lane.b32.xlu0 %v2783, 104
    %v4599 = vpop.permute.xlu0 %4598
    %4600 = vrot.lane.b32.xlu0 %v2784, 104
    %v4601 = vpop.permute.xlu0 %4600
    %4602 = vrot.lane.b32.xlu0 %v2785, 104
    %v4603 = vpop.permute.xlu0 %4602
    %4604 = vrot.lane.b32.xlu0 %v2786, 104
    %v4605 = vpop.permute.xlu0 %4604
    %4606 = vrot.lane.b32.xlu0 %v2787, 104
    %v4607 = vpop.permute.xlu0 %4606
    %4608 = vrot.lane.b32.xlu0 %v2788, 104
    %v4609 = vpop.permute.xlu0 %4608
    %4610 = vrot.lane.b32.xlu0 %v2789, 104
    %v4611 = vpop.permute.xlu0 %4610
    %4612 = vrot.lane.b32.xlu0 %v2782, 72
    %v4613 = vpop.permute.xlu0 %4612
    %4614 = vrot.lane.b32.xlu0 %v2783, 72
    %v4615 = vpop.permute.xlu0 %4614
    %4616 = vrot.lane.b32.xlu0 %v2784, 72
    %v4617 = vpop.permute.xlu0 %4616
    %4618 = vrot.lane.b32.xlu0 %v2785, 72
    %v4619 = vpop.permute.xlu0 %4618
    %4620 = vrot.lane.b32.xlu0 %v2786, 72
    %v4621 = vpop.permute.xlu0 %4620
    %4622 = vrot.lane.b32.xlu0 %v2787, 72
    %v4623 = vpop.permute.xlu0 %4622
    %4624 = vrot.lane.b32.xlu0 %v2788, 72
    %v4625 = vpop.permute.xlu0 %4624
    %4626 = vrot.lane.b32.xlu0 %v2789, 72
    %v4627 = vpop.permute.xlu0 %4626
    %v4629 = vsel %vm253, %v4597, 0
    %v4632 = vsel %vm253, %v4599, 0
    %v4635 = vsel %vm253, %v4601, 0
    %v4638 = vsel %vm253, %v4603, 0
    %v4641 = vsel %vm253, %v4605, 0
    %v4644 = vsel %vm253, %v4607, 0
    %v4647 = vsel %vm253, %v4609, 0
    %v4650 = vsel %vm253, %v4611, 0
    %v4653 = vsel %vm253, %v4613, 0
    %v4656 = vsel %vm253, %v4615, 0
    %v4659 = vsel %vm253, %v4617, 0
    %v4662 = vsel %vm253, %v4619, 0
    %v4665 = vsel %vm253, %v4621, 0
    %v4668 = vsel %vm253, %v4623, 0
    %v4671 = vsel %vm253, %v4625, 0
    %v4674 = vsel %vm253, %v4627, 0
    %4676 = vmatprep.subr.bf16.mxu0 0
    %4677 = vmatpush1.bf16.xpose.msra.mxu0 %v4653
    %4678 = vmatprep.subr.bf16.mxu0 0
    %4679 = vmatpush1.bf16.xpose.msra.mxu0 %v4656
    %4680 = vmatprep.subr.bf16.mxu0 0
    %4681 = vmatpush1.bf16.xpose.msra.mxu0 %v4659
    %4682 = vmatprep.subr.bf16.mxu0 0
    %4683 = vmatpush1.bf16.xpose.msra.mxu0 %v4662
    %4684 = vmatprep.subr.bf16.mxu0 0
    %4685 = vmatpush1.bf16.xpose.msra.mxu0 %v4665
    %4686 = vmatprep.subr.bf16.mxu0 0
    %4687 = vmatpush1.bf16.xpose.msra.mxu0 %v4668
    %4688 = vmatprep.subr.bf16.mxu0 0
    %4689 = vmatpush1.bf16.xpose.msra.mxu0 %v4671
    %4690 = vmatprep.subr.bf16.mxu0 0
    %4691 = vmatpush1.bf16.xpose.msra.mxu0 %v4674
    %4692 = vmatprep.subr.bf16.mxu0 0
    %4693 = vmatpush1.bf16.xpose.msra.mxu0 0
    %4694 = vmatprep.subr.bf16.mxu0 0
    %4695 = vmatpush1.bf16.xpose.msra.mxu0 0
    %4696 = vmatprep.subr.bf16.mxu0 0
    %4697 = vmatpush1.bf16.xpose.msra.mxu0 0
    %4698 = vmatprep.subr.bf16.mxu0 0
    %4699 = vmatpush1.bf16.xpose.msra.mxu0 0
    %4700 = vmatprep.subr.bf16.mxu0 0
    %4701 = vmatpush1.bf16.xpose.msra.mxu0 0
    %4702 = vmatprep.subr.bf16.mxu0 0
    %4703 = vmatpush1.bf16.xpose.msra.mxu0 0
    %4704 = vmatprep.subr.bf16.mxu0 0
    %4705 = vmatpush1.bf16.xpose.msra.mxu0 0
    %4706 = vmatprep.subr.bf16.mxu0 0
    %4707 = vmatpush1.bf16.xpose.msra.mxu0 0
    %4708 = vmatprep.mubr.bf16.mxu0 0
    %4709 = vmatmul.mubr.bf16.gmra.mrb[0].mxu0 %v4629
    %v4710 = vpop.f32.mrb[0].mxu0
    %v4711 = vadd.f32 %v2790, %v4710
    %v4712 = vpop.f32.mrb[0].mxu0
    %v4713 = vpop.f32.mrb[0].mxu0
    %v4714 = vadd.f32 %v2791, %v4713
    %v4715 = vpop.f32.mrb[0].mxu0
    %4716 = vmatprep.mubr.bf16.mxu0 0
    %4717 = vmatmul.mubr.bf16.gmra.mrb[0].mxu0 %v4632
    %v4718 = vpop.f32.mrb[0].mxu0
    %v4719 = vadd.f32 %v2792, %v4718
    %v4720 = vpop.f32.mrb[0].mxu0
    %v4721 = vpop.f32.mrb[0].mxu0
    %v4722 = vadd.f32 %v2793, %v4721
    %v4723 = vpop.f32.mrb[0].mxu0
    %4724 = vmatprep.mubr.bf16.mxu0 0
    %4725 = vmatmul.mubr.bf16.gmra.mrb[0].mxu0 %v4635
    %v4726 = vpop.f32.mrb[0].mxu0
    %v4727 = vadd.f32 %v2794, %v4726
    %v4728 = vpop.f32.mrb[0].mxu0
    %v4729 = vpop.f32.mrb[0].mxu0
    %v4730 = vadd.f32 %v2795, %v4729
    %v4731 = vpop.f32.mrb[0].mxu0
    %4732 = vmatprep.mubr.bf16.mxu0 0
    %4733 = vmatmul.mubr.bf16.gmra.mrb[0].mxu0 %v4638
    %v4734 = vpop.f32.mrb[0].mxu0
    %v4735 = vadd.f32 %v2796, %v4734
    %v4736 = vpop.f32.mrb[0].mxu0
    %v4737 = vpop.f32.mrb[0].mxu0
    %v4738 = vadd.f32 %v2797, %v4737
    %v4739 = vpop.f32.mrb[0].mxu0
    %4740 = vmatprep.mubr.bf16.mxu0 0
    %4741 = vmatmul.mubr.bf16.gmra.mrb[0].mxu0 %v4641
    %v4742 = vpop.f32.mrb[0].mxu0
    %v4743 = vadd.f32 %v2798, %v4742
    %v4744 = vpop.f32.mrb[0].mxu0
    %v4745 = vpop.f32.mrb[0].mxu0
    %v4746 = vadd.f32 %v2799, %v4745
    %v4747 = vpop.f32.mrb[0].mxu0
    %4748 = vmatprep.mubr.bf16.mxu0 0
    %4749 = vmatmul.mubr.bf16.gmra.mrb[0].mxu0 %v4644
    %v4750 = vpop.f32.mrb[0].mxu0
    %v4751 = vadd.f32 %v2800, %v4750
    %v4752 = vpop.f32.mrb[0].mxu0
    %v4753 = vpop.f32.mrb[0].mxu0
    %v4754 = vadd.f32 %v2801, %v4753
    %v4755 = vpop.f32.mrb[0].mxu0
    %4756 = vmatprep.mubr.bf16.mxu0 0
    %4757 = vmatmul.mubr.bf16.gmra.mrb[0].mxu0 %v4647
    %v4758 = vpop.f32.mrb[0].mxu0
    %v4759 = vadd.f32 %v2802, %v4758
    %v4760 = vpop.f32.mrb[0].mxu0
    %v4761 = vpop.f32.mrb[0].mxu0
    %v4762 = vadd.f32 %v2803, %v4761
    %v4763 = vpop.f32.mrb[0].mxu0
    %4764 = vmatprep.mubr.bf16.mxu0 0
    %4765 = vmatmul.mubr.bf16.gmra.mrb[0].mxu0 %v4650
    %v4766 = vpop.f32.mrb[0].mxu0
    %v4767 = vadd.f32 %v2804, %v4766
    %v4768 = vpop.f32.mrb[0].mxu0
    %v4769 = vpop.f32.mrb[0].mxu0
    %v4770 = vadd.f32 %v2805, %v4769
    %v4771 = vpop.f32.mrb[0].mxu0
    %4772 = vdwg.mxu0
    %4773 = vmax.xlane.f32.xlu0 %v4711
    %v4774 = vpop.xlane.xlu0 %4773
    %4775 = vmax.xlane.f32.xlu0 %v4714
    %v4776 = vpop.xlane.xlu0 %4775
    %4777 = vmax.xlane.f32.xlu0 %v4719
    %v4778 = vpop.xlane.xlu0 %4777
    %4779 = vmax.xlane.f32.xlu0 %v4722
    %v4780 = vpop.xlane.xlu0 %4779
    %4781 = vmax.xlane.f32.xlu0 %v4727
    %v4782 = vpop.xlane.xlu0 %4781
    %4783 = vmax.xlane.f32.xlu0 %v4730
    %v4784 = vpop.xlane.xlu0 %4783
    %4785 = vmax.xlane.f32.xlu0 %v4735
    %v4786 = vpop.xlane.xlu0 %4785
    %4787 = vmax.xlane.f32.xlu0 %v4738
    %v4788 = vpop.xlane.xlu0 %4787
    %4789 = vmax.xlane.f32.xlu0 %v4743
    %v4790 = vpop.xlane.xlu0 %4789
    %4791 = vmax.xlane.f32.xlu0 %v4746
    %v4792 = vpop.xlane.xlu0 %4791
    %4793 = vmax.xlane.f32.xlu0 %v4751
    %v4794 = vpop.xlane.xlu0 %4793
    %4795 = vmax.xlane.f32.xlu0 %v4754
    %v4796 = vpop.xlane.xlu0 %4795
    %4797 = vmax.xlane.f32.xlu0 %v4759
    %v4798 = vpop.xlane.xlu0 %4797
    %4799 = vmax.xlane.f32.xlu0 %v4762
    %v4800 = vpop.xlane.xlu0 %4799
    %4801 = vmax.xlane.f32.xlu0 %v4767
    %v4802 = vpop.xlane.xlu0 %4801
    %4803 = vmax.xlane.f32.xlu0 %v4770
    %v4804 = vpop.xlane.xlu0 %4803
    %v4805 = vsub.f32 %v4711, %v4774
    %v4806 = vsub.f32 %v4714, %v4776
    %v4807 = vsub.f32 %v4719, %v4778
    %v4808 = vsub.f32 %v4722, %v4780
    %v4809 = vsub.f32 %v4727, %v4782
    %v4810 = vsub.f32 %v4730, %v4784
    %v4811 = vsub.f32 %v4735, %v4786
    %v4812 = vsub.f32 %v4738, %v4788
    %v4813 = vsub.f32 %v4743, %v4790
    %v4814 = vsub.f32 %v4746, %v4792
    %v4815 = vsub.f32 %v4751, %v4794
    %v4816 = vsub.f32 %v4754, %v4796
    %v4817 = vsub.f32 %v4759, %v4798
    %v4818 = vsub.f32 %v4762, %v4800
    %v4819 = vsub.f32 %v4767, %v4802
    %v4820 = vsub.f32 %v4770, %v4804
    %v4821 = vmul.f32 %v4805, 1.442695
    %v4822 = vpow.pop %v4821
    %v4823 = vmul.f32 %v4806, 1.442695
    %v4824 = vpow.pop %v4823
    %v4825 = vmul.f32 %v4807, 1.442695
    %v4826 = vpow.pop %v4825
    %v4827 = vmul.f32 %v4808, 1.442695
    %v4828 = vpow.pop %v4827
    %v4829 = vmul.f32 %v4809, 1.442695
    %v4830 = vpow.pop %v4829
    %v4831 = vmul.f32 %v4810, 1.442695
    %v4832 = vpow.pop %v4831
    %v4833 = vmul.f32 %v4811, 1.442695
    %v4834 = vpow.pop %v4833
    %v4835 = vmul.f32 %v4812, 1.442695
    %v4836 = vpow.pop %v4835
    %v4837 = vmul.f32 %v4813, 1.442695
    %v4838 = vpow.pop %v4837
    %v4839 = vmul.f32 %v4814, 1.442695
    %v4840 = vpow.pop %v4839
    %v4841 = vmul.f32 %v4815, 1.442695
    %v4842 = vpow.pop %v4841
    %v4843 = vmul.f32 %v4816, 1.442695
    %v4844 = vpow.pop %v4843
    %v4845 = vmul.f32 %v4817, 1.442695
    %v4846 = vpow.pop %v4845
    %v4847 = vmul.f32 %v4818, 1.442695
    %v4848 = vpow.pop %v4847
    %v4849 = vmul.f32 %v4819, 1.442695
    %v4850 = vpow.pop %v4849
    %v4851 = vmul.f32 %v4820, 1.442695
    %v4852 = vpow.pop %v4851
    %4853 = vadd.xlane.f32.xlu0 %v4822
    %v4854 = vpop.xlane.xlu0 %4853
    %4855 = vadd.xlane.f32.xlu0 %v4824
    %v4856 = vpop.xlane.xlu0 %4855
    %4857 = vadd.xlane.f32.xlu0 %v4826
    %v4858 = vpop.xlane.xlu0 %4857
    %4859 = vadd.xlane.f32.xlu0 %v4828
    %v4860 = vpop.xlane.xlu0 %4859
    %4861 = vadd.xlane.f32.xlu0 %v4830
    %v4862 = vpop.xlane.xlu0 %4861
    %4863 = vadd.xlane.f32.xlu0 %v4832
    %v4864 = vpop.xlane.xlu0 %4863
    %4865 = vadd.xlane.f32.xlu0 %v4834
    %v4866 = vpop.xlane.xlu0 %4865
    %4867 = vadd.xlane.f32.xlu0 %v4836
    %v4868 = vpop.xlane.xlu0 %4867
    %4869 = vadd.xlane.f32.xlu0 %v4838
    %v4870 = vpop.xlane.xlu0 %4869
    %4871 = vadd.xlane.f32.xlu0 %v4840
    %v4872 = vpop.xlane.xlu0 %4871
    %4873 = vadd.xlane.f32.xlu0 %v4842
    %v4874 = vpop.xlane.xlu0 %4873
    %4875 = vadd.xlane.f32.xlu0 %v4844
    %v4876 = vpop.xlane.xlu0 %4875
    %4877 = vadd.xlane.f32.xlu0 %v4846
    %v4878 = vpop.xlane.xlu0 %4877
    %4879 = vadd.xlane.f32.xlu0 %v4848
    %v4880 = vpop.xlane.xlu0 %4879
    %4881 = vadd.xlane.f32.xlu0 %v4850
    %v4882 = vpop.xlane.xlu0 %4881
    %4883 = vadd.xlane.f32.xlu0 %v4852
    %v4884 = vpop.xlane.xlu0 %4883
    %v4885 = vrcp.pop %v4854
    %v4886 = vrcp.pop %v4856
    %v4887 = vrcp.pop %v4858
    %v4888 = vrcp.pop %v4860
    %v4889 = vrcp.pop %v4862
    %v4890 = vrcp.pop %v4864
    %v4891 = vrcp.pop %v4866
    %v4892 = vrcp.pop %v4868
    %v4893 = vrcp.pop %v4870
    %v4894 = vrcp.pop %v4872
    %v4895 = vrcp.pop %v4874
    %v4896 = vrcp.pop %v4876
    %v4897 = vrcp.pop %v4878
    %v4898 = vrcp.pop %v4880
    %v4899 = vrcp.pop %v4882
    %v4900 = vrcp.pop %v4884
    %v4901 = vmul.f32 %v4822, %v4885
    %v4902 = vmul.f32 %v4824, %v4886
    %v4903 = vmul.f32 %v4826, %v4887
    %v4904 = vmul.f32 %v4828, %v4888
    %v4905 = vmul.f32 %v4830, %v4889
    %v4906 = vmul.f32 %v4832, %v4890
    %v4907 = vmul.f32 %v4834, %v4891
    %v4908 = vmul.f32 %v4836, %v4892
    %v4909 = vmul.f32 %v4838, %v4893
    %v4910 = vmul.f32 %v4840, %v4894
    %v4911 = vmul.f32 %v4842, %v4895
    %v4912 = vmul.f32 %v4844, %v4896
    %v4913 = vmul.f32 %v4846, %v4897
    %v4914 = vmul.f32 %v4848, %v4898
    %v4915 = vmul.f32 %v4850, %v4899
    %v4916 = vmul.f32 %v4852, %v4900
    %v4917 = vpack.c.bf16 %v4902, %v4901
    %v4918 = vpack.c.bf16 %v4904, %v4903
    %v4919 = vpack.c.bf16 %v4906, %v4905
    %v4920 = vpack.c.bf16 %v4908, %v4907
    %v4921 = vpack.c.bf16 %v4910, %v4909
    %v4922 = vpack.c.bf16 %v4912, %v4911
    %v4923 = vpack.c.bf16 %v4914, %v4913
    %v4924 = vpack.c.bf16 %v4916, %v4915
    %4925 = vrot.lane.b32.xlu0 %v2782, 40
    %v4926 = vpop.permute.xlu0 %4925
    %4927 = vrot.lane.b32.xlu0 %v2783, 40
    %v4928 = vpop.permute.xlu0 %4927
    %4929 = vrot.lane.b32.xlu0 %v2784, 40
    %v4930 = vpop.permute.xlu0 %4929
    %4931 = vrot.lane.b32.xlu0 %v2785, 40
    %v4932 = vpop.permute.xlu0 %4931
    %4933 = vrot.lane.b32.xlu0 %v2786, 40
    %v4934 = vpop.permute.xlu0 %4933
    %4935 = vrot.lane.b32.xlu0 %v2787, 40
    %v4936 = vpop.permute.xlu0 %4935
    %4937 = vrot.lane.b32.xlu0 %v2788, 40
    %v4938 = vpop.permute.xlu0 %4937
    %4939 = vrot.lane.b32.xlu0 %v2789, 40
    %v4940 = vpop.permute.xlu0 %4939
    %4949 = vmatprep.subr.bf16.mxu0 0
    %4950 = vmatpush1.bf16.msra.mxu0 %v4926
    %4951 = vmatprep.subr.bf16.mxu0 0
    %4952 = vmatpush1.bf16.msra.mxu0 %v4928
    %4953 = vmatprep.subr.bf16.mxu0 0
    %4954 = vmatpush1.bf16.msra.mxu0 %v4930
    %4955 = vmatprep.subr.bf16.mxu0 0
    %4956 = vmatpush1.bf16.msra.mxu0 %v4932
    %4957 = vmatprep.subr.bf16.mxu0 0
    %4958 = vmatpush1.bf16.msra.mxu0 %v4934
    %4959 = vmatprep.subr.bf16.mxu0 0
    %4960 = vmatpush1.bf16.msra.mxu0 %v4936
    %4961 = vmatprep.subr.bf16.mxu0 0
    %4962 = vmatpush1.bf16.msra.mxu0 %v4938
    %4963 = vmatprep.subr.bf16.mxu0 0
    %4964 = vmatpush1.bf16.msra.mxu0 %v4940
    %4965 = vmatprep.subr.bf16.mxu0 0
    %4966 = vmatpush1.bf16.msra.mxu0 0
    %4967 = vmatprep.subr.bf16.mxu0 0
    %4968 = vmatpush1.bf16.msra.mxu0 0
    %4969 = vmatprep.subr.bf16.mxu0 0
    %4970 = vmatpush1.bf16.msra.mxu0 0
    %4971 = vmatprep.subr.bf16.mxu0 0
    %4972 = vmatpush1.bf16.msra.mxu0 0
    %4973 = vmatprep.subr.bf16.mxu0 0
    %4974 = vmatpush1.bf16.msra.mxu0 0
    %4975 = vmatprep.subr.bf16.mxu0 0
    %4976 = vmatpush1.bf16.msra.mxu0 0
    %4977 = vmatprep.subr.bf16.mxu0 0
    %4978 = vmatpush1.bf16.msra.mxu0 0
    %4979 = vmatprep.subr.bf16.mxu0 0
    %4980 = vmatpush1.bf16.msra.mxu0 0
    %4981 = vmatprep.mubr.bf16.mxu0 0
    %4982 = vmatmul.mubr.bf16.gmra.mrb[0].mxu0 %v4917
    %v4983 = vpop.f32.mrb[0].mxu0
    %v4984 = vadd.f32 0.0, %v4983
    %v4985 = vpop.f32.mrb[0].mxu0
    %v4986 = vpop.f32.mrb[0].mxu0
    %v4987 = vadd.f32 0.0, %v4986
    %v4988 = vpop.f32.mrb[0].mxu0
    %4989 = vmatprep.mubr.bf16.mxu0 0
    %4990 = vmatmul.mubr.bf16.gmra.mrb[0].mxu0 %v4918
    %v4991 = vpop.f32.mrb[0].mxu0
    %v4992 = vadd.f32 0.0, %v4991
    %v4993 = vpop.f32.mrb[0].mxu0
    %v4994 = vpop.f32.mrb[0].mxu0
    %v4995 = vadd.f32 0.0, %v4994
    %v4996 = vpop.f32.mrb[0].mxu0
    %4997 = vmatprep.mubr.bf16.mxu0 0
    %4998 = vmatmul.mubr.bf16.gmra.mrb[0].mxu0 %v4919
    %v4999 = vpop.f32.mrb[0].mxu0
    %v5000 = vadd.f32 0.0, %v4999
    %v5001 = vpop.f32.mrb[0].mxu0
    %v5002 = vpop.f32.mrb[0].mxu0
    %v5003 = vadd.f32 0.0, %v5002
    %v5004 = vpop.f32.mrb[0].mxu0
    %5005 = vmatprep.mubr.bf16.mxu0 0
    %5006 = vmatmul.mubr.bf16.gmra.mrb[0].mxu0 %v4920
    %v5007 = vpop.f32.mrb[0].mxu0
    %v5008 = vadd.f32 0.0, %v5007
    %v5009 = vpop.f32.mrb[0].mxu0
    %v5010 = vpop.f32.mrb[0].mxu0
    %v5011 = vadd.f32 0.0, %v5010
    %v5012 = vpop.f32.mrb[0].mxu0
    %5013 = vmatprep.mubr.bf16.mxu0 0
    %5014 = vmatmul.mubr.bf16.gmra.mrb[0].mxu0 %v4921
    %v5015 = vpop.f32.mrb[0].mxu0
    %v5016 = vadd.f32 0.0, %v5015
    %v5017 = vpop.f32.mrb[0].mxu0
    %v5018 = vpop.f32.mrb[0].mxu0
    %v5019 = vadd.f32 0.0, %v5018
    %v5020 = vpop.f32.mrb[0].mxu0
    %5021 = vmatprep.mubr.bf16.mxu0 0
    %5022 = vmatmul.mubr.bf16.gmra.mrb[0].mxu0 %v4922
    %v5023 = vpop.f32.mrb[0].mxu0
    %v5024 = vadd.f32 0.0, %v5023
    %v5025 = vpop.f32.mrb[0].mxu0
    %v5026 = vpop.f32.mrb[0].mxu0
    %v5027 = vadd.f32 0.0, %v5026
    %v5028 = vpop.f32.mrb[0].mxu0
    %5029 = vmatprep.mubr.bf16.mxu0 0
    %5030 = vmatmul.mubr.bf16.gmra.mrb[0].mxu0 %v4923
    %v5031 = vpop.f32.mrb[0].mxu0
    %v5032 = vadd.f32 0.0, %v5031
    %v5033 = vpop.f32.mrb[0].mxu0
    %v5034 = vpop.f32.mrb[0].mxu0
    %v5035 = vadd.f32 0.0, %v5034
    %v5036 = vpop.f32.mrb[0].mxu0
    %5037 = vmatprep.mubr.bf16.mxu0 0
    %5038 = vmatmul.mubr.bf16.gmra.mrb[0].mxu0 %v4924
    %v5039 = vpop.f32.mrb[0].mxu0
    %v5040 = vadd.f32 0.0, %v5039
    %v5041 = vpop.f32.mrb[0].mxu0
    %v5042 = vpop.f32.mrb[0].mxu0
    %v5043 = vadd.f32 0.0, %v5042
    %v5044 = vpop.f32.mrb[0].mxu0
    %5045 = vdwg.mxu0
    %v5046 = vpack.c.bf16 %v4987, %v4984
    %v5047 = vpack.c.bf16 %v4995, %v4992
    %v5048 = vpack.c.bf16 %v5003, %v5000
    %v5049 = vpack.c.bf16 %v5011, %v5008
    %v5050 = vpack.c.bf16 %v5019, %v5016
    %v5051 = vpack.c.bf16 %v5027, %v5024
    %v5052 = vpack.c.bf16 %v5035, %v5032
    %v5053 = vpack.c.bf16 %v5043, %v5040
    %v5054 = vld [vmem:[%s3256 + $0xc] sm:$0xf]
    %v5056 = vsel %vm253, %v5046, 0
    %v5059 = vsel %vm253, %v5047, 0
    %v5062 = vsel %vm253, %v5048, 0
    %v5065 = vsel %vm253, %v5049, 0
    %v5068 = vsel %vm253, %v5050, 0
    %v5071 = vsel %vm253, %v5051, 0
    %v5074 = vsel %vm253, %v5052, 0
    %v5077 = vsel %vm253, %v5053, 0
    %v5080 = vsel %vm705, %v5054, 0
    %5082 = vmatprep.subr.bf16.mxu0 0
    %5083 = vmatpush1.bf16.msra.mxu0 %v5080
    %5084 = vmatprep.subr.bf16.mxu0 0
    %5085 = vmatpush1.bf16.msra.mxu0 0
    %5086 = vmatprep.subr.bf16.mxu0 0
    %5087 = vmatpush1.bf16.msra.mxu0 0
    %5088 = vmatprep.subr.bf16.mxu0 0
    %5089 = vmatpush1.bf16.msra.mxu0 0
    %5090 = vmatprep.subr.bf16.mxu0 0
    %5091 = vmatpush1.bf16.msra.mxu0 0
    %5092 = vmatprep.subr.bf16.mxu0 0
    %5093 = vmatpush1.bf16.msra.mxu0 0
    %5094 = vmatprep.subr.bf16.mxu0 0
    %5095 = vmatpush1.bf16.msra.mxu0 0
    %5096 = vmatprep.subr.bf16.mxu0 0
    %5097 = vmatpush1.bf16.msra.mxu0 0
    %5098 = vmatprep.subr.bf16.mxu0 0
    %5099 = vmatpush1.bf16.msra.mxu0 0
    %5100 = vmatprep.subr.bf16.mxu0 0
    %5101 = vmatpush1.bf16.msra.mxu0 0
    %5102 = vmatprep.subr.bf16.mxu0 0
    %5103 = vmatpush1.bf16.msra.mxu0 0
    %5104 = vmatprep.subr.bf16.mxu0 0
    %5105 = vmatpush1.bf16.msra.mxu0 0
    %5106 = vmatprep.subr.bf16.mxu0 0
    %5107 = vmatpush1.bf16.msra.mxu0 0
    %5108 = vmatprep.subr.bf16.mxu0 0
    %5109 = vmatpush1.bf16.msra.mxu0 0
    %5110 = vmatprep.subr.bf16.mxu0 0
    %5111 = vmatpush1.bf16.msra.mxu0 0
    %5112 = vmatprep.subr.bf16.mxu0 0
    %5113 = vmatpush1.bf16.msra.mxu0 0
    %5114 = vmatprep.mubr.bf16.mxu0 0
    %5115 = vmatmul.mubr.bf16.gmra.mrb[0].mxu0 %v5056
    %v5116 = vpop.f32.mrb[0].mxu0
    %v5117 = vadd.f32 0.0, %v5116
    %v5118 = vpop.f32.mrb[0].mxu0
    %v5119 = vpop.f32.mrb[0].mxu0
    %v5120 = vadd.f32 0.0, %v5119
    %v5121 = vpop.f32.mrb[0].mxu0
    %5122 = vmatprep.mubr.bf16.mxu0 0
    %5123 = vmatmul.mubr.bf16.gmra.mrb[0].mxu0 %v5059
    %v5124 = vpop.f32.mrb[0].mxu0
    %v5125 = vadd.f32 0.0, %v5124
    %v5126 = vpop.f32.mrb[0].mxu0
    %v5127 = vpop.f32.mrb[0].mxu0
    %v5128 = vadd.f32 0.0, %v5127
    %v5129 = vpop.f32.mrb[0].mxu0
    %5130 = vmatprep.mubr.bf16.mxu0 0
    %5131 = vmatmul.mubr.bf16.gmra.mrb[0].mxu0 %v5062
    %v5132 = vpop.f32.mrb[0].mxu0
    %v5133 = vadd.f32 0.0, %v5132
    %v5134 = vpop.f32.mrb[0].mxu0
    %v5135 = vpop.f32.mrb[0].mxu0
    %v5136 = vadd.f32 0.0, %v5135
    %v5137 = vpop.f32.mrb[0].mxu0
    %5138 = vmatprep.mubr.bf16.mxu0 0
    %5139 = vmatmul.mubr.bf16.gmra.mrb[0].mxu0 %v5065
    %v5140 = vpop.f32.mrb[0].mxu0
    %v5141 = vadd.f32 0.0, %v5140
    %v5142 = vpop.f32.mrb[0].mxu0
    %v5143 = vpop.f32.mrb[0].mxu0
    %v5144 = vadd.f32 0.0, %v5143
    %v5145 = vpop.f32.mrb[0].mxu0
    %5146 = vmatprep.mubr.bf16.mxu0 0
    %5147 = vmatmul.mubr.bf16.gmra.mrb[0].mxu0 %v5068
    %v5148 = vpop.f32.mrb[0].mxu0
    %v5149 = vadd.f32 0.0, %v5148
    %v5150 = vpop.f32.mrb[0].mxu0
    %v5151 = vpop.f32.mrb[0].mxu0
    %v5152 = vadd.f32 0.0, %v5151
    %v5153 = vpop.f32.mrb[0].mxu0
    %5154 = vmatprep.mubr.bf16.mxu0 0
    %5155 = vmatmul.mubr.bf16.gmra.mrb[0].mxu0 %v5071
    %v5156 = vpop.f32.mrb[0].mxu0
    %v5157 = vadd.f32 0.0, %v5156
    %v5158 = vpop.f32.mrb[0].mxu0
    %v5159 = vpop.f32.mrb[0].mxu0
    %v5160 = vadd.f32 0.0, %v5159
    %v5161 = vpop.f32.mrb[0].mxu0
    %5162 = vmatprep.mubr.bf16.mxu0 0
    %5163 = vmatmul.mubr.bf16.gmra.mrb[0].mxu0 %v5074
    %v5164 = vpop.f32.mrb[0].mxu0
    %v5165 = vadd.f32 0.0, %v5164
    %v5166 = vpop.f32.mrb[0].mxu0
    %v5167 = vpop.f32.mrb[0].mxu0
    %v5168 = vadd.f32 0.0, %v5167
    %v5169 = vpop.f32.mrb[0].mxu0
    %5170 = vmatprep.mubr.bf16.mxu0 0
    %5171 = vmatmul.mubr.bf16.gmra.mrb[0].mxu0 %v5077
    %v5172 = vpop.f32.mrb[0].mxu0
    %v5173 = vadd.f32 0.0, %v5172
    %v5174 = vpop.f32.mrb[0].mxu0
    %v5175 = vpop.f32.mrb[0].mxu0
    %v5176 = vadd.f32 0.0, %v5175
    %v5177 = vpop.f32.mrb[0].mxu0
    %5178 = vdwg.mxu0
    %v5179 = vadd.f32 %v4580, %v5117
    %v5180 = vadd.f32 %v4581, %v5120
    %v5181 = vadd.f32 %v4582, %v5125
    %v5182 = vadd.f32 %v4583, %v5128
    %v5183 = vadd.f32 %v4584, %v5133
    %v5184 = vadd.f32 %v4585, %v5136
    %v5185 = vadd.f32 %v4586, %v5141
    %v5186 = vadd.f32 %v4587, %v5144
    %v5187 = vadd.f32 %v4588, %v5149
    %v5188 = vadd.f32 %v4589, %v5152
    %v5189 = vadd.f32 %v4590, %v5157
    %v5190 = vadd.f32 %v4591, %v5160
    %v5191 = vadd.f32 %v4592, %v5165
    %v5192 = vadd.f32 %v4593, %v5168
    %v5193 = vadd.f32 %v4594, %v5173
    %v5194 = vadd.f32 %v4595, %v5176
    %v5195 = vpack.c.bf16 %v5180, %v5179
    %v5196 = vpack.c.bf16 %v5182, %v5181
    %v5197 = vpack.c.bf16 %v5184, %v5183
    %v5198 = vpack.c.bf16 %v5186, %v5185
    %v5199 = vpack.c.bf16 %v5188, %v5187
    %v5200 = vpack.c.bf16 %v5190, %v5189
    %v5201 = vpack.c.bf16 %v5192, %v5191
    %v5202 = vpack.c.bf16 %v5194, %v5193
    %s5203 = scalar_lea.vmem %s3, 32
    %v5204 = vld [vmem:[%s5203] sm:$0xf]
    %v5205 = vld [vmem:[%s5203 + $0x4] sm:$0xf]
    %v5206 = vld [vmem:[%s5203 + $0x8] sm:$0xf]
    %v5207 = vld [vmem:[%s5203 + $0xc] sm:$0xf]
    %s5208 = scalar_lea.vmem %s4, 2
    %v5209 = vld [vmem:[%s5208] sm:$0x1]
    %v5211 = vlaneseq
    %v5212 = vshrl.u32 %v5211, 7
    %v5213 = vsub.s32 0, %v5212
    %v5214 = vrot.slane %v5209, %v5213
    %v5220 = vunpack.c.l.b16 %v5204
    %v5221 = vunpack.c.l.b16 %v5205
    %v5222 = vunpack.c.l.b16 %v5206
    %v5223 = vunpack.c.l.b16 %v5207
    %v5224 = vpack.c.b16 %v5221, %v5220
    %v5225 = vpack.c.b16 %v5223, %v5222
    %v5229 = vsel %vm75, %v5195, 0
    %v5232 = vsel %vm75, %v5196, 0
    %v5235 = vsel %vm75, %v5197, 0
    %v5238 = vsel %vm75, %v5198, 0
    %v5241 = vsel %vm75, %v5199, 0
    %v5244 = vsel %vm75, %v5200, 0
    %v5247 = vsel %vm75, %v5201, 0
    %v5250 = vsel %vm75, %v5202, 0
    %5252 = vmatprep.subr.bf16.mxu0 0
    %5253 = vmatpush1.bf16.msra.mxu0 %v5224
    %5254 = vmatprep.subr.bf16.mxu0 0
    %5255 = vmatpush1.bf16.msra.mxu0 %v5225
    %5256 = vmatprep.subr.bf16.mxu0 0
    %5257 = vmatpush1.bf16.msra.mxu0 0
    %5258 = vmatprep.subr.bf16.mxu0 0
    %5259 = vmatpush1.bf16.msra.mxu0 0
    %5260 = vmatprep.subr.bf16.mxu0 0
    %5261 = vmatpush1.bf16.msra.mxu0 0
    %5262 = vmatprep.subr.bf16.mxu0 0
    %5263 = vmatpush1.bf16.msra.mxu0 0
    %5264 = vmatprep.subr.bf16.mxu0 0
    %5265 = vmatpush1.bf16.msra.mxu0 0
    %5266 = vmatprep.subr.bf16.mxu0 0
    %5267 = vmatpush1.bf16.msra.mxu0 0
    %5268 = vmatprep.subr.bf16.mxu0 0
    %5269 = vmatpush1.bf16.msra.mxu0 0
    %5270 = vmatprep.subr.bf16.mxu0 0
    %5271 = vmatpush1.bf16.msra.mxu0 0
    %5272 = vmatprep.subr.bf16.mxu0 0
    %5273 = vmatpush1.bf16.msra.mxu0 0
    %5274 = vmatprep.subr.bf16.mxu0 0
    %5275 = vmatpush1.bf16.msra.mxu0 0
    %5276 = vmatprep.subr.bf16.mxu0 0
    %5277 = vmatpush1.bf16.msra.mxu0 0
    %5278 = vmatprep.subr.bf16.mxu0 0
    %5279 = vmatpush1.bf16.msra.mxu0 0
    %5280 = vmatprep.subr.bf16.mxu0 0
    %5281 = vmatpush1.bf16.msra.mxu0 0
    %5282 = vmatprep.subr.bf16.mxu0 0
    %5283 = vmatpush1.bf16.msra.mxu0 0
    %5284 = vmatprep.mubr.bf16.mxu0 0
    %5285 = vmatmul.mubr.bf16.gmra.mrb[0].mxu0 %v5229
    %v5286 = vpop.f32.mrb[0].mxu0
    %v5287 = vadd.f32 %v5214, %v5286
    %v5288 = vpop.f32.mrb[0].mxu0
    %v5289 = vpop.f32.mrb[0].mxu0
    %v5290 = vadd.f32 %v5214, %v5289
    %v5291 = vpop.f32.mrb[0].mxu0
    %5292 = vmatprep.mubr.bf16.mxu0 0
    %5293 = vmatmul.mubr.bf16.gmra.mrb[0].mxu0 %v5232
    %v5294 = vpop.f32.mrb[0].mxu0
    %v5295 = vadd.f32 %v5214, %v5294
    %v5296 = vpop.f32.mrb[0].mxu0
    %v5297 = vpop.f32.mrb[0].mxu0
    %v5298 = vadd.f32 %v5214, %v5297
    %v5299 = vpop.f32.mrb[0].mxu0
    %5300 = vmatprep.mubr.bf16.mxu0 0
    %5301 = vmatmul.mubr.bf16.gmra.mrb[0].mxu0 %v5235
    %v5302 = vpop.f32.mrb[0].mxu0
    %v5303 = vadd.f32 %v5214, %v5302
    %v5304 = vpop.f32.mrb[0].mxu0
    %v5305 = vpop.f32.mrb[0].mxu0
    %v5306 = vadd.f32 %v5214, %v5305
    %v5307 = vpop.f32.mrb[0].mxu0
    %5308 = vmatprep.mubr.bf16.mxu0 0
    %5309 = vmatmul.mubr.bf16.gmra.mrb[0].mxu0 %v5238
    %v5310 = vpop.f32.mrb[0].mxu0
    %v5311 = vadd.f32 %v5214, %v5310
    %v5312 = vpop.f32.mrb[0].mxu0
    %v5313 = vpop.f32.mrb[0].mxu0
    %v5314 = vadd.f32 %v5214, %v5313
    %v5315 = vpop.f32.mrb[0].mxu0
    %5316 = vmatprep.mubr.bf16.mxu0 0
    %5317 = vmatmul.mubr.bf16.gmra.mrb[0].mxu0 %v5241
    %v5318 = vpop.f32.mrb[0].mxu0
    %v5319 = vadd.f32 %v5214, %v5318
    %v5320 = vpop.f32.mrb[0].mxu0
    %v5321 = vpop.f32.mrb[0].mxu0
    %v5322 = vadd.f32 %v5214, %v5321
    %v5323 = vpop.f32.mrb[0].mxu0
    %5324 = vmatprep.mubr.bf16.mxu0 0
    %5325 = vmatmul.mubr.bf16.gmra.mrb[0].mxu0 %v5244
    %v5326 = vpop.f32.mrb[0].mxu0
    %v5327 = vadd.f32 %v5214, %v5326
    %v5328 = vpop.f32.mrb[0].mxu0
    %v5329 = vpop.f32.mrb[0].mxu0
    %v5330 = vadd.f32 %v5214, %v5329
    %v5331 = vpop.f32.mrb[0].mxu0
    %5332 = vmatprep.mubr.bf16.mxu0 0
    %5333 = vmatmul.mubr.bf16.gmra.mrb[0].mxu0 %v5247
    %v5334 = vpop.f32.mrb[0].mxu0
    %v5335 = vadd.f32 %v5214, %v5334
    %v5336 = vpop.f32.mrb[0].mxu0
    %v5337 = vpop.f32.mrb[0].mxu0
    %v5338 = vadd.f32 %v5214, %v5337
    %v5339 = vpop.f32.mrb[0].mxu0
    %5340 = vmatprep.mubr.bf16.mxu0 0
    %5341 = vmatmul.mubr.bf16.gmra.mrb[0].mxu0 %v5250
    %v5342 = vpop.f32.mrb[0].mxu0
    %v5343 = vadd.f32 %v5214, %v5342
    %v5344 = vpop.f32.mrb[0].mxu0
    %v5345 = vpop.f32.mrb[0].mxu0
    %v5346 = vadd.f32 %v5214, %v5345
    %v5347 = vpop.f32.mrb[0].mxu0
    %5348 = vdwg.mxu0
    %s5349 = scalar_lea.vmem %s6, 2
    %v5350 = vld [vmem:[%s5349] sm:$0x1]
    %v5352 = vlaneseq
    %v5353 = vshrl.u32 %v5352, 7
    %v5354 = vsub.s32 0, %v5353
    %v5355 = vrot.slane %v5350, %v5354
    %v5357 = vadd.f32 %v5355, 0.0
    %v5358 = vpack.c.bf16 %v5290, %v5287
    %v5359 = vpack.c.bf16 %v5298, %v5295
    %v5360 = vpack.c.bf16 %v5306, %v5303
    %v5361 = vpack.c.bf16 %v5314, %v5311
    %v5362 = vpack.c.bf16 %v5322, %v5319
    %v5363 = vpack.c.bf16 %v5330, %v5327
    %v5364 = vpack.c.bf16 %v5338, %v5335
    %v5365 = vpack.c.bf16 %v5346, %v5343
    %5374 = vrot.lane.b32.xlu0 %v5358, 96
    %v5375 = vpop.permute.xlu0 %5374
    %5376 = vrot.lane.b32.xlu0 %v5359, 96
    %v5377 = vpop.permute.xlu0 %5376
    %5378 = vrot.lane.b32.xlu0 %v5360, 96
    %v5379 = vpop.permute.xlu0 %5378
    %5380 = vrot.lane.b32.xlu0 %v5361, 96
    %v5381 = vpop.permute.xlu0 %5380
    %5382 = vrot.lane.b32.xlu0 %v5362, 96
    %v5383 = vpop.permute.xlu0 %5382
    %5384 = vrot.lane.b32.xlu0 %v5363, 96
    %v5385 = vpop.permute.xlu0 %5384
    %5386 = vrot.lane.b32.xlu0 %v5364, 96
    %v5387 = vpop.permute.xlu0 %5386
    %5388 = vrot.lane.b32.xlu0 %v5365, 96
    %v5389 = vpop.permute.xlu0 %5388
    %v5391 = vsel %vm253, %v5358, 0
    %v5394 = vsel %vm253, %v5359, 0
    %v5397 = vsel %vm253, %v5360, 0
    %v5400 = vsel %vm253, %v5361, 0
    %v5403 = vsel %vm253, %v5362, 0
    %v5406 = vsel %vm253, %v5363, 0
    %v5409 = vsel %vm253, %v5364, 0
    %v5412 = vsel %vm253, %v5365, 0
    %v5415 = vsel %vm253, %v5375, 0
    %v5418 = vsel %vm253, %v5377, 0
    %v5421 = vsel %vm253, %v5379, 0
    %v5424 = vsel %vm253, %v5381, 0
    %v5427 = vsel %vm253, %v5383, 0
    %v5430 = vsel %vm253, %v5385, 0
    %v5433 = vsel %vm253, %v5387, 0
    %v5436 = vsel %vm253, %v5389, 0
    %5438 = vmatprep.subr.bf16.mxu0 0
    %5439 = vmatpush1.bf16.xpose.msra.mxu0 %v5415
    %5440 = vmatprep.subr.bf16.mxu0 0
    %5441 = vmatpush1.bf16.xpose.msra.mxu0 %v5418
    %5442 = vmatprep.subr.bf16.mxu0 0
    %5443 = vmatpush1.bf16.xpose.msra.mxu0 %v5421
    %5444 = vmatprep.subr.bf16.mxu0 0
    %5445 = vmatpush1.bf16.xpose.msra.mxu0 %v5424
    %5446 = vmatprep.subr.bf16.mxu0 0
    %5447 = vmatpush1.bf16.xpose.msra.mxu0 %v5427
    %5448 = vmatprep.subr.bf16.mxu0 0
    %5449 = vmatpush1.bf16.xpose.msra.mxu0 %v5430
    %5450 = vmatprep.subr.bf16.mxu0 0
    %5451 = vmatpush1.bf16.xpose.msra.mxu0 %v5433
    %5452 = vmatprep.subr.bf16.mxu0 0
    %5453 = vmatpush1.bf16.xpose.msra.mxu0 %v5436
    %5454 = vmatprep.subr.bf16.mxu0 0
    %5455 = vmatpush1.bf16.xpose.msra.mxu0 0
    %5456 = vmatprep.subr.bf16.mxu0 0
    %5457 = vmatpush1.bf16.xpose.msra.mxu0 0
    %5458 = vmatprep.subr.bf16.mxu0 0
    %5459 = vmatpush1.bf16.xpose.msra.mxu0 0
    %5460 = vmatprep.subr.bf16.mxu0 0
    %5461 = vmatpush1.bf16.xpose.msra.mxu0 0
    %5462 = vmatprep.subr.bf16.mxu0 0
    %5463 = vmatpush1.bf16.xpose.msra.mxu0 0
    %5464 = vmatprep.subr.bf16.mxu0 0
    %5465 = vmatpush1.bf16.xpose.msra.mxu0 0
    %5466 = vmatprep.subr.bf16.mxu0 0
    %5467 = vmatpush1.bf16.xpose.msra.mxu0 0
    %5468 = vmatprep.subr.bf16.mxu0 0
    %5469 = vmatpush1.bf16.xpose.msra.mxu0 0
    %5470 = vmatprep.mubr.bf16.mxu0 0
    %5471 = vmatmul.mubr.bf16.gmra.mrb[0].mxu0 %v5391
    %v5472 = vpop.f32.mrb[0].mxu0
    %v5473 = vadd.f32 %v213, %v5472
    %v5474 = vpop.f32.mrb[0].mxu0
    %v5475 = vpop.f32.mrb[0].mxu0
    %v5476 = vadd.f32 %v214, %v5475
    %v5477 = vpop.f32.mrb[0].mxu0
    %5478 = vmatprep.mubr.bf16.mxu0 0
    %5479 = vmatmul.mubr.bf16.gmra.mrb[0].mxu0 %v5394
    %v5480 = vpop.f32.mrb[0].mxu0
    %v5481 = vadd.f32 %v215, %v5480
    %v5482 = vpop.f32.mrb[0].mxu0
    %v5483 = vpop.f32.mrb[0].mxu0
    %v5484 = vadd.f32 %v216, %v5483
    %v5485 = vpop.f32.mrb[0].mxu0
    %5486 = vmatprep.mubr.bf16.mxu0 0
    %5487 = vmatmul.mubr.bf16.gmra.mrb[0].mxu0 %v5397
    %v5488 = vpop.f32.mrb[0].mxu0
    %v5489 = vadd.f32 %v217, %v5488
    %v5490 = vpop.f32.mrb[0].mxu0
    %v5491 = vpop.f32.mrb[0].mxu0
    %v5492 = vadd.f32 %v218, %v5491
    %v5493 = vpop.f32.mrb[0].mxu0
    %5494 = vmatprep.mubr.bf16.mxu0 0
    %5495 = vmatmul.mubr.bf16.gmra.mrb[0].mxu0 %v5400
    %v5496 = vpop.f32.mrb[0].mxu0
    %v5497 = vadd.f32 %v219, %v5496
    %v5498 = vpop.f32.mrb[0].mxu0
    %v5499 = vpop.f32.mrb[0].mxu0
    %v5500 = vadd.f32 %v220, %v5499
    %v5501 = vpop.f32.mrb[0].mxu0
    %5502 = vmatprep.mubr.bf16.mxu0 0
    %5503 = vmatmul.mubr.bf16.gmra.mrb[0].mxu0 %v5403
    %v5504 = vpop.f32.mrb[0].mxu0
    %v5505 = vadd.f32 %v221, %v5504
    %v5506 = vpop.f32.mrb[0].mxu0
    %v5507 = vpop.f32.mrb[0].mxu0
    %v5508 = vadd.f32 %v222, %v5507
    %v5509 = vpop.f32.mrb[0].mxu0
    %5510 = vmatprep.mubr.bf16.mxu0 0
    %5511 = vmatmul.mubr.bf16.gmra.mrb[0].mxu0 %v5406
    %v5512 = vpop.f32.mrb[0].mxu0
    %v5513 = vadd.f32 %v223, %v5512
    %v5514 = vpop.f32.mrb[0].mxu0
    %v5515 = vpop.f32.mrb[0].mxu0
    %v5516 = vadd.f32 %v224, %v5515
    %v5517 = vpop.f32.mrb[0].mxu0
    %5518 = vmatprep.mubr.bf16.mxu0 0
    %5519 = vmatmul.mubr.bf16.gmra.mrb[0].mxu0 %v5409
    %v5520 = vpop.f32.mrb[0].mxu0
    %v5521 = vadd.f32 %v225, %v5520
    %v5522 = vpop.f32.mrb[0].mxu0
    %v5523 = vpop.f32.mrb[0].mxu0
    %v5524 = vadd.f32 %v226, %v5523
    %v5525 = vpop.f32.mrb[0].mxu0
    %5526 = vmatprep.mubr.bf16.mxu0 0
    %5527 = vmatmul.mubr.bf16.gmra.mrb[0].mxu0 %v5412
    %v5528 = vpop.f32.mrb[0].mxu0
    %v5529 = vadd.f32 %v227, %v5528
    %v5530 = vpop.f32.mrb[0].mxu0
    %v5531 = vpop.f32.mrb[0].mxu0
    %v5532 = vadd.f32 %v228, %v5531
    %v5533 = vpop.f32.mrb[0].mxu0
    %5534 = vdwg.mxu0
    %5535 = vmax.xlane.f32.xlu0 %v5473
    %v5536 = vpop.xlane.xlu0 %5535
    %5537 = vmax.xlane.f32.xlu0 %v5476
    %v5538 = vpop.xlane.xlu0 %5537
    %5539 = vmax.xlane.f32.xlu0 %v5481
    %v5540 = vpop.xlane.xlu0 %5539
    %5541 = vmax.xlane.f32.xlu0 %v5484
    %v5542 = vpop.xlane.xlu0 %5541
    %5543 = vmax.xlane.f32.xlu0 %v5489
    %v5544 = vpop.xlane.xlu0 %5543
    %5545 = vmax.xlane.f32.xlu0 %v5492
    %v5546 = vpop.xlane.xlu0 %5545
    %5547 = vmax.xlane.f32.xlu0 %v5497
    %v5548 = vpop.xlane.xlu0 %5547
    %5549 = vmax.xlane.f32.xlu0 %v5500
    %v5550 = vpop.xlane.xlu0 %5549
    %5551 = vmax.xlane.f32.xlu0 %v5505
    %v5552 = vpop.xlane.xlu0 %5551
    %5553 = vmax.xlane.f32.xlu0 %v5508
    %v5554 = vpop.xlane.xlu0 %5553
    %5555 = vmax.xlane.f32.xlu0 %v5513
    %v5556 = vpop.xlane.xlu0 %5555
    %5557 = vmax.xlane.f32.xlu0 %v5516
    %v5558 = vpop.xlane.xlu0 %5557
    %5559 = vmax.xlane.f32.xlu0 %v5521
    %v5560 = vpop.xlane.xlu0 %5559
    %5561 = vmax.xlane.f32.xlu0 %v5524
    %v5562 = vpop.xlane.xlu0 %5561
    %5563 = vmax.xlane.f32.xlu0 %v5529
    %v5564 = vpop.xlane.xlu0 %5563
    %5565 = vmax.xlane.f32.xlu0 %v5532
    %v5566 = vpop.xlane.xlu0 %5565
    %v5567 = vsub.f32 %v5473, %v5536
    %v5568 = vsub.f32 %v5476, %v5538
    %v5569 = vsub.f32 %v5481, %v5540
    %v5570 = vsub.f32 %v5484, %v5542
    %v5571 = vsub.f32 %v5489, %v5544
    %v5572 = vsub.f32 %v5492, %v5546
    %v5573 = vsub.f32 %v5497, %v5548
    %v5574 = vsub.f32 %v5500, %v5550
    %v5575 = vsub.f32 %v5505, %v5552
    %v5576 = vsub.f32 %v5508, %v5554
    %v5577 = vsub.f32 %v5513, %v5556
    %v5578 = vsub.f32 %v5516, %v5558
    %v5579 = vsub.f32 %v5521, %v5560
    %v5580 = vsub.f32 %v5524, %v5562
    %v5581 = vsub.f32 %v5529, %v5564
    %v5582 = vsub.f32 %v5532, %v5566
    %v5583 = vmul.f32 %v5567, 1.442695
    %v5584 = vpow.pop %v5583
    %v5585 = vmul.f32 %v5568, 1.442695
    %v5586 = vpow.pop %v5585
    %v5587 = vmul.f32 %v5569, 1.442695
    %v5588 = vpow.pop %v5587
    %v5589 = vmul.f32 %v5570, 1.442695
    %v5590 = vpow.pop %v5589
    %v5591 = vmul.f32 %v5571, 1.442695
    %v5592 = vpow.pop %v5591
    %v5593 = vmul.f32 %v5572, 1.442695
    %v5594 = vpow.pop %v5593
    %v5595 = vmul.f32 %v5573, 1.442695
    %v5596 = vpow.pop %v5595
    %v5597 = vmul.f32 %v5574, 1.442695
    %v5598 = vpow.pop %v5597
    %v5599 = vmul.f32 %v5575, 1.442695
    %v5600 = vpow.pop %v5599
    %v5601 = vmul.f32 %v5576, 1.442695
    %v5602 = vpow.pop %v5601
    %v5603 = vmul.f32 %v5577, 1.442695
    %v5604 = vpow.pop %v5603
    %v5605 = vmul.f32 %v5578, 1.442695
    %v5606 = vpow.pop %v5605
    %v5607 = vmul.f32 %v5579, 1.442695
    %v5608 = vpow.pop %v5607
    %v5609 = vmul.f32 %v5580, 1.442695
    %v5610 = vpow.pop %v5609
    %v5611 = vmul.f32 %v5581, 1.442695
    %v5612 = vpow.pop %v5611
    %v5613 = vmul.f32 %v5582, 1.442695
    %v5614 = vpow.pop %v5613
    %5615 = vadd.xlane.f32.xlu0 %v5584
    %v5616 = vpop.xlane.xlu0 %5615
    %5617 = vadd.xlane.f32.xlu0 %v5586
    %v5618 = vpop.xlane.xlu0 %5617
    %5619 = vadd.xlane.f32.xlu0 %v5588
    %v5620 = vpop.xlane.xlu0 %5619
    %5621 = vadd.xlane.f32.xlu0 %v5590
    %v5622 = vpop.xlane.xlu0 %5621
    %5623 = vadd.xlane.f32.xlu0 %v5592
    %v5624 = vpop.xlane.xlu0 %5623
    %5625 = vadd.xlane.f32.xlu0 %v5594
    %v5626 = vpop.xlane.xlu0 %5625
    %5627 = vadd.xlane.f32.xlu0 %v5596
    %v5628 = vpop.xlane.xlu0 %5627
    %5629 = vadd.xlane.f32.xlu0 %v5598
    %v5630 = vpop.xlane.xlu0 %5629
    %5631 = vadd.xlane.f32.xlu0 %v5600
    %v5632 = vpop.xlane.xlu0 %5631
    %5633 = vadd.xlane.f32.xlu0 %v5602
    %v5634 = vpop.xlane.xlu0 %5633
    %5635 = vadd.xlane.f32.xlu0 %v5604
    %v5636 = vpop.xlane.xlu0 %5635
    %5637 = vadd.xlane.f32.xlu0 %v5606
    %v5638 = vpop.xlane.xlu0 %5637
    %5639 = vadd.xlane.f32.xlu0 %v5608
    %v5640 = vpop.xlane.xlu0 %5639
    %5641 = vadd.xlane.f32.xlu0 %v5610
    %v5642 = vpop.xlane.xlu0 %5641
    %5643 = vadd.xlane.f32.xlu0 %v5612
    %v5644 = vpop.xlane.xlu0 %5643
    %5645 = vadd.xlane.f32.xlu0 %v5614
    %v5646 = vpop.xlane.xlu0 %5645
    %v5647 = vrcp.pop %v5616
    %v5648 = vrcp.pop %v5618
    %v5649 = vrcp.pop %v5620
    %v5650 = vrcp.pop %v5622
    %v5651 = vrcp.pop %v5624
    %v5652 = vrcp.pop %v5626
    %v5653 = vrcp.pop %v5628
    %v5654 = vrcp.pop %v5630
    %v5655 = vrcp.pop %v5632
    %v5656 = vrcp.pop %v5634
    %v5657 = vrcp.pop %v5636
    %v5658 = vrcp.pop %v5638
    %v5659 = vrcp.pop %v5640
    %v5660 = vrcp.pop %v5642
    %v5661 = vrcp.pop %v5644
    %v5662 = vrcp.pop %v5646
    %v5663 = vmul.f32 %v5584, %v5647
    %v5664 = vmul.f32 %v5586, %v5648
    %v5665 = vmul.f32 %v5588, %v5649
    %v5666 = vmul.f32 %v5590, %v5650
    %v5667 = vmul.f32 %v5592, %v5651
    %v5668 = vmul.f32 %v5594, %v5652
    %v5669 = vmul.f32 %v5596, %v5653
    %v5670 = vmul.f32 %v5598, %v5654
    %v5671 = vmul.f32 %v5600, %v5655
    %v5672 = vmul.f32 %v5602, %v5656
    %v5673 = vmul.f32 %v5604, %v5657
    %v5674 = vmul.f32 %v5606, %v5658
    %v5675 = vmul.f32 %v5608, %v5659
    %v5676 = vmul.f32 %v5610, %v5660
    %v5677 = vmul.f32 %v5612, %v5661
    %v5678 = vmul.f32 %v5614, %v5662
    %v5679 = vpack.c.bf16 %v5664, %v5663
    %v5680 = vpack.c.bf16 %v5666, %v5665
    %v5681 = vpack.c.bf16 %v5668, %v5667
    %v5682 = vpack.c.bf16 %v5670, %v5669
    %v5683 = vpack.c.bf16 %v5672, %v5671
    %v5684 = vpack.c.bf16 %v5674, %v5673
    %v5685 = vpack.c.bf16 %v5676, %v5675
    %v5686 = vpack.c.bf16 %v5678, %v5677
    %5687 = vrot.lane.b32.xlu0 %v5358, 64
    %v5688 = vpop.permute.xlu0 %5687
    %5689 = vrot.lane.b32.xlu0 %v5359, 64
    %v5690 = vpop.permute.xlu0 %5689
    %5691 = vrot.lane.b32.xlu0 %v5360, 64
    %v5692 = vpop.permute.xlu0 %5691
    %5693 = vrot.lane.b32.xlu0 %v5361, 64
    %v5694 = vpop.permute.xlu0 %5693
    %5695 = vrot.lane.b32.xlu0 %v5362, 64
    %v5696 = vpop.permute.xlu0 %5695
    %5697 = vrot.lane.b32.xlu0 %v5363, 64
    %v5698 = vpop.permute.xlu0 %5697
    %5699 = vrot.lane.b32.xlu0 %v5364, 64
    %v5700 = vpop.permute.xlu0 %5699
    %5701 = vrot.lane.b32.xlu0 %v5365, 64
    %v5702 = vpop.permute.xlu0 %5701
    %5711 = vmatprep.subr.bf16.mxu0 0
    %5712 = vmatpush1.bf16.msra.mxu0 %v5688
    %5713 = vmatprep.subr.bf16.mxu0 0
    %5714 = vmatpush1.bf16.msra.mxu0 %v5690
    %5715 = vmatprep.subr.bf16.mxu0 0
    %5716 = vmatpush1.bf16.msra.mxu0 %v5692
    %5717 = vmatprep.subr.bf16.mxu0 0
    %5718 = vmatpush1.bf16.msra.mxu0 %v5694
    %5719 = vmatprep.subr.bf16.mxu0 0
    %5720 = vmatpush1.bf16.msra.mxu0 %v5696
    %5721 = vmatprep.subr.bf16.mxu0 0
    %5722 = vmatpush1.bf16.msra.mxu0 %v5698
    %5723 = vmatprep.subr.bf16.mxu0 0
    %5724 = vmatpush1.bf16.msra.mxu0 %v5700
    %5725 = vmatprep.subr.bf16.mxu0 0
    %5726 = vmatpush1.bf16.msra.mxu0 %v5702
    %5727 = vmatprep.subr.bf16.mxu0 0
    %5728 = vmatpush1.bf16.msra.mxu0 0
    %5729 = vmatprep.subr.bf16.mxu0 0
    %5730 = vmatpush1.bf16.msra.mxu0 0
    %5731 = vmatprep.subr.bf16.mxu0 0
    %5732 = vmatpush1.bf16.msra.mxu0 0
    %5733 = vmatprep.subr.bf16.mxu0 0
    %5734 = vmatpush1.bf16.msra.mxu0 0
    %5735 = vmatprep.subr.bf16.mxu0 0
    %5736 = vmatpush1.bf16.msra.mxu0 0
    %5737 = vmatprep.subr.bf16.mxu0 0
    %5738 = vmatpush1.bf16.msra.mxu0 0
    %5739 = vmatprep.subr.bf16.mxu0 0
    %5740 = vmatpush1.bf16.msra.mxu0 0
    %5741 = vmatprep.subr.bf16.mxu0 0
    %5742 = vmatpush1.bf16.msra.mxu0 0
    %5743 = vmatprep.mubr.bf16.mxu0 0
    %5744 = vmatmul.mubr.bf16.gmra.mrb[0].mxu0 %v5679
    %v5745 = vpop.f32.mrb[0].mxu0
    %v5746 = vadd.f32 0.0, %v5745
    %v5747 = vpop.f32.mrb[0].mxu0
    %v5748 = vpop.f32.mrb[0].mxu0
    %v5749 = vadd.f32 0.0, %v5748
    %v5750 = vpop.f32.mrb[0].mxu0
    %5751 = vmatprep.mubr.bf16.mxu0 0
    %5752 = vmatmul.mubr.bf16.gmra.mrb[0].mxu0 %v5680
    %v5753 = vpop.f32.mrb[0].mxu0
    %v5754 = vadd.f32 0.0, %v5753
    %v5755 = vpop.f32.mrb[0].mxu0
    %v5756 = vpop.f32.mrb[0].mxu0
    %v5757 = vadd.f32 0.0, %v5756
    %v5758 = vpop.f32.mrb[0].mxu0
    %5759 = vmatprep.mubr.bf16.mxu0 0
    %5760 = vmatmul.mubr.bf16.gmra.mrb[0].mxu0 %v5681
    %v5761 = vpop.f32.mrb[0].mxu0
    %v5762 = vadd.f32 0.0, %v5761
    %v5763 = vpop.f32.mrb[0].mxu0
    %v5764 = vpop.f32.mrb[0].mxu0
    %v5765 = vadd.f32 0.0, %v5764
    %v5766 = vpop.f32.mrb[0].mxu0
    %5767 = vmatprep.mubr.bf16.mxu0 0
    %5768 = vmatmul.mubr.bf16.gmra.mrb[0].mxu0 %v5682
    %v5769 = vpop.f32.mrb[0].mxu0
    %v5770 = vadd.f32 0.0, %v5769
    %v5771 = vpop.f32.mrb[0].mxu0
    %v5772 = vpop.f32.mrb[0].mxu0
    %v5773 = vadd.f32 0.0, %v5772
    %v5774 = vpop.f32.mrb[0].mxu0
    %5775 = vmatprep.mubr.bf16.mxu0 0
    %5776 = vmatmul.mubr.bf16.gmra.mrb[0].mxu0 %v5683
    %v5777 = vpop.f32.mrb[0].mxu0
    %v5778 = vadd.f32 0.0, %v5777
    %v5779 = vpop.f32.mrb[0].mxu0
    %v5780 = vpop.f32.mrb[0].mxu0
    %v5781 = vadd.f32 0.0, %v5780
    %v5782 = vpop.f32.mrb[0].mxu0
    %5783 = vmatprep.mubr.bf16.mxu0 0
    %5784 = vmatmul.mubr.bf16.gmra.mrb[0].mxu0 %v5684
    %v5785 = vpop.f32.mrb[0].mxu0
    %v5786 = vadd.f32 0.0, %v5785
    %v5787 = vpop.f32.mrb[0].mxu0
    %v5788 = vpop.f32.mrb[0].mxu0
    %v5789 = vadd.f32 0.0, %v5788
    %v5790 = vpop.f32.mrb[0].mxu0
    %5791 = vmatprep.mubr.bf16.mxu0 0
    %5792 = vmatmul.mubr.bf16.gmra.mrb[0].mxu0 %v5685
    %v5793 = vpop.f32.mrb[0].mxu0
    %v5794 = vadd.f32 0.0, %v5793
    %v5795 = vpop.f32.mrb[0].mxu0
    %v5796 = vpop.f32.mrb[0].mxu0
    %v5797 = vadd.f32 0.0, %v5796
    %v5798 = vpop.f32.mrb[0].mxu0
    %5799 = vmatprep.mubr.bf16.mxu0 0
    %5800 = vmatmul.mubr.bf16.gmra.mrb[0].mxu0 %v5686
    %v5801 = vpop.f32.mrb[0].mxu0
    %v5802 = vadd.f32 0.0, %v5801
    %v5803 = vpop.f32.mrb[0].mxu0
    %v5804 = vpop.f32.mrb[0].mxu0
    %v5805 = vadd.f32 0.0, %v5804
    %v5806 = vpop.f32.mrb[0].mxu0
    %5807 = vdwg.mxu0
    %v5808 = vpack.c.bf16 %v5749, %v5746
    %v5809 = vpack.c.bf16 %v5757, %v5754
    %v5810 = vpack.c.bf16 %v5765, %v5762
    %v5811 = vpack.c.bf16 %v5773, %v5770
    %v5812 = vpack.c.bf16 %v5781, %v5778
    %v5813 = vpack.c.bf16 %v5789, %v5786
    %v5814 = vpack.c.bf16 %v5797, %v5794
    %v5815 = vpack.c.bf16 %v5805, %v5802
    %s5816 = scalar_lea.vmem %s5, 32
    %v5817 = vld [vmem:[%s5816] sm:$0xf]
    %v5819 = vsel %vm253, %v5808, 0
    %v5822 = vsel %vm253, %v5809, 0
    %v5825 = vsel %vm253, %v5810, 0
    %v5828 = vsel %vm253, %v5811, 0
    %v5831 = vsel %vm253, %v5812, 0
    %v5834 = vsel %vm253, %v5813, 0
    %v5837 = vsel %vm253, %v5814, 0
    %v5840 = vsel %vm253, %v5815, 0
    %v5843 = vsel %vm705, %v5817, 0
    %5845 = vmatprep.subr.bf16.mxu0 0
    %5846 = vmatpush1.bf16.msra.mxu0 %v5843
    %5847 = vmatprep.subr.bf16.mxu0 0
    %5848 = vmatpush1.bf16.msra.mxu0 0
    %5849 = vmatprep.subr.bf16.mxu0 0
    %5850 = vmatpush1.bf16.msra.mxu0 0
    %5851 = vmatprep.subr.bf16.mxu0 0
    %5852 = vmatpush1.bf16.msra.mxu0 0
    %5853 = vmatprep.subr.bf16.mxu0 0
    %5854 = vmatpush1.bf16.msra.mxu0 0
    %5855 = vmatprep.subr.bf16.mxu0 0
    %5856 = vmatpush1.bf16.msra.mxu0 0
    %5857 = vmatprep.subr.bf16.mxu0 0
    %5858 = vmatpush1.bf16.msra.mxu0 0
    %5859 = vmatprep.subr.bf16.mxu0 0
    %5860 = vmatpush1.bf16.msra.mxu0 0
    %5861 = vmatprep.subr.bf16.mxu0 0
    %5862 = vmatpush1.bf16.msra.mxu0 0
    %5863 = vmatprep.subr.bf16.mxu0 0
    %5864 = vmatpush1.bf16.msra.mxu0 0
    %5865 = vmatprep.subr.bf16.mxu0 0
    %5866 = vmatpush1.bf16.msra.mxu0 0
    %5867 = vmatprep.subr.bf16.mxu0 0
    %5868 = vmatpush1.bf16.msra.mxu0 0
    %5869 = vmatprep.subr.bf16.mxu0 0
    %5870 = vmatpush1.bf16.msra.mxu0 0
    %5871 = vmatprep.subr.bf16.mxu0 0
    %5872 = vmatpush1.bf16.msra.mxu0 0
    %5873 = vmatprep.subr.bf16.mxu0 0
    %5874 = vmatpush1.bf16.msra.mxu0 0
    %5875 = vmatprep.subr.bf16.mxu0 0
    %5876 = vmatpush1.bf16.msra.mxu0 0
    %5877 = vmatprep.mubr.bf16.mxu0 0
    %5878 = vmatmul.mubr.bf16.gmra.mrb[0].mxu0 %v5819
    %v5879 = vpop.f32.mrb[0].mxu0
    %v5880 = vadd.f32 0.0, %v5879
    %v5881 = vpop.f32.mrb[0].mxu0
    %v5882 = vpop.f32.mrb[0].mxu0
    %v5883 = vadd.f32 0.0, %v5882
    %v5884 = vpop.f32.mrb[0].mxu0
    %5885 = vmatprep.mubr.bf16.mxu0 0
    %5886 = vmatmul.mubr.bf16.gmra.mrb[0].mxu0 %v5822
    %v5887 = vpop.f32.mrb[0].mxu0
    %v5888 = vadd.f32 0.0, %v5887
    %v5889 = vpop.f32.mrb[0].mxu0
    %v5890 = vpop.f32.mrb[0].mxu0
    %v5891 = vadd.f32 0.0, %v5890
    %v5892 = vpop.f32.mrb[0].mxu0
    %5893 = vmatprep.mubr.bf16.mxu0 0
    %5894 = vmatmul.mubr.bf16.gmra.mrb[0].mxu0 %v5825
    %v5895 = vpop.f32.mrb[0].mxu0
    %v5896 = vadd.f32 0.0, %v5895
    %v5897 = vpop.f32.mrb[0].mxu0
    %v5898 = vpop.f32.mrb[0].mxu0
    %v5899 = vadd.f32 0.0, %v5898
    %v5900 = vpop.f32.mrb[0].mxu0
    %5901 = vmatprep.mubr.bf16.mxu0 0
    %5902 = vmatmul.mubr.bf16.gmra.mrb[0].mxu0 %v5828
    %v5903 = vpop.f32.mrb[0].mxu0
    %v5904 = vadd.f32 0.0, %v5903
    %v5905 = vpop.f32.mrb[0].mxu0
    %v5906 = vpop.f32.mrb[0].mxu0
    %v5907 = vadd.f32 0.0, %v5906
    %v5908 = vpop.f32.mrb[0].mxu0
    %5909 = vmatprep.mubr.bf16.mxu0 0
    %5910 = vmatmul.mubr.bf16.gmra.mrb[0].mxu0 %v5831
    %v5911 = vpop.f32.mrb[0].mxu0
    %v5912 = vadd.f32 0.0, %v5911
    %v5913 = vpop.f32.mrb[0].mxu0
    %v5914 = vpop.f32.mrb[0].mxu0
    %v5915 = vadd.f32 0.0, %v5914
    %v5916 = vpop.f32.mrb[0].mxu0
    %5917 = vmatprep.mubr.bf16.mxu0 0
    %5918 = vmatmul.mubr.bf16.gmra.mrb[0].mxu0 %v5834
    %v5919 = vpop.f32.mrb[0].mxu0
    %v5920 = vadd.f32 0.0, %v5919
    %v5921 = vpop.f32.mrb[0].mxu0
    %v5922 = vpop.f32.mrb[0].mxu0
    %v5923 = vadd.f32 0.0, %v5922
    %v5924 = vpop.f32.mrb[0].mxu0
    %5925 = vmatprep.mubr.bf16.mxu0 0
    %5926 = vmatmul.mubr.bf16.gmra.mrb[0].mxu0 %v5837
    %v5927 = vpop.f32.mrb[0].mxu0
    %v5928 = vadd.f32 0.0, %v5927
    %v5929 = vpop.f32.mrb[0].mxu0
    %v5930 = vpop.f32.mrb[0].mxu0
    %v5931 = vadd.f32 0.0, %v5930
    %v5932 = vpop.f32.mrb[0].mxu0
    %5933 = vmatprep.mubr.bf16.mxu0 0
    %5934 = vmatmul.mubr.bf16.gmra.mrb[0].mxu0 %v5840
    %v5935 = vpop.f32.mrb[0].mxu0
    %v5936 = vadd.f32 0.0, %v5935
    %v5937 = vpop.f32.mrb[0].mxu0
    %v5938 = vpop.f32.mrb[0].mxu0
    %v5939 = vadd.f32 0.0, %v5938
    %v5940 = vpop.f32.mrb[0].mxu0
    %5941 = vdwg.mxu0
    %v5942 = vadd.f32 %v5357, %v5880
    %v5943 = vadd.f32 %v5357, %v5883
    %v5944 = vadd.f32 %v5357, %v5888
    %v5945 = vadd.f32 %v5357, %v5891
    %v5946 = vadd.f32 %v5357, %v5896
    %v5947 = vadd.f32 %v5357, %v5899
    %v5948 = vadd.f32 %v5357, %v5904
    %v5949 = vadd.f32 %v5357, %v5907
    %v5950 = vadd.f32 %v5357, %v5912
    %v5951 = vadd.f32 %v5357, %v5915
    %v5952 = vadd.f32 %v5357, %v5920
    %v5953 = vadd.f32 %v5357, %v5923
    %v5954 = vadd.f32 %v5357, %v5928
    %v5955 = vadd.f32 %v5357, %v5931
    %v5956 = vadd.f32 %v5357, %v5936
    %v5957 = vadd.f32 %v5357, %v5939
    %5958 = vrot.lane.b32.xlu0 %v5358, 120
    %v5959 = vpop.permute.xlu0 %5958
    %5960 = vrot.lane.b32.xlu0 %v5359, 120
    %v5961 = vpop.permute.xlu0 %5960
    %5962 = vrot.lane.b32.xlu0 %v5360, 120
    %v5963 = vpop.permute.xlu0 %5962
    %5964 = vrot.lane.b32.xlu0 %v5361, 120
    %v5965 = vpop.permute.xlu0 %5964
    %5966 = vrot.lane.b32.xlu0 %v5362, 120
    %v5967 = vpop.permute.xlu0 %5966
    %5968 = vrot.lane.b32.xlu0 %v5363, 120
    %v5969 = vpop.permute.xlu0 %5968
    %5970 = vrot.lane.b32.xlu0 %v5364, 120
    %v5971 = vpop.permute.xlu0 %5970
    %5972 = vrot.lane.b32.xlu0 %v5365, 120
    %v5973 = vpop.permute.xlu0 %5972
    %5974 = vrot.lane.b32.xlu0 %v5358, 88
    %v5975 = vpop.permute.xlu0 %5974
    %5976 = vrot.lane.b32.xlu0 %v5359, 88
    %v5977 = vpop.permute.xlu0 %5976
    %5978 = vrot.lane.b32.xlu0 %v5360, 88
    %v5979 = vpop.permute.xlu0 %5978
    %5980 = vrot.lane.b32.xlu0 %v5361, 88
    %v5981 = vpop.permute.xlu0 %5980
    %5982 = vrot.lane.b32.xlu0 %v5362, 88
    %v5983 = vpop.permute.xlu0 %5982
    %5984 = vrot.lane.b32.xlu0 %v5363, 88
    %v5985 = vpop.permute.xlu0 %5984
    %5986 = vrot.lane.b32.xlu0 %v5364, 88
    %v5987 = vpop.permute.xlu0 %5986
    %5988 = vrot.lane.b32.xlu0 %v5365, 88
    %v5989 = vpop.permute.xlu0 %5988
    %v5991 = vsel %vm253, %v5959, 0
    %v5994 = vsel %vm253, %v5961, 0
    %v5997 = vsel %vm253, %v5963, 0
    %v6000 = vsel %vm253, %v5965, 0
    %v6003 = vsel %vm253, %v5967, 0
    %v6006 = vsel %vm253, %v5969, 0
    %v6009 = vsel %vm253, %v5971, 0
    %v6012 = vsel %vm253, %v5973, 0
    %v6015 = vsel %vm253, %v5975, 0
    %v6018 = vsel %vm253, %v5977, 0
    %v6021 = vsel %vm253, %v5979, 0
    %v6024 = vsel %vm253, %v5981, 0
    %v6027 = vsel %vm253, %v5983, 0
    %v6030 = vsel %vm253, %v5985, 0
    %v6033 = vsel %vm253, %v5987, 0
    %v6036 = vsel %vm253, %v5989, 0
    %6038 = vmatprep.subr.bf16.mxu0 0
    %6039 = vmatpush1.bf16.xpose.msra.mxu0 %v6015
    %6040 = vmatprep.subr.bf16.mxu0 0
    %6041 = vmatpush1.bf16.xpose.msra.mxu0 %v6018
    %6042 = vmatprep.subr.bf16.mxu0 0
    %6043 = vmatpush1.bf16.xpose.msra.mxu0 %v6021
    %6044 = vmatprep.subr.bf16.mxu0 0
    %6045 = vmatpush1.bf16.xpose.msra.mxu0 %v6024
    %6046 = vmatprep.subr.bf16.mxu0 0
    %6047 = vmatpush1.bf16.xpose.msra.mxu0 %v6027
    %6048 = vmatprep.subr.bf16.mxu0 0
    %6049 = vmatpush1.bf16.xpose.msra.mxu0 %v6030
    %6050 = vmatprep.subr.bf16.mxu0 0
    %6051 = vmatpush1.bf16.xpose.msra.mxu0 %v6033
    %6052 = vmatprep.subr.bf16.mxu0 0
    %6053 = vmatpush1.bf16.xpose.msra.mxu0 %v6036
    %6054 = vmatprep.subr.bf16.mxu0 0
    %6055 = vmatpush1.bf16.xpose.msra.mxu0 0
    %6056 = vmatprep.subr.bf16.mxu0 0
    %6057 = vmatpush1.bf16.xpose.msra.mxu0 0
    %6058 = vmatprep.subr.bf16.mxu0 0
    %6059 = vmatpush1.bf16.xpose.msra.mxu0 0
    %6060 = vmatprep.subr.bf16.mxu0 0
    %6061 = vmatpush1.bf16.xpose.msra.mxu0 0
    %6062 = vmatprep.subr.bf16.mxu0 0
    %6063 = vmatpush1.bf16.xpose.msra.mxu0 0
    %6064 = vmatprep.subr.bf16.mxu0 0
    %6065 = vmatpush1.bf16.xpose.msra.mxu0 0
    %6066 = vmatprep.subr.bf16.mxu0 0
    %6067 = vmatpush1.bf16.xpose.msra.mxu0 0
    %6068 = vmatprep.subr.bf16.mxu0 0
    %6069 = vmatpush1.bf16.xpose.msra.mxu0 0
    %6070 = vmatprep.mubr.bf16.mxu0 0
    %6071 = vmatmul.mubr.bf16.gmra.mrb[0].mxu0 %v5991
    %v6072 = vpop.f32.mrb[0].mxu0
    %v6073 = vadd.f32 %v213, %v6072
    %v6074 = vpop.f32.mrb[0].mxu0
    %v6075 = vpop.f32.mrb[0].mxu0
    %v6076 = vadd.f32 %v214, %v6075
    %v6077 = vpop.f32.mrb[0].mxu0
    %6078 = vmatprep.mubr.bf16.mxu0 0
    %6079 = vmatmul.mubr.bf16.gmra.mrb[0].mxu0 %v5994
    %v6080 = vpop.f32.mrb[0].mxu0
    %v6081 = vadd.f32 %v215, %v6080
    %v6082 = vpop.f32.mrb[0].mxu0
    %v6083 = vpop.f32.mrb[0].mxu0
    %v6084 = vadd.f32 %v216, %v6083
    %v6085 = vpop.f32.mrb[0].mxu0
    %6086 = vmatprep.mubr.bf16.mxu0 0
    %6087 = vmatmul.mubr.bf16.gmra.mrb[0].mxu0 %v5997
    %v6088 = vpop.f32.mrb[0].mxu0
    %v6089 = vadd.f32 %v217, %v6088
    %v6090 = vpop.f32.mrb[0].mxu0
    %v6091 = vpop.f32.mrb[0].mxu0
    %v6092 = vadd.f32 %v218, %v6091
    %v6093 = vpop.f32.mrb[0].mxu0
    %6094 = vmatprep.mubr.bf16.mxu0 0
    %6095 = vmatmul.mubr.bf16.gmra.mrb[0].mxu0 %v6000
    %v6096 = vpop.f32.mrb[0].mxu0
    %v6097 = vadd.f32 %v219, %v6096
    %v6098 = vpop.f32.mrb[0].mxu0
    %v6099 = vpop.f32.mrb[0].mxu0
    %v6100 = vadd.f32 %v220, %v6099
    %v6101 = vpop.f32.mrb[0].mxu0
    %6102 = vmatprep.mubr.bf16.mxu0 0
    %6103 = vmatmul.mubr.bf16.gmra.mrb[0].mxu0 %v6003
    %v6104 = vpop.f32.mrb[0].mxu0
    %v6105 = vadd.f32 %v221, %v6104
    %v6106 = vpop.f32.mrb[0].mxu0
    %v6107 = vpop.f32.mrb[0].mxu0
    %v6108 = vadd.f32 %v222, %v6107
    %v6109 = vpop.f32.mrb[0].mxu0
    %6110 = vmatprep.mubr.bf16.mxu0 0
    %6111 = vmatmul.mubr.bf16.gmra.mrb[0].mxu0 %v6006
    %v6112 = vpop.f32.mrb[0].mxu0
    %v6113 = vadd.f32 %v223, %v6112
    %v6114 = vpop.f32.mrb[0].mxu0
    %v6115 = vpop.f32.mrb[0].mxu0
    %v6116 = vadd.f32 %v224, %v6115
    %v6117 = vpop.f32.mrb[0].mxu0
    %6118 = vmatprep.mubr.bf16.mxu0 0
    %6119 = vmatmul.mubr.bf16.gmra.mrb[0].mxu0 %v6009
    %v6120 = vpop.f32.mrb[0].mxu0
    %v6121 = vadd.f32 %v225, %v6120
    %v6122 = vpop.f32.mrb[0].mxu0
    %v6123 = vpop.f32.mrb[0].mxu0
    %v6124 = vadd.f32 %v226, %v6123
    %v6125 = vpop.f32.mrb[0].mxu0
    %6126 = vmatprep.mubr.bf16.mxu0 0
    %6127 = vmatmul.mubr.bf16.gmra.mrb[0].mxu0 %v6012
    %v6128 = vpop.f32.mrb[0].mxu0
    %v6129 = vadd.f32 %v227, %v6128
    %v6130 = vpop.f32.mrb[0].mxu0
    %v6131 = vpop.f32.mrb[0].mxu0
    %v6132 = vadd.f32 %v228, %v6131
    %v6133 = vpop.f32.mrb[0].mxu0
    %6134 = vdwg.mxu0
    %6135 = vmax.xlane.f32.xlu0 %v6073
    %v6136 = vpop.xlane.xlu0 %6135
    %6137 = vmax.xlane.f32.xlu0 %v6076
    %v6138 = vpop.xlane.xlu0 %6137
    %6139 = vmax.xlane.f32.xlu0 %v6081
    %v6140 = vpop.xlane.xlu0 %6139
    %6141 = vmax.xlane.f32.xlu0 %v6084
    %v6142 = vpop.xlane.xlu0 %6141
    %6143 = vmax.xlane.f32.xlu0 %v6089
    %v6144 = vpop.xlane.xlu0 %6143
    %6145 = vmax.xlane.f32.xlu0 %v6092
    %v6146 = vpop.xlane.xlu0 %6145
    %6147 = vmax.xlane.f32.xlu0 %v6097
    %v6148 = vpop.xlane.xlu0 %6147
    %6149 = vmax.xlane.f32.xlu0 %v6100
    %v6150 = vpop.xlane.xlu0 %6149
    %6151 = vmax.xlane.f32.xlu0 %v6105
    %v6152 = vpop.xlane.xlu0 %6151
    %6153 = vmax.xlane.f32.xlu0 %v6108
    %v6154 = vpop.xlane.xlu0 %6153
    %6155 = vmax.xlane.f32.xlu0 %v6113
    %v6156 = vpop.xlane.xlu0 %6155
    %6157 = vmax.xlane.f32.xlu0 %v6116
    %v6158 = vpop.xlane.xlu0 %6157
    %6159 = vmax.xlane.f32.xlu0 %v6121
    %v6160 = vpop.xlane.xlu0 %6159
    %6161 = vmax.xlane.f32.xlu0 %v6124
    %v6162 = vpop.xlane.xlu0 %6161
    %6163 = vmax.xlane.f32.xlu0 %v6129
    %v6164 = vpop.xlane.xlu0 %6163
    %6165 = vmax.xlane.f32.xlu0 %v6132
    %v6166 = vpop.xlane.xlu0 %6165
    %v6167 = vsub.f32 %v6073, %v6136
    %v6168 = vsub.f32 %v6076, %v6138
    %v6169 = vsub.f32 %v6081, %v6140
    %v6170 = vsub.f32 %v6084, %v6142
    %v6171 = vsub.f32 %v6089, %v6144
    %v6172 = vsub.f32 %v6092, %v6146
    %v6173 = vsub.f32 %v6097, %v6148
    %v6174 = vsub.f32 %v6100, %v6150
    %v6175 = vsub.f32 %v6105, %v6152
    %v6176 = vsub.f32 %v6108, %v6154
    %v6177 = vsub.f32 %v6113, %v6156
    %v6178 = vsub.f32 %v6116, %v6158
    %v6179 = vsub.f32 %v6121, %v6160
    %v6180 = vsub.f32 %v6124, %v6162
    %v6181 = vsub.f32 %v6129, %v6164
    %v6182 = vsub.f32 %v6132, %v6166
    %v6183 = vmul.f32 %v6167, 1.442695
    %v6184 = vpow.pop %v6183
    %v6185 = vmul.f32 %v6168, 1.442695
    %v6186 = vpow.pop %v6185
    %v6187 = vmul.f32 %v6169, 1.442695
    %v6188 = vpow.pop %v6187
    %v6189 = vmul.f32 %v6170, 1.442695
    %v6190 = vpow.pop %v6189
    %v6191 = vmul.f32 %v6171, 1.442695
    %v6192 = vpow.pop %v6191
    %v6193 = vmul.f32 %v6172, 1.442695
    %v6194 = vpow.pop %v6193
    %v6195 = vmul.f32 %v6173, 1.442695
    %v6196 = vpow.pop %v6195
    %v6197 = vmul.f32 %v6174, 1.442695
    %v6198 = vpow.pop %v6197
    %v6199 = vmul.f32 %v6175, 1.442695
    %v6200 = vpow.pop %v6199
    %v6201 = vmul.f32 %v6176, 1.442695
    %v6202 = vpow.pop %v6201
    %v6203 = vmul.f32 %v6177, 1.442695
    %v6204 = vpow.pop %v6203
    %v6205 = vmul.f32 %v6178, 1.442695
    %v6206 = vpow.pop %v6205
    %v6207 = vmul.f32 %v6179, 1.442695
    %v6208 = vpow.pop %v6207
    %v6209 = vmul.f32 %v6180, 1.442695
    %v6210 = vpow.pop %v6209
    %v6211 = vmul.f32 %v6181, 1.442695
    %v6212 = vpow.pop %v6211
    %v6213 = vmul.f32 %v6182, 1.442695
    %v6214 = vpow.pop %v6213
    %6215 = vadd.xlane.f32.xlu0 %v6184
    %v6216 = vpop.xlane.xlu0 %6215
    %6217 = vadd.xlane.f32.xlu0 %v6186
    %v6218 = vpop.xlane.xlu0 %6217
    %6219 = vadd.xlane.f32.xlu0 %v6188
    %v6220 = vpop.xlane.xlu0 %6219
    %6221 = vadd.xlane.f32.xlu0 %v6190
    %v6222 = vpop.xlane.xlu0 %6221
    %6223 = vadd.xlane.f32.xlu0 %v6192
    %v6224 = vpop.xlane.xlu0 %6223
    %6225 = vadd.xlane.f32.xlu0 %v6194
    %v6226 = vpop.xlane.xlu0 %6225
    %6227 = vadd.xlane.f32.xlu0 %v6196
    %v6228 = vpop.xlane.xlu0 %6227
    %6229 = vadd.xlane.f32.xlu0 %v6198
    %v6230 = vpop.xlane.xlu0 %6229
    %6231 = vadd.xlane.f32.xlu0 %v6200
    %v6232 = vpop.xlane.xlu0 %6231
    %6233 = vadd.xlane.f32.xlu0 %v6202
    %v6234 = vpop.xlane.xlu0 %6233
    %6235 = vadd.xlane.f32.xlu0 %v6204
    %v6236 = vpop.xlane.xlu0 %6235
    %6237 = vadd.xlane.f32.xlu0 %v6206
    %v6238 = vpop.xlane.xlu0 %6237
    %6239 = vadd.xlane.f32.xlu0 %v6208
    %v6240 = vpop.xlane.xlu0 %6239
    %6241 = vadd.xlane.f32.xlu0 %v6210
    %v6242 = vpop.xlane.xlu0 %6241
    %6243 = vadd.xlane.f32.xlu0 %v6212
    %v6244 = vpop.xlane.xlu0 %6243
    %6245 = vadd.xlane.f32.xlu0 %v6214
    %v6246 = vpop.xlane.xlu0 %6245
    %v6247 = vrcp.pop %v6216
    %v6248 = vrcp.pop %v6218
    %v6249 = vrcp.pop %v6220
    %v6250 = vrcp.pop %v6222
    %v6251 = vrcp.pop %v6224
    %v6252 = vrcp.pop %v6226
    %v6253 = vrcp.pop %v6228
    %v6254 = vrcp.pop %v6230
    %v6255 = vrcp.pop %v6232
    %v6256 = vrcp.pop %v6234
    %v6257 = vrcp.pop %v6236
    %v6258 = vrcp.pop %v6238
    %v6259 = vrcp.pop %v6240
    %v6260 = vrcp.pop %v6242
    %v6261 = vrcp.pop %v6244
    %v6262 = vrcp.pop %v6246
    %v6263 = vmul.f32 %v6184, %v6247
    %v6264 = vmul.f32 %v6186, %v6248
    %v6265 = vmul.f32 %v6188, %v6249
    %v6266 = vmul.f32 %v6190, %v6250
    %v6267 = vmul.f32 %v6192, %v6251
    %v6268 = vmul.f32 %v6194, %v6252
    %v6269 = vmul.f32 %v6196, %v6253
    %v6270 = vmul.f32 %v6198, %v6254
    %v6271 = vmul.f32 %v6200, %v6255
    %v6272 = vmul.f32 %v6202, %v6256
    %v6273 = vmul.f32 %v6204, %v6257
    %v6274 = vmul.f32 %v6206, %v6258
    %v6275 = vmul.f32 %v6208, %v6259
    %v6276 = vmul.f32 %v6210, %v6260
    %v6277 = vmul.f32 %v6212, %v6261
    %v6278 = vmul.f32 %v6214, %v6262
    %v6279 = vpack.c.bf16 %v6264, %v6263
    %v6280 = vpack.c.bf16 %v6266, %v6265
    %v6281 = vpack.c.bf16 %v6268, %v6267
    %v6282 = vpack.c.bf16 %v6270, %v6269
    %v6283 = vpack.c.bf16 %v6272, %v6271
    %v6284 = vpack.c.bf16 %v6274, %v6273
    %v6285 = vpack.c.bf16 %v6276, %v6275
    %v6286 = vpack.c.bf16 %v6278, %v6277
    %6287 = vrot.lane.b32.xlu0 %v5358, 56
    %v6288 = vpop.permute.xlu0 %6287
    %6289 = vrot.lane.b32.xlu0 %v5359, 56
    %v6290 = vpop.permute.xlu0 %6289
    %6291 = vrot.lane.b32.xlu0 %v5360, 56
    %v6292 = vpop.permute.xlu0 %6291
    %6293 = vrot.lane.b32.xlu0 %v5361, 56
    %v6294 = vpop.permute.xlu0 %6293
    %6295 = vrot.lane.b32.xlu0 %v5362, 56
    %v6296 = vpop.permute.xlu0 %6295
    %6297 = vrot.lane.b32.xlu0 %v5363, 56
    %v6298 = vpop.permute.xlu0 %6297
    %6299 = vrot.lane.b32.xlu0 %v5364, 56
    %v6300 = vpop.permute.xlu0 %6299
    %6301 = vrot.lane.b32.xlu0 %v5365, 56
    %v6302 = vpop.permute.xlu0 %6301
    %6311 = vmatprep.subr.bf16.mxu0 0
    %6312 = vmatpush1.bf16.msra.mxu0 %v6288
    %6313 = vmatprep.subr.bf16.mxu0 0
    %6314 = vmatpush1.bf16.msra.mxu0 %v6290
    %6315 = vmatprep.subr.bf16.mxu0 0
    %6316 = vmatpush1.bf16.msra.mxu0 %v6292
    %6317 = vmatprep.subr.bf16.mxu0 0
    %6318 = vmatpush1.bf16.msra.mxu0 %v6294
    %6319 = vmatprep.subr.bf16.mxu0 0
    %6320 = vmatpush1.bf16.msra.mxu0 %v6296
    %6321 = vmatprep.subr.bf16.mxu0 0
    %6322 = vmatpush1.bf16.msra.mxu0 %v6298
    %6323 = vmatprep.subr.bf16.mxu0 0
    %6324 = vmatpush1.bf16.msra.mxu0 %v6300
    %6325 = vmatprep.subr.bf16.mxu0 0
    %6326 = vmatpush1.bf16.msra.mxu0 %v6302
    %6327 = vmatprep.subr.bf16.mxu0 0
    %6328 = vmatpush1.bf16.msra.mxu0 0
    %6329 = vmatprep.subr.bf16.mxu0 0
    %6330 = vmatpush1.bf16.msra.mxu0 0
    %6331 = vmatprep.subr.bf16.mxu0 0
    %6332 = vmatpush1.bf16.msra.mxu0 0
    %6333 = vmatprep.subr.bf16.mxu0 0
    %6334 = vmatpush1.bf16.msra.mxu0 0
    %6335 = vmatprep.subr.bf16.mxu0 0
    %6336 = vmatpush1.bf16.msra.mxu0 0
    %6337 = vmatprep.subr.bf16.mxu0 0
    %6338 = vmatpush1.bf16.msra.mxu0 0
    %6339 = vmatprep.subr.bf16.mxu0 0
    %6340 = vmatpush1.bf16.msra.mxu0 0
    %6341 = vmatprep.subr.bf16.mxu0 0
    %6342 = vmatpush1.bf16.msra.mxu0 0
    %6343 = vmatprep.mubr.bf16.mxu0 0
    %6344 = vmatmul.mubr.bf16.gmra.mrb[0].mxu0 %v6279
    %v6345 = vpop.f32.mrb[0].mxu0
    %v6346 = vadd.f32 0.0, %v6345
    %v6347 = vpop.f32.mrb[0].mxu0
    %v6348 = vpop.f32.mrb[0].mxu0
    %v6349 = vadd.f32 0.0, %v6348
    %v6350 = vpop.f32.mrb[0].mxu0
    %6351 = vmatprep.mubr.bf16.mxu0 0
    %6352 = vmatmul.mubr.bf16.gmra.mrb[0].mxu0 %v6280
    %v6353 = vpop.f32.mrb[0].mxu0
    %v6354 = vadd.f32 0.0, %v6353
    %v6355 = vpop.f32.mrb[0].mxu0
    %v6356 = vpop.f32.mrb[0].mxu0
    %v6357 = vadd.f32 0.0, %v6356
    %v6358 = vpop.f32.mrb[0].mxu0
    %6359 = vmatprep.mubr.bf16.mxu0 0
    %6360 = vmatmul.mubr.bf16.gmra.mrb[0].mxu0 %v6281
    %v6361 = vpop.f32.mrb[0].mxu0
    %v6362 = vadd.f32 0.0, %v6361
    %v6363 = vpop.f32.mrb[0].mxu0
    %v6364 = vpop.f32.mrb[0].mxu0
    %v6365 = vadd.f32 0.0, %v6364
    %v6366 = vpop.f32.mrb[0].mxu0
    %6367 = vmatprep.mubr.bf16.mxu0 0
    %6368 = vmatmul.mubr.bf16.gmra.mrb[0].mxu0 %v6282
    %v6369 = vpop.f32.mrb[0].mxu0
    %v6370 = vadd.f32 0.0, %v6369
    %v6371 = vpop.f32.mrb[0].mxu0
    %v6372 = vpop.f32.mrb[0].mxu0
    %v6373 = vadd.f32 0.0, %v6372
    %v6374 = vpop.f32.mrb[0].mxu0
    %6375 = vmatprep.mubr.bf16.mxu0 0
    %6376 = vmatmul.mubr.bf16.gmra.mrb[0].mxu0 %v6283
    %v6377 = vpop.f32.mrb[0].mxu0
    %v6378 = vadd.f32 0.0, %v6377
    %v6379 = vpop.f32.mrb[0].mxu0
    %v6380 = vpop.f32.mrb[0].mxu0
    %v6381 = vadd.f32 0.0, %v6380
    %v6382 = vpop.f32.mrb[0].mxu0
    %6383 = vmatprep.mubr.bf16.mxu0 0
    %6384 = vmatmul.mubr.bf16.gmra.mrb[0].mxu0 %v6284
    %v6385 = vpop.f32.mrb[0].mxu0
    %v6386 = vadd.f32 0.0, %v6385
    %v6387 = vpop.f32.mrb[0].mxu0
    %v6388 = vpop.f32.mrb[0].mxu0
    %v6389 = vadd.f32 0.0, %v6388
    %v6390 = vpop.f32.mrb[0].mxu0
    %6391 = vmatprep.mubr.bf16.mxu0 0
    %6392 = vmatmul.mubr.bf16.gmra.mrb[0].mxu0 %v6285
    %v6393 = vpop.f32.mrb[0].mxu0
    %v6394 = vadd.f32 0.0, %v6393
    %v6395 = vpop.f32.mrb[0].mxu0
    %v6396 = vpop.f32.mrb[0].mxu0
    %v6397 = vadd.f32 0.0, %v6396
    %v6398 = vpop.f32.mrb[0].mxu0
    %6399 = vmatprep.mubr.bf16.mxu0 0
    %6400 = vmatmul.mubr.bf16.gmra.mrb[0].mxu0 %v6286
    %v6401 = vpop.f32.mrb[0].mxu0
    %v6402 = vadd.f32 0.0, %v6401
    %v6403 = vpop.f32.mrb[0].mxu0
    %v6404 = vpop.f32.mrb[0].mxu0
    %v6405 = vadd.f32 0.0, %v6404
    %v6406 = vpop.f32.mrb[0].mxu0
    %6407 = vdwg.mxu0
    %v6408 = vpack.c.bf16 %v6349, %v6346
    %v6409 = vpack.c.bf16 %v6357, %v6354
    %v6410 = vpack.c.bf16 %v6365, %v6362
    %v6411 = vpack.c.bf16 %v6373, %v6370
    %v6412 = vpack.c.bf16 %v6381, %v6378
    %v6413 = vpack.c.bf16 %v6389, %v6386
    %v6414 = vpack.c.bf16 %v6397, %v6394
    %v6415 = vpack.c.bf16 %v6405, %v6402
    %v6416 = vld [vmem:[%s5816 + $0x4] sm:$0xf]
    %v6418 = vsel %vm253, %v6408, 0
    %v6421 = vsel %vm253, %v6409, 0
    %v6424 = vsel %vm253, %v6410, 0
    %v6427 = vsel %vm253, %v6411, 0
    %v6430 = vsel %vm253, %v6412, 0
    %v6433 = vsel %vm253, %v6413, 0
    %v6436 = vsel %vm253, %v6414, 0
    %v6439 = vsel %vm253, %v6415, 0
    %v6442 = vsel %vm705, %v6416, 0
    %6444 = vmatprep.subr.bf16.mxu0 0
    %6445 = vmatpush1.bf16.msra.mxu0 %v6442
    %6446 = vmatprep.subr.bf16.mxu0 0
    %6447 = vmatpush1.bf16.msra.mxu0 0
    %6448 = vmatprep.subr.bf16.mxu0 0
    %6449 = vmatpush1.bf16.msra.mxu0 0
    %6450 = vmatprep.subr.bf16.mxu0 0
    %6451 = vmatpush1.bf16.msra.mxu0 0
    %6452 = vmatprep.subr.bf16.mxu0 0
    %6453 = vmatpush1.bf16.msra.mxu0 0
    %6454 = vmatprep.subr.bf16.mxu0 0
    %6455 = vmatpush1.bf16.msra.mxu0 0
    %6456 = vmatprep.subr.bf16.mxu0 0
    %6457 = vmatpush1.bf16.msra.mxu0 0
    %6458 = vmatprep.subr.bf16.mxu0 0
    %6459 = vmatpush1.bf16.msra.mxu0 0
    %6460 = vmatprep.subr.bf16.mxu0 0
    %6461 = vmatpush1.bf16.msra.mxu0 0
    %6462 = vmatprep.subr.bf16.mxu0 0
    %6463 = vmatpush1.bf16.msra.mxu0 0
    %6464 = vmatprep.subr.bf16.mxu0 0
    %6465 = vmatpush1.bf16.msra.mxu0 0
    %6466 = vmatprep.subr.bf16.mxu0 0
    %6467 = vmatpush1.bf16.msra.mxu0 0
    %6468 = vmatprep.subr.bf16.mxu0 0
    %6469 = vmatpush1.bf16.msra.mxu0 0
    %6470 = vmatprep.subr.bf16.mxu0 0
    %6471 = vmatpush1.bf16.msra.mxu0 0
    %6472 = vmatprep.subr.bf16.mxu0 0
    %6473 = vmatpush1.bf16.msra.mxu0 0
    %6474 = vmatprep.subr.bf16.mxu0 0
    %6475 = vmatpush1.bf16.msra.mxu0 0
    %6476 = vmatprep.mubr.bf16.mxu0 0
    %6477 = vmatmul.mubr.bf16.gmra.mrb[0].mxu0 %v6418
    %v6478 = vpop.f32.mrb[0].mxu0
    %v6479 = vadd.f32 0.0, %v6478
    %v6480 = vpop.f32.mrb[0].mxu0
    %v6481 = vpop.f32.mrb[0].mxu0
    %v6482 = vadd.f32 0.0, %v6481
    %v6483 = vpop.f32.mrb[0].mxu0
    %6484 = vmatprep.mubr.bf16.mxu0 0
    %6485 = vmatmul.mubr.bf16.gmra.mrb[0].mxu0 %v6421
    %v6486 = vpop.f32.mrb[0].mxu0
    %v6487 = vadd.f32 0.0, %v6486
    %v6488 = vpop.f32.mrb[0].mxu0
    %v6489 = vpop.f32.mrb[0].mxu0
    %v6490 = vadd.f32 0.0, %v6489
    %v6491 = vpop.f32.mrb[0].mxu0
    %6492 = vmatprep.mubr.bf16.mxu0 0
    %6493 = vmatmul.mubr.bf16.gmra.mrb[0].mxu0 %v6424
    %v6494 = vpop.f32.mrb[0].mxu0
    %v6495 = vadd.f32 0.0, %v6494
    %v6496 = vpop.f32.mrb[0].mxu0
    %v6497 = vpop.f32.mrb[0].mxu0
    %v6498 = vadd.f32 0.0, %v6497
    %v6499 = vpop.f32.mrb[0].mxu0
    %6500 = vmatprep.mubr.bf16.mxu0 0
    %6501 = vmatmul.mubr.bf16.gmra.mrb[0].mxu0 %v6427
    %v6502 = vpop.f32.mrb[0].mxu0
    %v6503 = vadd.f32 0.0, %v6502
    %v6504 = vpop.f32.mrb[0].mxu0
    %v6505 = vpop.f32.mrb[0].mxu0
    %v6506 = vadd.f32 0.0, %v6505
    %v6507 = vpop.f32.mrb[0].mxu0
    %6508 = vmatprep.mubr.bf16.mxu0 0
    %6509 = vmatmul.mubr.bf16.gmra.mrb[0].mxu0 %v6430
    %v6510 = vpop.f32.mrb[0].mxu0
    %v6511 = vadd.f32 0.0, %v6510
    %v6512 = vpop.f32.mrb[0].mxu0
    %v6513 = vpop.f32.mrb[0].mxu0
    %v6514 = vadd.f32 0.0, %v6513
    %v6515 = vpop.f32.mrb[0].mxu0
    %6516 = vmatprep.mubr.bf16.mxu0 0
    %6517 = vmatmul.mubr.bf16.gmra.mrb[0].mxu0 %v6433
    %v6518 = vpop.f32.mrb[0].mxu0
    %v6519 = vadd.f32 0.0, %v6518
    %v6520 = vpop.f32.mrb[0].mxu0
    %v6521 = vpop.f32.mrb[0].mxu0
    %v6522 = vadd.f32 0.0, %v6521
    %v6523 = vpop.f32.mrb[0].mxu0
    %6524 = vmatprep.mubr.bf16.mxu0 0
    %6525 = vmatmul.mubr.bf16.gmra.mrb[0].mxu0 %v6436
    %v6526 = vpop.f32.mrb[0].mxu0
    %v6527 = vadd.f32 0.0, %v6526
    %v6528 = vpop.f32.mrb[0].mxu0
    %v6529 = vpop.f32.mrb[0].mxu0
    %v6530 = vadd.f32 0.0, %v6529
    %v6531 = vpop.f32.mrb[0].mxu0
    %6532 = vmatprep.mubr.bf16.mxu0 0
    %6533 = vmatmul.mubr.bf16.gmra.mrb[0].mxu0 %v6439
    %v6534 = vpop.f32.mrb[0].mxu0
    %v6535 = vadd.f32 0.0, %v6534
    %v6536 = vpop.f32.mrb[0].mxu0
    %v6537 = vpop.f32.mrb[0].mxu0
    %v6538 = vadd.f32 0.0, %v6537
    %v6539 = vpop.f32.mrb[0].mxu0
    %6540 = vdwg.mxu0
    %v6541 = vadd.f32 %v5942, %v6479
    %v6542 = vadd.f32 %v5943, %v6482
    %v6543 = vadd.f32 %v5944, %v6487
    %v6544 = vadd.f32 %v5945, %v6490
    %v6545 = vadd.f32 %v5946, %v6495
    %v6546 = vadd.f32 %v5947, %v6498
    %v6547 = vadd.f32 %v5948, %v6503
    %v6548 = vadd.f32 %v5949, %v6506
    %v6549 = vadd.f32 %v5950, %v6511
    %v6550 = vadd.f32 %v5951, %v6514
    %v6551 = vadd.f32 %v5952, %v6519
    %v6552 = vadd.f32 %v5953, %v6522
    %v6553 = vadd.f32 %v5954, %v6527
    %v6554 = vadd.f32 %v5955, %v6530
    %v6555 = vadd.f32 %v5956, %v6535
    %v6556 = vadd.f32 %v5957, %v6538
    %6557 = vrot.lane.b32.xlu0 %v5358, 112
    %v6558 = vpop.permute.xlu0 %6557
    %6559 = vrot.lane.b32.xlu0 %v5359, 112
    %v6560 = vpop.permute.xlu0 %6559
    %6561 = vrot.lane.b32.xlu0 %v5360, 112
    %v6562 = vpop.permute.xlu0 %6561
    %6563 = vrot.lane.b32.xlu0 %v5361, 112
    %v6564 = vpop.permute.xlu0 %6563
    %6565 = vrot.lane.b32.xlu0 %v5362, 112
    %v6566 = vpop.permute.xlu0 %6565
    %6567 = vrot.lane.b32.xlu0 %v5363, 112
    %v6568 = vpop.permute.xlu0 %6567
    %6569 = vrot.lane.b32.xlu0 %v5364, 112
    %v6570 = vpop.permute.xlu0 %6569
    %6571 = vrot.lane.b32.xlu0 %v5365, 112
    %v6572 = vpop.permute.xlu0 %6571
    %6573 = vrot.lane.b32.xlu0 %v5358, 80
    %v6574 = vpop.permute.xlu0 %6573
    %6575 = vrot.lane.b32.xlu0 %v5359, 80
    %v6576 = vpop.permute.xlu0 %6575
    %6577 = vrot.lane.b32.xlu0 %v5360, 80
    %v6578 = vpop.permute.xlu0 %6577
    %6579 = vrot.lane.b32.xlu0 %v5361, 80
    %v6580 = vpop.permute.xlu0 %6579
    %6581 = vrot.lane.b32.xlu0 %v5362, 80
    %v6582 = vpop.permute.xlu0 %6581
    %6583 = vrot.lane.b32.xlu0 %v5363, 80
    %v6584 = vpop.permute.xlu0 %6583
    %6585 = vrot.lane.b32.xlu0 %v5364, 80
    %v6586 = vpop.permute.xlu0 %6585
    %6587 = vrot.lane.b32.xlu0 %v5365, 80
    %v6588 = vpop.permute.xlu0 %6587
    %v6590 = vsel %vm253, %v6558, 0
    %v6593 = vsel %vm253, %v6560, 0
    %v6596 = vsel %vm253, %v6562, 0
    %v6599 = vsel %vm253, %v6564, 0
    %v6602 = vsel %vm253, %v6566, 0
    %v6605 = vsel %vm253, %v6568, 0
    %v6608 = vsel %vm253, %v6570, 0
    %v6611 = vsel %vm253, %v6572, 0
    %v6614 = vsel %vm253, %v6574, 0
    %v6617 = vsel %vm253, %v6576, 0
    %v6620 = vsel %vm253, %v6578, 0
    %v6623 = vsel %vm253, %v6580, 0
    %v6626 = vsel %vm253, %v6582, 0
    %v6629 = vsel %vm253, %v6584, 0
    %v6632 = vsel %vm253, %v6586, 0
    %v6635 = vsel %vm253, %v6588, 0
    %6637 = vmatprep.subr.bf16.mxu0 0
    %6638 = vmatpush1.bf16.xpose.msra.mxu0 %v6614
    %6639 = vmatprep.subr.bf16.mxu0 0
    %6640 = vmatpush1.bf16.xpose.msra.mxu0 %v6617
    %6641 = vmatprep.subr.bf16.mxu0 0
    %6642 = vmatpush1.bf16.xpose.msra.mxu0 %v6620
    %6643 = vmatprep.subr.bf16.mxu0 0
    %6644 = vmatpush1.bf16.xpose.msra.mxu0 %v6623
    %6645 = vmatprep.subr.bf16.mxu0 0
    %6646 = vmatpush1.bf16.xpose.msra.mxu0 %v6626
    %6647 = vmatprep.subr.bf16.mxu0 0
    %6648 = vmatpush1.bf16.xpose.msra.mxu0 %v6629
    %6649 = vmatprep.subr.bf16.mxu0 0
    %6650 = vmatpush1.bf16.xpose.msra.mxu0 %v6632
    %6651 = vmatprep.subr.bf16.mxu0 0
    %6652 = vmatpush1.bf16.xpose.msra.mxu0 %v6635
    %6653 = vmatprep.subr.bf16.mxu0 0
    %6654 = vmatpush1.bf16.xpose.msra.mxu0 0
    %6655 = vmatprep.subr.bf16.mxu0 0
    %6656 = vmatpush1.bf16.xpose.msra.mxu0 0
    %6657 = vmatprep.subr.bf16.mxu0 0
    %6658 = vmatpush1.bf16.xpose.msra.mxu0 0
    %6659 = vmatprep.subr.bf16.mxu0 0
    %6660 = vmatpush1.bf16.xpose.msra.mxu0 0
    %6661 = vmatprep.subr.bf16.mxu0 0
    %6662 = vmatpush1.bf16.xpose.msra.mxu0 0
    %6663 = vmatprep.subr.bf16.mxu0 0
    %6664 = vmatpush1.bf16.xpose.msra.mxu0 0
    %6665 = vmatprep.subr.bf16.mxu0 0
    %6666 = vmatpush1.bf16.xpose.msra.mxu0 0
    %6667 = vmatprep.subr.bf16.mxu0 0
    %6668 = vmatpush1.bf16.xpose.msra.mxu0 0
    %6669 = vmatprep.mubr.bf16.mxu0 0
    %6670 = vmatmul.mubr.bf16.gmra.mrb[0].mxu0 %v6590
    %v6671 = vpop.f32.mrb[0].mxu0
    %v6672 = vadd.f32 %v213, %v6671
    %v6673 = vpop.f32.mrb[0].mxu0
    %v6674 = vpop.f32.mrb[0].mxu0
    %v6675 = vadd.f32 %v214, %v6674
    %v6676 = vpop.f32.mrb[0].mxu0
    %6677 = vmatprep.mubr.bf16.mxu0 0
    %6678 = vmatmul.mubr.bf16.gmra.mrb[0].mxu0 %v6593
    %v6679 = vpop.f32.mrb[0].mxu0
    %v6680 = vadd.f32 %v215, %v6679
    %v6681 = vpop.f32.mrb[0].mxu0
    %v6682 = vpop.f32.mrb[0].mxu0
    %v6683 = vadd.f32 %v216, %v6682
    %v6684 = vpop.f32.mrb[0].mxu0
    %6685 = vmatprep.mubr.bf16.mxu0 0
    %6686 = vmatmul.mubr.bf16.gmra.mrb[0].mxu0 %v6596
    %v6687 = vpop.f32.mrb[0].mxu0
    %v6688 = vadd.f32 %v217, %v6687
    %v6689 = vpop.f32.mrb[0].mxu0
    %v6690 = vpop.f32.mrb[0].mxu0
    %v6691 = vadd.f32 %v218, %v6690
    %v6692 = vpop.f32.mrb[0].mxu0
    %6693 = vmatprep.mubr.bf16.mxu0 0
    %6694 = vmatmul.mubr.bf16.gmra.mrb[0].mxu0 %v6599
    %v6695 = vpop.f32.mrb[0].mxu0
    %v6696 = vadd.f32 %v219, %v6695
    %v6697 = vpop.f32.mrb[0].mxu0
    %v6698 = vpop.f32.mrb[0].mxu0
    %v6699 = vadd.f32 %v220, %v6698
    %v6700 = vpop.f32.mrb[0].mxu0
    %6701 = vmatprep.mubr.bf16.mxu0 0
    %6702 = vmatmul.mubr.bf16.gmra.mrb[0].mxu0 %v6602
    %v6703 = vpop.f32.mrb[0].mxu0
    %v6704 = vadd.f32 %v221, %v6703
    %v6705 = vpop.f32.mrb[0].mxu0
    %v6706 = vpop.f32.mrb[0].mxu0
    %v6707 = vadd.f32 %v222, %v6706
    %v6708 = vpop.f32.mrb[0].mxu0
    %6709 = vmatprep.mubr.bf16.mxu0 0
    %6710 = vmatmul.mubr.bf16.gmra.mrb[0].mxu0 %v6605
    %v6711 = vpop.f32.mrb[0].mxu0
    %v6712 = vadd.f32 %v223, %v6711
    %v6713 = vpop.f32.mrb[0].mxu0
    %v6714 = vpop.f32.mrb[0].mxu0
    %v6715 = vadd.f32 %v224, %v6714
    %v6716 = vpop.f32.mrb[0].mxu0
    %6717 = vmatprep.mubr.bf16.mxu0 0
    %6718 = vmatmul.mubr.bf16.gmra.mrb[0].mxu0 %v6608
    %v6719 = vpop.f32.mrb[0].mxu0
    %v6720 = vadd.f32 %v225, %v6719
    %v6721 = vpop.f32.mrb[0].mxu0
    %v6722 = vpop.f32.mrb[0].mxu0
    %v6723 = vadd.f32 %v226, %v6722
    %v6724 = vpop.f32.mrb[0].mxu0
    %6725 = vmatprep.mubr.bf16.mxu0 0
    %6726 = vmatmul.mubr.bf16.gmra.mrb[0].mxu0 %v6611
    %v6727 = vpop.f32.mrb[0].mxu0
    %v6728 = vadd.f32 %v227, %v6727
    %v6729 = vpop.f32.mrb[0].mxu0
    %v6730 = vpop.f32.mrb[0].mxu0
    %v6731 = vadd.f32 %v228, %v6730
    %v6732 = vpop.f32.mrb[0].mxu0
    %6733 = vdwg.mxu0
    %6734 = vmax.xlane.f32.xlu0 %v6672
    %v6735 = vpop.xlane.xlu0 %6734
    %6736 = vmax.xlane.f32.xlu0 %v6675
    %v6737 = vpop.xlane.xlu0 %6736
    %6738 = vmax.xlane.f32.xlu0 %v6680
    %v6739 = vpop.xlane.xlu0 %6738
    %6740 = vmax.xlane.f32.xlu0 %v6683
    %v6741 = vpop.xlane.xlu0 %6740
    %6742 = vmax.xlane.f32.xlu0 %v6688
    %v6743 = vpop.xlane.xlu0 %6742
    %6744 = vmax.xlane.f32.xlu0 %v6691
    %v6745 = vpop.xlane.xlu0 %6744
    %6746 = vmax.xlane.f32.xlu0 %v6696
    %v6747 = vpop.xlane.xlu0 %6746
    %6748 = vmax.xlane.f32.xlu0 %v6699
    %v6749 = vpop.xlane.xlu0 %6748
    %6750 = vmax.xlane.f32.xlu0 %v6704
    %v6751 = vpop.xlane.xlu0 %6750
    %6752 = vmax.xlane.f32.xlu0 %v6707
    %v6753 = vpop.xlane.xlu0 %6752
    %6754 = vmax.xlane.f32.xlu0 %v6712
    %v6755 = vpop.xlane.xlu0 %6754
    %6756 = vmax.xlane.f32.xlu0 %v6715
    %v6757 = vpop.xlane.xlu0 %6756
    %6758 = vmax.xlane.f32.xlu0 %v6720
    %v6759 = vpop.xlane.xlu0 %6758
    %6760 = vmax.xlane.f32.xlu0 %v6723
    %v6761 = vpop.xlane.xlu0 %6760
    %6762 = vmax.xlane.f32.xlu0 %v6728
    %v6763 = vpop.xlane.xlu0 %6762
    %6764 = vmax.xlane.f32.xlu0 %v6731
    %v6765 = vpop.xlane.xlu0 %6764
    %v6766 = vsub.f32 %v6672, %v6735
    %v6767 = vsub.f32 %v6675, %v6737
    %v6768 = vsub.f32 %v6680, %v6739
    %v6769 = vsub.f32 %v6683, %v6741
    %v6770 = vsub.f32 %v6688, %v6743
    %v6771 = vsub.f32 %v6691, %v6745
    %v6772 = vsub.f32 %v6696, %v6747
    %v6773 = vsub.f32 %v6699, %v6749
    %v6774 = vsub.f32 %v6704, %v6751
    %v6775 = vsub.f32 %v6707, %v6753
    %v6776 = vsub.f32 %v6712, %v6755
    %v6777 = vsub.f32 %v6715, %v6757
    %v6778 = vsub.f32 %v6720, %v6759
    %v6779 = vsub.f32 %v6723, %v6761
    %v6780 = vsub.f32 %v6728, %v6763
    %v6781 = vsub.f32 %v6731, %v6765
    %v6782 = vmul.f32 %v6766, 1.442695
    %v6783 = vpow.pop %v6782
    %v6784 = vmul.f32 %v6767, 1.442695
    %v6785 = vpow.pop %v6784
    %v6786 = vmul.f32 %v6768, 1.442695
    %v6787 = vpow.pop %v6786
    %v6788 = vmul.f32 %v6769, 1.442695
    %v6789 = vpow.pop %v6788
    %v6790 = vmul.f32 %v6770, 1.442695
    %v6791 = vpow.pop %v6790
    %v6792 = vmul.f32 %v6771, 1.442695
    %v6793 = vpow.pop %v6792
    %v6794 = vmul.f32 %v6772, 1.442695
    %v6795 = vpow.pop %v6794
    %v6796 = vmul.f32 %v6773, 1.442695
    %v6797 = vpow.pop %v6796
    %v6798 = vmul.f32 %v6774, 1.442695
    %v6799 = vpow.pop %v6798
    %v6800 = vmul.f32 %v6775, 1.442695
    %v6801 = vpow.pop %v6800
    %v6802 = vmul.f32 %v6776, 1.442695
    %v6803 = vpow.pop %v6802
    %v6804 = vmul.f32 %v6777, 1.442695
    %v6805 = vpow.pop %v6804
    %v6806 = vmul.f32 %v6778, 1.442695
    %v6807 = vpow.pop %v6806
    %v6808 = vmul.f32 %v6779, 1.442695
    %v6809 = vpow.pop %v6808
    %v6810 = vmul.f32 %v6780, 1.442695
    %v6811 = vpow.pop %v6810
    %v6812 = vmul.f32 %v6781, 1.442695
    %v6813 = vpow.pop %v6812
    %6814 = vadd.xlane.f32.xlu0 %v6783
    %v6815 = vpop.xlane.xlu0 %6814
    %6816 = vadd.xlane.f32.xlu0 %v6785
    %v6817 = vpop.xlane.xlu0 %6816
    %6818 = vadd.xlane.f32.xlu0 %v6787
    %v6819 = vpop.xlane.xlu0 %6818
    %6820 = vadd.xlane.f32.xlu0 %v6789
    %v6821 = vpop.xlane.xlu0 %6820
    %6822 = vadd.xlane.f32.xlu0 %v6791
    %v6823 = vpop.xlane.xlu0 %6822
    %6824 = vadd.xlane.f32.xlu0 %v6793
    %v6825 = vpop.xlane.xlu0 %6824
    %6826 = vadd.xlane.f32.xlu0 %v6795
    %v6827 = vpop.xlane.xlu0 %6826
    %6828 = vadd.xlane.f32.xlu0 %v6797
    %v6829 = vpop.xlane.xlu0 %6828
    %6830 = vadd.xlane.f32.xlu0 %v6799
    %v6831 = vpop.xlane.xlu0 %6830
    %6832 = vadd.xlane.f32.xlu0 %v6801
    %v6833 = vpop.xlane.xlu0 %6832
    %6834 = vadd.xlane.f32.xlu0 %v6803
    %v6835 = vpop.xlane.xlu0 %6834
    %6836 = vadd.xlane.f32.xlu0 %v6805
    %v6837 = vpop.xlane.xlu0 %6836
    %6838 = vadd.xlane.f32.xlu0 %v6807
    %v6839 = vpop.xlane.xlu0 %6838
    %6840 = vadd.xlane.f32.xlu0 %v6809
    %v6841 = vpop.xlane.xlu0 %6840
    %6842 = vadd.xlane.f32.xlu0 %v6811
    %v6843 = vpop.xlane.xlu0 %6842
    %6844 = vadd.xlane.f32.xlu0 %v6813
    %v6845 = vpop.xlane.xlu0 %6844
    %v6846 = vrcp.pop %v6815
    %v6847 = vrcp.pop %v6817
    %v6848 = vrcp.pop %v6819
    %v6849 = vrcp.pop %v6821
    %v6850 = vrcp.pop %v6823
    %v6851 = vrcp.pop %v6825
    %v6852 = vrcp.pop %v6827
    %v6853 = vrcp.pop %v6829
    %v6854 = vrcp.pop %v6831
    %v6855 = vrcp.pop %v6833
    %v6856 = vrcp.pop %v6835
    %v6857 = vrcp.pop %v6837
    %v6858 = vrcp.pop %v6839
    %v6859 = vrcp.pop %v6841
    %v6860 = vrcp.pop %v6843
    %v6861 = vrcp.pop %v6845
    %v6862 = vmul.f32 %v6783, %v6846
    %v6863 = vmul.f32 %v6785, %v6847
    %v6864 = vmul.f32 %v6787, %v6848
    %v6865 = vmul.f32 %v6789, %v6849
    %v6866 = vmul.f32 %v6791, %v6850
    %v6867 = vmul.f32 %v6793, %v6851
    %v6868 = vmul.f32 %v6795, %v6852
    %v6869 = vmul.f32 %v6797, %v6853
    %v6870 = vmul.f32 %v6799, %v6854
    %v6871 = vmul.f32 %v6801, %v6855
    %v6872 = vmul.f32 %v6803, %v6856
    %v6873 = vmul.f32 %v6805, %v6857
    %v6874 = vmul.f32 %v6807, %v6858
    %v6875 = vmul.f32 %v6809, %v6859
    %v6876 = vmul.f32 %v6811, %v6860
    %v6877 = vmul.f32 %v6813, %v6861
    %v6878 = vpack.c.bf16 %v6863, %v6862
    %v6879 = vpack.c.bf16 %v6865, %v6864
    %v6880 = vpack.c.bf16 %v6867, %v6866
    %v6881 = vpack.c.bf16 %v6869, %v6868
    %v6882 = vpack.c.bf16 %v6871, %v6870
    %v6883 = vpack.c.bf16 %v6873, %v6872
    %v6884 = vpack.c.bf16 %v6875, %v6874
    %v6885 = vpack.c.bf16 %v6877, %v6876
    %6886 = vrot.lane.b32.xlu0 %v5358, 48
    %v6887 = vpop.permute.xlu0 %6886
    %6888 = vrot.lane.b32.xlu0 %v5359, 48
    %v6889 = vpop.permute.xlu0 %6888
    %6890 = vrot.lane.b32.xlu0 %v5360, 48
    %v6891 = vpop.permute.xlu0 %6890
    %6892 = vrot.lane.b32.xlu0 %v5361, 48
    %v6893 = vpop.permute.xlu0 %6892
    %6894 = vrot.lane.b32.xlu0 %v5362, 48
    %v6895 = vpop.permute.xlu0 %6894
    %6896 = vrot.lane.b32.xlu0 %v5363, 48
    %v6897 = vpop.permute.xlu0 %6896
    %6898 = vrot.lane.b32.xlu0 %v5364, 48
    %v6899 = vpop.permute.xlu0 %6898
    %6900 = vrot.lane.b32.xlu0 %v5365, 48
    %v6901 = vpop.permute.xlu0 %6900
    %6910 = vmatprep.subr.bf16.mxu0 0
    %6911 = vmatpush1.bf16.msra.mxu0 %v6887
    %6912 = vmatprep.subr.bf16.mxu0 0
    %6913 = vmatpush1.bf16.msra.mxu0 %v6889
    %6914 = vmatprep.subr.bf16.mxu0 0
    %6915 = vmatpush1.bf16.msra.mxu0 %v6891
    %6916 = vmatprep.subr.bf16.mxu0 0
    %6917 = vmatpush1.bf16.msra.mxu0 %v6893
    %6918 = vmatprep.subr.bf16.mxu0 0
    %6919 = vmatpush1.bf16.msra.mxu0 %v6895
    %6920 = vmatprep.subr.bf16.mxu0 0
    %6921 = vmatpush1.bf16.msra.mxu0 %v6897
    %6922 = vmatprep.subr.bf16.mxu0 0
    %6923 = vmatpush1.bf16.msra.mxu0 %v6899
    %6924 = vmatprep.subr.bf16.mxu0 0
    %6925 = vmatpush1.bf16.msra.mxu0 %v6901
    %6926 = vmatprep.subr.bf16.mxu0 0
    %6927 = vmatpush1.bf16.msra.mxu0 0
    %6928 = vmatprep.subr.bf16.mxu0 0
    %6929 = vmatpush1.bf16.msra.mxu0 0
    %6930 = vmatprep.subr.bf16.mxu0 0
    %6931 = vmatpush1.bf16.msra.mxu0 0
    %6932 = vmatprep.subr.bf16.mxu0 0
    %6933 = vmatpush1.bf16.msra.mxu0 0
    %6934 = vmatprep.subr.bf16.mxu0 0
    %6935 = vmatpush1.bf16.msra.mxu0 0
    %6936 = vmatprep.subr.bf16.mxu0 0
    %6937 = vmatpush1.bf16.msra.mxu0 0
    %6938 = vmatprep.subr.bf16.mxu0 0
    %6939 = vmatpush1.bf16.msra.mxu0 0
    %6940 = vmatprep.subr.bf16.mxu0 0
    %6941 = vmatpush1.bf16.msra.mxu0 0
    %6942 = vmatprep.mubr.bf16.mxu0 0
    %6943 = vmatmul.mubr.bf16.gmra.mrb[0].mxu0 %v6878
    %v6944 = vpop.f32.mrb[0].mxu0
    %v6945 = vadd.f32 0.0, %v6944
    %v6946 = vpop.f32.mrb[0].mxu0
    %v6947 = vpop.f32.mrb[0].mxu0
    %v6948 = vadd.f32 0.0, %v6947
    %v6949 = vpop.f32.mrb[0].mxu0
    %6950 = vmatprep.mubr.bf16.mxu0 0
    %6951 = vmatmul.mubr.bf16.gmra.mrb[0].mxu0 %v6879
    %v6952 = vpop.f32.mrb[0].mxu0
    %v6953 = vadd.f32 0.0, %v6952
    %v6954 = vpop.f32.mrb[0].mxu0
    %v6955 = vpop.f32.mrb[0].mxu0
    %v6956 = vadd.f32 0.0, %v6955
    %v6957 = vpop.f32.mrb[0].mxu0
    %6958 = vmatprep.mubr.bf16.mxu0 0
    %6959 = vmatmul.mubr.bf16.gmra.mrb[0].mxu0 %v6880
    %v6960 = vpop.f32.mrb[0].mxu0
    %v6961 = vadd.f32 0.0, %v6960
    %v6962 = vpop.f32.mrb[0].mxu0
    %v6963 = vpop.f32.mrb[0].mxu0
    %v6964 = vadd.f32 0.0, %v6963
    %v6965 = vpop.f32.mrb[0].mxu0
    %6966 = vmatprep.mubr.bf16.mxu0 0
    %6967 = vmatmul.mubr.bf16.gmra.mrb[0].mxu0 %v6881
    %v6968 = vpop.f32.mrb[0].mxu0
    %v6969 = vadd.f32 0.0, %v6968
    %v6970 = vpop.f32.mrb[0].mxu0
    %v6971 = vpop.f32.mrb[0].mxu0
    %v6972 = vadd.f32 0.0, %v6971
    %v6973 = vpop.f32.mrb[0].mxu0
    %6974 = vmatprep.mubr.bf16.mxu0 0
    %6975 = vmatmul.mubr.bf16.gmra.mrb[0].mxu0 %v6882
    %v6976 = vpop.f32.mrb[0].mxu0
    %v6977 = vadd.f32 0.0, %v6976
    %v6978 = vpop.f32.mrb[0].mxu0
    %v6979 = vpop.f32.mrb[0].mxu0
    %v6980 = vadd.f32 0.0, %v6979
    %v6981 = vpop.f32.mrb[0].mxu0
    %6982 = vmatprep.mubr.bf16.mxu0 0
    %6983 = vmatmul.mubr.bf16.gmra.mrb[0].mxu0 %v6883
    %v6984 = vpop.f32.mrb[0].mxu0
    %v6985 = vadd.f32 0.0, %v6984
    %v6986 = vpop.f32.mrb[0].mxu0
    %v6987 = vpop.f32.mrb[0].mxu0
    %v6988 = vadd.f32 0.0, %v6987
    %v6989 = vpop.f32.mrb[0].mxu0
    %6990 = vmatprep.mubr.bf16.mxu0 0
    %6991 = vmatmul.mubr.bf16.gmra.mrb[0].mxu0 %v6884
    %v6992 = vpop.f32.mrb[0].mxu0
    %v6993 = vadd.f32 0.0, %v6992
    %v6994 = vpop.f32.mrb[0].mxu0
    %v6995 = vpop.f32.mrb[0].mxu0
    %v6996 = vadd.f32 0.0, %v6995
    %v6997 = vpop.f32.mrb[0].mxu0
    %6998 = vmatprep.mubr.bf16.mxu0 0
    %6999 = vmatmul.mubr.bf16.gmra.mrb[0].mxu0 %v6885
    %v7000 = vpop.f32.mrb[0].mxu0
    %v7001 = vadd.f32 0.0, %v7000
    %v7002 = vpop.f32.mrb[0].mxu0
    %v7003 = vpop.f32.mrb[0].mxu0
    %v7004 = vadd.f32 0.0, %v7003
    %v7005 = vpop.f32.mrb[0].mxu0
    %7006 = vdwg.mxu0
    %v7007 = vpack.c.bf16 %v6948, %v6945
    %v7008 = vpack.c.bf16 %v6956, %v6953
    %v7009 = vpack.c.bf16 %v6964, %v6961
    %v7010 = vpack.c.bf16 %v6972, %v6969
    %v7011 = vpack.c.bf16 %v6980, %v6977
    %v7012 = vpack.c.bf16 %v6988, %v6985
    %v7013 = vpack.c.bf16 %v6996, %v6993
    %v7014 = vpack.c.bf16 %v7004, %v7001
    %v7015 = vld [vmem:[%s5816 + $0x8] sm:$0xf]
    %v7017 = vsel %vm253, %v7007, 0
    %v7020 = vsel %vm253, %v7008, 0
    %v7023 = vsel %vm253, %v7009, 0
    %v7026 = vsel %vm253, %v7010, 0
    %v7029 = vsel %vm253, %v7011, 0
    %v7032 = vsel %vm253, %v7012, 0
    %v7035 = vsel %vm253, %v7013, 0
    %v7038 = vsel %vm253, %v7014, 0
    %v7041 = vsel %vm705, %v7015, 0
    %7043 = vmatprep.subr.bf16.mxu0 0
    %7044 = vmatpush1.bf16.msra.mxu0 %v7041
    %7045 = vmatprep.subr.bf16.mxu0 0
    %7046 = vmatpush1.bf16.msra.mxu0 0
    %7047 = vmatprep.subr.bf16.mxu0 0
    %7048 = vmatpush1.bf16.msra.mxu0 0
    %7049 = vmatprep.subr.bf16.mxu0 0
    %7050 = vmatpush1.bf16.msra.mxu0 0
    %7051 = vmatprep.subr.bf16.mxu0 0
    %7052 = vmatpush1.bf16.msra.mxu0 0
    %7053 = vmatprep.subr.bf16.mxu0 0
    %7054 = vmatpush1.bf16.msra.mxu0 0
    %7055 = vmatprep.subr.bf16.mxu0 0
    %7056 = vmatpush1.bf16.msra.mxu0 0
    %7057 = vmatprep.subr.bf16.mxu0 0
    %7058 = vmatpush1.bf16.msra.mxu0 0
    %7059 = vmatprep.subr.bf16.mxu0 0
    %7060 = vmatpush1.bf16.msra.mxu0 0
    %7061 = vmatprep.subr.bf16.mxu0 0
    %7062 = vmatpush1.bf16.msra.mxu0 0
    %7063 = vmatprep.subr.bf16.mxu0 0
    %7064 = vmatpush1.bf16.msra.mxu0 0
    %7065 = vmatprep.subr.bf16.mxu0 0
    %7066 = vmatpush1.bf16.msra.mxu0 0
    %7067 = vmatprep.subr.bf16.mxu0 0
    %7068 = vmatpush1.bf16.msra.mxu0 0
    %7069 = vmatprep.subr.bf16.mxu0 0
    %7070 = vmatpush1.bf16.msra.mxu0 0
    %7071 = vmatprep.subr.bf16.mxu0 0
    %7072 = vmatpush1.bf16.msra.mxu0 0
    %7073 = vmatprep.subr.bf16.mxu0 0
    %7074 = vmatpush1.bf16.msra.mxu0 0
    %7075 = vmatprep.mubr.bf16.mxu0 0
    %7076 = vmatmul.mubr.bf16.gmra.mrb[0].mxu0 %v7017
    %v7077 = vpop.f32.mrb[0].mxu0
    %v7078 = vadd.f32 0.0, %v7077
    %v7079 = vpop.f32.mrb[0].mxu0
    %v7080 = vpop.f32.mrb[0].mxu0
    %v7081 = vadd.f32 0.0, %v7080
    %v7082 = vpop.f32.mrb[0].mxu0
    %7083 = vmatprep.mubr.bf16.mxu0 0
    %7084 = vmatmul.mubr.bf16.gmra.mrb[0].mxu0 %v7020
    %v7085 = vpop.f32.mrb[0].mxu0
    %v7086 = vadd.f32 0.0, %v7085
    %v7087 = vpop.f32.mrb[0].mxu0
    %v7088 = vpop.f32.mrb[0].mxu0
    %v7089 = vadd.f32 0.0, %v7088
    %v7090 = vpop.f32.mrb[0].mxu0
    %7091 = vmatprep.mubr.bf16.mxu0 0
    %7092 = vmatmul.mubr.bf16.gmra.mrb[0].mxu0 %v7023
    %v7093 = vpop.f32.mrb[0].mxu0
    %v7094 = vadd.f32 0.0, %v7093
    %v7095 = vpop.f32.mrb[0].mxu0
    %v7096 = vpop.f32.mrb[0].mxu0
    %v7097 = vadd.f32 0.0, %v7096
    %v7098 = vpop.f32.mrb[0].mxu0
    %7099 = vmatprep.mubr.bf16.mxu0 0
    %7100 = vmatmul.mubr.bf16.gmra.mrb[0].mxu0 %v7026
    %v7101 = vpop.f32.mrb[0].mxu0
    %v7102 = vadd.f32 0.0, %v7101
    %v7103 = vpop.f32.mrb[0].mxu0
    %v7104 = vpop.f32.mrb[0].mxu0
    %v7105 = vadd.f32 0.0, %v7104
    %v7106 = vpop.f32.mrb[0].mxu0
    %7107 = vmatprep.mubr.bf16.mxu0 0
    %7108 = vmatmul.mubr.bf16.gmra.mrb[0].mxu0 %v7029
    %v7109 = vpop.f32.mrb[0].mxu0
    %v7110 = vadd.f32 0.0, %v7109
    %v7111 = vpop.f32.mrb[0].mxu0
    %v7112 = vpop.f32.mrb[0].mxu0
    %v7113 = vadd.f32 0.0, %v7112
    %v7114 = vpop.f32.mrb[0].mxu0
    %7115 = vmatprep.mubr.bf16.mxu0 0
    %7116 = vmatmul.mubr.bf16.gmra.mrb[0].mxu0 %v7032
    %v7117 = vpop.f32.mrb[0].mxu0
    %v7118 = vadd.f32 0.0, %v7117
    %v7119 = vpop.f32.mrb[0].mxu0
    %v7120 = vpop.f32.mrb[0].mxu0
    %v7121 = vadd.f32 0.0, %v7120
    %v7122 = vpop.f32.mrb[0].mxu0
    %7123 = vmatprep.mubr.bf16.mxu0 0
    %7124 = vmatmul.mubr.bf16.gmra.mrb[0].mxu0 %v7035
    %v7125 = vpop.f32.mrb[0].mxu0
    %v7126 = vadd.f32 0.0, %v7125
    %v7127 = vpop.f32.mrb[0].mxu0
    %v7128 = vpop.f32.mrb[0].mxu0
    %v7129 = vadd.f32 0.0, %v7128
    %v7130 = vpop.f32.mrb[0].mxu0
    %7131 = vmatprep.mubr.bf16.mxu0 0
    %7132 = vmatmul.mubr.bf16.gmra.mrb[0].mxu0 %v7038
    %v7133 = vpop.f32.mrb[0].mxu0
    %v7134 = vadd.f32 0.0, %v7133
    %v7135 = vpop.f32.mrb[0].mxu0
    %v7136 = vpop.f32.mrb[0].mxu0
    %v7137 = vadd.f32 0.0, %v7136
    %v7138 = vpop.f32.mrb[0].mxu0
    %7139 = vdwg.mxu0
    %v7140 = vadd.f32 %v6541, %v7078
    %v7141 = vadd.f32 %v6542, %v7081
    %v7142 = vadd.f32 %v6543, %v7086
    %v7143 = vadd.f32 %v6544, %v7089
    %v7144 = vadd.f32 %v6545, %v7094
    %v7145 = vadd.f32 %v6546, %v7097
    %v7146 = vadd.f32 %v6547, %v7102
    %v7147 = vadd.f32 %v6548, %v7105
    %v7148 = vadd.f32 %v6549, %v7110
    %v7149 = vadd.f32 %v6550, %v7113
    %v7150 = vadd.f32 %v6551, %v7118
    %v7151 = vadd.f32 %v6552, %v7121
    %v7152 = vadd.f32 %v6553, %v7126
    %v7153 = vadd.f32 %v6554, %v7129
    %v7154 = vadd.f32 %v6555, %v7134
    %v7155 = vadd.f32 %v6556, %v7137
    %7156 = vrot.lane.b32.xlu0 %v5358, 104
    %v7157 = vpop.permute.xlu0 %7156
    %7158 = vrot.lane.b32.xlu0 %v5359, 104
    %v7159 = vpop.permute.xlu0 %7158
    %7160 = vrot.lane.b32.xlu0 %v5360, 104
    %v7161 = vpop.permute.xlu0 %7160
    %7162 = vrot.lane.b32.xlu0 %v5361, 104
    %v7163 = vpop.permute.xlu0 %7162
    %7164 = vrot.lane.b32.xlu0 %v5362, 104
    %v7165 = vpop.permute.xlu0 %7164
    %7166 = vrot.lane.b32.xlu0 %v5363, 104
    %v7167 = vpop.permute.xlu0 %7166
    %7168 = vrot.lane.b32.xlu0 %v5364, 104
    %v7169 = vpop.permute.xlu0 %7168
    %7170 = vrot.lane.b32.xlu0 %v5365, 104
    %v7171 = vpop.permute.xlu0 %7170
    %7172 = vrot.lane.b32.xlu0 %v5358, 72
    %v7173 = vpop.permute.xlu0 %7172
    %7174 = vrot.lane.b32.xlu0 %v5359, 72
    %v7175 = vpop.permute.xlu0 %7174
    %7176 = vrot.lane.b32.xlu0 %v5360, 72
    %v7177 = vpop.permute.xlu0 %7176
    %7178 = vrot.lane.b32.xlu0 %v5361, 72
    %v7179 = vpop.permute.xlu0 %7178
    %7180 = vrot.lane.b32.xlu0 %v5362, 72
    %v7181 = vpop.permute.xlu0 %7180
    %7182 = vrot.lane.b32.xlu0 %v5363, 72
    %v7183 = vpop.permute.xlu0 %7182
    %7184 = vrot.lane.b32.xlu0 %v5364, 72
    %v7185 = vpop.permute.xlu0 %7184
    %7186 = vrot.lane.b32.xlu0 %v5365, 72
    %v7187 = vpop.permute.xlu0 %7186
    %v7189 = vsel %vm253, %v7157, 0
    %v7192 = vsel %vm253, %v7159, 0
    %v7195 = vsel %vm253, %v7161, 0
    %v7198 = vsel %vm253, %v7163, 0
    %v7201 = vsel %vm253, %v7165, 0
    %v7204 = vsel %vm253, %v7167, 0
    %v7207 = vsel %vm253, %v7169, 0
    %v7210 = vsel %vm253, %v7171, 0
    %v7213 = vsel %vm253, %v7173, 0
    %v7216 = vsel %vm253, %v7175, 0
    %v7219 = vsel %vm253, %v7177, 0
    %v7222 = vsel %vm253, %v7179, 0
    %v7225 = vsel %vm253, %v7181, 0
    %v7228 = vsel %vm253, %v7183, 0
    %v7231 = vsel %vm253, %v7185, 0
    %v7234 = vsel %vm253, %v7187, 0
    %7236 = vmatprep.subr.bf16.mxu0 0
    %7237 = vmatpush1.bf16.xpose.msra.mxu0 %v7213
    %7238 = vmatprep.subr.bf16.mxu0 0
    %7239 = vmatpush1.bf16.xpose.msra.mxu0 %v7216
    %7240 = vmatprep.subr.bf16.mxu0 0
    %7241 = vmatpush1.bf16.xpose.msra.mxu0 %v7219
    %7242 = vmatprep.subr.bf16.mxu0 0
    %7243 = vmatpush1.bf16.xpose.msra.mxu0 %v7222
    %7244 = vmatprep.subr.bf16.mxu0 0
    %7245 = vmatpush1.bf16.xpose.msra.mxu0 %v7225
    %7246 = vmatprep.subr.bf16.mxu0 0
    %7247 = vmatpush1.bf16.xpose.msra.mxu0 %v7228
    %7248 = vmatprep.subr.bf16.mxu0 0
    %7249 = vmatpush1.bf16.xpose.msra.mxu0 %v7231
    %7250 = vmatprep.subr.bf16.mxu0 0
    %7251 = vmatpush1.bf16.xpose.msra.mxu0 %v7234
    %7252 = vmatprep.subr.bf16.mxu0 0
    %7253 = vmatpush1.bf16.xpose.msra.mxu0 0
    %7254 = vmatprep.subr.bf16.mxu0 0
    %7255 = vmatpush1.bf16.xpose.msra.mxu0 0
    %7256 = vmatprep.subr.bf16.mxu0 0
    %7257 = vmatpush1.bf16.xpose.msra.mxu0 0
    %7258 = vmatprep.subr.bf16.mxu0 0
    %7259 = vmatpush1.bf16.xpose.msra.mxu0 0
    %7260 = vmatprep.subr.bf16.mxu0 0
    %7261 = vmatpush1.bf16.xpose.msra.mxu0 0
    %7262 = vmatprep.subr.bf16.mxu0 0
    %7263 = vmatpush1.bf16.xpose.msra.mxu0 0
    %7264 = vmatprep.subr.bf16.mxu0 0
    %7265 = vmatpush1.bf16.xpose.msra.mxu0 0
    %7266 = vmatprep.subr.bf16.mxu0 0
    %7267 = vmatpush1.bf16.xpose.msra.mxu0 0
    %7268 = vmatprep.mubr.bf16.mxu0 0
    %7269 = vmatmul.mubr.bf16.gmra.mrb[0].mxu0 %v7189
    %v7270 = vpop.f32.mrb[0].mxu0
    %v7271 = vadd.f32 %v213, %v7270
    %v7272 = vpop.f32.mrb[0].mxu0
    %v7273 = vpop.f32.mrb[0].mxu0
    %v7274 = vadd.f32 %v214, %v7273
    %v7275 = vpop.f32.mrb[0].mxu0
    %7276 = vmatprep.mubr.bf16.mxu0 0
    %7277 = vmatmul.mubr.bf16.gmra.mrb[0].mxu0 %v7192
    %v7278 = vpop.f32.mrb[0].mxu0
    %v7279 = vadd.f32 %v215, %v7278
    %v7280 = vpop.f32.mrb[0].mxu0
    %v7281 = vpop.f32.mrb[0].mxu0
    %v7282 = vadd.f32 %v216, %v7281
    %v7283 = vpop.f32.mrb[0].mxu0
    %7284 = vmatprep.mubr.bf16.mxu0 0
    %7285 = vmatmul.mubr.bf16.gmra.mrb[0].mxu0 %v7195
    %v7286 = vpop.f32.mrb[0].mxu0
    %v7287 = vadd.f32 %v217, %v7286
    %v7288 = vpop.f32.mrb[0].mxu0
    %v7289 = vpop.f32.mrb[0].mxu0
    %v7290 = vadd.f32 %v218, %v7289
    %v7291 = vpop.f32.mrb[0].mxu0
    %7292 = vmatprep.mubr.bf16.mxu0 0
    %7293 = vmatmul.mubr.bf16.gmra.mrb[0].mxu0 %v7198
    %v7294 = vpop.f32.mrb[0].mxu0
    %v7295 = vadd.f32 %v219, %v7294
    %v7296 = vpop.f32.mrb[0].mxu0
    %v7297 = vpop.f32.mrb[0].mxu0
    %v7298 = vadd.f32 %v220, %v7297
    %v7299 = vpop.f32.mrb[0].mxu0
    %7300 = vmatprep.mubr.bf16.mxu0 0
    %7301 = vmatmul.mubr.bf16.gmra.mrb[0].mxu0 %v7201
    %v7302 = vpop.f32.mrb[0].mxu0
    %v7303 = vadd.f32 %v221, %v7302
    %v7304 = vpop.f32.mrb[0].mxu0
    %v7305 = vpop.f32.mrb[0].mxu0
    %v7306 = vadd.f32 %v222, %v7305
    %v7307 = vpop.f32.mrb[0].mxu0
    %7308 = vmatprep.mubr.bf16.mxu0 0
    %7309 = vmatmul.mubr.bf16.gmra.mrb[0].mxu0 %v7204
    %v7310 = vpop.f32.mrb[0].mxu0
    %v7311 = vadd.f32 %v223, %v7310
    %v7312 = vpop.f32.mrb[0].mxu0
    %v7313 = vpop.f32.mrb[0].mxu0
    %v7314 = vadd.f32 %v224, %v7313
    %v7315 = vpop.f32.mrb[0].mxu0
    %7316 = vmatprep.mubr.bf16.mxu0 0
    %7317 = vmatmul.mubr.bf16.gmra.mrb[0].mxu0 %v7207
    %v7318 = vpop.f32.mrb[0].mxu0
    %v7319 = vadd.f32 %v225, %v7318
    %v7320 = vpop.f32.mrb[0].mxu0
    %v7321 = vpop.f32.mrb[0].mxu0
    %v7322 = vadd.f32 %v226, %v7321
    %v7323 = vpop.f32.mrb[0].mxu0
    %7324 = vmatprep.mubr.bf16.mxu0 0
    %7325 = vmatmul.mubr.bf16.gmra.mrb[0].mxu0 %v7210
    %v7326 = vpop.f32.mrb[0].mxu0
    %v7327 = vadd.f32 %v227, %v7326
    %v7328 = vpop.f32.mrb[0].mxu0
    %v7329 = vpop.f32.mrb[0].mxu0
    %v7330 = vadd.f32 %v228, %v7329
    %v7331 = vpop.f32.mrb[0].mxu0
    %7332 = vdwg.mxu0
    %7333 = vmax.xlane.f32.xlu0 %v7271
    %v7334 = vpop.xlane.xlu0 %7333
    %7335 = vmax.xlane.f32.xlu0 %v7274
    %v7336 = vpop.xlane.xlu0 %7335
    %7337 = vmax.xlane.f32.xlu0 %v7279
    %v7338 = vpop.xlane.xlu0 %7337
    %7339 = vmax.xlane.f32.xlu0 %v7282
    %v7340 = vpop.xlane.xlu0 %7339
    %7341 = vmax.xlane.f32.xlu0 %v7287
    %v7342 = vpop.xlane.xlu0 %7341
    %7343 = vmax.xlane.f32.xlu0 %v7290
    %v7344 = vpop.xlane.xlu0 %7343
    %7345 = vmax.xlane.f32.xlu0 %v7295
    %v7346 = vpop.xlane.xlu0 %7345
    %7347 = vmax.xlane.f32.xlu0 %v7298
    %v7348 = vpop.xlane.xlu0 %7347
    %7349 = vmax.xlane.f32.xlu0 %v7303
    %v7350 = vpop.xlane.xlu0 %7349
    %7351 = vmax.xlane.f32.xlu0 %v7306
    %v7352 = vpop.xlane.xlu0 %7351
    %7353 = vmax.xlane.f32.xlu0 %v7311
    %v7354 = vpop.xlane.xlu0 %7353
    %7355 = vmax.xlane.f32.xlu0 %v7314
    %v7356 = vpop.xlane.xlu0 %7355
    %7357 = vmax.xlane.f32.xlu0 %v7319
    %v7358 = vpop.xlane.xlu0 %7357
    %7359 = vmax.xlane.f32.xlu0 %v7322
    %v7360 = vpop.xlane.xlu0 %7359
    %7361 = vmax.xlane.f32.xlu0 %v7327
    %v7362 = vpop.xlane.xlu0 %7361
    %7363 = vmax.xlane.f32.xlu0 %v7330
    %v7364 = vpop.xlane.xlu0 %7363
    %v7365 = vsub.f32 %v7271, %v7334
    %v7366 = vsub.f32 %v7274, %v7336
    %v7367 = vsub.f32 %v7279, %v7338
    %v7368 = vsub.f32 %v7282, %v7340
    %v7369 = vsub.f32 %v7287, %v7342
    %v7370 = vsub.f32 %v7290, %v7344
    %v7371 = vsub.f32 %v7295, %v7346
    %v7372 = vsub.f32 %v7298, %v7348
    %v7373 = vsub.f32 %v7303, %v7350
    %v7374 = vsub.f32 %v7306, %v7352
    %v7375 = vsub.f32 %v7311, %v7354
    %v7376 = vsub.f32 %v7314, %v7356
    %v7377 = vsub.f32 %v7319, %v7358
    %v7378 = vsub.f32 %v7322, %v7360
    %v7379 = vsub.f32 %v7327, %v7362
    %v7380 = vsub.f32 %v7330, %v7364
    %v7381 = vmul.f32 %v7365, 1.442695
    %v7382 = vpow.pop %v7381
    %v7383 = vmul.f32 %v7366, 1.442695
    %v7384 = vpow.pop %v7383
    %v7385 = vmul.f32 %v7367, 1.442695
    %v7386 = vpow.pop %v7385
    %v7387 = vmul.f32 %v7368, 1.442695
    %v7388 = vpow.pop %v7387
    %v7389 = vmul.f32 %v7369, 1.442695
    %v7390 = vpow.pop %v7389
    %v7391 = vmul.f32 %v7370, 1.442695
    %v7392 = vpow.pop %v7391
    %v7393 = vmul.f32 %v7371, 1.442695
    %v7394 = vpow.pop %v7393
    %v7395 = vmul.f32 %v7372, 1.442695
    %v7396 = vpow.pop %v7395
    %v7397 = vmul.f32 %v7373, 1.442695
    %v7398 = vpow.pop %v7397
    %v7399 = vmul.f32 %v7374, 1.442695
    %v7400 = vpow.pop %v7399
    %v7401 = vmul.f32 %v7375, 1.442695
    %v7402 = vpow.pop %v7401
    %v7403 = vmul.f32 %v7376, 1.442695
    %v7404 = vpow.pop %v7403
    %v7405 = vmul.f32 %v7377, 1.442695
    %v7406 = vpow.pop %v7405
    %v7407 = vmul.f32 %v7378, 1.442695
    %v7408 = vpow.pop %v7407
    %v7409 = vmul.f32 %v7379, 1.442695
    %v7410 = vpow.pop %v7409
    %v7411 = vmul.f32 %v7380, 1.442695
    %v7412 = vpow.pop %v7411
    %7413 = vadd.xlane.f32.xlu0 %v7382
    %v7414 = vpop.xlane.xlu0 %7413
    %7415 = vadd.xlane.f32.xlu0 %v7384
    %v7416 = vpop.xlane.xlu0 %7415
    %7417 = vadd.xlane.f32.xlu0 %v7386
    %v7418 = vpop.xlane.xlu0 %7417
    %7419 = vadd.xlane.f32.xlu0 %v7388
    %v7420 = vpop.xlane.xlu0 %7419
    %7421 = vadd.xlane.f32.xlu0 %v7390
    %v7422 = vpop.xlane.xlu0 %7421
    %7423 = vadd.xlane.f32.xlu0 %v7392
    %v7424 = vpop.xlane.xlu0 %7423
    %7425 = vadd.xlane.f32.xlu0 %v7394
    %v7426 = vpop.xlane.xlu0 %7425
    %7427 = vadd.xlane.f32.xlu0 %v7396
    %v7428 = vpop.xlane.xlu0 %7427
    %7429 = vadd.xlane.f32.xlu0 %v7398
    %v7430 = vpop.xlane.xlu0 %7429
    %7431 = vadd.xlane.f32.xlu0 %v7400
    %v7432 = vpop.xlane.xlu0 %7431
    %7433 = vadd.xlane.f32.xlu0 %v7402
    %v7434 = vpop.xlane.xlu0 %7433
    %7435 = vadd.xlane.f32.xlu0 %v7404
    %v7436 = vpop.xlane.xlu0 %7435
    %7437 = vadd.xlane.f32.xlu0 %v7406
    %v7438 = vpop.xlane.xlu0 %7437
    %7439 = vadd.xlane.f32.xlu0 %v7408
    %v7440 = vpop.xlane.xlu0 %7439
    %7441 = vadd.xlane.f32.xlu0 %v7410
    %v7442 = vpop.xlane.xlu0 %7441
    %7443 = vadd.xlane.f32.xlu0 %v7412
    %v7444 = vpop.xlane.xlu0 %7443
    %v7445 = vrcp.pop %v7414
    %v7446 = vrcp.pop %v7416
    %v7447 = vrcp.pop %v7418
    %v7448 = vrcp.pop %v7420
    %v7449 = vrcp.pop %v7422
    %v7450 = vrcp.pop %v7424
    %v7451 = vrcp.pop %v7426
    %v7452 = vrcp.pop %v7428
    %v7453 = vrcp.pop %v7430
    %v7454 = vrcp.pop %v7432
    %v7455 = vrcp.pop %v7434
    %v7456 = vrcp.pop %v7436
    %v7457 = vrcp.pop %v7438
    %v7458 = vrcp.pop %v7440
    %v7459 = vrcp.pop %v7442
    %v7460 = vrcp.pop %v7444
    %v7461 = vmul.f32 %v7382, %v7445
    %v7462 = vmul.f32 %v7384, %v7446
    %v7463 = vmul.f32 %v7386, %v7447
    %v7464 = vmul.f32 %v7388, %v7448
    %v7465 = vmul.f32 %v7390, %v7449
    %v7466 = vmul.f32 %v7392, %v7450
    %v7467 = vmul.f32 %v7394, %v7451
    %v7468 = vmul.f32 %v7396, %v7452
    %v7469 = vmul.f32 %v7398, %v7453
    %v7470 = vmul.f32 %v7400, %v7454
    %v7471 = vmul.f32 %v7402, %v7455
    %v7472 = vmul.f32 %v7404, %v7456
    %v7473 = vmul.f32 %v7406, %v7457
    %v7474 = vmul.f32 %v7408, %v7458
    %v7475 = vmul.f32 %v7410, %v7459
    %v7476 = vmul.f32 %v7412, %v7460
    %v7477 = vpack.c.bf16 %v7462, %v7461
    %v7478 = vpack.c.bf16 %v7464, %v7463
    %v7479 = vpack.c.bf16 %v7466, %v7465
    %v7480 = vpack.c.bf16 %v7468, %v7467
    %v7481 = vpack.c.bf16 %v7470, %v7469
    %v7482 = vpack.c.bf16 %v7472, %v7471
    %v7483 = vpack.c.bf16 %v7474, %v7473
    %v7484 = vpack.c.bf16 %v7476, %v7475
    %7485 = vrot.lane.b32.xlu0 %v5358, 40
    %v7486 = vpop.permute.xlu0 %7485
    %7487 = vrot.lane.b32.xlu0 %v5359, 40
    %v7488 = vpop.permute.xlu0 %7487
    %7489 = vrot.lane.b32.xlu0 %v5360, 40
    %v7490 = vpop.permute.xlu0 %7489
    %7491 = vrot.lane.b32.xlu0 %v5361, 40
    %v7492 = vpop.permute.xlu0 %7491
    %7493 = vrot.lane.b32.xlu0 %v5362, 40
    %v7494 = vpop.permute.xlu0 %7493
    %7495 = vrot.lane.b32.xlu0 %v5363, 40
    %v7496 = vpop.permute.xlu0 %7495
    %7497 = vrot.lane.b32.xlu0 %v5364, 40
    %v7498 = vpop.permute.xlu0 %7497
    %7499 = vrot.lane.b32.xlu0 %v5365, 40
    %v7500 = vpop.permute.xlu0 %7499
    %7509 = vmatprep.subr.bf16.mxu0 0
    %7510 = vmatpush1.bf16.msra.mxu0 %v7486
    %7511 = vmatprep.subr.bf16.mxu0 0
    %7512 = vmatpush1.bf16.msra.mxu0 %v7488
    %7513 = vmatprep.subr.bf16.mxu0 0
    %7514 = vmatpush1.bf16.msra.mxu0 %v7490
    %7515 = vmatprep.subr.bf16.mxu0 0
    %7516 = vmatpush1.bf16.msra.mxu0 %v7492
    %7517 = vmatprep.subr.bf16.mxu0 0
    %7518 = vmatpush1.bf16.msra.mxu0 %v7494
    %7519 = vmatprep.subr.bf16.mxu0 0
    %7520 = vmatpush1.bf16.msra.mxu0 %v7496
    %7521 = vmatprep.subr.bf16.mxu0 0
    %7522 = vmatpush1.bf16.msra.mxu0 %v7498
    %7523 = vmatprep.subr.bf16.mxu0 0
    %7524 = vmatpush1.bf16.msra.mxu0 %v7500
    %7525 = vmatprep.subr.bf16.mxu0 0
    %7526 = vmatpush1.bf16.msra.mxu0 0
    %7527 = vmatprep.subr.bf16.mxu0 0
    %7528 = vmatpush1.bf16.msra.mxu0 0
    %7529 = vmatprep.subr.bf16.mxu0 0
    %7530 = vmatpush1.bf16.msra.mxu0 0
    %7531 = vmatprep.subr.bf16.mxu0 0
    %7532 = vmatpush1.bf16.msra.mxu0 0
    %7533 = vmatprep.subr.bf16.mxu0 0
    %7534 = vmatpush1.bf16.msra.mxu0 0
    %7535 = vmatprep.subr.bf16.mxu0 0
    %7536 = vmatpush1.bf16.msra.mxu0 0
    %7537 = vmatprep.subr.bf16.mxu0 0
    %7538 = vmatpush1.bf16.msra.mxu0 0
    %7539 = vmatprep.subr.bf16.mxu0 0
    %7540 = vmatpush1.bf16.msra.mxu0 0
    %7541 = vmatprep.mubr.bf16.mxu0 0
    %7542 = vmatmul.mubr.bf16.gmra.mrb[0].mxu0 %v7477
    %v7543 = vpop.f32.mrb[0].mxu0
    %v7544 = vadd.f32 0.0, %v7543
    %v7545 = vpop.f32.mrb[0].mxu0
    %v7546 = vpop.f32.mrb[0].mxu0
    %v7547 = vadd.f32 0.0, %v7546
    %v7548 = vpop.f32.mrb[0].mxu0
    %7549 = vmatprep.mubr.bf16.mxu0 0
    %7550 = vmatmul.mubr.bf16.gmra.mrb[0].mxu0 %v7478
    %v7551 = vpop.f32.mrb[0].mxu0
    %v7552 = vadd.f32 0.0, %v7551
    %v7553 = vpop.f32.mrb[0].mxu0
    %v7554 = vpop.f32.mrb[0].mxu0
    %v7555 = vadd.f32 0.0, %v7554
    %v7556 = vpop.f32.mrb[0].mxu0
    %7557 = vmatprep.mubr.bf16.mxu0 0
    %7558 = vmatmul.mubr.bf16.gmra.mrb[0].mxu0 %v7479
    %v7559 = vpop.f32.mrb[0].mxu0
    %v7560 = vadd.f32 0.0, %v7559
    %v7561 = vpop.f32.mrb[0].mxu0
    %v7562 = vpop.f32.mrb[0].mxu0
    %v7563 = vadd.f32 0.0, %v7562
    %v7564 = vpop.f32.mrb[0].mxu0
    %7565 = vmatprep.mubr.bf16.mxu0 0
    %7566 = vmatmul.mubr.bf16.gmra.mrb[0].mxu0 %v7480
    %v7567 = vpop.f32.mrb[0].mxu0
    %v7568 = vadd.f32 0.0, %v7567
    %v7569 = vpop.f32.mrb[0].mxu0
    %v7570 = vpop.f32.mrb[0].mxu0
    %v7571 = vadd.f32 0.0, %v7570
    %v7572 = vpop.f32.mrb[0].mxu0
    %7573 = vmatprep.mubr.bf16.mxu0 0
    %7574 = vmatmul.mubr.bf16.gmra.mrb[0].mxu0 %v7481
    %v7575 = vpop.f32.mrb[0].mxu0
    %v7576 = vadd.f32 0.0, %v7575
    %v7577 = vpop.f32.mrb[0].mxu0
    %v7578 = vpop.f32.mrb[0].mxu0
    %v7579 = vadd.f32 0.0, %v7578
    %v7580 = vpop.f32.mrb[0].mxu0
    %7581 = vmatprep.mubr.bf16.mxu0 0
    %7582 = vmatmul.mubr.bf16.gmra.mrb[0].mxu0 %v7482
    %v7583 = vpop.f32.mrb[0].mxu0
    %v7584 = vadd.f32 0.0, %v7583
    %v7585 = vpop.f32.mrb[0].mxu0
    %v7586 = vpop.f32.mrb[0].mxu0
    %v7587 = vadd.f32 0.0, %v7586
    %v7588 = vpop.f32.mrb[0].mxu0
    %7589 = vmatprep.mubr.bf16.mxu0 0
    %7590 = vmatmul.mubr.bf16.gmra.mrb[0].mxu0 %v7483
    %v7591 = vpop.f32.mrb[0].mxu0
    %v7592 = vadd.f32 0.0, %v7591
    %v7593 = vpop.f32.mrb[0].mxu0
    %v7594 = vpop.f32.mrb[0].mxu0
    %v7595 = vadd.f32 0.0, %v7594
    %v7596 = vpop.f32.mrb[0].mxu0
    %7597 = vmatprep.mubr.bf16.mxu0 0
    %7598 = vmatmul.mubr.bf16.gmra.mrb[0].mxu0 %v7484
    %v7599 = vpop.f32.mrb[0].mxu0
    %v7600 = vadd.f32 0.0, %v7599
    %v7601 = vpop.f32.mrb[0].mxu0
    %v7602 = vpop.f32.mrb[0].mxu0
    %v7603 = vadd.f32 0.0, %v7602
    %v7604 = vpop.f32.mrb[0].mxu0
    %7605 = vdwg.mxu0
    %v7606 = vpack.c.bf16 %v7547, %v7544
    %v7607 = vpack.c.bf16 %v7555, %v7552
    %v7608 = vpack.c.bf16 %v7563, %v7560
    %v7609 = vpack.c.bf16 %v7571, %v7568
    %v7610 = vpack.c.bf16 %v7579, %v7576
    %v7611 = vpack.c.bf16 %v7587, %v7584
    %v7612 = vpack.c.bf16 %v7595, %v7592
    %v7613 = vpack.c.bf16 %v7603, %v7600
    %v7614 = vld [vmem:[%s5816 + $0xc] sm:$0xf]
    %v7616 = vsel %vm253, %v7606, 0
    %v7619 = vsel %vm253, %v7607, 0
    %v7622 = vsel %vm253, %v7608, 0
    %v7625 = vsel %vm253, %v7609, 0
    %v7628 = vsel %vm253, %v7610, 0
    %v7631 = vsel %vm253, %v7611, 0
    %v7634 = vsel %vm253, %v7612, 0
    %v7637 = vsel %vm253, %v7613, 0
    %v7640 = vsel %vm705, %v7614, 0
    %7642 = vmatprep.subr.bf16.mxu0 0
    %7643 = vmatpush1.bf16.msra.mxu0 %v7640
    %7644 = vmatprep.subr.bf16.mxu0 0
    %7645 = vmatpush1.bf16.msra.mxu0 0
    %7646 = vmatprep.subr.bf16.mxu0 0
    %7647 = vmatpush1.bf16.msra.mxu0 0
    %7648 = vmatprep.subr.bf16.mxu0 0
    %7649 = vmatpush1.bf16.msra.mxu0 0
    %7650 = vmatprep.subr.bf16.mxu0 0
    %7651 = vmatpush1.bf16.msra.mxu0 0
    %7652 = vmatprep.subr.bf16.mxu0 0
    %7653 = vmatpush1.bf16.msra.mxu0 0
    %7654 = vmatprep.subr.bf16.mxu0 0
    %7655 = vmatpush1.bf16.msra.mxu0 0
    %7656 = vmatprep.subr.bf16.mxu0 0
    %7657 = vmatpush1.bf16.msra.mxu0 0
    %7658 = vmatprep.subr.bf16.mxu0 0
    %7659 = vmatpush1.bf16.msra.mxu0 0
    %7660 = vmatprep.subr.bf16.mxu0 0
    %7661 = vmatpush1.bf16.msra.mxu0 0
    %7662 = vmatprep.subr.bf16.mxu0 0
    %7663 = vmatpush1.bf16.msra.mxu0 0
    %7664 = vmatprep.subr.bf16.mxu0 0
    %7665 = vmatpush1.bf16.msra.mxu0 0
    %7666 = vmatprep.subr.bf16.mxu0 0
    %7667 = vmatpush1.bf16.msra.mxu0 0
    %7668 = vmatprep.subr.bf16.mxu0 0
    %7669 = vmatpush1.bf16.msra.mxu0 0
    %7670 = vmatprep.subr.bf16.mxu0 0
    %7671 = vmatpush1.bf16.msra.mxu0 0
    %7672 = vmatprep.subr.bf16.mxu0 0
    %7673 = vmatpush1.bf16.msra.mxu0 0
    %7674 = vmatprep.mubr.bf16.mxu0 0
    %7675 = vmatmul.mubr.bf16.gmra.mrb[0].mxu0 %v7616
    %v7676 = vpop.f32.mrb[0].mxu0
    %v7677 = vadd.f32 0.0, %v7676
    %v7678 = vpop.f32.mrb[0].mxu0
    %v7679 = vpop.f32.mrb[0].mxu0
    %v7680 = vadd.f32 0.0, %v7679
    %v7681 = vpop.f32.mrb[0].mxu0
    %7682 = vmatprep.mubr.bf16.mxu0 0
    %7683 = vmatmul.mubr.bf16.gmra.mrb[0].mxu0 %v7619
    %v7684 = vpop.f32.mrb[0].mxu0
    %v7685 = vadd.f32 0.0, %v7684
    %v7686 = vpop.f32.mrb[0].mxu0
    %v7687 = vpop.f32.mrb[0].mxu0
    %v7688 = vadd.f32 0.0, %v7687
    %v7689 = vpop.f32.mrb[0].mxu0
    %7690 = vmatprep.mubr.bf16.mxu0 0
    %7691 = vmatmul.mubr.bf16.gmra.mrb[0].mxu0 %v7622
    %v7692 = vpop.f32.mrb[0].mxu0
    %v7693 = vadd.f32 0.0, %v7692
    %v7694 = vpop.f32.mrb[0].mxu0
    %v7695 = vpop.f32.mrb[0].mxu0
    %v7696 = vadd.f32 0.0, %v7695
    %v7697 = vpop.f32.mrb[0].mxu0
    %7698 = vmatprep.mubr.bf16.mxu0 0
    %7699 = vmatmul.mubr.bf16.gmra.mrb[0].mxu0 %v7625
    %v7700 = vpop.f32.mrb[0].mxu0
    %v7701 = vadd.f32 0.0, %v7700
    %v7702 = vpop.f32.mrb[0].mxu0
    %v7703 = vpop.f32.mrb[0].mxu0
    %v7704 = vadd.f32 0.0, %v7703
    %v7705 = vpop.f32.mrb[0].mxu0
    %7706 = vmatprep.mubr.bf16.mxu0 0
    %7707 = vmatmul.mubr.bf16.gmra.mrb[0].mxu0 %v7628
    %v7708 = vpop.f32.mrb[0].mxu0
    %v7709 = vadd.f32 0.0, %v7708
    %v7710 = vpop.f32.mrb[0].mxu0
    %v7711 = vpop.f32.mrb[0].mxu0
    %v7712 = vadd.f32 0.0, %v7711
    %v7713 = vpop.f32.mrb[0].mxu0
    %7714 = vmatprep.mubr.bf16.mxu0 0
    %7715 = vmatmul.mubr.bf16.gmra.mrb[0].mxu0 %v7631
    %v7716 = vpop.f32.mrb[0].mxu0
    %v7717 = vadd.f32 0.0, %v7716
    %v7718 = vpop.f32.mrb[0].mxu0
    %v7719 = vpop.f32.mrb[0].mxu0
    %v7720 = vadd.f32 0.0, %v7719
    %v7721 = vpop.f32.mrb[0].mxu0
    %7722 = vmatprep.mubr.bf16.mxu0 0
    %7723 = vmatmul.mubr.bf16.gmra.mrb[0].mxu0 %v7634
    %v7724 = vpop.f32.mrb[0].mxu0
    %v7725 = vadd.f32 0.0, %v7724
    %v7726 = vpop.f32.mrb[0].mxu0
    %v7727 = vpop.f32.mrb[0].mxu0
    %v7728 = vadd.f32 0.0, %v7727
    %v7729 = vpop.f32.mrb[0].mxu0
    %7730 = vmatprep.mubr.bf16.mxu0 0
    %7731 = vmatmul.mubr.bf16.gmra.mrb[0].mxu0 %v7637
    %v7732 = vpop.f32.mrb[0].mxu0
    %v7733 = vadd.f32 0.0, %v7732
    %v7734 = vpop.f32.mrb[0].mxu0
    %v7735 = vpop.f32.mrb[0].mxu0
    %v7736 = vadd.f32 0.0, %v7735
    %v7737 = vpop.f32.mrb[0].mxu0
    %7738 = vdwg.mxu0
    %v7739 = vadd.f32 %v7140, %v7677
    %v7740 = vadd.f32 %v7141, %v7680
    %v7741 = vadd.f32 %v7142, %v7685
    %v7742 = vadd.f32 %v7143, %v7688
    %v7743 = vadd.f32 %v7144, %v7693
    %v7744 = vadd.f32 %v7145, %v7696
    %v7745 = vadd.f32 %v7146, %v7701
    %v7746 = vadd.f32 %v7147, %v7704
    %v7747 = vadd.f32 %v7148, %v7709
    %v7748 = vadd.f32 %v7149, %v7712
    %v7749 = vadd.f32 %v7150, %v7717
    %v7750 = vadd.f32 %v7151, %v7720
    %v7751 = vadd.f32 %v7152, %v7725
    %v7752 = vadd.f32 %v7153, %v7728
    %v7753 = vadd.f32 %v7154, %v7733
    %v7754 = vadd.f32 %v7155, %v7736
    %v7755 = vpack.c.bf16 %v7740, %v7739
    %v7756 = vpack.c.bf16 %v7742, %v7741
    %v7757 = vpack.c.bf16 %v7744, %v7743
    %v7758 = vpack.c.bf16 %v7746, %v7745
    %v7759 = vpack.c.bf16 %v7748, %v7747
    %v7760 = vpack.c.bf16 %v7750, %v7749
    %v7761 = vpack.c.bf16 %v7752, %v7751
    %v7762 = vpack.c.bf16 %v7754, %v7753
    %s7763 = scalar_lea.vmem %s3, 48
    %v7764 = vld [vmem:[%s7763] sm:$0xf]
    %v7765 = vld [vmem:[%s7763 + $0x4] sm:$0xf]
    %v7766 = vld [vmem:[%s7763 + $0x8] sm:$0xf]
    %v7767 = vld [vmem:[%s7763 + $0xc] sm:$0xf]
    %s7768 = scalar_lea.vmem %s4, 3
    %v7769 = vld [vmem:[%s7768] sm:$0x1]
    %v7771 = vlaneseq
    %v7772 = vshrl.u32 %v7771, 7
    %v7773 = vsub.s32 0, %v7772
    %v7774 = vrot.slane %v7769, %v7773
    %v7780 = vunpack.c.l.b16 %v7764
    %v7781 = vunpack.c.l.b16 %v7765
    %v7782 = vunpack.c.l.b16 %v7766
    %v7783 = vunpack.c.l.b16 %v7767
    %v7784 = vpack.c.b16 %v7781, %v7780
    %v7785 = vpack.c.b16 %v7783, %v7782
    %v7789 = vsel %vm75, %v7755, 0
    %v7792 = vsel %vm75, %v7756, 0
    %v7795 = vsel %vm75, %v7757, 0
    %v7798 = vsel %vm75, %v7758, 0
    %v7801 = vsel %vm75, %v7759, 0
    %v7804 = vsel %vm75, %v7760, 0
    %v7807 = vsel %vm75, %v7761, 0
    %v7810 = vsel %vm75, %v7762, 0
    %7812 = vmatprep.subr.bf16.mxu0 0
    %7813 = vmatpush1.bf16.msra.mxu0 %v7784
    %7814 = vmatprep.subr.bf16.mxu0 0
    %7815 = vmatpush1.bf16.msra.mxu0 %v7785
    %7816 = vmatprep.subr.bf16.mxu0 0
    %7817 = vmatpush1.bf16.msra.mxu0 0
    %7818 = vmatprep.subr.bf16.mxu0 0
    %7819 = vmatpush1.bf16.msra.mxu0 0
    %7820 = vmatprep.subr.bf16.mxu0 0
    %7821 = vmatpush1.bf16.msra.mxu0 0
    %7822 = vmatprep.subr.bf16.mxu0 0
    %7823 = vmatpush1.bf16.msra.mxu0 0
    %7824 = vmatprep.subr.bf16.mxu0 0
    %7825 = vmatpush1.bf16.msra.mxu0 0
    %7826 = vmatprep.subr.bf16.mxu0 0
    %7827 = vmatpush1.bf16.msra.mxu0 0
    %7828 = vmatprep.subr.bf16.mxu0 0
    %7829 = vmatpush1.bf16.msra.mxu0 0
    %7830 = vmatprep.subr.bf16.mxu0 0
    %7831 = vmatpush1.bf16.msra.mxu0 0
    %7832 = vmatprep.subr.bf16.mxu0 0
    %7833 = vmatpush1.bf16.msra.mxu0 0
    %7834 = vmatprep.subr.bf16.mxu0 0
    %7835 = vmatpush1.bf16.msra.mxu0 0
    %7836 = vmatprep.subr.bf16.mxu0 0
    %7837 = vmatpush1.bf16.msra.mxu0 0
    %7838 = vmatprep.subr.bf16.mxu0 0
    %7839 = vmatpush1.bf16.msra.mxu0 0
    %7840 = vmatprep.subr.bf16.mxu0 0
    %7841 = vmatpush1.bf16.msra.mxu0 0
    %7842 = vmatprep.subr.bf16.mxu0 0
    %7843 = vmatpush1.bf16.msra.mxu0 0
    %7844 = vmatprep.mubr.bf16.mxu0 0
    %7845 = vmatmul.mubr.bf16.gmra.mrb[0].mxu0 %v7789
    %v7846 = vpop.f32.mrb[0].mxu0
    %v7847 = vadd.f32 %v7774, %v7846
    %v7848 = vpop.f32.mrb[0].mxu0
    %v7849 = vpop.f32.mrb[0].mxu0
    %v7850 = vadd.f32 %v7774, %v7849
    %v7851 = vpop.f32.mrb[0].mxu0
    %7852 = vmatprep.mubr.bf16.mxu0 0
    %7853 = vmatmul.mubr.bf16.gmra.mrb[0].mxu0 %v7792
    %v7854 = vpop.f32.mrb[0].mxu0
    %v7855 = vadd.f32 %v7774, %v7854
    %v7856 = vpop.f32.mrb[0].mxu0
    %v7857 = vpop.f32.mrb[0].mxu0
    %v7858 = vadd.f32 %v7774, %v7857
    %v7859 = vpop.f32.mrb[0].mxu0
    %7860 = vmatprep.mubr.bf16.mxu0 0
    %7861 = vmatmul.mubr.bf16.gmra.mrb[0].mxu0 %v7795
    %v7862 = vpop.f32.mrb[0].mxu0
    %v7863 = vadd.f32 %v7774, %v7862
    %v7864 = vpop.f32.mrb[0].mxu0
    %v7865 = vpop.f32.mrb[0].mxu0
    %v7866 = vadd.f32 %v7774, %v7865
    %v7867 = vpop.f32.mrb[0].mxu0
    %7868 = vmatprep.mubr.bf16.mxu0 0
    %7869 = vmatmul.mubr.bf16.gmra.mrb[0].mxu0 %v7798
    %v7870 = vpop.f32.mrb[0].mxu0
    %v7871 = vadd.f32 %v7774, %v7870
    %v7872 = vpop.f32.mrb[0].mxu0
    %v7873 = vpop.f32.mrb[0].mxu0
    %v7874 = vadd.f32 %v7774, %v7873
    %v7875 = vpop.f32.mrb[0].mxu0
    %7876 = vmatprep.mubr.bf16.mxu0 0
    %7877 = vmatmul.mubr.bf16.gmra.mrb[0].mxu0 %v7801
    %v7878 = vpop.f32.mrb[0].mxu0
    %v7879 = vadd.f32 %v7774, %v7878
    %v7880 = vpop.f32.mrb[0].mxu0
    %v7881 = vpop.f32.mrb[0].mxu0
    %v7882 = vadd.f32 %v7774, %v7881
    %v7883 = vpop.f32.mrb[0].mxu0
    %7884 = vmatprep.mubr.bf16.mxu0 0
    %7885 = vmatmul.mubr.bf16.gmra.mrb[0].mxu0 %v7804
    %v7886 = vpop.f32.mrb[0].mxu0
    %v7887 = vadd.f32 %v7774, %v7886
    %v7888 = vpop.f32.mrb[0].mxu0
    %v7889 = vpop.f32.mrb[0].mxu0
    %v7890 = vadd.f32 %v7774, %v7889
    %v7891 = vpop.f32.mrb[0].mxu0
    %7892 = vmatprep.mubr.bf16.mxu0 0
    %7893 = vmatmul.mubr.bf16.gmra.mrb[0].mxu0 %v7807
    %v7894 = vpop.f32.mrb[0].mxu0
    %v7895 = vadd.f32 %v7774, %v7894
    %v7896 = vpop.f32.mrb[0].mxu0
    %v7897 = vpop.f32.mrb[0].mxu0
    %v7898 = vadd.f32 %v7774, %v7897
    %v7899 = vpop.f32.mrb[0].mxu0
    %7900 = vmatprep.mubr.bf16.mxu0 0
    %7901 = vmatmul.mubr.bf16.gmra.mrb[0].mxu0 %v7810
    %v7902 = vpop.f32.mrb[0].mxu0
    %v7903 = vadd.f32 %v7774, %v7902
    %v7904 = vpop.f32.mrb[0].mxu0
    %v7905 = vpop.f32.mrb[0].mxu0
    %v7906 = vadd.f32 %v7774, %v7905
    %v7907 = vpop.f32.mrb[0].mxu0
    %7908 = vdwg.mxu0
    %s7909 = scalar_lea.vmem %s6, 3
    %v7910 = vld [vmem:[%s7909] sm:$0x1]
    %v7912 = vlaneseq
    %v7913 = vshrl.u32 %v7912, 7
    %v7914 = vsub.s32 0, %v7913
    %v7915 = vrot.slane %v7910, %v7914
    %v7917 = vadd.f32 %v7915, 0.0
    %v7918 = vpack.c.bf16 %v7850, %v7847
    %v7919 = vpack.c.bf16 %v7858, %v7855
    %v7920 = vpack.c.bf16 %v7866, %v7863
    %v7921 = vpack.c.bf16 %v7874, %v7871
    %v7922 = vpack.c.bf16 %v7882, %v7879
    %v7923 = vpack.c.bf16 %v7890, %v7887
    %v7924 = vpack.c.bf16 %v7898, %v7895
    %v7925 = vpack.c.bf16 %v7906, %v7903
    %7934 = vrot.lane.b32.xlu0 %v7918, 96
    %v7935 = vpop.permute.xlu0 %7934
    %7936 = vrot.lane.b32.xlu0 %v7919, 96
    %v7937 = vpop.permute.xlu0 %7936
    %7938 = vrot.lane.b32.xlu0 %v7920, 96
    %v7939 = vpop.permute.xlu0 %7938
    %7940 = vrot.lane.b32.xlu0 %v7921, 96
    %v7941 = vpop.permute.xlu0 %7940
    %7942 = vrot.lane.b32.xlu0 %v7922, 96
    %v7943 = vpop.permute.xlu0 %7942
    %7944 = vrot.lane.b32.xlu0 %v7923, 96
    %v7945 = vpop.permute.xlu0 %7944
    %7946 = vrot.lane.b32.xlu0 %v7924, 96
    %v7947 = vpop.permute.xlu0 %7946
    %7948 = vrot.lane.b32.xlu0 %v7925, 96
    %v7949 = vpop.permute.xlu0 %7948
    %v7951 = vsel %vm253, %v7918, 0
    %v7954 = vsel %vm253, %v7919, 0
    %v7957 = vsel %vm253, %v7920, 0
    %v7960 = vsel %vm253, %v7921, 0
    %v7963 = vsel %vm253, %v7922, 0
    %v7966 = vsel %vm253, %v7923, 0
    %v7969 = vsel %vm253, %v7924, 0
    %v7972 = vsel %vm253, %v7925, 0
    %v7975 = vsel %vm253, %v7935, 0
    %v7978 = vsel %vm253, %v7937, 0
    %v7981 = vsel %vm253, %v7939, 0
    %v7984 = vsel %vm253, %v7941, 0
    %v7987 = vsel %vm253, %v7943, 0
    %v7990 = vsel %vm253, %v7945, 0
    %v7993 = vsel %vm253, %v7947, 0
    %v7996 = vsel %vm253, %v7949, 0
    %7998 = vmatprep.subr.bf16.mxu0 0
    %7999 = vmatpush1.bf16.xpose.msra.mxu0 %v7975
    %8000 = vmatprep.subr.bf16.mxu0 0
    %8001 = vmatpush1.bf16.xpose.msra.mxu0 %v7978
    %8002 = vmatprep.subr.bf16.mxu0 0
    %8003 = vmatpush1.bf16.xpose.msra.mxu0 %v7981
    %8004 = vmatprep.subr.bf16.mxu0 0
    %8005 = vmatpush1.bf16.xpose.msra.mxu0 %v7984
    %8006 = vmatprep.subr.bf16.mxu0 0
    %8007 = vmatpush1.bf16.xpose.msra.mxu0 %v7987
    %8008 = vmatprep.subr.bf16.mxu0 0
    %8009 = vmatpush1.bf16.xpose.msra.mxu0 %v7990
    %8010 = vmatprep.subr.bf16.mxu0 0
    %8011 = vmatpush1.bf16.xpose.msra.mxu0 %v7993
    %8012 = vmatprep.subr.bf16.mxu0 0
    %8013 = vmatpush1.bf16.xpose.msra.mxu0 %v7996
    %8014 = vmatprep.subr.bf16.mxu0 0
    %8015 = vmatpush1.bf16.xpose.msra.mxu0 0
    %8016 = vmatprep.subr.bf16.mxu0 0
    %8017 = vmatpush1.bf16.xpose.msra.mxu0 0
    %8018 = vmatprep.subr.bf16.mxu0 0
    %8019 = vmatpush1.bf16.xpose.msra.mxu0 0
    %8020 = vmatprep.subr.bf16.mxu0 0
    %8021 = vmatpush1.bf16.xpose.msra.mxu0 0
    %8022 = vmatprep.subr.bf16.mxu0 0
    %8023 = vmatpush1.bf16.xpose.msra.mxu0 0
    %8024 = vmatprep.subr.bf16.mxu0 0
    %8025 = vmatpush1.bf16.xpose.msra.mxu0 0
    %8026 = vmatprep.subr.bf16.mxu0 0
    %8027 = vmatpush1.bf16.xpose.msra.mxu0 0
    %8028 = vmatprep.subr.bf16.mxu0 0
    %8029 = vmatpush1.bf16.xpose.msra.mxu0 0
    %8030 = vmatprep.mubr.bf16.mxu0 0
    %8031 = vmatmul.mubr.bf16.gmra.mrb[0].mxu0 %v7951
    %v8032 = vpop.f32.mrb[0].mxu0
    %v8033 = vadd.f32 %v2790, %v8032
    %v8034 = vpop.f32.mrb[0].mxu0
    %v8035 = vpop.f32.mrb[0].mxu0
    %v8036 = vadd.f32 %v2791, %v8035
    %v8037 = vpop.f32.mrb[0].mxu0
    %8038 = vmatprep.mubr.bf16.mxu0 0
    %8039 = vmatmul.mubr.bf16.gmra.mrb[0].mxu0 %v7954
    %v8040 = vpop.f32.mrb[0].mxu0
    %v8041 = vadd.f32 %v2792, %v8040
    %v8042 = vpop.f32.mrb[0].mxu0
    %v8043 = vpop.f32.mrb[0].mxu0
    %v8044 = vadd.f32 %v2793, %v8043
    %v8045 = vpop.f32.mrb[0].mxu0
    %8046 = vmatprep.mubr.bf16.mxu0 0
    %8047 = vmatmul.mubr.bf16.gmra.mrb[0].mxu0 %v7957
    %v8048 = vpop.f32.mrb[0].mxu0
    %v8049 = vadd.f32 %v2794, %v8048
    %v8050 = vpop.f32.mrb[0].mxu0
    %v8051 = vpop.f32.mrb[0].mxu0
    %v8052 = vadd.f32 %v2795, %v8051
    %v8053 = vpop.f32.mrb[0].mxu0
    %8054 = vmatprep.mubr.bf16.mxu0 0
    %8055 = vmatmul.mubr.bf16.gmra.mrb[0].mxu0 %v7960
    %v8056 = vpop.f32.mrb[0].mxu0
    %v8057 = vadd.f32 %v2796, %v8056
    %v8058 = vpop.f32.mrb[0].mxu0
    %v8059 = vpop.f32.mrb[0].mxu0
    %v8060 = vadd.f32 %v2797, %v8059
    %v8061 = vpop.f32.mrb[0].mxu0
    %8062 = vmatprep.mubr.bf16.mxu0 0
    %8063 = vmatmul.mubr.bf16.gmra.mrb[0].mxu0 %v7963
    %v8064 = vpop.f32.mrb[0].mxu0
    %v8065 = vadd.f32 %v2798, %v8064
    %v8066 = vpop.f32.mrb[0].mxu0
    %v8067 = vpop.f32.mrb[0].mxu0
    %v8068 = vadd.f32 %v2799, %v8067
    %v8069 = vpop.f32.mrb[0].mxu0
    %8070 = vmatprep.mubr.bf16.mxu0 0
    %8071 = vmatmul.mubr.bf16.gmra.mrb[0].mxu0 %v7966
    %v8072 = vpop.f32.mrb[0].mxu0
    %v8073 = vadd.f32 %v2800, %v8072
    %v8074 = vpop.f32.mrb[0].mxu0
    %v8075 = vpop.f32.mrb[0].mxu0
    %v8076 = vadd.f32 %v2801, %v8075
    %v8077 = vpop.f32.mrb[0].mxu0
    %8078 = vmatprep.mubr.bf16.mxu0 0
    %8079 = vmatmul.mubr.bf16.gmra.mrb[0].mxu0 %v7969
    %v8080 = vpop.f32.mrb[0].mxu0
    %v8081 = vadd.f32 %v2802, %v8080
    %v8082 = vpop.f32.mrb[0].mxu0
    %v8083 = vpop.f32.mrb[0].mxu0
    %v8084 = vadd.f32 %v2803, %v8083
    %v8085 = vpop.f32.mrb[0].mxu0
    %8086 = vmatprep.mubr.bf16.mxu0 0
    %8087 = vmatmul.mubr.bf16.gmra.mrb[0].mxu0 %v7972
    %v8088 = vpop.f32.mrb[0].mxu0
    %v8089 = vadd.f32 %v2804, %v8088
    %v8090 = vpop.f32.mrb[0].mxu0
    %v8091 = vpop.f32.mrb[0].mxu0
    %v8092 = vadd.f32 %v2805, %v8091
    %v8093 = vpop.f32.mrb[0].mxu0
    %8094 = vdwg.mxu0
    %8095 = vmax.xlane.f32.xlu0 %v8033
    %v8096 = vpop.xlane.xlu0 %8095
    %8097 = vmax.xlane.f32.xlu0 %v8036
    %v8098 = vpop.xlane.xlu0 %8097
    %8099 = vmax.xlane.f32.xlu0 %v8041
    %v8100 = vpop.xlane.xlu0 %8099
    %8101 = vmax.xlane.f32.xlu0 %v8044
    %v8102 = vpop.xlane.xlu0 %8101
    %8103 = vmax.xlane.f32.xlu0 %v8049
    %v8104 = vpop.xlane.xlu0 %8103
    %8105 = vmax.xlane.f32.xlu0 %v8052
    %v8106 = vpop.xlane.xlu0 %8105
    %8107 = vmax.xlane.f32.xlu0 %v8057
    %v8108 = vpop.xlane.xlu0 %8107
    %8109 = vmax.xlane.f32.xlu0 %v8060
    %v8110 = vpop.xlane.xlu0 %8109
    %8111 = vmax.xlane.f32.xlu0 %v8065
    %v8112 = vpop.xlane.xlu0 %8111
    %8113 = vmax.xlane.f32.xlu0 %v8068
    %v8114 = vpop.xlane.xlu0 %8113
    %8115 = vmax.xlane.f32.xlu0 %v8073
    %v8116 = vpop.xlane.xlu0 %8115
    %8117 = vmax.xlane.f32.xlu0 %v8076
    %v8118 = vpop.xlane.xlu0 %8117
    %8119 = vmax.xlane.f32.xlu0 %v8081
    %v8120 = vpop.xlane.xlu0 %8119
    %8121 = vmax.xlane.f32.xlu0 %v8084
    %v8122 = vpop.xlane.xlu0 %8121
    %8123 = vmax.xlane.f32.xlu0 %v8089
    %v8124 = vpop.xlane.xlu0 %8123
    %8125 = vmax.xlane.f32.xlu0 %v8092
    %v8126 = vpop.xlane.xlu0 %8125
    %v8127 = vsub.f32 %v8033, %v8096
    %v8128 = vsub.f32 %v8036, %v8098
    %v8129 = vsub.f32 %v8041, %v8100
    %v8130 = vsub.f32 %v8044, %v8102
    %v8131 = vsub.f32 %v8049, %v8104
    %v8132 = vsub.f32 %v8052, %v8106
    %v8133 = vsub.f32 %v8057, %v8108
    %v8134 = vsub.f32 %v8060, %v8110
    %v8135 = vsub.f32 %v8065, %v8112
    %v8136 = vsub.f32 %v8068, %v8114
    %v8137 = vsub.f32 %v8073, %v8116
    %v8138 = vsub.f32 %v8076, %v8118
    %v8139 = vsub.f32 %v8081, %v8120
    %v8140 = vsub.f32 %v8084, %v8122
    %v8141 = vsub.f32 %v8089, %v8124
    %v8142 = vsub.f32 %v8092, %v8126
    %v8143 = vmul.f32 %v8127, 1.442695
    %v8144 = vpow.pop %v8143
    %v8145 = vmul.f32 %v8128, 1.442695
    %v8146 = vpow.pop %v8145
    %v8147 = vmul.f32 %v8129, 1.442695
    %v8148 = vpow.pop %v8147
    %v8149 = vmul.f32 %v8130, 1.442695
    %v8150 = vpow.pop %v8149
    %v8151 = vmul.f32 %v8131, 1.442695
    %v8152 = vpow.pop %v8151
    %v8153 = vmul.f32 %v8132, 1.442695
    %v8154 = vpow.pop %v8153
    %v8155 = vmul.f32 %v8133, 1.442695
    %v8156 = vpow.pop %v8155
    %v8157 = vmul.f32 %v8134, 1.442695
    %v8158 = vpow.pop %v8157
    %v8159 = vmul.f32 %v8135, 1.442695
    %v8160 = vpow.pop %v8159
    %v8161 = vmul.f32 %v8136, 1.442695
    %v8162 = vpow.pop %v8161
    %v8163 = vmul.f32 %v8137, 1.442695
    %v8164 = vpow.pop %v8163
    %v8165 = vmul.f32 %v8138, 1.442695
    %v8166 = vpow.pop %v8165
    %v8167 = vmul.f32 %v8139, 1.442695
    %v8168 = vpow.pop %v8167
    %v8169 = vmul.f32 %v8140, 1.442695
    %v8170 = vpow.pop %v8169
    %v8171 = vmul.f32 %v8141, 1.442695
    %v8172 = vpow.pop %v8171
    %v8173 = vmul.f32 %v8142, 1.442695
    %v8174 = vpow.pop %v8173
    %8175 = vadd.xlane.f32.xlu0 %v8144
    %v8176 = vpop.xlane.xlu0 %8175
    %8177 = vadd.xlane.f32.xlu0 %v8146
    %v8178 = vpop.xlane.xlu0 %8177
    %8179 = vadd.xlane.f32.xlu0 %v8148
    %v8180 = vpop.xlane.xlu0 %8179
    %8181 = vadd.xlane.f32.xlu0 %v8150
    %v8182 = vpop.xlane.xlu0 %8181
    %8183 = vadd.xlane.f32.xlu0 %v8152
    %v8184 = vpop.xlane.xlu0 %8183
    %8185 = vadd.xlane.f32.xlu0 %v8154
    %v8186 = vpop.xlane.xlu0 %8185
    %8187 = vadd.xlane.f32.xlu0 %v8156
    %v8188 = vpop.xlane.xlu0 %8187
    %8189 = vadd.xlane.f32.xlu0 %v8158
    %v8190 = vpop.xlane.xlu0 %8189
    %8191 = vadd.xlane.f32.xlu0 %v8160
    %v8192 = vpop.xlane.xlu0 %8191
    %8193 = vadd.xlane.f32.xlu0 %v8162
    %v8194 = vpop.xlane.xlu0 %8193
    %8195 = vadd.xlane.f32.xlu0 %v8164
    %v8196 = vpop.xlane.xlu0 %8195
    %8197 = vadd.xlane.f32.xlu0 %v8166
    %v8198 = vpop.xlane.xlu0 %8197
    %8199 = vadd.xlane.f32.xlu0 %v8168
    %v8200 = vpop.xlane.xlu0 %8199
    %8201 = vadd.xlane.f32.xlu0 %v8170
    %v8202 = vpop.xlane.xlu0 %8201
    %8203 = vadd.xlane.f32.xlu0 %v8172
    %v8204 = vpop.xlane.xlu0 %8203
    %8205 = vadd.xlane.f32.xlu0 %v8174
    %v8206 = vpop.xlane.xlu0 %8205
    %v8207 = vrcp.pop %v8176
    %v8208 = vrcp.pop %v8178
    %v8209 = vrcp.pop %v8180
    %v8210 = vrcp.pop %v8182
    %v8211 = vrcp.pop %v8184
    %v8212 = vrcp.pop %v8186
    %v8213 = vrcp.pop %v8188
    %v8214 = vrcp.pop %v8190
    %v8215 = vrcp.pop %v8192
    %v8216 = vrcp.pop %v8194
    %v8217 = vrcp.pop %v8196
    %v8218 = vrcp.pop %v8198
    %v8219 = vrcp.pop %v8200
    %v8220 = vrcp.pop %v8202
    %v8221 = vrcp.pop %v8204
    %v8222 = vrcp.pop %v8206
    %v8223 = vmul.f32 %v8144, %v8207
    %v8224 = vmul.f32 %v8146, %v8208
    %v8225 = vmul.f32 %v8148, %v8209
    %v8226 = vmul.f32 %v8150, %v8210
    %v8227 = vmul.f32 %v8152, %v8211
    %v8228 = vmul.f32 %v8154, %v8212
    %v8229 = vmul.f32 %v8156, %v8213
    %v8230 = vmul.f32 %v8158, %v8214
    %v8231 = vmul.f32 %v8160, %v8215
    %v8232 = vmul.f32 %v8162, %v8216
    %v8233 = vmul.f32 %v8164, %v8217
    %v8234 = vmul.f32 %v8166, %v8218
    %v8235 = vmul.f32 %v8168, %v8219
    %v8236 = vmul.f32 %v8170, %v8220
    %v8237 = vmul.f32 %v8172, %v8221
    %v8238 = vmul.f32 %v8174, %v8222
    %v8239 = vpack.c.bf16 %v8224, %v8223
    %v8240 = vpack.c.bf16 %v8226, %v8225
    %v8241 = vpack.c.bf16 %v8228, %v8227
    %v8242 = vpack.c.bf16 %v8230, %v8229
    %v8243 = vpack.c.bf16 %v8232, %v8231
    %v8244 = vpack.c.bf16 %v8234, %v8233
    %v8245 = vpack.c.bf16 %v8236, %v8235
    %v8246 = vpack.c.bf16 %v8238, %v8237
    %8247 = vrot.lane.b32.xlu0 %v7918, 64
    %v8248 = vpop.permute.xlu0 %8247
    %8249 = vrot.lane.b32.xlu0 %v7919, 64
    %v8250 = vpop.permute.xlu0 %8249
    %8251 = vrot.lane.b32.xlu0 %v7920, 64
    %v8252 = vpop.permute.xlu0 %8251
    %8253 = vrot.lane.b32.xlu0 %v7921, 64
    %v8254 = vpop.permute.xlu0 %8253
    %8255 = vrot.lane.b32.xlu0 %v7922, 64
    %v8256 = vpop.permute.xlu0 %8255
    %8257 = vrot.lane.b32.xlu0 %v7923, 64
    %v8258 = vpop.permute.xlu0 %8257
    %8259 = vrot.lane.b32.xlu0 %v7924, 64
    %v8260 = vpop.permute.xlu0 %8259
    %8261 = vrot.lane.b32.xlu0 %v7925, 64
    %v8262 = vpop.permute.xlu0 %8261
    %8271 = vmatprep.subr.bf16.mxu0 0
    %8272 = vmatpush1.bf16.msra.mxu0 %v8248
    %8273 = vmatprep.subr.bf16.mxu0 0
    %8274 = vmatpush1.bf16.msra.mxu0 %v8250
    %8275 = vmatprep.subr.bf16.mxu0 0
    %8276 = vmatpush1.bf16.msra.mxu0 %v8252
    %8277 = vmatprep.subr.bf16.mxu0 0
    %8278 = vmatpush1.bf16.msra.mxu0 %v8254
    %8279 = vmatprep.subr.bf16.mxu0 0
    %8280 = vmatpush1.bf16.msra.mxu0 %v8256
    %8281 = vmatprep.subr.bf16.mxu0 0
    %8282 = vmatpush1.bf16.msra.mxu0 %v8258
    %8283 = vmatprep.subr.bf16.mxu0 0
    %8284 = vmatpush1.bf16.msra.mxu0 %v8260
    %8285 = vmatprep.subr.bf16.mxu0 0
    %8286 = vmatpush1.bf16.msra.mxu0 %v8262
    %8287 = vmatprep.subr.bf16.mxu0 0
    %8288 = vmatpush1.bf16.msra.mxu0 0
    %8289 = vmatprep.subr.bf16.mxu0 0
    %8290 = vmatpush1.bf16.msra.mxu0 0
    %8291 = vmatprep.subr.bf16.mxu0 0
    %8292 = vmatpush1.bf16.msra.mxu0 0
    %8293 = vmatprep.subr.bf16.mxu0 0
    %8294 = vmatpush1.bf16.msra.mxu0 0
    %8295 = vmatprep.subr.bf16.mxu0 0
    %8296 = vmatpush1.bf16.msra.mxu0 0
    %8297 = vmatprep.subr.bf16.mxu0 0
    %8298 = vmatpush1.bf16.msra.mxu0 0
    %8299 = vmatprep.subr.bf16.mxu0 0
    %8300 = vmatpush1.bf16.msra.mxu0 0
    %8301 = vmatprep.subr.bf16.mxu0 0
    %8302 = vmatpush1.bf16.msra.mxu0 0
    %8303 = vmatprep.mubr.bf16.mxu0 0
    %8304 = vmatmul.mubr.bf16.gmra.mrb[0].mxu0 %v8239
    %v8305 = vpop.f32.mrb[0].mxu0
    %v8306 = vadd.f32 0.0, %v8305
    %v8307 = vpop.f32.mrb[0].mxu0
    %v8308 = vpop.f32.mrb[0].mxu0
    %v8309 = vadd.f32 0.0, %v8308
    %v8310 = vpop.f32.mrb[0].mxu0
    %8311 = vmatprep.mubr.bf16.mxu0 0
    %8312 = vmatmul.mubr.bf16.gmra.mrb[0].mxu0 %v8240
    %v8313 = vpop.f32.mrb[0].mxu0
    %v8314 = vadd.f32 0.0, %v8313
    %v8315 = vpop.f32.mrb[0].mxu0
    %v8316 = vpop.f32.mrb[0].mxu0
    %v8317 = vadd.f32 0.0, %v8316
    %v8318 = vpop.f32.mrb[0].mxu0
    %8319 = vmatprep.mubr.bf16.mxu0 0
    %8320 = vmatmul.mubr.bf16.gmra.mrb[0].mxu0 %v8241
    %v8321 = vpop.f32.mrb[0].mxu0
    %v8322 = vadd.f32 0.0, %v8321
    %v8323 = vpop.f32.mrb[0].mxu0
    %v8324 = vpop.f32.mrb[0].mxu0
    %v8325 = vadd.f32 0.0, %v8324
    %v8326 = vpop.f32.mrb[0].mxu0
    %8327 = vmatprep.mubr.bf16.mxu0 0
    %8328 = vmatmul.mubr.bf16.gmra.mrb[0].mxu0 %v8242
    %v8329 = vpop.f32.mrb[0].mxu0
    %v8330 = vadd.f32 0.0, %v8329
    %v8331 = vpop.f32.mrb[0].mxu0
    %v8332 = vpop.f32.mrb[0].mxu0
    %v8333 = vadd.f32 0.0, %v8332
    %v8334 = vpop.f32.mrb[0].mxu0
    %8335 = vmatprep.mubr.bf16.mxu0 0
    %8336 = vmatmul.mubr.bf16.gmra.mrb[0].mxu0 %v8243
    %v8337 = vpop.f32.mrb[0].mxu0
    %v8338 = vadd.f32 0.0, %v8337
    %v8339 = vpop.f32.mrb[0].mxu0
    %v8340 = vpop.f32.mrb[0].mxu0
    %v8341 = vadd.f32 0.0, %v8340
    %v8342 = vpop.f32.mrb[0].mxu0
    %8343 = vmatprep.mubr.bf16.mxu0 0
    %8344 = vmatmul.mubr.bf16.gmra.mrb[0].mxu0 %v8244
    %v8345 = vpop.f32.mrb[0].mxu0
    %v8346 = vadd.f32 0.0, %v8345
    %v8347 = vpop.f32.mrb[0].mxu0
    %v8348 = vpop.f32.mrb[0].mxu0
    %v8349 = vadd.f32 0.0, %v8348
    %v8350 = vpop.f32.mrb[0].mxu0
    %8351 = vmatprep.mubr.bf16.mxu0 0
    %8352 = vmatmul.mubr.bf16.gmra.mrb[0].mxu0 %v8245
    %v8353 = vpop.f32.mrb[0].mxu0
    %v8354 = vadd.f32 0.0, %v8353
    %v8355 = vpop.f32.mrb[0].mxu0
    %v8356 = vpop.f32.mrb[0].mxu0
    %v8357 = vadd.f32 0.0, %v8356
    %v8358 = vpop.f32.mrb[0].mxu0
    %8359 = vmatprep.mubr.bf16.mxu0 0
    %8360 = vmatmul.mubr.bf16.gmra.mrb[0].mxu0 %v8246
    %v8361 = vpop.f32.mrb[0].mxu0
    %v8362 = vadd.f32 0.0, %v8361
    %v8363 = vpop.f32.mrb[0].mxu0
    %v8364 = vpop.f32.mrb[0].mxu0
    %v8365 = vadd.f32 0.0, %v8364
    %v8366 = vpop.f32.mrb[0].mxu0
    %8367 = vdwg.mxu0
    %v8368 = vpack.c.bf16 %v8309, %v8306
    %v8369 = vpack.c.bf16 %v8317, %v8314
    %v8370 = vpack.c.bf16 %v8325, %v8322
    %v8371 = vpack.c.bf16 %v8333, %v8330
    %v8372 = vpack.c.bf16 %v8341, %v8338
    %v8373 = vpack.c.bf16 %v8349, %v8346
    %v8374 = vpack.c.bf16 %v8357, %v8354
    %v8375 = vpack.c.bf16 %v8365, %v8362
    %s8376 = scalar_lea.vmem %s5, 48
    %v8377 = vld [vmem:[%s8376] sm:$0xf]
    %v8379 = vsel %vm253, %v8368, 0
    %v8382 = vsel %vm253, %v8369, 0
    %v8385 = vsel %vm253, %v8370, 0
    %v8388 = vsel %vm253, %v8371, 0
    %v8391 = vsel %vm253, %v8372, 0
    %v8394 = vsel %vm253, %v8373, 0
    %v8397 = vsel %vm253, %v8374, 0
    %v8400 = vsel %vm253, %v8375, 0
    %v8403 = vsel %vm705, %v8377, 0
    %8405 = vmatprep.subr.bf16.mxu0 0
    %8406 = vmatpush1.bf16.msra.mxu0 %v8403
    %8407 = vmatprep.subr.bf16.mxu0 0
    %8408 = vmatpush1.bf16.msra.mxu0 0
    %8409 = vmatprep.subr.bf16.mxu0 0
    %8410 = vmatpush1.bf16.msra.mxu0 0
    %8411 = vmatprep.subr.bf16.mxu0 0
    %8412 = vmatpush1.bf16.msra.mxu0 0
    %8413 = vmatprep.subr.bf16.mxu0 0
    %8414 = vmatpush1.bf16.msra.mxu0 0
    %8415 = vmatprep.subr.bf16.mxu0 0
    %8416 = vmatpush1.bf16.msra.mxu0 0
    %8417 = vmatprep.subr.bf16.mxu0 0
    %8418 = vmatpush1.bf16.msra.mxu0 0
    %8419 = vmatprep.subr.bf16.mxu0 0
    %8420 = vmatpush1.bf16.msra.mxu0 0
    %8421 = vmatprep.subr.bf16.mxu0 0
    %8422 = vmatpush1.bf16.msra.mxu0 0
    %8423 = vmatprep.subr.bf16.mxu0 0
    %8424 = vmatpush1.bf16.msra.mxu0 0
    %8425 = vmatprep.subr.bf16.mxu0 0
    %8426 = vmatpush1.bf16.msra.mxu0 0
    %8427 = vmatprep.subr.bf16.mxu0 0
    %8428 = vmatpush1.bf16.msra.mxu0 0
    %8429 = vmatprep.subr.bf16.mxu0 0
    %8430 = vmatpush1.bf16.msra.mxu0 0
    %8431 = vmatprep.subr.bf16.mxu0 0
    %8432 = vmatpush1.bf16.msra.mxu0 0
    %8433 = vmatprep.subr.bf16.mxu0 0
    %8434 = vmatpush1.bf16.msra.mxu0 0
    %8435 = vmatprep.subr.bf16.mxu0 0
    %8436 = vmatpush1.bf16.msra.mxu0 0
    %8437 = vmatprep.mubr.bf16.mxu0 0
    %8438 = vmatmul.mubr.bf16.gmra.mrb[0].mxu0 %v8379
    %v8439 = vpop.f32.mrb[0].mxu0
    %v8440 = vadd.f32 0.0, %v8439
    %v8441 = vpop.f32.mrb[0].mxu0
    %v8442 = vpop.f32.mrb[0].mxu0
    %v8443 = vadd.f32 0.0, %v8442
    %v8444 = vpop.f32.mrb[0].mxu0
    %8445 = vmatprep.mubr.bf16.mxu0 0
    %8446 = vmatmul.mubr.bf16.gmra.mrb[0].mxu0 %v8382
    %v8447 = vpop.f32.mrb[0].mxu0
    %v8448 = vadd.f32 0.0, %v8447
    %v8449 = vpop.f32.mrb[0].mxu0
    %v8450 = vpop.f32.mrb[0].mxu0
    %v8451 = vadd.f32 0.0, %v8450
    %v8452 = vpop.f32.mrb[0].mxu0
    %8453 = vmatprep.mubr.bf16.mxu0 0
    %8454 = vmatmul.mubr.bf16.gmra.mrb[0].mxu0 %v8385
    %v8455 = vpop.f32.mrb[0].mxu0
    %v8456 = vadd.f32 0.0, %v8455
    %v8457 = vpop.f32.mrb[0].mxu0
    %v8458 = vpop.f32.mrb[0].mxu0
    %v8459 = vadd.f32 0.0, %v8458
    %v8460 = vpop.f32.mrb[0].mxu0
    %8461 = vmatprep.mubr.bf16.mxu0 0
    %8462 = vmatmul.mubr.bf16.gmra.mrb[0].mxu0 %v8388
    %v8463 = vpop.f32.mrb[0].mxu0
    %v8464 = vadd.f32 0.0, %v8463
    %v8465 = vpop.f32.mrb[0].mxu0
    %v8466 = vpop.f32.mrb[0].mxu0
    %v8467 = vadd.f32 0.0, %v8466
    %v8468 = vpop.f32.mrb[0].mxu0
    %8469 = vmatprep.mubr.bf16.mxu0 0
    %8470 = vmatmul.mubr.bf16.gmra.mrb[0].mxu0 %v8391
    %v8471 = vpop.f32.mrb[0].mxu0
    %v8472 = vadd.f32 0.0, %v8471
    %v8473 = vpop.f32.mrb[0].mxu0
    %v8474 = vpop.f32.mrb[0].mxu0
    %v8475 = vadd.f32 0.0, %v8474
    %v8476 = vpop.f32.mrb[0].mxu0
    %8477 = vmatprep.mubr.bf16.mxu0 0
    %8478 = vmatmul.mubr.bf16.gmra.mrb[0].mxu0 %v8394
    %v8479 = vpop.f32.mrb[0].mxu0
    %v8480 = vadd.f32 0.0, %v8479
    %v8481 = vpop.f32.mrb[0].mxu0
    %v8482 = vpop.f32.mrb[0].mxu0
    %v8483 = vadd.f32 0.0, %v8482
    %v8484 = vpop.f32.mrb[0].mxu0
    %8485 = vmatprep.mubr.bf16.mxu0 0
    %8486 = vmatmul.mubr.bf16.gmra.mrb[0].mxu0 %v8397
    %v8487 = vpop.f32.mrb[0].mxu0
    %v8488 = vadd.f32 0.0, %v8487
    %v8489 = vpop.f32.mrb[0].mxu0
    %v8490 = vpop.f32.mrb[0].mxu0
    %v8491 = vadd.f32 0.0, %v8490
    %v8492 = vpop.f32.mrb[0].mxu0
    %8493 = vmatprep.mubr.bf16.mxu0 0
    %8494 = vmatmul.mubr.bf16.gmra.mrb[0].mxu0 %v8400
    %v8495 = vpop.f32.mrb[0].mxu0
    %v8496 = vadd.f32 0.0, %v8495
    %v8497 = vpop.f32.mrb[0].mxu0
    %v8498 = vpop.f32.mrb[0].mxu0
    %v8499 = vadd.f32 0.0, %v8498
    %v8500 = vpop.f32.mrb[0].mxu0
    %8501 = vdwg.mxu0
    %v8502 = vadd.f32 %v7917, %v8440
    %v8503 = vadd.f32 %v7917, %v8443
    %v8504 = vadd.f32 %v7917, %v8448
    %v8505 = vadd.f32 %v7917, %v8451
    %v8506 = vadd.f32 %v7917, %v8456
    %v8507 = vadd.f32 %v7917, %v8459
    %v8508 = vadd.f32 %v7917, %v8464
    %v8509 = vadd.f32 %v7917, %v8467
    %v8510 = vadd.f32 %v7917, %v8472
    %v8511 = vadd.f32 %v7917, %v8475
    %v8512 = vadd.f32 %v7917, %v8480
    %v8513 = vadd.f32 %v7917, %v8483
    %v8514 = vadd.f32 %v7917, %v8488
    %v8515 = vadd.f32 %v7917, %v8491
    %v8516 = vadd.f32 %v7917, %v8496
    %v8517 = vadd.f32 %v7917, %v8499
    %8518 = vrot.lane.b32.xlu0 %v7918, 120
    %v8519 = vpop.permute.xlu0 %8518
    %8520 = vrot.lane.b32.xlu0 %v7919, 120
    %v8521 = vpop.permute.xlu0 %8520
    %8522 = vrot.lane.b32.xlu0 %v7920, 120
    %v8523 = vpop.permute.xlu0 %8522
    %8524 = vrot.lane.b32.xlu0 %v7921, 120
    %v8525 = vpop.permute.xlu0 %8524
    %8526 = vrot.lane.b32.xlu0 %v7922, 120
    %v8527 = vpop.permute.xlu0 %8526
    %8528 = vrot.lane.b32.xlu0 %v7923, 120
    %v8529 = vpop.permute.xlu0 %8528
    %8530 = vrot.lane.b32.xlu0 %v7924, 120
    %v8531 = vpop.permute.xlu0 %8530
    %8532 = vrot.lane.b32.xlu0 %v7925, 120
    %v8533 = vpop.permute.xlu0 %8532
    %8534 = vrot.lane.b32.xlu0 %v7918, 88
    %v8535 = vpop.permute.xlu0 %8534
    %8536 = vrot.lane.b32.xlu0 %v7919, 88
    %v8537 = vpop.permute.xlu0 %8536
    %8538 = vrot.lane.b32.xlu0 %v7920, 88
    %v8539 = vpop.permute.xlu0 %8538
    %8540 = vrot.lane.b32.xlu0 %v7921, 88
    %v8541 = vpop.permute.xlu0 %8540
    %8542 = vrot.lane.b32.xlu0 %v7922, 88
    %v8543 = vpop.permute.xlu0 %8542
    %8544 = vrot.lane.b32.xlu0 %v7923, 88
    %v8545 = vpop.permute.xlu0 %8544
    %8546 = vrot.lane.b32.xlu0 %v7924, 88
    %v8547 = vpop.permute.xlu0 %8546
    %8548 = vrot.lane.b32.xlu0 %v7925, 88
    %v8549 = vpop.permute.xlu0 %8548
    %v8551 = vsel %vm253, %v8519, 0
    %v8554 = vsel %vm253, %v8521, 0
    %v8557 = vsel %vm253, %v8523, 0
    %v8560 = vsel %vm253, %v8525, 0
    %v8563 = vsel %vm253, %v8527, 0
    %v8566 = vsel %vm253, %v8529, 0
    %v8569 = vsel %vm253, %v8531, 0
    %v8572 = vsel %vm253, %v8533, 0
    %v8575 = vsel %vm253, %v8535, 0
    %v8578 = vsel %vm253, %v8537, 0
    %v8581 = vsel %vm253, %v8539, 0
    %v8584 = vsel %vm253, %v8541, 0
    %v8587 = vsel %vm253, %v8543, 0
    %v8590 = vsel %vm253, %v8545, 0
    %v8593 = vsel %vm253, %v8547, 0
    %v8596 = vsel %vm253, %v8549, 0
    %8598 = vmatprep.subr.bf16.mxu0 0
    %8599 = vmatpush1.bf16.xpose.msra.mxu0 %v8575
    %8600 = vmatprep.subr.bf16.mxu0 0
    %8601 = vmatpush1.bf16.xpose.msra.mxu0 %v8578
    %8602 = vmatprep.subr.bf16.mxu0 0
    %8603 = vmatpush1.bf16.xpose.msra.mxu0 %v8581
    %8604 = vmatprep.subr.bf16.mxu0 0
    %8605 = vmatpush1.bf16.xpose.msra.mxu0 %v8584
    %8606 = vmatprep.subr.bf16.mxu0 0
    %8607 = vmatpush1.bf16.xpose.msra.mxu0 %v8587
    %8608 = vmatprep.subr.bf16.mxu0 0
    %8609 = vmatpush1.bf16.xpose.msra.mxu0 %v8590
    %8610 = vmatprep.subr.bf16.mxu0 0
    %8611 = vmatpush1.bf16.xpose.msra.mxu0 %v8593
    %8612 = vmatprep.subr.bf16.mxu0 0
    %8613 = vmatpush1.bf16.xpose.msra.mxu0 %v8596
    %8614 = vmatprep.subr.bf16.mxu0 0
    %8615 = vmatpush1.bf16.xpose.msra.mxu0 0
    %8616 = vmatprep.subr.bf16.mxu0 0
    %8617 = vmatpush1.bf16.xpose.msra.mxu0 0
    %8618 = vmatprep.subr.bf16.mxu0 0
    %8619 = vmatpush1.bf16.xpose.msra.mxu0 0
    %8620 = vmatprep.subr.bf16.mxu0 0
    %8621 = vmatpush1.bf16.xpose.msra.mxu0 0
    %8622 = vmatprep.subr.bf16.mxu0 0
    %8623 = vmatpush1.bf16.xpose.msra.mxu0 0
    %8624 = vmatprep.subr.bf16.mxu0 0
    %8625 = vmatpush1.bf16.xpose.msra.mxu0 0
    %8626 = vmatprep.subr.bf16.mxu0 0
    %8627 = vmatpush1.bf16.xpose.msra.mxu0 0
    %8628 = vmatprep.subr.bf16.mxu0 0
    %8629 = vmatpush1.bf16.xpose.msra.mxu0 0
    %8630 = vmatprep.mubr.bf16.mxu0 0
    %8631 = vmatmul.mubr.bf16.gmra.mrb[0].mxu0 %v8551
    %v8632 = vpop.f32.mrb[0].mxu0
    %v8633 = vadd.f32 %v2790, %v8632
    %v8634 = vpop.f32.mrb[0].mxu0
    %v8635 = vpop.f32.mrb[0].mxu0
    %v8636 = vadd.f32 %v2791, %v8635
    %v8637 = vpop.f32.mrb[0].mxu0
    %8638 = vmatprep.mubr.bf16.mxu0 0
    %8639 = vmatmul.mubr.bf16.gmra.mrb[0].mxu0 %v8554
    %v8640 = vpop.f32.mrb[0].mxu0
    %v8641 = vadd.f32 %v2792, %v8640
    %v8642 = vpop.f32.mrb[0].mxu0
    %v8643 = vpop.f32.mrb[0].mxu0
    %v8644 = vadd.f32 %v2793, %v8643
    %v8645 = vpop.f32.mrb[0].mxu0
    %8646 = vmatprep.mubr.bf16.mxu0 0
    %8647 = vmatmul.mubr.bf16.gmra.mrb[0].mxu0 %v8557
    %v8648 = vpop.f32.mrb[0].mxu0
    %v8649 = vadd.f32 %v2794, %v8648
    %v8650 = vpop.f32.mrb[0].mxu0
    %v8651 = vpop.f32.mrb[0].mxu0
    %v8652 = vadd.f32 %v2795, %v8651
    %v8653 = vpop.f32.mrb[0].mxu0
    %8654 = vmatprep.mubr.bf16.mxu0 0
    %8655 = vmatmul.mubr.bf16.gmra.mrb[0].mxu0 %v8560
    %v8656 = vpop.f32.mrb[0].mxu0
    %v8657 = vadd.f32 %v2796, %v8656
    %v8658 = vpop.f32.mrb[0].mxu0
    %v8659 = vpop.f32.mrb[0].mxu0
    %v8660 = vadd.f32 %v2797, %v8659
    %v8661 = vpop.f32.mrb[0].mxu0
    %8662 = vmatprep.mubr.bf16.mxu0 0
    %8663 = vmatmul.mubr.bf16.gmra.mrb[0].mxu0 %v8563
    %v8664 = vpop.f32.mrb[0].mxu0
    %v8665 = vadd.f32 %v2798, %v8664
    %v8666 = vpop.f32.mrb[0].mxu0
    %v8667 = vpop.f32.mrb[0].mxu0
    %v8668 = vadd.f32 %v2799, %v8667
    %v8669 = vpop.f32.mrb[0].mxu0
    %8670 = vmatprep.mubr.bf16.mxu0 0
    %8671 = vmatmul.mubr.bf16.gmra.mrb[0].mxu0 %v8566
    %v8672 = vpop.f32.mrb[0].mxu0
    %v8673 = vadd.f32 %v2800, %v8672
    %v8674 = vpop.f32.mrb[0].mxu0
    %v8675 = vpop.f32.mrb[0].mxu0
    %v8676 = vadd.f32 %v2801, %v8675
    %v8677 = vpop.f32.mrb[0].mxu0
    %8678 = vmatprep.mubr.bf16.mxu0 0
    %8679 = vmatmul.mubr.bf16.gmra.mrb[0].mxu0 %v8569
    %v8680 = vpop.f32.mrb[0].mxu0
    %v8681 = vadd.f32 %v2802, %v8680
    %v8682 = vpop.f32.mrb[0].mxu0
    %v8683 = vpop.f32.mrb[0].mxu0
    %v8684 = vadd.f32 %v2803, %v8683
    %v8685 = vpop.f32.mrb[0].mxu0
    %8686 = vmatprep.mubr.bf16.mxu0 0
    %8687 = vmatmul.mubr.bf16.gmra.mrb[0].mxu0 %v8572
    %v8688 = vpop.f32.mrb[0].mxu0
    %v8689 = vadd.f32 %v2804, %v8688
    %v8690 = vpop.f32.mrb[0].mxu0
    %v8691 = vpop.f32.mrb[0].mxu0
    %v8692 = vadd.f32 %v2805, %v8691
    %v8693 = vpop.f32.mrb[0].mxu0
    %8694 = vdwg.mxu0
    %8695 = vmax.xlane.f32.xlu0 %v8633
    %v8696 = vpop.xlane.xlu0 %8695
    %8697 = vmax.xlane.f32.xlu0 %v8636
    %v8698 = vpop.xlane.xlu0 %8697
    %8699 = vmax.xlane.f32.xlu0 %v8641
    %v8700 = vpop.xlane.xlu0 %8699
    %8701 = vmax.xlane.f32.xlu0 %v8644
    %v8702 = vpop.xlane.xlu0 %8701
    %8703 = vmax.xlane.f32.xlu0 %v8649
    %v8704 = vpop.xlane.xlu0 %8703
    %8705 = vmax.xlane.f32.xlu0 %v8652
    %v8706 = vpop.xlane.xlu0 %8705
    %8707 = vmax.xlane.f32.xlu0 %v8657
    %v8708 = vpop.xlane.xlu0 %8707
    %8709 = vmax.xlane.f32.xlu0 %v8660
    %v8710 = vpop.xlane.xlu0 %8709
    %8711 = vmax.xlane.f32.xlu0 %v8665
    %v8712 = vpop.xlane.xlu0 %8711
    %8713 = vmax.xlane.f32.xlu0 %v8668
    %v8714 = vpop.xlane.xlu0 %8713
    %8715 = vmax.xlane.f32.xlu0 %v8673
    %v8716 = vpop.xlane.xlu0 %8715
    %8717 = vmax.xlane.f32.xlu0 %v8676
    %v8718 = vpop.xlane.xlu0 %8717
    %8719 = vmax.xlane.f32.xlu0 %v8681
    %v8720 = vpop.xlane.xlu0 %8719
    %8721 = vmax.xlane.f32.xlu0 %v8684
    %v8722 = vpop.xlane.xlu0 %8721
    %8723 = vmax.xlane.f32.xlu0 %v8689
    %v8724 = vpop.xlane.xlu0 %8723
    %8725 = vmax.xlane.f32.xlu0 %v8692
    %v8726 = vpop.xlane.xlu0 %8725
    %v8727 = vsub.f32 %v8633, %v8696
    %v8728 = vsub.f32 %v8636, %v8698
    %v8729 = vsub.f32 %v8641, %v8700
    %v8730 = vsub.f32 %v8644, %v8702
    %v8731 = vsub.f32 %v8649, %v8704
    %v8732 = vsub.f32 %v8652, %v8706
    %v8733 = vsub.f32 %v8657, %v8708
    %v8734 = vsub.f32 %v8660, %v8710
    %v8735 = vsub.f32 %v8665, %v8712
    %v8736 = vsub.f32 %v8668, %v8714
    %v8737 = vsub.f32 %v8673, %v8716
    %v8738 = vsub.f32 %v8676, %v8718
    %v8739 = vsub.f32 %v8681, %v8720
    %v8740 = vsub.f32 %v8684, %v8722
    %v8741 = vsub.f32 %v8689, %v8724
    %v8742 = vsub.f32 %v8692, %v8726
    %v8743 = vmul.f32 %v8727, 1.442695
    %v8744 = vpow.pop %v8743
    %v8745 = vmul.f32 %v8728, 1.442695
    %v8746 = vpow.pop %v8745
    %v8747 = vmul.f32 %v8729, 1.442695
    %v8748 = vpow.pop %v8747
    %v8749 = vmul.f32 %v8730, 1.442695
    %v8750 = vpow.pop %v8749
    %v8751 = vmul.f32 %v8731, 1.442695
    %v8752 = vpow.pop %v8751
    %v8753 = vmul.f32 %v8732, 1.442695
    %v8754 = vpow.pop %v8753
    %v8755 = vmul.f32 %v8733, 1.442695
    %v8756 = vpow.pop %v8755
    %v8757 = vmul.f32 %v8734, 1.442695
    %v8758 = vpow.pop %v8757
    %v8759 = vmul.f32 %v8735, 1.442695
    %v8760 = vpow.pop %v8759
    %v8761 = vmul.f32 %v8736, 1.442695
    %v8762 = vpow.pop %v8761
    %v8763 = vmul.f32 %v8737, 1.442695
    %v8764 = vpow.pop %v8763
    %v8765 = vmul.f32 %v8738, 1.442695
    %v8766 = vpow.pop %v8765
    %v8767 = vmul.f32 %v8739, 1.442695
    %v8768 = vpow.pop %v8767
    %v8769 = vmul.f32 %v8740, 1.442695
    %v8770 = vpow.pop %v8769
    %v8771 = vmul.f32 %v8741, 1.442695
    %v8772 = vpow.pop %v8771
    %v8773 = vmul.f32 %v8742, 1.442695
    %v8774 = vpow.pop %v8773
    %8775 = vadd.xlane.f32.xlu0 %v8744
    %v8776 = vpop.xlane.xlu0 %8775
    %8777 = vadd.xlane.f32.xlu0 %v8746
    %v8778 = vpop.xlane.xlu0 %8777
    %8779 = vadd.xlane.f32.xlu0 %v8748
    %v8780 = vpop.xlane.xlu0 %8779
    %8781 = vadd.xlane.f32.xlu0 %v8750
    %v8782 = vpop.xlane.xlu0 %8781
    %8783 = vadd.xlane.f32.xlu0 %v8752
    %v8784 = vpop.xlane.xlu0 %8783
    %8785 = vadd.xlane.f32.xlu0 %v8754
    %v8786 = vpop.xlane.xlu0 %8785
    %8787 = vadd.xlane.f32.xlu0 %v8756
    %v8788 = vpop.xlane.xlu0 %8787
    %8789 = vadd.xlane.f32.xlu0 %v8758
    %v8790 = vpop.xlane.xlu0 %8789
    %8791 = vadd.xlane.f32.xlu0 %v8760
    %v8792 = vpop.xlane.xlu0 %8791
    %8793 = vadd.xlane.f32.xlu0 %v8762
    %v8794 = vpop.xlane.xlu0 %8793
    %8795 = vadd.xlane.f32.xlu0 %v8764
    %v8796 = vpop.xlane.xlu0 %8795
    %8797 = vadd.xlane.f32.xlu0 %v8766
    %v8798 = vpop.xlane.xlu0 %8797
    %8799 = vadd.xlane.f32.xlu0 %v8768
    %v8800 = vpop.xlane.xlu0 %8799
    %8801 = vadd.xlane.f32.xlu0 %v8770
    %v8802 = vpop.xlane.xlu0 %8801
    %8803 = vadd.xlane.f32.xlu0 %v8772
    %v8804 = vpop.xlane.xlu0 %8803
    %8805 = vadd.xlane.f32.xlu0 %v8774
    %v8806 = vpop.xlane.xlu0 %8805
    %v8807 = vrcp.pop %v8776
    %v8808 = vrcp.pop %v8778
    %v8809 = vrcp.pop %v8780
    %v8810 = vrcp.pop %v8782
    %v8811 = vrcp.pop %v8784
    %v8812 = vrcp.pop %v8786
    %v8813 = vrcp.pop %v8788
    %v8814 = vrcp.pop %v8790
    %v8815 = vrcp.pop %v8792
    %v8816 = vrcp.pop %v8794
    %v8817 = vrcp.pop %v8796
    %v8818 = vrcp.pop %v8798
    %v8819 = vrcp.pop %v8800
    %v8820 = vrcp.pop %v8802
    %v8821 = vrcp.pop %v8804
    %v8822 = vrcp.pop %v8806
    %v8823 = vmul.f32 %v8744, %v8807
    %v8824 = vmul.f32 %v8746, %v8808
    %v8825 = vmul.f32 %v8748, %v8809
    %v8826 = vmul.f32 %v8750, %v8810
    %v8827 = vmul.f32 %v8752, %v8811
    %v8828 = vmul.f32 %v8754, %v8812
    %v8829 = vmul.f32 %v8756, %v8813
    %v8830 = vmul.f32 %v8758, %v8814
    %v8831 = vmul.f32 %v8760, %v8815
    %v8832 = vmul.f32 %v8762, %v8816
    %v8833 = vmul.f32 %v8764, %v8817
    %v8834 = vmul.f32 %v8766, %v8818
    %v8835 = vmul.f32 %v8768, %v8819
    %v8836 = vmul.f32 %v8770, %v8820
    %v8837 = vmul.f32 %v8772, %v8821
    %v8838 = vmul.f32 %v8774, %v8822
    %v8839 = vpack.c.bf16 %v8824, %v8823
    %v8840 = vpack.c.bf16 %v8826, %v8825
    %v8841 = vpack.c.bf16 %v8828, %v8827
    %v8842 = vpack.c.bf16 %v8830, %v8829
    %v8843 = vpack.c.bf16 %v8832, %v8831
    %v8844 = vpack.c.bf16 %v8834, %v8833
    %v8845 = vpack.c.bf16 %v8836, %v8835
    %v8846 = vpack.c.bf16 %v8838, %v8837
    %8847 = vrot.lane.b32.xlu0 %v7918, 56
    %v8848 = vpop.permute.xlu0 %8847
    %8849 = vrot.lane.b32.xlu0 %v7919, 56
    %v8850 = vpop.permute.xlu0 %8849
    %8851 = vrot.lane.b32.xlu0 %v7920, 56
    %v8852 = vpop.permute.xlu0 %8851
    %8853 = vrot.lane.b32.xlu0 %v7921, 56
    %v8854 = vpop.permute.xlu0 %8853
    %8855 = vrot.lane.b32.xlu0 %v7922, 56
    %v8856 = vpop.permute.xlu0 %8855
    %8857 = vrot.lane.b32.xlu0 %v7923, 56
    %v8858 = vpop.permute.xlu0 %8857
    %8859 = vrot.lane.b32.xlu0 %v7924, 56
    %v8860 = vpop.permute.xlu0 %8859
    %8861 = vrot.lane.b32.xlu0 %v7925, 56
    %v8862 = vpop.permute.xlu0 %8861
    %8871 = vmatprep.subr.bf16.mxu0 0
    %8872 = vmatpush1.bf16.msra.mxu0 %v8848
    %8873 = vmatprep.subr.bf16.mxu0 0
    %8874 = vmatpush1.bf16.msra.mxu0 %v8850
    %8875 = vmatprep.subr.bf16.mxu0 0
    %8876 = vmatpush1.bf16.msra.mxu0 %v8852
    %8877 = vmatprep.subr.bf16.mxu0 0
    %8878 = vmatpush1.bf16.msra.mxu0 %v8854
    %8879 = vmatprep.subr.bf16.mxu0 0
    %8880 = vmatpush1.bf16.msra.mxu0 %v8856
    %8881 = vmatprep.subr.bf16.mxu0 0
    %8882 = vmatpush1.bf16.msra.mxu0 %v8858
    %8883 = vmatprep.subr.bf16.mxu0 0
    %8884 = vmatpush1.bf16.msra.mxu0 %v8860
    %8885 = vmatprep.subr.bf16.mxu0 0
    %8886 = vmatpush1.bf16.msra.mxu0 %v8862
    %8887 = vmatprep.subr.bf16.mxu0 0
    %8888 = vmatpush1.bf16.msra.mxu0 0
    %8889 = vmatprep.subr.bf16.mxu0 0
    %8890 = vmatpush1.bf16.msra.mxu0 0
    %8891 = vmatprep.subr.bf16.mxu0 0
    %8892 = vmatpush1.bf16.msra.mxu0 0
    %8893 = vmatprep.subr.bf16.mxu0 0
    %8894 = vmatpush1.bf16.msra.mxu0 0
    %8895 = vmatprep.subr.bf16.mxu0 0
    %8896 = vmatpush1.bf16.msra.mxu0 0
    %8897 = vmatprep.subr.bf16.mxu0 0
    %8898 = vmatpush1.bf16.msra.mxu0 0
    %8899 = vmatprep.subr.bf16.mxu0 0
    %8900 = vmatpush1.bf16.msra.mxu0 0
    %8901 = vmatprep.subr.bf16.mxu0 0
    %8902 = vmatpush1.bf16.msra.mxu0 0
    %8903 = vmatprep.mubr.bf16.mxu0 0
    %8904 = vmatmul.mubr.bf16.gmra.mrb[0].mxu0 %v8839
    %v8905 = vpop.f32.mrb[0].mxu0
    %v8906 = vadd.f32 0.0, %v8905
    %v8907 = vpop.f32.mrb[0].mxu0
    %v8908 = vpop.f32.mrb[0].mxu0
    %v8909 = vadd.f32 0.0, %v8908
    %v8910 = vpop.f32.mrb[0].mxu0
    %8911 = vmatprep.mubr.bf16.mxu0 0
    %8912 = vmatmul.mubr.bf16.gmra.mrb[0].mxu0 %v8840
    %v8913 = vpop.f32.mrb[0].mxu0
    %v8914 = vadd.f32 0.0, %v8913
    %v8915 = vpop.f32.mrb[0].mxu0
    %v8916 = vpop.f32.mrb[0].mxu0
    %v8917 = vadd.f32 0.0, %v8916
    %v8918 = vpop.f32.mrb[0].mxu0
    %8919 = vmatprep.mubr.bf16.mxu0 0
    %8920 = vmatmul.mubr.bf16.gmra.mrb[0].mxu0 %v8841
    %v8921 = vpop.f32.mrb[0].mxu0
    %v8922 = vadd.f32 0.0, %v8921
    %v8923 = vpop.f32.mrb[0].mxu0
    %v8924 = vpop.f32.mrb[0].mxu0
    %v8925 = vadd.f32 0.0, %v8924
    %v8926 = vpop.f32.mrb[0].mxu0
    %8927 = vmatprep.mubr.bf16.mxu0 0
    %8928 = vmatmul.mubr.bf16.gmra.mrb[0].mxu0 %v8842
    %v8929 = vpop.f32.mrb[0].mxu0
    %v8930 = vadd.f32 0.0, %v8929
    %v8931 = vpop.f32.mrb[0].mxu0
    %v8932 = vpop.f32.mrb[0].mxu0
    %v8933 = vadd.f32 0.0, %v8932
    %v8934 = vpop.f32.mrb[0].mxu0
    %8935 = vmatprep.mubr.bf16.mxu0 0
    %8936 = vmatmul.mubr.bf16.gmra.mrb[0].mxu0 %v8843
    %v8937 = vpop.f32.mrb[0].mxu0
    %v8938 = vadd.f32 0.0, %v8937
    %v8939 = vpop.f32.mrb[0].mxu0
    %v8940 = vpop.f32.mrb[0].mxu0
    %v8941 = vadd.f32 0.0, %v8940
    %v8942 = vpop.f32.mrb[0].mxu0
    %8943 = vmatprep.mubr.bf16.mxu0 0
    %8944 = vmatmul.mubr.bf16.gmra.mrb[0].mxu0 %v8844
    %v8945 = vpop.f32.mrb[0].mxu0
    %v8946 = vadd.f32 0.0, %v8945
    %v8947 = vpop.f32.mrb[0].mxu0
    %v8948 = vpop.f32.mrb[0].mxu0
    %v8949 = vadd.f32 0.0, %v8948
    %v8950 = vpop.f32.mrb[0].mxu0
    %8951 = vmatprep.mubr.bf16.mxu0 0
    %8952 = vmatmul.mubr.bf16.gmra.mrb[0].mxu0 %v8845
    %v8953 = vpop.f32.mrb[0].mxu0
    %v8954 = vadd.f32 0.0, %v8953
    %v8955 = vpop.f32.mrb[0].mxu0
    %v8956 = vpop.f32.mrb[0].mxu0
    %v8957 = vadd.f32 0.0, %v8956
    %v8958 = vpop.f32.mrb[0].mxu0
    %8959 = vmatprep.mubr.bf16.mxu0 0
    %8960 = vmatmul.mubr.bf16.gmra.mrb[0].mxu0 %v8846
    %v8961 = vpop.f32.mrb[0].mxu0
    %v8962 = vadd.f32 0.0, %v8961
    %v8963 = vpop.f32.mrb[0].mxu0
    %v8964 = vpop.f32.mrb[0].mxu0
    %v8965 = vadd.f32 0.0, %v8964
    %v8966 = vpop.f32.mrb[0].mxu0
    %8967 = vdwg.mxu0
    %v8968 = vpack.c.bf16 %v8909, %v8906
    %v8969 = vpack.c.bf16 %v8917, %v8914
    %v8970 = vpack.c.bf16 %v8925, %v8922
    %v8971 = vpack.c.bf16 %v8933, %v8930
    %v8972 = vpack.c.bf16 %v8941, %v8938
    %v8973 = vpack.c.bf16 %v8949, %v8946
    %v8974 = vpack.c.bf16 %v8957, %v8954
    %v8975 = vpack.c.bf16 %v8965, %v8962
    %v8976 = vld [vmem:[%s8376 + $0x4] sm:$0xf]
    %v8978 = vsel %vm253, %v8968, 0
    %v8981 = vsel %vm253, %v8969, 0
    %v8984 = vsel %vm253, %v8970, 0
    %v8987 = vsel %vm253, %v8971, 0
    %v8990 = vsel %vm253, %v8972, 0
    %v8993 = vsel %vm253, %v8973, 0
    %v8996 = vsel %vm253, %v8974, 0
    %v8999 = vsel %vm253, %v8975, 0
    %v9002 = vsel %vm705, %v8976, 0
    %9004 = vmatprep.subr.bf16.mxu0 0
    %9005 = vmatpush1.bf16.msra.mxu0 %v9002
    %9006 = vmatprep.subr.bf16.mxu0 0
    %9007 = vmatpush1.bf16.msra.mxu0 0
    %9008 = vmatprep.subr.bf16.mxu0 0
    %9009 = vmatpush1.bf16.msra.mxu0 0
    %9010 = vmatprep.subr.bf16.mxu0 0
    %9011 = vmatpush1.bf16.msra.mxu0 0
    %9012 = vmatprep.subr.bf16.mxu0 0
    %9013 = vmatpush1.bf16.msra.mxu0 0
    %9014 = vmatprep.subr.bf16.mxu0 0
    %9015 = vmatpush1.bf16.msra.mxu0 0
    %9016 = vmatprep.subr.bf16.mxu0 0
    %9017 = vmatpush1.bf16.msra.mxu0 0
    %9018 = vmatprep.subr.bf16.mxu0 0
    %9019 = vmatpush1.bf16.msra.mxu0 0
    %9020 = vmatprep.subr.bf16.mxu0 0
    %9021 = vmatpush1.bf16.msra.mxu0 0
    %9022 = vmatprep.subr.bf16.mxu0 0
    %9023 = vmatpush1.bf16.msra.mxu0 0
    %9024 = vmatprep.subr.bf16.mxu0 0
    %9025 = vmatpush1.bf16.msra.mxu0 0
    %9026 = vmatprep.subr.bf16.mxu0 0
    %9027 = vmatpush1.bf16.msra.mxu0 0
    %9028 = vmatprep.subr.bf16.mxu0 0
    %9029 = vmatpush1.bf16.msra.mxu0 0
    %9030 = vmatprep.subr.bf16.mxu0 0
    %9031 = vmatpush1.bf16.msra.mxu0 0
    %9032 = vmatprep.subr.bf16.mxu0 0
    %9033 = vmatpush1.bf16.msra.mxu0 0
    %9034 = vmatprep.subr.bf16.mxu0 0
    %9035 = vmatpush1.bf16.msra.mxu0 0
    %9036 = vmatprep.mubr.bf16.mxu0 0
    %9037 = vmatmul.mubr.bf16.gmra.mrb[0].mxu0 %v8978
    %v9038 = vpop.f32.mrb[0].mxu0
    %v9039 = vadd.f32 0.0, %v9038
    %v9040 = vpop.f32.mrb[0].mxu0
    %v9041 = vpop.f32.mrb[0].mxu0
    %v9042 = vadd.f32 0.0, %v9041
    %v9043 = vpop.f32.mrb[0].mxu0
    %9044 = vmatprep.mubr.bf16.mxu0 0
    %9045 = vmatmul.mubr.bf16.gmra.mrb[0].mxu0 %v8981
    %v9046 = vpop.f32.mrb[0].mxu0
    %v9047 = vadd.f32 0.0, %v9046
    %v9048 = vpop.f32.mrb[0].mxu0
    %v9049 = vpop.f32.mrb[0].mxu0
    %v9050 = vadd.f32 0.0, %v9049
    %v9051 = vpop.f32.mrb[0].mxu0
    %9052 = vmatprep.mubr.bf16.mxu0 0
    %9053 = vmatmul.mubr.bf16.gmra.mrb[0].mxu0 %v8984
    %v9054 = vpop.f32.mrb[0].mxu0
    %v9055 = vadd.f32 0.0, %v9054
    %v9056 = vpop.f32.mrb[0].mxu0
    %v9057 = vpop.f32.mrb[0].mxu0
    %v9058 = vadd.f32 0.0, %v9057
    %v9059 = vpop.f32.mrb[0].mxu0
    %9060 = vmatprep.mubr.bf16.mxu0 0
    %9061 = vmatmul.mubr.bf16.gmra.mrb[0].mxu0 %v8987
    %v9062 = vpop.f32.mrb[0].mxu0
    %v9063 = vadd.f32 0.0, %v9062
    %v9064 = vpop.f32.mrb[0].mxu0
    %v9065 = vpop.f32.mrb[0].mxu0
    %v9066 = vadd.f32 0.0, %v9065
    %v9067 = vpop.f32.mrb[0].mxu0
    %9068 = vmatprep.mubr.bf16.mxu0 0
    %9069 = vmatmul.mubr.bf16.gmra.mrb[0].mxu0 %v8990
    %v9070 = vpop.f32.mrb[0].mxu0
    %v9071 = vadd.f32 0.0, %v9070
    %v9072 = vpop.f32.mrb[0].mxu0
    %v9073 = vpop.f32.mrb[0].mxu0
    %v9074 = vadd.f32 0.0, %v9073
    %v9075 = vpop.f32.mrb[0].mxu0
    %9076 = vmatprep.mubr.bf16.mxu0 0
    %9077 = vmatmul.mubr.bf16.gmra.mrb[0].mxu0 %v8993
    %v9078 = vpop.f32.mrb[0].mxu0
    %v9079 = vadd.f32 0.0, %v9078
    %v9080 = vpop.f32.mrb[0].mxu0
    %v9081 = vpop.f32.mrb[0].mxu0
    %v9082 = vadd.f32 0.0, %v9081
    %v9083 = vpop.f32.mrb[0].mxu0
    %9084 = vmatprep.mubr.bf16.mxu0 0
    %9085 = vmatmul.mubr.bf16.gmra.mrb[0].mxu0 %v8996
    %v9086 = vpop.f32.mrb[0].mxu0
    %v9087 = vadd.f32 0.0, %v9086
    %v9088 = vpop.f32.mrb[0].mxu0
    %v9089 = vpop.f32.mrb[0].mxu0
    %v9090 = vadd.f32 0.0, %v9089
    %v9091 = vpop.f32.mrb[0].mxu0
    %9092 = vmatprep.mubr.bf16.mxu0 0
    %9093 = vmatmul.mubr.bf16.gmra.mrb[0].mxu0 %v8999
    %v9094 = vpop.f32.mrb[0].mxu0
    %v9095 = vadd.f32 0.0, %v9094
    %v9096 = vpop.f32.mrb[0].mxu0
    %v9097 = vpop.f32.mrb[0].mxu0
    %v9098 = vadd.f32 0.0, %v9097
    %v9099 = vpop.f32.mrb[0].mxu0
    %9100 = vdwg.mxu0
    %v9101 = vadd.f32 %v8502, %v9039
    %v9102 = vadd.f32 %v8503, %v9042
    %v9103 = vadd.f32 %v8504, %v9047
    %v9104 = vadd.f32 %v8505, %v9050
    %v9105 = vadd.f32 %v8506, %v9055
    %v9106 = vadd.f32 %v8507, %v9058
    %v9107 = vadd.f32 %v8508, %v9063
    %v9108 = vadd.f32 %v8509, %v9066
    %v9109 = vadd.f32 %v8510, %v9071
    %v9110 = vadd.f32 %v8511, %v9074
    %v9111 = vadd.f32 %v8512, %v9079
    %v9112 = vadd.f32 %v8513, %v9082
    %v9113 = vadd.f32 %v8514, %v9087
    %v9114 = vadd.f32 %v8515, %v9090
    %v9115 = vadd.f32 %v8516, %v9095
    %v9116 = vadd.f32 %v8517, %v9098
    %9117 = vrot.lane.b32.xlu0 %v7918, 112
    %v9118 = vpop.permute.xlu0 %9117
    %9119 = vrot.lane.b32.xlu0 %v7919, 112
    %v9120 = vpop.permute.xlu0 %9119
    %9121 = vrot.lane.b32.xlu0 %v7920, 112
    %v9122 = vpop.permute.xlu0 %9121
    %9123 = vrot.lane.b32.xlu0 %v7921, 112
    %v9124 = vpop.permute.xlu0 %9123
    %9125 = vrot.lane.b32.xlu0 %v7922, 112
    %v9126 = vpop.permute.xlu0 %9125
    %9127 = vrot.lane.b32.xlu0 %v7923, 112
    %v9128 = vpop.permute.xlu0 %9127
    %9129 = vrot.lane.b32.xlu0 %v7924, 112
    %v9130 = vpop.permute.xlu0 %9129
    %9131 = vrot.lane.b32.xlu0 %v7925, 112
    %v9132 = vpop.permute.xlu0 %9131
    %9133 = vrot.lane.b32.xlu0 %v7918, 80
    %v9134 = vpop.permute.xlu0 %9133
    %9135 = vrot.lane.b32.xlu0 %v7919, 80
    %v9136 = vpop.permute.xlu0 %9135
    %9137 = vrot.lane.b32.xlu0 %v7920, 80
    %v9138 = vpop.permute.xlu0 %9137
    %9139 = vrot.lane.b32.xlu0 %v7921, 80
    %v9140 = vpop.permute.xlu0 %9139
    %9141 = vrot.lane.b32.xlu0 %v7922, 80
    %v9142 = vpop.permute.xlu0 %9141
    %9143 = vrot.lane.b32.xlu0 %v7923, 80
    %v9144 = vpop.permute.xlu0 %9143
    %9145 = vrot.lane.b32.xlu0 %v7924, 80
    %v9146 = vpop.permute.xlu0 %9145
    %9147 = vrot.lane.b32.xlu0 %v7925, 80
    %v9148 = vpop.permute.xlu0 %9147
    %v9150 = vsel %vm253, %v9118, 0
    %v9153 = vsel %vm253, %v9120, 0
    %v9156 = vsel %vm253, %v9122, 0
    %v9159 = vsel %vm253, %v9124, 0
    %v9162 = vsel %vm253, %v9126, 0
    %v9165 = vsel %vm253, %v9128, 0
    %v9168 = vsel %vm253, %v9130, 0
    %v9171 = vsel %vm253, %v9132, 0
    %v9174 = vsel %vm253, %v9134, 0
    %v9177 = vsel %vm253, %v9136, 0
    %v9180 = vsel %vm253, %v9138, 0
    %v9183 = vsel %vm253, %v9140, 0
    %v9186 = vsel %vm253, %v9142, 0
    %v9189 = vsel %vm253, %v9144, 0
    %v9192 = vsel %vm253, %v9146, 0
    %v9195 = vsel %vm253, %v9148, 0
    %9197 = vmatprep.subr.bf16.mxu0 0
    %9198 = vmatpush1.bf16.xpose.msra.mxu0 %v9174
    %9199 = vmatprep.subr.bf16.mxu0 0
    %9200 = vmatpush1.bf16.xpose.msra.mxu0 %v9177
    %9201 = vmatprep.subr.bf16.mxu0 0
    %9202 = vmatpush1.bf16.xpose.msra.mxu0 %v9180
    %9203 = vmatprep.subr.bf16.mxu0 0
    %9204 = vmatpush1.bf16.xpose.msra.mxu0 %v9183
    %9205 = vmatprep.subr.bf16.mxu0 0
    %9206 = vmatpush1.bf16.xpose.msra.mxu0 %v9186
    %9207 = vmatprep.subr.bf16.mxu0 0
    %9208 = vmatpush1.bf16.xpose.msra.mxu0 %v9189
    %9209 = vmatprep.subr.bf16.mxu0 0
    %9210 = vmatpush1.bf16.xpose.msra.mxu0 %v9192
    %9211 = vmatprep.subr.bf16.mxu0 0
    %9212 = vmatpush1.bf16.xpose.msra.mxu0 %v9195
    %9213 = vmatprep.subr.bf16.mxu0 0
    %9214 = vmatpush1.bf16.xpose.msra.mxu0 0
    %9215 = vmatprep.subr.bf16.mxu0 0
    %9216 = vmatpush1.bf16.xpose.msra.mxu0 0
    %9217 = vmatprep.subr.bf16.mxu0 0
    %9218 = vmatpush1.bf16.xpose.msra.mxu0 0
    %9219 = vmatprep.subr.bf16.mxu0 0
    %9220 = vmatpush1.bf16.xpose.msra.mxu0 0
    %9221 = vmatprep.subr.bf16.mxu0 0
    %9222 = vmatpush1.bf16.xpose.msra.mxu0 0
    %9223 = vmatprep.subr.bf16.mxu0 0
    %9224 = vmatpush1.bf16.xpose.msra.mxu0 0
    %9225 = vmatprep.subr.bf16.mxu0 0
    %9226 = vmatpush1.bf16.xpose.msra.mxu0 0
    %9227 = vmatprep.subr.bf16.mxu0 0
    %9228 = vmatpush1.bf16.xpose.msra.mxu0 0
    %9229 = vmatprep.mubr.bf16.mxu0 0
    %9230 = vmatmul.mubr.bf16.gmra.mrb[0].mxu0 %v9150
    %v9231 = vpop.f32.mrb[0].mxu0
    %v9232 = vadd.f32 %v2790, %v9231
    %v9233 = vpop.f32.mrb[0].mxu0
    %v9234 = vpop.f32.mrb[0].mxu0
    %v9235 = vadd.f32 %v2791, %v9234
    %v9236 = vpop.f32.mrb[0].mxu0
    %9237 = vmatprep.mubr.bf16.mxu0 0
    %9238 = vmatmul.mubr.bf16.gmra.mrb[0].mxu0 %v9153
    %v9239 = vpop.f32.mrb[0].mxu0
    %v9240 = vadd.f32 %v2792, %v9239
    %v9241 = vpop.f32.mrb[0].mxu0
    %v9242 = vpop.f32.mrb[0].mxu0
    %v9243 = vadd.f32 %v2793, %v9242
    %v9244 = vpop.f32.mrb[0].mxu0
    %9245 = vmatprep.mubr.bf16.mxu0 0
    %9246 = vmatmul.mubr.bf16.gmra.mrb[0].mxu0 %v9156
    %v9247 = vpop.f32.mrb[0].mxu0
    %v9248 = vadd.f32 %v2794, %v9247
    %v9249 = vpop.f32.mrb[0].mxu0
    %v9250 = vpop.f32.mrb[0].mxu0
    %v9251 = vadd.f32 %v2795, %v9250
    %v9252 = vpop.f32.mrb[0].mxu0
    %9253 = vmatprep.mubr.bf16.mxu0 0
    %9254 = vmatmul.mubr.bf16.gmra.mrb[0].mxu0 %v9159
    %v9255 = vpop.f32.mrb[0].mxu0
    %v9256 = vadd.f32 %v2796, %v9255
    %v9257 = vpop.f32.mrb[0].mxu0
    %v9258 = vpop.f32.mrb[0].mxu0
    %v9259 = vadd.f32 %v2797, %v9258
    %v9260 = vpop.f32.mrb[0].mxu0
    %9261 = vmatprep.mubr.bf16.mxu0 0
    %9262 = vmatmul.mubr.bf16.gmra.mrb[0].mxu0 %v9162
    %v9263 = vpop.f32.mrb[0].mxu0
    %v9264 = vadd.f32 %v2798, %v9263
    %v9265 = vpop.f32.mrb[0].mxu0
    %v9266 = vpop.f32.mrb[0].mxu0
    %v9267 = vadd.f32 %v2799, %v9266
    %v9268 = vpop.f32.mrb[0].mxu0
    %9269 = vmatprep.mubr.bf16.mxu0 0
    %9270 = vmatmul.mubr.bf16.gmra.mrb[0].mxu0 %v9165
    %v9271 = vpop.f32.mrb[0].mxu0
    %v9272 = vadd.f32 %v2800, %v9271
    %v9273 = vpop.f32.mrb[0].mxu0
    %v9274 = vpop.f32.mrb[0].mxu0
    %v9275 = vadd.f32 %v2801, %v9274
    %v9276 = vpop.f32.mrb[0].mxu0
    %9277 = vmatprep.mubr.bf16.mxu0 0
    %9278 = vmatmul.mubr.bf16.gmra.mrb[0].mxu0 %v9168
    %v9279 = vpop.f32.mrb[0].mxu0
    %v9280 = vadd.f32 %v2802, %v9279
    %v9281 = vpop.f32.mrb[0].mxu0
    %v9282 = vpop.f32.mrb[0].mxu0
    %v9283 = vadd.f32 %v2803, %v9282
    %v9284 = vpop.f32.mrb[0].mxu0
    %9285 = vmatprep.mubr.bf16.mxu0 0
    %9286 = vmatmul.mubr.bf16.gmra.mrb[0].mxu0 %v9171
    %v9287 = vpop.f32.mrb[0].mxu0
    %v9288 = vadd.f32 %v2804, %v9287
    %v9289 = vpop.f32.mrb[0].mxu0
    %v9290 = vpop.f32.mrb[0].mxu0
    %v9291 = vadd.f32 %v2805, %v9290
    %v9292 = vpop.f32.mrb[0].mxu0
    %9293 = vdwg.mxu0
    %9294 = vmax.xlane.f32.xlu0 %v9232
    %v9295 = vpop.xlane.xlu0 %9294
    %9296 = vmax.xlane.f32.xlu0 %v9235
    %v9297 = vpop.xlane.xlu0 %9296
    %9298 = vmax.xlane.f32.xlu0 %v9240
    %v9299 = vpop.xlane.xlu0 %9298
    %9300 = vmax.xlane.f32.xlu0 %v9243
    %v9301 = vpop.xlane.xlu0 %9300
    %9302 = vmax.xlane.f32.xlu0 %v9248
    %v9303 = vpop.xlane.xlu0 %9302
    %9304 = vmax.xlane.f32.xlu0 %v9251
    %v9305 = vpop.xlane.xlu0 %9304
    %9306 = vmax.xlane.f32.xlu0 %v9256
    %v9307 = vpop.xlane.xlu0 %9306
    %9308 = vmax.xlane.f32.xlu0 %v9259
    %v9309 = vpop.xlane.xlu0 %9308
    %9310 = vmax.xlane.f32.xlu0 %v9264
    %v9311 = vpop.xlane.xlu0 %9310
    %9312 = vmax.xlane.f32.xlu0 %v9267
    %v9313 = vpop.xlane.xlu0 %9312
    %9314 = vmax.xlane.f32.xlu0 %v9272
    %v9315 = vpop.xlane.xlu0 %9314
    %9316 = vmax.xlane.f32.xlu0 %v9275
    %v9317 = vpop.xlane.xlu0 %9316
    %9318 = vmax.xlane.f32.xlu0 %v9280
    %v9319 = vpop.xlane.xlu0 %9318
    %9320 = vmax.xlane.f32.xlu0 %v9283
    %v9321 = vpop.xlane.xlu0 %9320
    %9322 = vmax.xlane.f32.xlu0 %v9288
    %v9323 = vpop.xlane.xlu0 %9322
    %9324 = vmax.xlane.f32.xlu0 %v9291
    %v9325 = vpop.xlane.xlu0 %9324
    %v9326 = vsub.f32 %v9232, %v9295
    %v9327 = vsub.f32 %v9235, %v9297
    %v9328 = vsub.f32 %v9240, %v9299
    %v9329 = vsub.f32 %v9243, %v9301
    %v9330 = vsub.f32 %v9248, %v9303
    %v9331 = vsub.f32 %v9251, %v9305
    %v9332 = vsub.f32 %v9256, %v9307
    %v9333 = vsub.f32 %v9259, %v9309
    %v9334 = vsub.f32 %v9264, %v9311
    %v9335 = vsub.f32 %v9267, %v9313
    %v9336 = vsub.f32 %v9272, %v9315
    %v9337 = vsub.f32 %v9275, %v9317
    %v9338 = vsub.f32 %v9280, %v9319
    %v9339 = vsub.f32 %v9283, %v9321
    %v9340 = vsub.f32 %v9288, %v9323
    %v9341 = vsub.f32 %v9291, %v9325
    %v9342 = vmul.f32 %v9326, 1.442695
    %v9343 = vpow.pop %v9342
    %v9344 = vmul.f32 %v9327, 1.442695
    %v9345 = vpow.pop %v9344
    %v9346 = vmul.f32 %v9328, 1.442695
    %v9347 = vpow.pop %v9346
    %v9348 = vmul.f32 %v9329, 1.442695
    %v9349 = vpow.pop %v9348
    %v9350 = vmul.f32 %v9330, 1.442695
    %v9351 = vpow.pop %v9350
    %v9352 = vmul.f32 %v9331, 1.442695
    %v9353 = vpow.pop %v9352
    %v9354 = vmul.f32 %v9332, 1.442695
    %v9355 = vpow.pop %v9354
    %v9356 = vmul.f32 %v9333, 1.442695
    %v9357 = vpow.pop %v9356
    %v9358 = vmul.f32 %v9334, 1.442695
    %v9359 = vpow.pop %v9358
    %v9360 = vmul.f32 %v9335, 1.442695
    %v9361 = vpow.pop %v9360
    %v9362 = vmul.f32 %v9336, 1.442695
    %v9363 = vpow.pop %v9362
    %v9364 = vmul.f32 %v9337, 1.442695
    %v9365 = vpow.pop %v9364
    %v9366 = vmul.f32 %v9338, 1.442695
    %v9367 = vpow.pop %v9366
    %v9368 = vmul.f32 %v9339, 1.442695
    %v9369 = vpow.pop %v9368
    %v9370 = vmul.f32 %v9340, 1.442695
    %v9371 = vpow.pop %v9370
    %v9372 = vmul.f32 %v9341, 1.442695
    %v9373 = vpow.pop %v9372
    %9374 = vadd.xlane.f32.xlu0 %v9343
    %v9375 = vpop.xlane.xlu0 %9374
    %9376 = vadd.xlane.f32.xlu0 %v9345
    %v9377 = vpop.xlane.xlu0 %9376
    %9378 = vadd.xlane.f32.xlu0 %v9347
    %v9379 = vpop.xlane.xlu0 %9378
    %9380 = vadd.xlane.f32.xlu0 %v9349
    %v9381 = vpop.xlane.xlu0 %9380
    %9382 = vadd.xlane.f32.xlu0 %v9351
    %v9383 = vpop.xlane.xlu0 %9382
    %9384 = vadd.xlane.f32.xlu0 %v9353
    %v9385 = vpop.xlane.xlu0 %9384
    %9386 = vadd.xlane.f32.xlu0 %v9355
    %v9387 = vpop.xlane.xlu0 %9386
    %9388 = vadd.xlane.f32.xlu0 %v9357
    %v9389 = vpop.xlane.xlu0 %9388
    %9390 = vadd.xlane.f32.xlu0 %v9359
    %v9391 = vpop.xlane.xlu0 %9390
    %9392 = vadd.xlane.f32.xlu0 %v9361
    %v9393 = vpop.xlane.xlu0 %9392
    %9394 = vadd.xlane.f32.xlu0 %v9363
    %v9395 = vpop.xlane.xlu0 %9394
    %9396 = vadd.xlane.f32.xlu0 %v9365
    %v9397 = vpop.xlane.xlu0 %9396
    %9398 = vadd.xlane.f32.xlu0 %v9367
    %v9399 = vpop.xlane.xlu0 %9398
    %9400 = vadd.xlane.f32.xlu0 %v9369
    %v9401 = vpop.xlane.xlu0 %9400
    %9402 = vadd.xlane.f32.xlu0 %v9371
    %v9403 = vpop.xlane.xlu0 %9402
    %9404 = vadd.xlane.f32.xlu0 %v9373
    %v9405 = vpop.xlane.xlu0 %9404
    %v9406 = vrcp.pop %v9375
    %v9407 = vrcp.pop %v9377
    %v9408 = vrcp.pop %v9379
    %v9409 = vrcp.pop %v9381
    %v9410 = vrcp.pop %v9383
    %v9411 = vrcp.pop %v9385
    %v9412 = vrcp.pop %v9387
    %v9413 = vrcp.pop %v9389
    %v9414 = vrcp.pop %v9391
    %v9415 = vrcp.pop %v9393
    %v9416 = vrcp.pop %v9395
    %v9417 = vrcp.pop %v9397
    %v9418 = vrcp.pop %v9399
    %v9419 = vrcp.pop %v9401
    %v9420 = vrcp.pop %v9403
    %v9421 = vrcp.pop %v9405
    %v9422 = vmul.f32 %v9343, %v9406
    %v9423 = vmul.f32 %v9345, %v9407
    %v9424 = vmul.f32 %v9347, %v9408
    %v9425 = vmul.f32 %v9349, %v9409
    %v9426 = vmul.f32 %v9351, %v9410
    %v9427 = vmul.f32 %v9353, %v9411
    %v9428 = vmul.f32 %v9355, %v9412
    %v9429 = vmul.f32 %v9357, %v9413
    %v9430 = vmul.f32 %v9359, %v9414
    %v9431 = vmul.f32 %v9361, %v9415
    %v9432 = vmul.f32 %v9363, %v9416
    %v9433 = vmul.f32 %v9365, %v9417
    %v9434 = vmul.f32 %v9367, %v9418
    %v9435 = vmul.f32 %v9369, %v9419
    %v9436 = vmul.f32 %v9371, %v9420
    %v9437 = vmul.f32 %v9373, %v9421
    %v9438 = vpack.c.bf16 %v9423, %v9422
    %v9439 = vpack.c.bf16 %v9425, %v9424
    %v9440 = vpack.c.bf16 %v9427, %v9426
    %v9441 = vpack.c.bf16 %v9429, %v9428
    %v9442 = vpack.c.bf16 %v9431, %v9430
    %v9443 = vpack.c.bf16 %v9433, %v9432
    %v9444 = vpack.c.bf16 %v9435, %v9434
    %v9445 = vpack.c.bf16 %v9437, %v9436
    %9446 = vrot.lane.b32.xlu0 %v7918, 48
    %v9447 = vpop.permute.xlu0 %9446
    %9448 = vrot.lane.b32.xlu0 %v7919, 48
    %v9449 = vpop.permute.xlu0 %9448
    %9450 = vrot.lane.b32.xlu0 %v7920, 48
    %v9451 = vpop.permute.xlu0 %9450
    %9452 = vrot.lane.b32.xlu0 %v7921, 48
    %v9453 = vpop.permute.xlu0 %9452
    %9454 = vrot.lane.b32.xlu0 %v7922, 48
    %v9455 = vpop.permute.xlu0 %9454
    %9456 = vrot.lane.b32.xlu0 %v7923, 48
    %v9457 = vpop.permute.xlu0 %9456
    %9458 = vrot.lane.b32.xlu0 %v7924, 48
    %v9459 = vpop.permute.xlu0 %9458
    %9460 = vrot.lane.b32.xlu0 %v7925, 48
    %v9461 = vpop.permute.xlu0 %9460
    %9470 = vmatprep.subr.bf16.mxu0 0
    %9471 = vmatpush1.bf16.msra.mxu0 %v9447
    %9472 = vmatprep.subr.bf16.mxu0 0
    %9473 = vmatpush1.bf16.msra.mxu0 %v9449
    %9474 = vmatprep.subr.bf16.mxu0 0
    %9475 = vmatpush1.bf16.msra.mxu0 %v9451
    %9476 = vmatprep.subr.bf16.mxu0 0
    %9477 = vmatpush1.bf16.msra.mxu0 %v9453
    %9478 = vmatprep.subr.bf16.mxu0 0
    %9479 = vmatpush1.bf16.msra.mxu0 %v9455
    %9480 = vmatprep.subr.bf16.mxu0 0
    %9481 = vmatpush1.bf16.msra.mxu0 %v9457
    %9482 = vmatprep.subr.bf16.mxu0 0
    %9483 = vmatpush1.bf16.msra.mxu0 %v9459
    %9484 = vmatprep.subr.bf16.mxu0 0
    %9485 = vmatpush1.bf16.msra.mxu0 %v9461
    %9486 = vmatprep.subr.bf16.mxu0 0
    %9487 = vmatpush1.bf16.msra.mxu0 0
    %9488 = vmatprep.subr.bf16.mxu0 0
    %9489 = vmatpush1.bf16.msra.mxu0 0
    %9490 = vmatprep.subr.bf16.mxu0 0
    %9491 = vmatpush1.bf16.msra.mxu0 0
    %9492 = vmatprep.subr.bf16.mxu0 0
    %9493 = vmatpush1.bf16.msra.mxu0 0
    %9494 = vmatprep.subr.bf16.mxu0 0
    %9495 = vmatpush1.bf16.msra.mxu0 0
    %9496 = vmatprep.subr.bf16.mxu0 0
    %9497 = vmatpush1.bf16.msra.mxu0 0
    %9498 = vmatprep.subr.bf16.mxu0 0
    %9499 = vmatpush1.bf16.msra.mxu0 0
    %9500 = vmatprep.subr.bf16.mxu0 0
    %9501 = vmatpush1.bf16.msra.mxu0 0
    %9502 = vmatprep.mubr.bf16.mxu0 0
    %9503 = vmatmul.mubr.bf16.gmra.mrb[0].mxu0 %v9438
    %v9504 = vpop.f32.mrb[0].mxu0
    %v9505 = vadd.f32 0.0, %v9504
    %v9506 = vpop.f32.mrb[0].mxu0
    %v9507 = vpop.f32.mrb[0].mxu0
    %v9508 = vadd.f32 0.0, %v9507
    %v9509 = vpop.f32.mrb[0].mxu0
    %9510 = vmatprep.mubr.bf16.mxu0 0
    %9511 = vmatmul.mubr.bf16.gmra.mrb[0].mxu0 %v9439
    %v9512 = vpop.f32.mrb[0].mxu0
    %v9513 = vadd.f32 0.0, %v9512
    %v9514 = vpop.f32.mrb[0].mxu0
    %v9515 = vpop.f32.mrb[0].mxu0
    %v9516 = vadd.f32 0.0, %v9515
    %v9517 = vpop.f32.mrb[0].mxu0
    %9518 = vmatprep.mubr.bf16.mxu0 0
    %9519 = vmatmul.mubr.bf16.gmra.mrb[0].mxu0 %v9440
    %v9520 = vpop.f32.mrb[0].mxu0
    %v9521 = vadd.f32 0.0, %v9520
    %v9522 = vpop.f32.mrb[0].mxu0
    %v9523 = vpop.f32.mrb[0].mxu0
    %v9524 = vadd.f32 0.0, %v9523
    %v9525 = vpop.f32.mrb[0].mxu0
    %9526 = vmatprep.mubr.bf16.mxu0 0
    %9527 = vmatmul.mubr.bf16.gmra.mrb[0].mxu0 %v9441
    %v9528 = vpop.f32.mrb[0].mxu0
    %v9529 = vadd.f32 0.0, %v9528
    %v9530 = vpop.f32.mrb[0].mxu0
    %v9531 = vpop.f32.mrb[0].mxu0
    %v9532 = vadd.f32 0.0, %v9531
    %v9533 = vpop.f32.mrb[0].mxu0
    %9534 = vmatprep.mubr.bf16.mxu0 0
    %9535 = vmatmul.mubr.bf16.gmra.mrb[0].mxu0 %v9442
    %v9536 = vpop.f32.mrb[0].mxu0
    %v9537 = vadd.f32 0.0, %v9536
    %v9538 = vpop.f32.mrb[0].mxu0
    %v9539 = vpop.f32.mrb[0].mxu0
    %v9540 = vadd.f32 0.0, %v9539
    %v9541 = vpop.f32.mrb[0].mxu0
    %9542 = vmatprep.mubr.bf16.mxu0 0
    %9543 = vmatmul.mubr.bf16.gmra.mrb[0].mxu0 %v9443
    %v9544 = vpop.f32.mrb[0].mxu0
    %v9545 = vadd.f32 0.0, %v9544
    %v9546 = vpop.f32.mrb[0].mxu0
    %v9547 = vpop.f32.mrb[0].mxu0
    %v9548 = vadd.f32 0.0, %v9547
    %v9549 = vpop.f32.mrb[0].mxu0
    %9550 = vmatprep.mubr.bf16.mxu0 0
    %9551 = vmatmul.mubr.bf16.gmra.mrb[0].mxu0 %v9444
    %v9552 = vpop.f32.mrb[0].mxu0
    %v9553 = vadd.f32 0.0, %v9552
    %v9554 = vpop.f32.mrb[0].mxu0
    %v9555 = vpop.f32.mrb[0].mxu0
    %v9556 = vadd.f32 0.0, %v9555
    %v9557 = vpop.f32.mrb[0].mxu0
    %9558 = vmatprep.mubr.bf16.mxu0 0
    %9559 = vmatmul.mubr.bf16.gmra.mrb[0].mxu0 %v9445
    %v9560 = vpop.f32.mrb[0].mxu0
    %v9561 = vadd.f32 0.0, %v9560
    %v9562 = vpop.f32.mrb[0].mxu0
    %v9563 = vpop.f32.mrb[0].mxu0
    %v9564 = vadd.f32 0.0, %v9563
    %v9565 = vpop.f32.mrb[0].mxu0
    %9566 = vdwg.mxu0
    %v9567 = vpack.c.bf16 %v9508, %v9505
    %v9568 = vpack.c.bf16 %v9516, %v9513
    %v9569 = vpack.c.bf16 %v9524, %v9521
    %v9570 = vpack.c.bf16 %v9532, %v9529
    %v9571 = vpack.c.bf16 %v9540, %v9537
    %v9572 = vpack.c.bf16 %v9548, %v9545
    %v9573 = vpack.c.bf16 %v9556, %v9553
    %v9574 = vpack.c.bf16 %v9564, %v9561
    %v9575 = vld [vmem:[%s8376 + $0x8] sm:$0xf]
    %v9577 = vsel %vm253, %v9567, 0
    %v9580 = vsel %vm253, %v9568, 0
    %v9583 = vsel %vm253, %v9569, 0
    %v9586 = vsel %vm253, %v9570, 0
    %v9589 = vsel %vm253, %v9571, 0
    %v9592 = vsel %vm253, %v9572, 0
    %v9595 = vsel %vm253, %v9573, 0
    %v9598 = vsel %vm253, %v9574, 0
    %v9601 = vsel %vm705, %v9575, 0
    %9603 = vmatprep.subr.bf16.mxu0 0
    %9604 = vmatpush1.bf16.msra.mxu0 %v9601
    %9605 = vmatprep.subr.bf16.mxu0 0
    %9606 = vmatpush1.bf16.msra.mxu0 0
    %9607 = vmatprep.subr.bf16.mxu0 0
    %9608 = vmatpush1.bf16.msra.mxu0 0
    %9609 = vmatprep.subr.bf16.mxu0 0
    %9610 = vmatpush1.bf16.msra.mxu0 0
    %9611 = vmatprep.subr.bf16.mxu0 0
    %9612 = vmatpush1.bf16.msra.mxu0 0
    %9613 = vmatprep.subr.bf16.mxu0 0
    %9614 = vmatpush1.bf16.msra.mxu0 0
    %9615 = vmatprep.subr.bf16.mxu0 0
    %9616 = vmatpush1.bf16.msra.mxu0 0
    %9617 = vmatprep.subr.bf16.mxu0 0
    %9618 = vmatpush1.bf16.msra.mxu0 0
    %9619 = vmatprep.subr.bf16.mxu0 0
    %9620 = vmatpush1.bf16.msra.mxu0 0
    %9621 = vmatprep.subr.bf16.mxu0 0
    %9622 = vmatpush1.bf16.msra.mxu0 0
    %9623 = vmatprep.subr.bf16.mxu0 0
    %9624 = vmatpush1.bf16.msra.mxu0 0
    %9625 = vmatprep.subr.bf16.mxu0 0
    %9626 = vmatpush1.bf16.msra.mxu0 0
    %9627 = vmatprep.subr.bf16.mxu0 0
    %9628 = vmatpush1.bf16.msra.mxu0 0
    %9629 = vmatprep.subr.bf16.mxu0 0
    %9630 = vmatpush1.bf16.msra.mxu0 0
    %9631 = vmatprep.subr.bf16.mxu0 0
    %9632 = vmatpush1.bf16.msra.mxu0 0
    %9633 = vmatprep.subr.bf16.mxu0 0
    %9634 = vmatpush1.bf16.msra.mxu0 0
    %9635 = vmatprep.mubr.bf16.mxu0 0
    %9636 = vmatmul.mubr.bf16.gmra.mrb[0].mxu0 %v9577
    %v9637 = vpop.f32.mrb[0].mxu0
    %v9638 = vadd.f32 0.0, %v9637
    %v9639 = vpop.f32.mrb[0].mxu0
    %v9640 = vpop.f32.mrb[0].mxu0
    %v9641 = vadd.f32 0.0, %v9640
    %v9642 = vpop.f32.mrb[0].mxu0
    %9643 = vmatprep.mubr.bf16.mxu0 0
    %9644 = vmatmul.mubr.bf16.gmra.mrb[0].mxu0 %v9580
    %v9645 = vpop.f32.mrb[0].mxu0
    %v9646 = vadd.f32 0.0, %v9645
    %v9647 = vpop.f32.mrb[0].mxu0
    %v9648 = vpop.f32.mrb[0].mxu0
    %v9649 = vadd.f32 0.0, %v9648
    %v9650 = vpop.f32.mrb[0].mxu0
    %9651 = vmatprep.mubr.bf16.mxu0 0
    %9652 = vmatmul.mubr.bf16.gmra.mrb[0].mxu0 %v9583
    %v9653 = vpop.f32.mrb[0].mxu0
    %v9654 = vadd.f32 0.0, %v9653
    %v9655 = vpop.f32.mrb[0].mxu0
    %v9656 = vpop.f32.mrb[0].mxu0
    %v9657 = vadd.f32 0.0, %v9656
    %v9658 = vpop.f32.mrb[0].mxu0
    %9659 = vmatprep.mubr.bf16.mxu0 0
    %9660 = vmatmul.mubr.bf16.gmra.mrb[0].mxu0 %v9586
    %v9661 = vpop.f32.mrb[0].mxu0
    %v9662 = vadd.f32 0.0, %v9661
    %v9663 = vpop.f32.mrb[0].mxu0
    %v9664 = vpop.f32.mrb[0].mxu0
    %v9665 = vadd.f32 0.0, %v9664
    %v9666 = vpop.f32.mrb[0].mxu0
    %9667 = vmatprep.mubr.bf16.mxu0 0
    %9668 = vmatmul.mubr.bf16.gmra.mrb[0].mxu0 %v9589
    %v9669 = vpop.f32.mrb[0].mxu0
    %v9670 = vadd.f32 0.0, %v9669
    %v9671 = vpop.f32.mrb[0].mxu0
    %v9672 = vpop.f32.mrb[0].mxu0
    %v9673 = vadd.f32 0.0, %v9672
    %v9674 = vpop.f32.mrb[0].mxu0
    %9675 = vmatprep.mubr.bf16.mxu0 0
    %9676 = vmatmul.mubr.bf16.gmra.mrb[0].mxu0 %v9592
    %v9677 = vpop.f32.mrb[0].mxu0
    %v9678 = vadd.f32 0.0, %v9677
    %v9679 = vpop.f32.mrb[0].mxu0
    %v9680 = vpop.f32.mrb[0].mxu0
    %v9681 = vadd.f32 0.0, %v9680
    %v9682 = vpop.f32.mrb[0].mxu0
    %9683 = vmatprep.mubr.bf16.mxu0 0
    %9684 = vmatmul.mubr.bf16.gmra.mrb[0].mxu0 %v9595
    %v9685 = vpop.f32.mrb[0].mxu0
    %v9686 = vadd.f32 0.0, %v9685
    %v9687 = vpop.f32.mrb[0].mxu0
    %v9688 = vpop.f32.mrb[0].mxu0
    %v9689 = vadd.f32 0.0, %v9688
    %v9690 = vpop.f32.mrb[0].mxu0
    %9691 = vmatprep.mubr.bf16.mxu0 0
    %9692 = vmatmul.mubr.bf16.gmra.mrb[0].mxu0 %v9598
    %v9693 = vpop.f32.mrb[0].mxu0
    %v9694 = vadd.f32 0.0, %v9693
    %v9695 = vpop.f32.mrb[0].mxu0
    %v9696 = vpop.f32.mrb[0].mxu0
    %v9697 = vadd.f32 0.0, %v9696
    %v9698 = vpop.f32.mrb[0].mxu0
    %9699 = vdwg.mxu0
    %v9700 = vadd.f32 %v9101, %v9638
    %v9701 = vadd.f32 %v9102, %v9641
    %v9702 = vadd.f32 %v9103, %v9646
    %v9703 = vadd.f32 %v9104, %v9649
    %v9704 = vadd.f32 %v9105, %v9654
    %v9705 = vadd.f32 %v9106, %v9657
    %v9706 = vadd.f32 %v9107, %v9662
    %v9707 = vadd.f32 %v9108, %v9665
    %v9708 = vadd.f32 %v9109, %v9670
    %v9709 = vadd.f32 %v9110, %v9673
    %v9710 = vadd.f32 %v9111, %v9678
    %v9711 = vadd.f32 %v9112, %v9681
    %v9712 = vadd.f32 %v9113, %v9686
    %v9713 = vadd.f32 %v9114, %v9689
    %v9714 = vadd.f32 %v9115, %v9694
    %v9715 = vadd.f32 %v9116, %v9697
    %9716 = vrot.lane.b32.xlu0 %v7918, 104
    %v9717 = vpop.permute.xlu0 %9716
    %9718 = vrot.lane.b32.xlu0 %v7919, 104
    %v9719 = vpop.permute.xlu0 %9718
    %9720 = vrot.lane.b32.xlu0 %v7920, 104
    %v9721 = vpop.permute.xlu0 %9720
    %9722 = vrot.lane.b32.xlu0 %v7921, 104
    %v9723 = vpop.permute.xlu0 %9722
    %9724 = vrot.lane.b32.xlu0 %v7922, 104
    %v9725 = vpop.permute.xlu0 %9724
    %9726 = vrot.lane.b32.xlu0 %v7923, 104
    %v9727 = vpop.permute.xlu0 %9726
    %9728 = vrot.lane.b32.xlu0 %v7924, 104
    %v9729 = vpop.permute.xlu0 %9728
    %9730 = vrot.lane.b32.xlu0 %v7925, 104
    %v9731 = vpop.permute.xlu0 %9730
    %9732 = vrot.lane.b32.xlu0 %v7918, 72
    %v9733 = vpop.permute.xlu0 %9732
    %9734 = vrot.lane.b32.xlu0 %v7919, 72
    %v9735 = vpop.permute.xlu0 %9734
    %9736 = vrot.lane.b32.xlu0 %v7920, 72
    %v9737 = vpop.permute.xlu0 %9736
    %9738 = vrot.lane.b32.xlu0 %v7921, 72
    %v9739 = vpop.permute.xlu0 %9738
    %9740 = vrot.lane.b32.xlu0 %v7922, 72
    %v9741 = vpop.permute.xlu0 %9740
    %9742 = vrot.lane.b32.xlu0 %v7923, 72
    %v9743 = vpop.permute.xlu0 %9742
    %9744 = vrot.lane.b32.xlu0 %v7924, 72
    %v9745 = vpop.permute.xlu0 %9744
    %9746 = vrot.lane.b32.xlu0 %v7925, 72
    %v9747 = vpop.permute.xlu0 %9746
    %v9749 = vsel %vm253, %v9717, 0
    %v9752 = vsel %vm253, %v9719, 0
    %v9755 = vsel %vm253, %v9721, 0
    %v9758 = vsel %vm253, %v9723, 0
    %v9761 = vsel %vm253, %v9725, 0
    %v9764 = vsel %vm253, %v9727, 0
    %v9767 = vsel %vm253, %v9729, 0
    %v9770 = vsel %vm253, %v9731, 0
    %v9773 = vsel %vm253, %v9733, 0
    %v9776 = vsel %vm253, %v9735, 0
    %v9779 = vsel %vm253, %v9737, 0
    %v9782 = vsel %vm253, %v9739, 0
    %v9785 = vsel %vm253, %v9741, 0
    %v9788 = vsel %vm253, %v9743, 0
    %v9791 = vsel %vm253, %v9745, 0
    %v9794 = vsel %vm253, %v9747, 0
    %9796 = vmatprep.subr.bf16.mxu0 0
    %9797 = vmatpush1.bf16.xpose.msra.mxu0 %v9773
    %9798 = vmatprep.subr.bf16.mxu0 0
    %9799 = vmatpush1.bf16.xpose.msra.mxu0 %v9776
    %9800 = vmatprep.subr.bf16.mxu0 0
    %9801 = vmatpush1.bf16.xpose.msra.mxu0 %v9779
    %9802 = vmatprep.subr.bf16.mxu0 0
    %9803 = vmatpush1.bf16.xpose.msra.mxu0 %v9782
    %9804 = vmatprep.subr.bf16.mxu0 0
    %9805 = vmatpush1.bf16.xpose.msra.mxu0 %v9785
    %9806 = vmatprep.subr.bf16.mxu0 0
    %9807 = vmatpush1.bf16.xpose.msra.mxu0 %v9788
    %9808 = vmatprep.subr.bf16.mxu0 0
    %9809 = vmatpush1.bf16.xpose.msra.mxu0 %v9791
    %9810 = vmatprep.subr.bf16.mxu0 0
    %9811 = vmatpush1.bf16.xpose.msra.mxu0 %v9794
    %9812 = vmatprep.subr.bf16.mxu0 0
    %9813 = vmatpush1.bf16.xpose.msra.mxu0 0
    %9814 = vmatprep.subr.bf16.mxu0 0
    %9815 = vmatpush1.bf16.xpose.msra.mxu0 0
    %9816 = vmatprep.subr.bf16.mxu0 0
    %9817 = vmatpush1.bf16.xpose.msra.mxu0 0
    %9818 = vmatprep.subr.bf16.mxu0 0
    %9819 = vmatpush1.bf16.xpose.msra.mxu0 0
    %9820 = vmatprep.subr.bf16.mxu0 0
    %9821 = vmatpush1.bf16.xpose.msra.mxu0 0
    %9822 = vmatprep.subr.bf16.mxu0 0
    %9823 = vmatpush1.bf16.xpose.msra.mxu0 0
    %9824 = vmatprep.subr.bf16.mxu0 0
    %9825 = vmatpush1.bf16.xpose.msra.mxu0 0
    %9826 = vmatprep.subr.bf16.mxu0 0
    %9827 = vmatpush1.bf16.xpose.msra.mxu0 0
    %9828 = vmatprep.mubr.bf16.mxu0 0
    %9829 = vmatmul.mubr.bf16.gmra.mrb[0].mxu0 %v9749
    %v9830 = vpop.f32.mrb[0].mxu0
    %v9831 = vadd.f32 %v2790, %v9830
    %v9832 = vpop.f32.mrb[0].mxu0
    %v9833 = vpop.f32.mrb[0].mxu0
    %v9834 = vadd.f32 %v2791, %v9833
    %v9835 = vpop.f32.mrb[0].mxu0
    %9836 = vmatprep.mubr.bf16.mxu0 0
    %9837 = vmatmul.mubr.bf16.gmra.mrb[0].mxu0 %v9752
    %v9838 = vpop.f32.mrb[0].mxu0
    %v9839 = vadd.f32 %v2792, %v9838
    %v9840 = vpop.f32.mrb[0].mxu0
    %v9841 = vpop.f32.mrb[0].mxu0
    %v9842 = vadd.f32 %v2793, %v9841
    %v9843 = vpop.f32.mrb[0].mxu0
    %9844 = vmatprep.mubr.bf16.mxu0 0
    %9845 = vmatmul.mubr.bf16.gmra.mrb[0].mxu0 %v9755
    %v9846 = vpop.f32.mrb[0].mxu0
    %v9847 = vadd.f32 %v2794, %v9846
    %v9848 = vpop.f32.mrb[0].mxu0
    %v9849 = vpop.f32.mrb[0].mxu0
    %v9850 = vadd.f32 %v2795, %v9849
    %v9851 = vpop.f32.mrb[0].mxu0
    %9852 = vmatprep.mubr.bf16.mxu0 0
    %9853 = vmatmul.mubr.bf16.gmra.mrb[0].mxu0 %v9758
    %v9854 = vpop.f32.mrb[0].mxu0
    %v9855 = vadd.f32 %v2796, %v9854
    %v9856 = vpop.f32.mrb[0].mxu0
    %v9857 = vpop.f32.mrb[0].mxu0
    %v9858 = vadd.f32 %v2797, %v9857
    %v9859 = vpop.f32.mrb[0].mxu0
    %9860 = vmatprep.mubr.bf16.mxu0 0
    %9861 = vmatmul.mubr.bf16.gmra.mrb[0].mxu0 %v9761
    %v9862 = vpop.f32.mrb[0].mxu0
    %v9863 = vadd.f32 %v2798, %v9862
    %v9864 = vpop.f32.mrb[0].mxu0
    %v9865 = vpop.f32.mrb[0].mxu0
    %v9866 = vadd.f32 %v2799, %v9865
    %v9867 = vpop.f32.mrb[0].mxu0
    %9868 = vmatprep.mubr.bf16.mxu0 0
    %9869 = vmatmul.mubr.bf16.gmra.mrb[0].mxu0 %v9764
    %v9870 = vpop.f32.mrb[0].mxu0
    %v9871 = vadd.f32 %v2800, %v9870
    %v9872 = vpop.f32.mrb[0].mxu0
    %v9873 = vpop.f32.mrb[0].mxu0
    %v9874 = vadd.f32 %v2801, %v9873
    %v9875 = vpop.f32.mrb[0].mxu0
    %9876 = vmatprep.mubr.bf16.mxu0 0
    %9877 = vmatmul.mubr.bf16.gmra.mrb[0].mxu0 %v9767
    %v9878 = vpop.f32.mrb[0].mxu0
    %v9879 = vadd.f32 %v2802, %v9878
    %v9880 = vpop.f32.mrb[0].mxu0
    %v9881 = vpop.f32.mrb[0].mxu0
    %v9882 = vadd.f32 %v2803, %v9881
    %v9883 = vpop.f32.mrb[0].mxu0
    %9884 = vmatprep.mubr.bf16.mxu0 0
    %9885 = vmatmul.mubr.bf16.gmra.mrb[0].mxu0 %v9770
    %v9886 = vpop.f32.mrb[0].mxu0
    %v9887 = vadd.f32 %v2804, %v9886
    %v9888 = vpop.f32.mrb[0].mxu0
    %v9889 = vpop.f32.mrb[0].mxu0
    %v9890 = vadd.f32 %v2805, %v9889
    %v9891 = vpop.f32.mrb[0].mxu0
    %9892 = vdwg.mxu0
    %9893 = vmax.xlane.f32.xlu0 %v9831
    %v9894 = vpop.xlane.xlu0 %9893
    %9895 = vmax.xlane.f32.xlu0 %v9834
    %v9896 = vpop.xlane.xlu0 %9895
    %9897 = vmax.xlane.f32.xlu0 %v9839
    %v9898 = vpop.xlane.xlu0 %9897
    %9899 = vmax.xlane.f32.xlu0 %v9842
    %v9900 = vpop.xlane.xlu0 %9899
    %9901 = vmax.xlane.f32.xlu0 %v9847
    %v9902 = vpop.xlane.xlu0 %9901
    %9903 = vmax.xlane.f32.xlu0 %v9850
    %v9904 = vpop.xlane.xlu0 %9903
    %9905 = vmax.xlane.f32.xlu0 %v9855
    %v9906 = vpop.xlane.xlu0 %9905
    %9907 = vmax.xlane.f32.xlu0 %v9858
    %v9908 = vpop.xlane.xlu0 %9907
    %9909 = vmax.xlane.f32.xlu0 %v9863
    %v9910 = vpop.xlane.xlu0 %9909
    %9911 = vmax.xlane.f32.xlu0 %v9866
    %v9912 = vpop.xlane.xlu0 %9911
    %9913 = vmax.xlane.f32.xlu0 %v9871
    %v9914 = vpop.xlane.xlu0 %9913
    %9915 = vmax.xlane.f32.xlu0 %v9874
    %v9916 = vpop.xlane.xlu0 %9915
    %9917 = vmax.xlane.f32.xlu0 %v9879
    %v9918 = vpop.xlane.xlu0 %9917
    %9919 = vmax.xlane.f32.xlu0 %v9882
    %v9920 = vpop.xlane.xlu0 %9919
    %9921 = vmax.xlane.f32.xlu0 %v9887
    %v9922 = vpop.xlane.xlu0 %9921
    %9923 = vmax.xlane.f32.xlu0 %v9890
    %v9924 = vpop.xlane.xlu0 %9923
    %v9925 = vsub.f32 %v9831, %v9894
    %v9926 = vsub.f32 %v9834, %v9896
    %v9927 = vsub.f32 %v9839, %v9898
    %v9928 = vsub.f32 %v9842, %v9900
    %v9929 = vsub.f32 %v9847, %v9902
    %v9930 = vsub.f32 %v9850, %v9904
    %v9931 = vsub.f32 %v9855, %v9906
    %v9932 = vsub.f32 %v9858, %v9908
    %v9933 = vsub.f32 %v9863, %v9910
    %v9934 = vsub.f32 %v9866, %v9912
    %v9935 = vsub.f32 %v9871, %v9914
    %v9936 = vsub.f32 %v9874, %v9916
    %v9937 = vsub.f32 %v9879, %v9918
    %v9938 = vsub.f32 %v9882, %v9920
    %v9939 = vsub.f32 %v9887, %v9922
    %v9940 = vsub.f32 %v9890, %v9924
    %v9941 = vmul.f32 %v9925, 1.442695
    %v9942 = vpow.pop %v9941
    %v9943 = vmul.f32 %v9926, 1.442695
    %v9944 = vpow.pop %v9943
    %v9945 = vmul.f32 %v9927, 1.442695
    %v9946 = vpow.pop %v9945
    %v9947 = vmul.f32 %v9928, 1.442695
    %v9948 = vpow.pop %v9947
    %v9949 = vmul.f32 %v9929, 1.442695
    %v9950 = vpow.pop %v9949
    %v9951 = vmul.f32 %v9930, 1.442695
    %v9952 = vpow.pop %v9951
    %v9953 = vmul.f32 %v9931, 1.442695
    %v9954 = vpow.pop %v9953
    %v9955 = vmul.f32 %v9932, 1.442695
    %v9956 = vpow.pop %v9955
    %v9957 = vmul.f32 %v9933, 1.442695
    %v9958 = vpow.pop %v9957
    %v9959 = vmul.f32 %v9934, 1.442695
    %v9960 = vpow.pop %v9959
    %v9961 = vmul.f32 %v9935, 1.442695
    %v9962 = vpow.pop %v9961
    %v9963 = vmul.f32 %v9936, 1.442695
    %v9964 = vpow.pop %v9963
    %v9965 = vmul.f32 %v9937, 1.442695
    %v9966 = vpow.pop %v9965
    %v9967 = vmul.f32 %v9938, 1.442695
    %v9968 = vpow.pop %v9967
    %v9969 = vmul.f32 %v9939, 1.442695
    %v9970 = vpow.pop %v9969
    %v9971 = vmul.f32 %v9940, 1.442695
    %v9972 = vpow.pop %v9971
    %9973 = vadd.xlane.f32.xlu0 %v9942
    %v9974 = vpop.xlane.xlu0 %9973
    %9975 = vadd.xlane.f32.xlu0 %v9944
    %v9976 = vpop.xlane.xlu0 %9975
    %9977 = vadd.xlane.f32.xlu0 %v9946
    %v9978 = vpop.xlane.xlu0 %9977
    %9979 = vadd.xlane.f32.xlu0 %v9948
    %v9980 = vpop.xlane.xlu0 %9979
    %9981 = vadd.xlane.f32.xlu0 %v9950
    %v9982 = vpop.xlane.xlu0 %9981
    %9983 = vadd.xlane.f32.xlu0 %v9952
    %v9984 = vpop.xlane.xlu0 %9983
    %9985 = vadd.xlane.f32.xlu0 %v9954
    %v9986 = vpop.xlane.xlu0 %9985
    %9987 = vadd.xlane.f32.xlu0 %v9956
    %v9988 = vpop.xlane.xlu0 %9987
    %9989 = vadd.xlane.f32.xlu0 %v9958
    %v9990 = vpop.xlane.xlu0 %9989
    %9991 = vadd.xlane.f32.xlu0 %v9960
    %v9992 = vpop.xlane.xlu0 %9991
    %9993 = vadd.xlane.f32.xlu0 %v9962
    %v9994 = vpop.xlane.xlu0 %9993
    %9995 = vadd.xlane.f32.xlu0 %v9964
    %v9996 = vpop.xlane.xlu0 %9995
    %9997 = vadd.xlane.f32.xlu0 %v9966
    %v9998 = vpop.xlane.xlu0 %9997
    %9999 = vadd.xlane.f32.xlu0 %v9968
    %v10000 = vpop.xlane.xlu0 %9999
    %10001 = vadd.xlane.f32.xlu0 %v9970
    %v10002 = vpop.xlane.xlu0 %10001
    %10003 = vadd.xlane.f32.xlu0 %v9972
    %v10004 = vpop.xlane.xlu0 %10003
    %v10005 = vrcp.pop %v9974
    %v10006 = vrcp.pop %v9976
    %v10007 = vrcp.pop %v9978
    %v10008 = vrcp.pop %v9980
    %v10009 = vrcp.pop %v9982
    %v10010 = vrcp.pop %v9984
    %v10011 = vrcp.pop %v9986
    %v10012 = vrcp.pop %v9988
    %v10013 = vrcp.pop %v9990
    %v10014 = vrcp.pop %v9992
    %v10015 = vrcp.pop %v9994
    %v10016 = vrcp.pop %v9996
    %v10017 = vrcp.pop %v9998
    %v10018 = vrcp.pop %v10000
    %v10019 = vrcp.pop %v10002
    %v10020 = vrcp.pop %v10004
    %v10021 = vmul.f32 %v9942, %v10005
    %v10022 = vmul.f32 %v9944, %v10006
    %v10023 = vmul.f32 %v9946, %v10007
    %v10024 = vmul.f32 %v9948, %v10008
    %v10025 = vmul.f32 %v9950, %v10009
    %v10026 = vmul.f32 %v9952, %v10010
    %v10027 = vmul.f32 %v9954, %v10011
    %v10028 = vmul.f32 %v9956, %v10012
    %v10029 = vmul.f32 %v9958, %v10013
    %v10030 = vmul.f32 %v9960, %v10014
    %v10031 = vmul.f32 %v9962, %v10015
    %v10032 = vmul.f32 %v9964, %v10016
    %v10033 = vmul.f32 %v9966, %v10017
    %v10034 = vmul.f32 %v9968, %v10018
    %v10035 = vmul.f32 %v9970, %v10019
    %v10036 = vmul.f32 %v9972, %v10020
    %v10037 = vpack.c.bf16 %v10022, %v10021
    %v10038 = vpack.c.bf16 %v10024, %v10023
    %v10039 = vpack.c.bf16 %v10026, %v10025
    %v10040 = vpack.c.bf16 %v10028, %v10027
    %v10041 = vpack.c.bf16 %v10030, %v10029
    %v10042 = vpack.c.bf16 %v10032, %v10031
    %v10043 = vpack.c.bf16 %v10034, %v10033
    %v10044 = vpack.c.bf16 %v10036, %v10035
    %10045 = vrot.lane.b32.xlu0 %v7918, 40
    %v10046 = vpop.permute.xlu0 %10045
    %10047 = vrot.lane.b32.xlu0 %v7919, 40
    %v10048 = vpop.permute.xlu0 %10047
    %10049 = vrot.lane.b32.xlu0 %v7920, 40
    %v10050 = vpop.permute.xlu0 %10049
    %10051 = vrot.lane.b32.xlu0 %v7921, 40
    %v10052 = vpop.permute.xlu0 %10051
    %10053 = vrot.lane.b32.xlu0 %v7922, 40
    %v10054 = vpop.permute.xlu0 %10053
    %10055 = vrot.lane.b32.xlu0 %v7923, 40
    %v10056 = vpop.permute.xlu0 %10055
    %10057 = vrot.lane.b32.xlu0 %v7924, 40
    %v10058 = vpop.permute.xlu0 %10057
    %10059 = vrot.lane.b32.xlu0 %v7925, 40
    %v10060 = vpop.permute.xlu0 %10059
    %10069 = vmatprep.subr.bf16.mxu0 0
    %10070 = vmatpush1.bf16.msra.mxu0 %v10046
    %10071 = vmatprep.subr.bf16.mxu0 0
    %10072 = vmatpush1.bf16.msra.mxu0 %v10048
    %10073 = vmatprep.subr.bf16.mxu0 0
    %10074 = vmatpush1.bf16.msra.mxu0 %v10050
    %10075 = vmatprep.subr.bf16.mxu0 0
    %10076 = vmatpush1.bf16.msra.mxu0 %v10052
    %10077 = vmatprep.subr.bf16.mxu0 0
    %10078 = vmatpush1.bf16.msra.mxu0 %v10054
    %10079 = vmatprep.subr.bf16.mxu0 0
    %10080 = vmatpush1.bf16.msra.mxu0 %v10056
    %10081 = vmatprep.subr.bf16.mxu0 0
    %10082 = vmatpush1.bf16.msra.mxu0 %v10058
    %10083 = vmatprep.subr.bf16.mxu0 0
    %10084 = vmatpush1.bf16.msra.mxu0 %v10060
    %10085 = vmatprep.subr.bf16.mxu0 0
    %10086 = vmatpush1.bf16.msra.mxu0 0
    %10087 = vmatprep.subr.bf16.mxu0 0
    %10088 = vmatpush1.bf16.msra.mxu0 0
    %10089 = vmatprep.subr.bf16.mxu0 0
    %10090 = vmatpush1.bf16.msra.mxu0 0
    %10091 = vmatprep.subr.bf16.mxu0 0
    %10092 = vmatpush1.bf16.msra.mxu0 0
    %10093 = vmatprep.subr.bf16.mxu0 0
    %10094 = vmatpush1.bf16.msra.mxu0 0
    %10095 = vmatprep.subr.bf16.mxu0 0
    %10096 = vmatpush1.bf16.msra.mxu0 0
    %10097 = vmatprep.subr.bf16.mxu0 0
    %10098 = vmatpush1.bf16.msra.mxu0 0
    %10099 = vmatprep.subr.bf16.mxu0 0
    %10100 = vmatpush1.bf16.msra.mxu0 0
    %10101 = vmatprep.mubr.bf16.mxu0 0
    %10102 = vmatmul.mubr.bf16.gmra.mrb[0].mxu0 %v10037
    %v10103 = vpop.f32.mrb[0].mxu0
    %v10104 = vadd.f32 0.0, %v10103
    %v10105 = vpop.f32.mrb[0].mxu0
    %v10106 = vpop.f32.mrb[0].mxu0
    %v10107 = vadd.f32 0.0, %v10106
    %v10108 = vpop.f32.mrb[0].mxu0
    %10109 = vmatprep.mubr.bf16.mxu0 0
    %10110 = vmatmul.mubr.bf16.gmra.mrb[0].mxu0 %v10038
    %v10111 = vpop.f32.mrb[0].mxu0
    %v10112 = vadd.f32 0.0, %v10111
    %v10113 = vpop.f32.mrb[0].mxu0
    %v10114 = vpop.f32.mrb[0].mxu0
    %v10115 = vadd.f32 0.0, %v10114
    %v10116 = vpop.f32.mrb[0].mxu0
    %10117 = vmatprep.mubr.bf16.mxu0 0
    %10118 = vmatmul.mubr.bf16.gmra.mrb[0].mxu0 %v10039
    %v10119 = vpop.f32.mrb[0].mxu0
    %v10120 = vadd.f32 0.0, %v10119
    %v10121 = vpop.f32.mrb[0].mxu0
    %v10122 = vpop.f32.mrb[0].mxu0
    %v10123 = vadd.f32 0.0, %v10122
    %v10124 = vpop.f32.mrb[0].mxu0
    %10125 = vmatprep.mubr.bf16.mxu0 0
    %10126 = vmatmul.mubr.bf16.gmra.mrb[0].mxu0 %v10040
    %v10127 = vpop.f32.mrb[0].mxu0
    %v10128 = vadd.f32 0.0, %v10127
    %v10129 = vpop.f32.mrb[0].mxu0
    %v10130 = vpop.f32.mrb[0].mxu0
    %v10131 = vadd.f32 0.0, %v10130
    %v10132 = vpop.f32.mrb[0].mxu0
    %10133 = vmatprep.mubr.bf16.mxu0 0
    %10134 = vmatmul.mubr.bf16.gmra.mrb[0].mxu0 %v10041
    %v10135 = vpop.f32.mrb[0].mxu0
    %v10136 = vadd.f32 0.0, %v10135
    %v10137 = vpop.f32.mrb[0].mxu0
    %v10138 = vpop.f32.mrb[0].mxu0
    %v10139 = vadd.f32 0.0, %v10138
    %v10140 = vpop.f32.mrb[0].mxu0
    %10141 = vmatprep.mubr.bf16.mxu0 0
    %10142 = vmatmul.mubr.bf16.gmra.mrb[0].mxu0 %v10042
    %v10143 = vpop.f32.mrb[0].mxu0
    %v10144 = vadd.f32 0.0, %v10143
    %v10145 = vpop.f32.mrb[0].mxu0
    %v10146 = vpop.f32.mrb[0].mxu0
    %v10147 = vadd.f32 0.0, %v10146
    %v10148 = vpop.f32.mrb[0].mxu0
    %10149 = vmatprep.mubr.bf16.mxu0 0
    %10150 = vmatmul.mubr.bf16.gmra.mrb[0].mxu0 %v10043
    %v10151 = vpop.f32.mrb[0].mxu0
    %v10152 = vadd.f32 0.0, %v10151
    %v10153 = vpop.f32.mrb[0].mxu0
    %v10154 = vpop.f32.mrb[0].mxu0
    %v10155 = vadd.f32 0.0, %v10154
    %v10156 = vpop.f32.mrb[0].mxu0
    %10157 = vmatprep.mubr.bf16.mxu0 0
    %10158 = vmatmul.mubr.bf16.gmra.mrb[0].mxu0 %v10044
    %v10159 = vpop.f32.mrb[0].mxu0
    %v10160 = vadd.f32 0.0, %v10159
    %v10161 = vpop.f32.mrb[0].mxu0
    %v10162 = vpop.f32.mrb[0].mxu0
    %v10163 = vadd.f32 0.0, %v10162
    %v10164 = vpop.f32.mrb[0].mxu0
    %10165 = vdwg.mxu0
    %v10166 = vpack.c.bf16 %v10107, %v10104
    %v10167 = vpack.c.bf16 %v10115, %v10112
    %v10168 = vpack.c.bf16 %v10123, %v10120
    %v10169 = vpack.c.bf16 %v10131, %v10128
    %v10170 = vpack.c.bf16 %v10139, %v10136
    %v10171 = vpack.c.bf16 %v10147, %v10144
    %v10172 = vpack.c.bf16 %v10155, %v10152
    %v10173 = vpack.c.bf16 %v10163, %v10160
    %v10174 = vld [vmem:[%s8376 + $0xc] sm:$0xf]
    %v10176 = vsel %vm253, %v10166, 0
    %v10179 = vsel %vm253, %v10167, 0
    %v10182 = vsel %vm253, %v10168, 0
    %v10185 = vsel %vm253, %v10169, 0
    %v10188 = vsel %vm253, %v10170, 0
    %v10191 = vsel %vm253, %v10171, 0
    %v10194 = vsel %vm253, %v10172, 0
    %v10197 = vsel %vm253, %v10173, 0
    %v10200 = vsel %vm705, %v10174, 0
    %10202 = vmatprep.subr.bf16.mxu0 0
    %10203 = vmatpush1.bf16.msra.mxu0 %v10200
    %10204 = vmatprep.subr.bf16.mxu0 0
    %10205 = vmatpush1.bf16.msra.mxu0 0
    %10206 = vmatprep.subr.bf16.mxu0 0
    %10207 = vmatpush1.bf16.msra.mxu0 0
    %10208 = vmatprep.subr.bf16.mxu0 0
    %10209 = vmatpush1.bf16.msra.mxu0 0
    %10210 = vmatprep.subr.bf16.mxu0 0
    %10211 = vmatpush1.bf16.msra.mxu0 0
    %10212 = vmatprep.subr.bf16.mxu0 0
    %10213 = vmatpush1.bf16.msra.mxu0 0
    %10214 = vmatprep.subr.bf16.mxu0 0
    %10215 = vmatpush1.bf16.msra.mxu0 0
    %10216 = vmatprep.subr.bf16.mxu0 0
    %10217 = vmatpush1.bf16.msra.mxu0 0
    %10218 = vmatprep.subr.bf16.mxu0 0
    %10219 = vmatpush1.bf16.msra.mxu0 0
    %10220 = vmatprep.subr.bf16.mxu0 0
    %10221 = vmatpush1.bf16.msra.mxu0 0
    %10222 = vmatprep.subr.bf16.mxu0 0
    %10223 = vmatpush1.bf16.msra.mxu0 0
    %10224 = vmatprep.subr.bf16.mxu0 0
    %10225 = vmatpush1.bf16.msra.mxu0 0
    %10226 = vmatprep.subr.bf16.mxu0 0
    %10227 = vmatpush1.bf16.msra.mxu0 0
    %10228 = vmatprep.subr.bf16.mxu0 0
    %10229 = vmatpush1.bf16.msra.mxu0 0
    %10230 = vmatprep.subr.bf16.mxu0 0
    %10231 = vmatpush1.bf16.msra.mxu0 0
    %10232 = vmatprep.subr.bf16.mxu0 0
    %10233 = vmatpush1.bf16.msra.mxu0 0
    %10234 = vmatprep.mubr.bf16.mxu0 0
    %10235 = vmatmul.mubr.bf16.gmra.mrb[0].mxu0 %v10176
    %v10236 = vpop.f32.mrb[0].mxu0
    %v10237 = vadd.f32 0.0, %v10236
    %v10238 = vpop.f32.mrb[0].mxu0
    %v10239 = vpop.f32.mrb[0].mxu0
    %v10240 = vadd.f32 0.0, %v10239
    %v10241 = vpop.f32.mrb[0].mxu0
    %10242 = vmatprep.mubr.bf16.mxu0 0
    %10243 = vmatmul.mubr.bf16.gmra.mrb[0].mxu0 %v10179
    %v10244 = vpop.f32.mrb[0].mxu0
    %v10245 = vadd.f32 0.0, %v10244
    %v10246 = vpop.f32.mrb[0].mxu0
    %v10247 = vpop.f32.mrb[0].mxu0
    %v10248 = vadd.f32 0.0, %v10247
    %v10249 = vpop.f32.mrb[0].mxu0
    %10250 = vmatprep.mubr.bf16.mxu0 0
    %10251 = vmatmul.mubr.bf16.gmra.mrb[0].mxu0 %v10182
    %v10252 = vpop.f32.mrb[0].mxu0
    %v10253 = vadd.f32 0.0, %v10252
    %v10254 = vpop.f32.mrb[0].mxu0
    %v10255 = vpop.f32.mrb[0].mxu0
    %v10256 = vadd.f32 0.0, %v10255
    %v10257 = vpop.f32.mrb[0].mxu0
    %10258 = vmatprep.mubr.bf16.mxu0 0
    %10259 = vmatmul.mubr.bf16.gmra.mrb[0].mxu0 %v10185
    %v10260 = vpop.f32.mrb[0].mxu0
    %v10261 = vadd.f32 0.0, %v10260
    %v10262 = vpop.f32.mrb[0].mxu0
    %v10263 = vpop.f32.mrb[0].mxu0
    %v10264 = vadd.f32 0.0, %v10263
    %v10265 = vpop.f32.mrb[0].mxu0
    %10266 = vmatprep.mubr.bf16.mxu0 0
    %10267 = vmatmul.mubr.bf16.gmra.mrb[0].mxu0 %v10188
    %v10268 = vpop.f32.mrb[0].mxu0
    %v10269 = vadd.f32 0.0, %v10268
    %v10270 = vpop.f32.mrb[0].mxu0
    %v10271 = vpop.f32.mrb[0].mxu0
    %v10272 = vadd.f32 0.0, %v10271
    %v10273 = vpop.f32.mrb[0].mxu0
    %10274 = vmatprep.mubr.bf16.mxu0 0
    %10275 = vmatmul.mubr.bf16.gmra.mrb[0].mxu0 %v10191
    %v10276 = vpop.f32.mrb[0].mxu0
    %v10277 = vadd.f32 0.0, %v10276
    %v10278 = vpop.f32.mrb[0].mxu0
    %v10279 = vpop.f32.mrb[0].mxu0
    %v10280 = vadd.f32 0.0, %v10279
    %v10281 = vpop.f32.mrb[0].mxu0
    %10282 = vmatprep.mubr.bf16.mxu0 0
    %10283 = vmatmul.mubr.bf16.gmra.mrb[0].mxu0 %v10194
    %v10284 = vpop.f32.mrb[0].mxu0
    %v10285 = vadd.f32 0.0, %v10284
    %v10286 = vpop.f32.mrb[0].mxu0
    %v10287 = vpop.f32.mrb[0].mxu0
    %v10288 = vadd.f32 0.0, %v10287
    %v10289 = vpop.f32.mrb[0].mxu0
    %10290 = vmatprep.mubr.bf16.mxu0 0
    %10291 = vmatmul.mubr.bf16.gmra.mrb[0].mxu0 %v10197
    %v10292 = vpop.f32.mrb[0].mxu0
    %v10293 = vadd.f32 0.0, %v10292
    %v10294 = vpop.f32.mrb[0].mxu0
    %v10295 = vpop.f32.mrb[0].mxu0
    %v10296 = vadd.f32 0.0, %v10295
    %v10297 = vpop.f32.mrb[0].mxu0
    %10298 = vdwg.mxu0
    %v10299 = vadd.f32 %v9700, %v10237
    %v10300 = vadd.f32 %v9701, %v10240
    %v10301 = vadd.f32 %v9702, %v10245
    %v10302 = vadd.f32 %v9703, %v10248
    %v10303 = vadd.f32 %v9704, %v10253
    %v10304 = vadd.f32 %v9705, %v10256
    %v10305 = vadd.f32 %v9706, %v10261
    %v10306 = vadd.f32 %v9707, %v10264
    %v10307 = vadd.f32 %v9708, %v10269
    %v10308 = vadd.f32 %v9709, %v10272
    %v10309 = vadd.f32 %v9710, %v10277
    %v10310 = vadd.f32 %v9711, %v10280
    %v10311 = vadd.f32 %v9712, %v10285
    %v10312 = vadd.f32 %v9713, %v10288
    %v10313 = vadd.f32 %v9714, %v10293
    %v10314 = vadd.f32 %v9715, %v10296
    %10315 = vst.msk [vmem:[#allocation2] sm:$0xff] %vm75, %v10299
    %10316 = vst.msk [vmem:[#allocation2 + $0x8] sm:$0xff] %vm75, %v10300
    %10317 = vst.msk [vmem:[#allocation2 + $0x10] sm:$0xff] %vm75, %v10301
    %10318 = vst.msk [vmem:[#allocation2 + $0x18] sm:$0xff] %vm75, %v10302
    %10319 = vst.msk [vmem:[#allocation2 + $0x20] sm:$0xff] %vm75, %v10303
    %10320 = vst.msk [vmem:[#allocation2 + $0x28] sm:$0xff] %vm75, %v10304
    %10321 = vst.msk [vmem:[#allocation2 + $0x30] sm:$0xff] %vm75, %v10305
    %10322 = vst.msk [vmem:[#allocation2 + $0x38] sm:$0xff] %vm75, %v10306
    %10323 = vst.msk [vmem:[#allocation2 + $0x40] sm:$0xff] %vm75, %v10307
    %10324 = vst.msk [vmem:[#allocation2 + $0x48] sm:$0xff] %vm75, %v10308
    %10325 = vst.msk [vmem:[#allocation2 + $0x50] sm:$0xff] %vm75, %v10309
    %10326 = vst.msk [vmem:[#allocation2 + $0x58] sm:$0xff] %vm75, %v10310
    %10327 = vst.msk [vmem:[#allocation2 + $0x60] sm:$0xff] %vm75, %v10311
    %10328 = vst.msk [vmem:[#allocation2 + $0x68] sm:$0xff] %vm75, %v10312
    %10329 = vst.msk [vmem:[#allocation2 + $0x70] sm:$0xff] %vm75, %v10313
    %10330 = vst.msk [vmem:[#allocation2 + $0x78] sm:$0xff] %vm75, %v10314
    // Predicated region
    $region30: #{refiner_attention_pallas.1} parent=1 // pred_check
      _
    $region31: #{refiner_attention_pallas.1} parent=1 // pred_check_branch
      %10332 = sbr.rel (0) target = $region33
    $region32: #{refiner_attention_pallas.1} parent=1 // pred_region
      %s10334 = ssub.s32 2048, 2048
      %10335 = vsyncadd [#allocation3], %s10334
      %s10336 = sshll.u32 [#allocation2], 4
      %s10337 = int_to_ptr.vmem [resolvable:$true] %s10336
      %10342 = dma.vmem_to_hbm [thread:$0]  %s10337, 2048, %s7, [#allocation3], 128, 128, 8
    $region33: #{refiner_attention_pallas.1} parent=1 // pred_fallthru
      _
    // Predicated region
    $region34: #{refiner_attention_pallas.1} parent=1 // pred_check
      _
    $region35: #{refiner_attention_pallas.1} parent=1 // pred_check_branch
      %10344 = sbr.rel (0) target = $region37
    $region36: #{refiner_attention_pallas.1} parent=1 // pred_region
      %10345 = dma.done [#allocation3], 2048
    $region37: #{refiner_attention_pallas.1} parent=1 // pred_fallthru
      _
    %10346 = vsyncpa [#allocation3], 1

</llo_original>
